<compile_context>
chip_gen: v7x
topology: tpu7x:2x2x1
jax: 0.10.0
libtpu: 0.0.40
codegen_flags: <defaults>
</compile_context>

<pallas_src>
import math
from functools import partial

import jax
import jax.numpy as jnp
from jax import lax
from jax.experimental import pallas as pl
from jax.experimental.pallas import tpu as pltpu


# --------------------------- Fused transformer kernel ---------------------------
def _fused_transformer_kernel(
    x_ref, pos_ref, w1a_ref, w2_ref, b2_ref,
    wqkv_ref, bqkv_ref, wo_ref, bo_ref,
    wf1_ref, bf1_ref, wf2_ref, bf2_ref,
    g1_ref, be1_ref, g2_ref, be2_ref,
    o_ref, attn_scratch,
    *, num_heads, num_layers, batch, seq,
):
    # TODO(synk): dropout layers are treated as identity (eval-mode semantics).
    D = o_ref.shape[-1]
    hd = D // num_heads

    # ---- LearnedPositionalEncoder ------------------------------------------------
    # cat([x, enc], -1) @ W1^T + b1  ==  x @ W1a + (enc @ W1b + b1)
    # The batch-invariant term (enc @ W1b + b1) is precomputed in the wrapper (pos_ref).
    x = x_ref[...]                                                      # (B*S, D)
    h = jnp.dot(x, w1a_ref[...], preferred_element_type=jnp.float32) + pos_ref[...]
    h = jnp.maximum(h, 0.0)
    x = jnp.dot(h, w2_ref[...], preferred_element_type=jnp.float32) + b2_ref[...]
    x = jnp.maximum(x, 0.0)

    def layer_norm(y, g, b):
        mu = jnp.mean(y, axis=-1, keepdims=True)
        var = jnp.mean(jnp.square(y - mu), axis=-1, keepdims=True)
        return (y - mu) * lax.rsqrt(var + 1e-5) * g + b

    # ---- N x TransformerEncoderLayer (post-LN, ReLU), statically unrolled ---------
    for l in range(num_layers):
        # Fused QKV projection: one (B*S, D) @ (D, 3D) matmul.
        # The 1/sqrt(hd) attention scale is already folded into Wq / bq.
        qkv = jnp.dot(x, wqkv_ref[l], preferred_element_type=jnp.float32) + bqkv_ref[l]
        q = qkv[:, :D]
        k = qkv[:, D:2 * D]
        v = qkv[:, 2 * D:]

        # Attention per (batch, head); head outputs land in a VMEM scratch so the
        # output projection is a single (B*S, D) @ (D, D) matmul with K = D.
        for b in range(batch):
            rows = slice(b * seq, (b + 1) * seq)
            for hh in range(num_heads):
                cols = slice(hh * hd, (hh + 1) * hd)
                qh = q[rows, cols]
                kh = k[rows, cols]
                vh = v[rows, cols]
                s = jnp.dot(qh, kh.T, preferred_element_type=jnp.float32)   # (S, S)
                s = s - jnp.max(s, axis=-1, keepdims=True)
                p = jnp.exp(s)
                p = p * pl.reciprocal(jnp.sum(p, axis=-1, keepdims=True), approx=True)
                attn_scratch[rows, cols] = jnp.dot(
                    p, vh, preferred_element_type=jnp.float32)              # (S, hd)

        attn = (jnp.dot(attn_scratch[...], wo_ref[l],
                        preferred_element_type=jnp.float32) + bo_ref[l])

        x1 = layer_norm(x + attn, g1_ref[l], be1_ref[l])
        ff = jnp.maximum(
            jnp.dot(x1, wf1_ref[l], preferred_element_type=jnp.float32) + bf1_ref[l], 0.0)
        ff = jnp.dot(ff, wf2_ref[l], preferred_element_type=jnp.float32) + bf2_ref[l]
        x = layer_norm(x1 + ff, g2_ref[l], be2_ref[l])

    o_ref[...] = x


# ----------------------------------- Wrapper ------------------------------------
@partial(jax.jit, static_argnames=("num_heads",))
def transformer_encoder_forward(src, params, num_heads):
    B, H, W, D = src.shape
    S = H * W
    BS = B * S
    N = params["wqkv"].shape[0]
    FF = params["wf1"].shape[2]

    x = src.reshape(BS, D)
    pos_full = jnp.tile(params["pos_row"], (B, 1))      # (B*S, D) batch-invariant term

    def rep(shape):
        zeros = (0,) * len(shape)
        return pl.BlockSpec(shape, lambda i, _z=zeros: _z)

    out = pl.pallas_call(
        partial(_fused_transformer_kernel, num_heads=num_heads,
                num_layers=N, batch=B, seq=S),
        out_shape=jax.ShapeDtypeStruct((BS, D), jnp.float32),
        grid=(1,),
        in_specs=[
            rep((BS, D)),            # x
            rep((BS, D)),            # pos_full = enc @ W1b + b1 (tiled over batch)
            rep((D, D)),             # W1a
            rep((D, D)),             # W2
            rep((1, D)),             # b2
            rep((N, D, 3 * D)),      # fused Wqkv (scale folded into Wq)
            rep((N, 1, 3 * D)),      # fused bqkv
            rep((N, D, D)),          # Wo
            rep((N, 1, D)),          # bo
            rep((N, D, FF)),         # W_ff1
            rep((N, 1, FF)),         # b_ff1
            rep((N, FF, D)),         # W_ff2
            rep((N, 1, D)),          # b_ff2
            rep((N, 1, D)),          # ln1 gamma
            rep((N, 1, D)),          # ln1 beta
            rep((N, 1, D)),          # ln2 gamma
            rep((N, 1, D)),          # ln2 beta
        ],
        out_specs=rep((BS, D)),
        scratch_shapes=[pltpu.VMEM((BS, D), jnp.float32)],
        compiler_params=pltpu.CompilerParams(dimension_semantics=("arbitrary",)),
    )(x, pos_full, params["w1a"], params["w2"], params["b2"],
      params["wqkv"], params["bqkv"], params["wo"], params["bo"],
      params["wf1"], params["bf1"], params["wf2"], params["bf2"],
      params["g1"], params["be1"], params["g2"], params["be2"])

    return out.reshape(B, H, W, D)


# ------------------------------- Parameter init ----------------------------------
def init_params(key, d_model, n_layers, num_heads, height, width):
    d = d_model
    hd = d // num_heads
    state = {"key": key}

    def nxt():
        state["key"], sub = jax.random.split(state["key"])
        return sub

    # LearnedPositionalEncoder.enc: randn(h, w, k), L2-normalized along k.
    enc = jax.random.normal(nxt(), (height, width, d), jnp.float32)
    enc = enc / jnp.linalg.norm(enc, axis=2, keepdims=True)
    enc = enc.reshape(height * width, d)

    def linear(fan_in, fan_out):
        # nn.Linear-style uniform init; weight returned pre-transposed (in, out).
        bound = 1.0 / math.sqrt(fan_in)
        w = jax.random.uniform(nxt(), (fan_out, fan_in), jnp.float32, -bound, bound)
        b = jax.random.uniform(nxt(), (1, fan_out), jnp.float32, -bound, bound)
        return w.T, b

    # Positional MLP: Linear(2d, d) -> ReLU -> Linear(d, d) -> ReLU
    w1t, b1 = linear(2 * d, d)
    w2t, b2 = linear(d, d)
    w1a, w1b = w1t[:d], w1t[d:]
    pos_row = enc @ w1b + b1                 # (S, d), batch-invariant, hoisted

    scale = 1.0 / math.sqrt(hd)
    wqkv, bqkv, wo, bo = [], [], [], []
    wf1, bf1, wf2, bf2 = [], [], [], []
    g1, be1, g2, be2 = [], [], [], []
    for _ in range(n_layers):
        wqt, bq = linear(d, d)
        wkt, bk = linear(d, d)
        wvt, bv = linear(d, d)
        wot, bo_ = linear(d, d)
        wf1t, bf1_ = linear(d, d)            # dim_feedforward = d_model
        wf2t, bf2_ = linear(d, d)
        # Fuse QKV; fold the 1/sqrt(head_dim) attention scale into Wq / bq.
        wqkv.append(jnp.concatenate([wqt * scale, wkt, wvt], axis=1))   # (d, 3d)
        bqkv.append(jnp.concatenate([bq * scale, bk, bv], axis=1))      # (1, 3d)
        wo.append(wot); bo.append(bo_)
        wf1.append(wf1t); bf1.append(bf1_)
        wf2.append(wf2t); bf2.append(bf2_)
        g1.append(jnp.ones((1, d), jnp.float32))
        be1.append(jnp.zeros((1, d), jnp.float32))
        g2.append(jnp.ones((1, d), jnp.float32))
        be2.append(jnp.zeros((1, d), jnp.float32))

    stack = lambda xs: jnp.stack(xs, axis=0)
    return dict(
        w1a=w1a, w2=w2t, b2=b2, pos_row=pos_row,
        wqkv=stack(wqkv), bqkv=stack(bqkv), wo=stack(wo), bo=stack(bo),
        wf1=stack(wf1), bf1=stack(bf1), wf2=stack(wf2), bf2=stack(bf2),
        g1=stack(g1), be1=stack(be1), g2=stack(g2), be2=stack(be2),
    )


if __name__ == "__main__":
    d_model, N, heads, height, width, bs = 32, 2, 4, 8, 8, 2
    key = jax.random.PRNGKey(0)
    pkey, xkey = jax.random.split(key)
    params = init_params(pkey, d_model, N, heads, height, width)
    src = jax.random.normal(xkey, (bs, height, width, d_model), jnp.float32)

    out = transformer_encoder_forward(src, params, num_heads=heads)
    out = jax.block_until_ready(out)

    assert out.shape == (bs, height, width, d_model), out.shape
    assert bool(jnp.all(jnp.isfinite(out)))
    print("KERNEL_OK")
</pallas_src>

<mosaic_0001>
module attributes {stable_mosaic.version = 11 : i64} {
  func.func @_fused_transformer_kernel(%arg0: i32, %arg1: memref<128x32xf32, #tpu.memory_space<vmem>>, %arg2: memref<128x32xf32, #tpu.memory_space<vmem>>, %arg3: memref<32x32xf32, #tpu.memory_space<vmem>>, %arg4: memref<32x32xf32, #tpu.memory_space<vmem>>, %arg5: memref<1x32xf32, #tpu.memory_space<vmem>>, %arg6: memref<2x32x96xf32, #tpu.memory_space<vmem>>, %arg7: memref<2x1x96xf32, #tpu.memory_space<vmem>>, %arg8: memref<2x32x32xf32, #tpu.memory_space<vmem>>, %arg9: memref<2x1x32xf32, #tpu.memory_space<vmem>>, %arg10: memref<2x32x32xf32, #tpu.memory_space<vmem>>, %arg11: memref<2x1x32xf32, #tpu.memory_space<vmem>>, %arg12: memref<2x32x32xf32, #tpu.memory_space<vmem>>, %arg13: memref<2x1x32xf32, #tpu.memory_space<vmem>>, %arg14: memref<2x1x32xf32, #tpu.memory_space<vmem>>, %arg15: memref<2x1x32xf32, #tpu.memory_space<vmem>>, %arg16: memref<2x1x32xf32, #tpu.memory_space<vmem>>, %arg17: memref<2x1x32xf32, #tpu.memory_space<vmem>>, %arg18: memref<128x32xf32, #tpu.memory_space<vmem>>, %arg19: memref<128x32xf32, #tpu.memory_space<vmem>>) attributes {dimension_semantics = [#tpu.dimension_semantics<arbitrary>], iteration_bounds = array<i64: 1>, scalar_prefetch = 0 : i64, scratch_operands = 1 : i64, tpu.core_type = #tpu.core_type<tc>, window_params = [{pipeline_mode = #tpu.pipeline_mode<synchronous>, transform_indices = @transform_0, window_bounds = array<i64: 128, 32>}, {pipeline_mode = #tpu.pipeline_mode<synchronous>, transform_indices = @transform_1, window_bounds = array<i64: 128, 32>}, {pipeline_mode = #tpu.pipeline_mode<synchronous>, transform_indices = @transform_2, window_bounds = array<i64: 32, 32>}, {pipeline_mode = #tpu.pipeline_mode<synchronous>, transform_indices = @transform_3, window_bounds = array<i64: 32, 32>}, {pipeline_mode = #tpu.pipeline_mode<synchronous>, transform_indices = @transform_4, window_bounds = array<i64: 1, 32>}, {pipeline_mode = #tpu.pipeline_mode<synchronous>, transform_indices = @transform_5, window_bounds = array<i64: 2, 32, 96>}, {pipeline_mode = #tpu.pipeline_mode<synchronous>, transform_indices = @transform_6, window_bounds = array<i64: 2, 1, 96>}, {pipeline_mode = #tpu.pipeline_mode<synchronous>, transform_indices = @transform_7, window_bounds = array<i64: 2, 32, 32>}, {pipeline_mode = #tpu.pipeline_mode<synchronous>, transform_indices = @transform_8, window_bounds = array<i64: 2, 1, 32>}, {pipeline_mode = #tpu.pipeline_mode<synchronous>, transform_indices = @transform_9, window_bounds = array<i64: 2, 32, 32>}, {pipeline_mode = #tpu.pipeline_mode<synchronous>, transform_indices = @transform_10, window_bounds = array<i64: 2, 1, 32>}, {pipeline_mode = #tpu.pipeline_mode<synchronous>, transform_indices = @transform_11, window_bounds = array<i64: 2, 32, 32>}, {pipeline_mode = #tpu.pipeline_mode<synchronous>, transform_indices = @transform_12, window_bounds = array<i64: 2, 1, 32>}, {pipeline_mode = #tpu.pipeline_mode<synchronous>, transform_indices = @transform_13, window_bounds = array<i64: 2, 1, 32>}, {pipeline_mode = #tpu.pipeline_mode<synchronous>, transform_indices = @transform_14, window_bounds = array<i64: 2, 1, 32>}, {pipeline_mode = #tpu.pipeline_mode<synchronous>, transform_indices = @transform_15, window_bounds = array<i64: 2, 1, 32>}, {pipeline_mode = #tpu.pipeline_mode<synchronous>, transform_indices = @transform_16, window_bounds = array<i64: 2, 1, 32>}, {pipeline_mode = #tpu.pipeline_mode<synchronous>, transform_indices = @transform_17, window_bounds = array<i64: 128, 32>}]} {
    %c0 = arith.constant 0 : index
    %c0_0 = arith.constant 0 : index
    %0 = vector.load %arg1[%c0, %c0_0] : memref<128x32xf32, #tpu.memory_space<vmem>>, vector<128x32xf32>
    %c0_1 = arith.constant 0 : index
    %c0_2 = arith.constant 0 : index
    %1 = vector.load %arg3[%c0_1, %c0_2] : memref<32x32xf32, #tpu.memory_space<vmem>>, vector<32x32xf32>
    %cst = arith.constant dense<0.000000e+00> : vector<128x32xf32>
    %2 = tpu.matmul %0, %1, %cst {dimension_numbers = #tpu.dot_dimension_numbers<[1], [0], [0], [1], [0, 0, 1, 1], [], []>} : vector<128x32xf32>, vector<32x32xf32>, vector<128x32xf32> -> vector<128x32xf32>
    %c0_3 = arith.constant 0 : index
    %c0_4 = arith.constant 0 : index
    %3 = vector.load %arg2[%c0_3, %c0_4] : memref<128x32xf32, #tpu.memory_space<vmem>>, vector<128x32xf32>
    %4 = arith.addf %2, %3 : vector<128x32xf32>
    %cst_5 = arith.constant 0.000000e+00 : f32
    %5 = vector.broadcast %cst_5 : f32 to vector<128x32xf32>
    %6 = arith.maximumf %4, %5 : vector<128x32xf32>
    %c0_6 = arith.constant 0 : index
    %c0_7 = arith.constant 0 : index
    %7 = vector.load %arg4[%c0_6, %c0_7] : memref<32x32xf32, #tpu.memory_space<vmem>>, vector<32x32xf32>
    %cst_8 = arith.constant dense<0.000000e+00> : vector<128x32xf32>
    %8 = tpu.matmul %6, %7, %cst_8 {dimension_numbers = #tpu.dot_dimension_numbers<[1], [0], [0], [1], [0, 0, 1, 1], [], []>} : vector<128x32xf32>, vector<32x32xf32>, vector<128x32xf32> -> vector<128x32xf32>
    %c0_9 = arith.constant 0 : index
    %c0_10 = arith.constant 0 : index
    %9 = vector.load %arg5[%c0_9, %c0_10] : memref<1x32xf32, #tpu.memory_space<vmem>>, vector<1x32xf32>
    %10 = vector.broadcast %9 : vector<1x32xf32> to vector<128x32xf32>
    %11 = arith.addf %8, %10 : vector<128x32xf32>
    %cst_11 = arith.constant 0.000000e+00 : f32
    %12 = vector.broadcast %cst_11 : f32 to vector<128x32xf32>
    %13 = arith.maximumf %11, %12 : vector<128x32xf32>
    %c0_12 = arith.constant 0 : index
    %c0_13 = arith.constant 0 : index
    %c0_14 = arith.constant 0 : index
    %14 = vector.load %arg6[%c0_12, %c0_13, %c0_14] : memref<2x32x96xf32, #tpu.memory_space<vmem>>, vector<1x32x96xf32>
    %15 = vector.shape_cast %14 : vector<1x32x96xf32> to vector<32x96xf32>
    %cst_15 = arith.constant dense<0.000000e+00> : vector<128x96xf32>
    %16 = tpu.matmul %13, %15, %cst_15 {dimension_numbers = #tpu.dot_dimension_numbers<[1], [0], [0], [1], [0, 0, 1, 1], [], []>} : vector<128x32xf32>, vector<32x96xf32>, vector<128x96xf32> -> vector<128x96xf32>
    %c0_16 = arith.constant 0 : index
    %c0_17 = arith.constant 0 : index
    %c0_18 = arith.constant 0 : index
    %17 = vector.load %arg7[%c0_16, %c0_17, %c0_18] : memref<2x1x96xf32, #tpu.memory_space<vmem>>, vector<1x1x96xf32>
    %18 = vector.shape_cast %17 : vector<1x1x96xf32> to vector<1x96xf32>
    %19 = vector.broadcast %18 : vector<1x96xf32> to vector<128x96xf32>
    %20 = arith.addf %16, %19 : vector<128x96xf32>
    %21 = vector.extract_strided_slice %20 {offsets = [0, 0], sizes = [128, 32], strides = [1, 1]} : vector<128x96xf32> to vector<128x32xf32>
    %22 = vector.extract_strided_slice %20 {offsets = [0, 32], sizes = [128, 32], strides = [1, 1]} : vector<128x96xf32> to vector<128x32xf32>
    %23 = vector.extract_strided_slice %20 {offsets = [0, 64], sizes = [128, 32], strides = [1, 1]} : vector<128x96xf32> to vector<128x32xf32>
    %24 = vector.extract_strided_slice %21 {offsets = [0, 0], sizes = [64, 8], strides = [1, 1]} : vector<128x32xf32> to vector<64x8xf32>
    %25 = vector.extract_strided_slice %22 {offsets = [0, 0], sizes = [64, 8], strides = [1, 1]} : vector<128x32xf32> to vector<64x8xf32>
    %26 = vector.extract_strided_slice %23 {offsets = [0, 0], sizes = [64, 8], strides = [1, 1]} : vector<128x32xf32> to vector<64x8xf32>
    %27 = tpu.transpose %25, [1, 0] : vector<64x8xf32> -> vector<8x64xf32>
    %cst_19 = arith.constant dense<0.000000e+00> : vector<64x64xf32>
    %28 = tpu.matmul %24, %27, %cst_19 {dimension_numbers = #tpu.dot_dimension_numbers<[1], [0], [0], [1], [0, 0, 1, 1], [], []>} : vector<64x8xf32>, vector<8x64xf32>, vector<64x64xf32> -> vector<64x64xf32>
    %cst_20 = arith.constant dense<0xFF800000> : vector<64xf32>
    %29 = vector.multi_reduction <maximumf>, %28, %cst_20 [1] : vector<64x64xf32> to vector<64xf32>
    %30 = vector.shape_cast %29 : vector<64xf32> to vector<64x1xf32>
    %31 = vector.broadcast %30 : vector<64x1xf32> to vector<64x64xf32>
    %32 = arith.subf %28, %31 : vector<64x64xf32>
    %33 = math.exp %32 : vector<64x64xf32>
    %cst_21 = arith.constant dense<0.000000e+00> : vector<64xf32>
    %34 = vector.multi_reduction <add>, %33, %cst_21 [1] : vector<64x64xf32> to vector<64xf32>
    %35 = vector.shape_cast %34 : vector<64xf32> to vector<64x1xf32>
    %36 = tpu.reciprocal %35 {approx = true} : vector<64x1xf32> -> vector<64x1xf32>
    %37 = vector.broadcast %36 : vector<64x1xf32> to vector<64x64xf32>
    %38 = arith.mulf %33, %37 : vector<64x64xf32>
    %cst_22 = arith.constant dense<0.000000e+00> : vector<64x8xf32>
    %39 = tpu.matmul %38, %26, %cst_22 {dimension_numbers = #tpu.dot_dimension_numbers<[1], [0], [0], [1], [0, 0, 1, 1], [], []>} : vector<64x64xf32>, vector<64x8xf32>, vector<64x8xf32> -> vector<64x8xf32>
    %c0_23 = arith.constant 0 : index
    %c0_24 = arith.constant 0 : index
    %40 = vector.load %arg19[%c0_23, %c0_24] : memref<128x32xf32, #tpu.memory_space<vmem>>, vector<64x8xf32>
    tpu.vector_store %arg19[%c0_23, %c0_24], %39 {strides = array<i32>} : memref<128x32xf32, #tpu.memory_space<vmem>>, vector<64x8xf32>,
    %41 = vector.extract_strided_slice %21 {offsets = [0, 8], sizes = [64, 8], strides = [1, 1]} : vector<128x32xf32> to vector<64x8xf32>
    %42 = vector.extract_strided_slice %22 {offsets = [0, 8], sizes = [64, 8], strides = [1, 1]} : vector<128x32xf32> to vector<64x8xf32>
    %43 = vector.extract_strided_slice %23 {offsets = [0, 8], sizes = [64, 8], strides = [1, 1]} : vector<128x32xf32> to vector<64x8xf32>
    %44 = tpu.transpose %42, [1, 0] : vector<64x8xf32> -> vector<8x64xf32>
    %cst_25 = arith.constant dense<0.000000e+00> : vector<64x64xf32>
    %45 = tpu.matmul %41, %44, %cst_25 {dimension_numbers = #tpu.dot_dimension_numbers<[1], [0], [0], [1], [0, 0, 1, 1], [], []>} : vector<64x8xf32>, vector<8x64xf32>, vector<64x64xf32> -> vector<64x64xf32>
    %cst_26 = arith.constant dense<0xFF800000> : vector<64xf32>
    %46 = vector.multi_reduction <maximumf>, %45, %cst_26 [1] : vector<64x64xf32> to vector<64xf32>
    %47 = vector.shape_cast %46 : vector<64xf32> to vector<64x1xf32>
    %48 = vector.broadcast %47 : vector<64x1xf32> to vector<64x64xf32>
    %49 = arith.subf %45, %48 : vector<64x64xf32>
    %50 = math.exp %49 : vector<64x64xf32>
    %cst_27 = arith.constant dense<0.000000e+00> : vector<64xf32>
    %51 = vector.multi_reduction <add>, %50, %cst_27 [1] : vector<64x64xf32> to vector<64xf32>
    %52 = vector.shape_cast %51 : vector<64xf32> to vector<64x1xf32>
    %53 = tpu.reciprocal %52 {approx = true} : vector<64x1xf32> -> vector<64x1xf32>
    %54 = vector.broadcast %53 : vector<64x1xf32> to vector<64x64xf32>
    %55 = arith.mulf %50, %54 : vector<64x64xf32>
    %cst_28 = arith.constant dense<0.000000e+00> : vector<64x8xf32>
    %56 = tpu.matmul %55, %43, %cst_28 {dimension_numbers = #tpu.dot_dimension_numbers<[1], [0], [0], [1], [0, 0, 1, 1], [], []>} : vector<64x64xf32>, vector<64x8xf32>, vector<64x8xf32> -> vector<64x8xf32>
    %c0_29 = arith.constant 0 : index
    %c8 = arith.constant 8 : index
    %57 = vector.load %arg19[%c0_29, %c8] : memref<128x32xf32, #tpu.memory_space<vmem>>, vector<64x8xf32>
    tpu.vector_store %arg19[%c0_29, %c8], %56 {strides = array<i32>} : memref<128x32xf32, #tpu.memory_space<vmem>>, vector<64x8xf32>,
    %58 = vector.extract_strided_slice %21 {offsets = [0, 16], sizes = [64, 8], strides = [1, 1]} : vector<128x32xf32> to vector<64x8xf32>
    %59 = vector.extract_strided_slice %22 {offsets = [0, 16], sizes = [64, 8], strides = [1, 1]} : vector<128x32xf32> to vector<64x8xf32>
    %60 = vector.extract_strided_slice %23 {offsets = [0, 16], sizes = [64, 8], strides = [1, 1]} : vector<128x32xf32> to vector<64x8xf32>
    %61 = tpu.transpose %59, [1, 0] : vector<64x8xf32> -> vector<8x64xf32>
    %cst_30 = arith.constant dense<0.000000e+00> : vector<64x64xf32>
    %62 = tpu.matmul %58, %61, %cst_30 {dimension_numbers = #tpu.dot_dimension_numbers<[1], [0], [0], [1], [0, 0, 1, 1], [], []>} : vector<64x8xf32>, vector<8x64xf32>, vector<64x64xf32> -> vector<64x64xf32>
    %cst_31 = arith.constant dense<0xFF800000> : vector<64xf32>
    %63 = vector.multi_reduction <maximumf>, %62, %cst_31 [1] : vector<64x64xf32> to vector<64xf32>
    %64 = vector.shape_cast %63 : vector<64xf32> to vector<64x1xf32>
    %65 = vector.broadcast %64 : vector<64x1xf32> to vector<64x64xf32>
    %66 = arith.subf %62, %65 : vector<64x64xf32>
    %67 = math.exp %66 : vector<64x64xf32>
    %cst_32 = arith.constant dense<0.000000e+00> : vector<64xf32>
    %68 = vector.multi_reduction <add>, %67, %cst_32 [1] : vector<64x64xf32> to vector<64xf32>
    %69 = vector.shape_cast %68 : vector<64xf32> to vector<64x1xf32>
    %70 = tpu.reciprocal %69 {approx = true} : vector<64x1xf32> -> vector<64x1xf32>
    %71 = vector.broadcast %70 : vector<64x1xf32> to vector<64x64xf32>
    %72 = arith.mulf %67, %71 : vector<64x64xf32>
    %cst_33 = arith.constant dense<0.000000e+00> : vector<64x8xf32>
    %73 = tpu.matmul %72, %60, %cst_33 {dimension_numbers = #tpu.dot_dimension_numbers<[1], [0], [0], [1], [0, 0, 1, 1], [], []>} : vector<64x64xf32>, vector<64x8xf32>, vector<64x8xf32> -> vector<64x8xf32>
    %c0_34 = arith.constant 0 : index
    %c16 = arith.constant 16 : index
    %74 = vector.load %arg19[%c0_34, %c16] : memref<128x32xf32, #tpu.memory_space<vmem>>, vector<64x8xf32>
    tpu.vector_store %arg19[%c0_34, %c16], %73 {strides = array<i32>} : memref<128x32xf32, #tpu.memory_space<vmem>>, vector<64x8xf32>,
    %75 = vector.extract_strided_slice %21 {offsets = [0, 24], sizes = [64, 8], strides = [1, 1]} : vector<128x32xf32> to vector<64x8xf32>
    %76 = vector.extract_strided_slice %22 {offsets = [0, 24], sizes = [64, 8], strides = [1, 1]} : vector<128x32xf32> to vector<64x8xf32>
    %77 = vector.extract_strided_slice %23 {offsets = [0, 24], sizes = [64, 8], strides = [1, 1]} : vector<128x32xf32> to vector<64x8xf32>
    %78 = tpu.transpose %76, [1, 0] : vector<64x8xf32> -> vector<8x64xf32>
    %cst_35 = arith.constant dense<0.000000e+00> : vector<64x64xf32>
    %79 = tpu.matmul %75, %78, %cst_35 {dimension_numbers = #tpu.dot_dimension_numbers<[1], [0], [0], [1], [0, 0, 1, 1], [], []>} : vector<64x8xf32>, vector<8x64xf32>, vector<64x64xf32> -> vector<64x64xf32>
    %cst_36 = arith.constant dense<0xFF800000> : vector<64xf32>
    %80 = vector.multi_reduction <maximumf>, %79, %cst_36 [1] : vector<64x64xf32> to vector<64xf32>
    %81 = vector.shape_cast %80 : vector<64xf32> to vector<64x1xf32>
    %82 = vector.broadcast %81 : vector<64x1xf32> to vector<64x64xf32>
    %83 = arith.subf %79, %82 : vector<64x64xf32>
    %84 = math.exp %83 : vector<64x64xf32>
    %cst_37 = arith.constant dense<0.000000e+00> : vector<64xf32>
    %85 = vector.multi_reduction <add>, %84, %cst_37 [1] : vector<64x64xf32> to vector<64xf32>
    %86 = vector.shape_cast %85 : vector<64xf32> to vector<64x1xf32>
    %87 = tpu.reciprocal %86 {approx = true} : vector<64x1xf32> -> vector<64x1xf32>
    %88 = vector.broadcast %87 : vector<64x1xf32> to vector<64x64xf32>
    %89 = arith.mulf %84, %88 : vector<64x64xf32>
    %cst_38 = arith.constant dense<0.000000e+00> : vector<64x8xf32>
    %90 = tpu.matmul %89, %77, %cst_38 {dimension_numbers = #tpu.dot_dimension_numbers<[1], [0], [0], [1], [0, 0, 1, 1], [], []>} : vector<64x64xf32>, vector<64x8xf32>, vector<64x8xf32> -> vector<64x8xf32>
    %c0_39 = arith.constant 0 : index
    %c24 = arith.constant 24 : index
    %91 = vector.load %arg19[%c0_39, %c24] : memref<128x32xf32, #tpu.memory_space<vmem>>, vector<64x8xf32>
    tpu.vector_store %arg19[%c0_39, %c24], %90 {strides = array<i32>} : memref<128x32xf32, #tpu.memory_space<vmem>>, vector<64x8xf32>,
    %92 = vector.extract_strided_slice %21 {offsets = [64, 0], sizes = [64, 8], strides = [1, 1]} : vector<128x32xf32> to vector<64x8xf32>
    %93 = vector.extract_strided_slice %22 {offsets = [64, 0], sizes = [64, 8], strides = [1, 1]} : vector<128x32xf32> to vector<64x8xf32>
    %94 = vector.extract_strided_slice %23 {offsets = [64, 0], sizes = [64, 8], strides = [1, 1]} : vector<128x32xf32> to vector<64x8xf32>
    %95 = tpu.transpose %93, [1, 0] : vector<64x8xf32> -> vector<8x64xf32>
    %cst_40 = arith.constant dense<0.000000e+00> : vector<64x64xf32>
    %96 = tpu.matmul %92, %95, %cst_40 {dimension_numbers = #tpu.dot_dimension_numbers<[1], [0], [0], [1], [0, 0, 1, 1], [], []>} : vector<64x8xf32>, vector<8x64xf32>, vector<64x64xf32> -> vector<64x64xf32>
    %cst_41 = arith.constant dense<0xFF800000> : vector<64xf32>
    %97 = vector.multi_reduction <maximumf>, %96, %cst_41 [1] : vector<64x64xf32> to vector<64xf32>
    %98 = vector.shape_cast %97 : vector<64xf32> to vector<64x1xf32>
    %99 = vector.broadcast %98 : vector<64x1xf32> to vector<64x64xf32>
    %100 = arith.subf %96, %99 : vector<64x64xf32>
    %101 = math.exp %100 : vector<64x64xf32>
    %cst_42 = arith.constant dense<0.000000e+00> : vector<64xf32>
    %102 = vector.multi_reduction <add>, %101, %cst_42 [1] : vector<64x64xf32> to vector<64xf32>
    %103 = vector.shape_cast %102 : vector<64xf32> to vector<64x1xf32>
    %104 = tpu.reciprocal %103 {approx = true} : vector<64x1xf32> -> vector<64x1xf32>
    %105 = vector.broadcast %104 : vector<64x1xf32> to vector<64x64xf32>
    %106 = arith.mulf %101, %105 : vector<64x64xf32>
    %cst_43 = arith.constant dense<0.000000e+00> : vector<64x8xf32>
    %107 = tpu.matmul %106, %94, %cst_43 {dimension_numbers = #tpu.dot_dimension_numbers<[1], [0], [0], [1], [0, 0, 1, 1], [], []>} : vector<64x64xf32>, vector<64x8xf32>, vector<64x8xf32> -> vector<64x8xf32>
    %c64 = arith.constant 64 : index
    %c0_44 = arith.constant 0 : index
    %108 = vector.load %arg19[%c64, %c0_44] : memref<128x32xf32, #tpu.memory_space<vmem>>, vector<64x8xf32>
    tpu.vector_store %arg19[%c64, %c0_44], %107 {strides = array<i32>} : memref<128x32xf32, #tpu.memory_space<vmem>>, vector<64x8xf32>,
    %109 = vector.extract_strided_slice %21 {offsets = [64, 8], sizes = [64, 8], strides = [1, 1]} : vector<128x32xf32> to vector<64x8xf32>
    %110 = vector.extract_strided_slice %22 {offsets = [64, 8], sizes = [64, 8], strides = [1, 1]} : vector<128x32xf32> to vector<64x8xf32>
    %111 = vector.extract_strided_slice %23 {offsets = [64, 8], sizes = [64, 8], strides = [1, 1]} : vector<128x32xf32> to vector<64x8xf32>
    %112 = tpu.transpose %110, [1, 0] : vector<64x8xf32> -> vector<8x64xf32>
    %cst_45 = arith.constant dense<0.000000e+00> : vector<64x64xf32>
    %113 = tpu.matmul %109, %112, %cst_45 {dimension_numbers = #tpu.dot_dimension_numbers<[1], [0], [0], [1], [0, 0, 1, 1], [], []>} : vector<64x8xf32>, vector<8x64xf32>, vector<64x64xf32> -> vector<64x64xf32>
    %cst_46 = arith.constant dense<0xFF800000> : vector<64xf32>
    %114 = vector.multi_reduction <maximumf>, %113, %cst_46 [1] : vector<64x64xf32> to vector<64xf32>
    %115 = vector.shape_cast %114 : vector<64xf32> to vector<64x1xf32>
    %116 = vector.broadcast %115 : vector<64x1xf32> to vector<64x64xf32>
    %117 = arith.subf %113, %116 : vector<64x64xf32>
    %118 = math.exp %117 : vector<64x64xf32>
    %cst_47 = arith.constant dense<0.000000e+00> : vector<64xf32>
    %119 = vector.multi_reduction <add>, %118, %cst_47 [1] : vector<64x64xf32> to vector<64xf32>
    %120 = vector.shape_cast %119 : vector<64xf32> to vector<64x1xf32>
    %121 = tpu.reciprocal %120 {approx = true} : vector<64x1xf32> -> vector<64x1xf32>
    %122 = vector.broadcast %121 : vector<64x1xf32> to vector<64x64xf32>
    %123 = arith.mulf %118, %122 : vector<64x64xf32>
    %cst_48 = arith.constant dense<0.000000e+00> : vector<64x8xf32>
    %124 = tpu.matmul %123, %111, %cst_48 {dimension_numbers = #tpu.dot_dimension_numbers<[1], [0], [0], [1], [0, 0, 1, 1], [], []>} : vector<64x64xf32>, vector<64x8xf32>, vector<64x8xf32> -> vector<64x8xf32>
    %c64_49 = arith.constant 64 : index
    %c8_50 = arith.constant 8 : index
    %125 = vector.load %arg19[%c64_49, %c8_50] : memref<128x32xf32, #tpu.memory_space<vmem>>, vector<64x8xf32>
    tpu.vector_store %arg19[%c64_49, %c8_50], %124 {strides = array<i32>} : memref<128x32xf32, #tpu.memory_space<vmem>>, vector<64x8xf32>,
    %126 = vector.extract_strided_slice %21 {offsets = [64, 16], sizes = [64, 8], strides = [1, 1]} : vector<128x32xf32> to vector<64x8xf32>
    %127 = vector.extract_strided_slice %22 {offsets = [64, 16], sizes = [64, 8], strides = [1, 1]} : vector<128x32xf32> to vector<64x8xf32>
    %128 = vector.extract_strided_slice %23 {offsets = [64, 16], sizes = [64, 8], strides = [1, 1]} : vector<128x32xf32> to vector<64x8xf32>
    %129 = tpu.transpose %127, [1, 0] : vector<64x8xf32> -> vector<8x64xf32>
    %cst_51 = arith.constant dense<0.000000e+00> : vector<64x64xf32>
    %130 = tpu.matmul %126, %129, %cst_51 {dimension_numbers = #tpu.dot_dimension_numbers<[1], [0], [0], [1], [0, 0, 1, 1], [], []>} : vector<64x8xf32>, vector<8x64xf32>, vector<64x64xf32> -> vector<64x64xf32>
    %cst_52 = arith.constant dense<0xFF800000> : vector<64xf32>
    %131 = vector.multi_reduction <maximumf>, %130, %cst_52 [1] : vector<64x64xf32> to vector<64xf32>
    %132 = vector.shape_cast %131 : vector<64xf32> to vector<64x1xf32>
    %133 = vector.broadcast %132 : vector<64x1xf32> to vector<64x64xf32>
    %134 = arith.subf %130, %133 : vector<64x64xf32>
    %135 = math.exp %134 : vector<64x64xf32>
    %cst_53 = arith.constant dense<0.000000e+00> : vector<64xf32>
    %136 = vector.multi_reduction <add>, %135, %cst_53 [1] : vector<64x64xf32> to vector<64xf32>
    %137 = vector.shape_cast %136 : vector<64xf32> to vector<64x1xf32>
    %138 = tpu.reciprocal %137 {approx = true} : vector<64x1xf32> -> vector<64x1xf32>
    %139 = vector.broadcast %138 : vector<64x1xf32> to vector<64x64xf32>
    %140 = arith.mulf %135, %139 : vector<64x64xf32>
    %cst_54 = arith.constant dense<0.000000e+00> : vector<64x8xf32>
    %141 = tpu.matmul %140, %128, %cst_54 {dimension_numbers = #tpu.dot_dimension_numbers<[1], [0], [0], [1], [0, 0, 1, 1], [], []>} : vector<64x64xf32>, vector<64x8xf32>, vector<64x8xf32> -> vector<64x8xf32>
    %c64_55 = arith.constant 64 : index
    %c16_56 = arith.constant 16 : index
    %142 = vector.load %arg19[%c64_55, %c16_56] : memref<128x32xf32, #tpu.memory_space<vmem>>, vector<64x8xf32>
    tpu.vector_store %arg19[%c64_55, %c16_56], %141 {strides = array<i32>} : memref<128x32xf32, #tpu.memory_space<vmem>>, vector<64x8xf32>,
    %143 = vector.extract_strided_slice %21 {offsets = [64, 24], sizes = [64, 8], strides = [1, 1]} : vector<128x32xf32> to vector<64x8xf32>
    %144 = vector.extract_strided_slice %22 {offsets = [64, 24], sizes = [64, 8], strides = [1, 1]} : vector<128x32xf32> to vector<64x8xf32>
    %145 = vector.extract_strided_slice %23 {offsets = [64, 24], sizes = [64, 8], strides = [1, 1]} : vector<128x32xf32> to vector<64x8xf32>
    %146 = tpu.transpose %144, [1, 0] : vector<64x8xf32> -> vector<8x64xf32>
    %cst_57 = arith.constant dense<0.000000e+00> : vector<64x64xf32>
    %147 = tpu.matmul %143, %146, %cst_57 {dimension_numbers = #tpu.dot_dimension_numbers<[1], [0], [0], [1], [0, 0, 1, 1], [], []>} : vector<64x8xf32>, vector<8x64xf32>, vector<64x64xf32> -> vector<64x64xf32>
    %cst_58 = arith.constant dense<0xFF800000> : vector<64xf32>
    %148 = vector.multi_reduction <maximumf>, %147, %cst_58 [1] : vector<64x64xf32> to vector<64xf32>
    %149 = vector.shape_cast %148 : vector<64xf32> to vector<64x1xf32>
    %150 = vector.broadcast %149 : vector<64x1xf32> to vector<64x64xf32>
    %151 = arith.subf %147, %150 : vector<64x64xf32>
    %152 = math.exp %151 : vector<64x64xf32>
    %cst_59 = arith.constant dense<0.000000e+00> : vector<64xf32>
    %153 = vector.multi_reduction <add>, %152, %cst_59 [1] : vector<64x64xf32> to vector<64xf32>
    %154 = vector.shape_cast %153 : vector<64xf32> to vector<64x1xf32>
    %155 = tpu.reciprocal %154 {approx = true} : vector<64x1xf32> -> vector<64x1xf32>
    %156 = vector.broadcast %155 : vector<64x1xf32> to vector<64x64xf32>
    %157 = arith.mulf %152, %156 : vector<64x64xf32>
    %cst_60 = arith.constant dense<0.000000e+00> : vector<64x8xf32>
    %158 = tpu.matmul %157, %145, %cst_60 {dimension_numbers = #tpu.dot_dimension_numbers<[1], [0], [0], [1], [0, 0, 1, 1], [], []>} : vector<64x64xf32>, vector<64x8xf32>, vector<64x8xf32> -> vector<64x8xf32>
    %c64_61 = arith.constant 64 : index
    %c24_62 = arith.constant 24 : index
    %159 = vector.load %arg19[%c64_61, %c24_62] : memref<128x32xf32, #tpu.memory_space<vmem>>, vector<64x8xf32>
    tpu.vector_store %arg19[%c64_61, %c24_62], %158 {strides = array<i32>} : memref<128x32xf32, #tpu.memory_space<vmem>>, vector<64x8xf32>,
    %c0_63 = arith.constant 0 : index
    %c0_64 = arith.constant 0 : index
    %160 = vector.load %arg19[%c0_63, %c0_64] : memref<128x32xf32, #tpu.memory_space<vmem>>, vector<128x32xf32>
    %c0_65 = arith.constant 0 : index
    %c0_66 = arith.constant 0 : index
    %c0_67 = arith.constant 0 : index
    %161 = vector.load %arg8[%c0_65, %c0_66, %c0_67] : memref<2x32x32xf32, #tpu.memory_space<vmem>>, vector<1x32x32xf32>
    %162 = vector.shape_cast %161 : vector<1x32x32xf32> to vector<32x32xf32>
    %cst_68 = arith.constant dense<0.000000e+00> : vector<128x32xf32>
    %163 = tpu.matmul %160, %162, %cst_68 {dimension_numbers = #tpu.dot_dimension_numbers<[1], [0], [0], [1], [0, 0, 1, 1], [], []>} : vector<128x32xf32>, vector<32x32xf32>, vector<128x32xf32> -> vector<128x32xf32>
    %c0_69 = arith.constant 0 : index
    %c0_70 = arith.constant 0 : index
    %c0_71 = arith.constant 0 : index
    %164 = vector.load %arg9[%c0_69, %c0_70, %c0_71] : memref<2x1x32xf32, #tpu.memory_space<vmem>>, vector<1x1x32xf32>
    %165 = vector.shape_cast %164 : vector<1x1x32xf32> to vector<1x32xf32>
    %166 = vector.broadcast %165 : vector<1x32xf32> to vector<128x32xf32>
    %167 = arith.addf %163, %166 : vector<128x32xf32>
    %168 = arith.addf %13, %167 : vector<128x32xf32>
    %c0_72 = arith.constant 0 : index
    %c0_73 = arith.constant 0 : index
    %c0_74 = arith.constant 0 : index
    %169 = vector.load %arg14[%c0_72, %c0_73, %c0_74] : memref<2x1x32xf32, #tpu.memory_space<vmem>>, vector<1x1x32xf32>
    %170 = vector.shape_cast %169 : vector<1x1x32xf32> to vector<1x32xf32>
    %c0_75 = arith.constant 0 : index
    %c0_76 = arith.constant 0 : index
    %c0_77 = arith.constant 0 : index
    %171 = vector.load %arg15[%c0_75, %c0_76, %c0_77] : memref<2x1x32xf32, #tpu.memory_space<vmem>>, vector<1x1x32xf32>
    %172 = vector.shape_cast %171 : vector<1x1x32xf32> to vector<1x32xf32>
    %cst_78 = arith.constant dense<0.000000e+00> : vector<128xf32>
    %173 = vector.multi_reduction <add>, %168, %cst_78 [1] : vector<128x32xf32> to vector<128xf32>
    %174 = vector.shape_cast %173 : vector<128xf32> to vector<128x1xf32>
    %cst_79 = arith.constant 3.200000e+01 : f32
    %175 = vector.broadcast %cst_79 : f32 to vector<128x1xf32>
    %176 = arith.divf %174, %175 : vector<128x1xf32>
    %177 = vector.broadcast %176 : vector<128x1xf32> to vector<128x32xf32>
    %178 = arith.subf %168, %177 : vector<128x32xf32>
    %179 = arith.mulf %178, %178 : vector<128x32xf32>
    %cst_80 = arith.constant dense<0.000000e+00> : vector<128xf32>
    %180 = vector.multi_reduction <add>, %179, %cst_80 [1] : vector<128x32xf32> to vector<128xf32>
    %181 = vector.shape_cast %180 : vector<128xf32> to vector<128x1xf32>
    %cst_81 = arith.constant 3.200000e+01 : f32
    %182 = vector.broadcast %cst_81 : f32 to vector<128x1xf32>
    %183 = arith.divf %181, %182 : vector<128x1xf32>
    %184 = vector.broadcast %176 : vector<128x1xf32> to vector<128x32xf32>
    %185 = arith.subf %168, %184 : vector<128x32xf32>
    %cst_82 = arith.constant 9.99999974E-6 : f32
    %186 = vector.broadcast %cst_82 : f32 to vector<128x1xf32>
    %187 = arith.addf %183, %186 : vector<128x1xf32>
    %188 = math.rsqrt %187 : vector<128x1xf32>
    %189 = vector.broadcast %188 : vector<128x1xf32> to vector<128x32xf32>
    %190 = arith.mulf %185, %189 : vector<128x32xf32>
    %191 = vector.broadcast %170 : vector<1x32xf32> to vector<128x32xf32>
    %192 = arith.mulf %190, %191 : vector<128x32xf32>
    %193 = vector.broadcast %172 : vector<1x32xf32> to vector<128x32xf32>
    %194 = arith.addf %192, %193 : vector<128x32xf32>
    %c0_83 = arith.constant 0 : index
    %c0_84 = arith.constant 0 : index
    %c0_85 = arith.constant 0 : index
    %195 = vector.load %arg10[%c0_83, %c0_84, %c0_85] : memref<2x32x32xf32, #tpu.memory_space<vmem>>, vector<1x32x32xf32>
    %196 = vector.shape_cast %195 : vector<1x32x32xf32> to vector<32x32xf32>
    %cst_86 = arith.constant dense<0.000000e+00> : vector<128x32xf32>
    %197 = tpu.matmul %194, %196, %cst_86 {dimension_numbers = #tpu.dot_dimension_numbers<[1], [0], [0], [1], [0, 0, 1, 1], [], []>} : vector<128x32xf32>, vector<32x32xf32>, vector<128x32xf32> -> vector<128x32xf32>
    %c0_87 = arith.constant 0 : index
    %c0_88 = arith.constant 0 : index
    %c0_89 = arith.constant 0 : index
    %198 = vector.load %arg11[%c0_87, %c0_88, %c0_89] : memref<2x1x32xf32, #tpu.memory_space<vmem>>, vector<1x1x32xf32>
    %199 = vector.shape_cast %198 : vector<1x1x32xf32> to vector<1x32xf32>
    %200 = vector.broadcast %199 : vector<1x32xf32> to vector<128x32xf32>
    %201 = arith.addf %197, %200 : vector<128x32xf32>
    %cst_90 = arith.constant 0.000000e+00 : f32
    %202 = vector.broadcast %cst_90 : f32 to vector<128x32xf32>
    %203 = arith.maximumf %201, %202 : vector<128x32xf32>
    %c0_91 = arith.constant 0 : index
    %c0_92 = arith.constant 0 : index
    %c0_93 = arith.constant 0 : index
    %204 = vector.load %arg12[%c0_91, %c0_92, %c0_93] : memref<2x32x32xf32, #tpu.memory_space<vmem>>, vector<1x32x32xf32>
    %205 = vector.shape_cast %204 : vector<1x32x32xf32> to vector<32x32xf32>
    %cst_94 = arith.constant dense<0.000000e+00> : vector<128x32xf32>
    %206 = tpu.matmul %203, %205, %cst_94 {dimension_numbers = #tpu.dot_dimension_numbers<[1], [0], [0], [1], [0, 0, 1, 1], [], []>} : vector<128x32xf32>, vector<32x32xf32>, vector<128x32xf32> -> vector<128x32xf32>
    %c0_95 = arith.constant 0 : index
    %c0_96 = arith.constant 0 : index
    %c0_97 = arith.constant 0 : index
    %207 = vector.load %arg13[%c0_95, %c0_96, %c0_97] : memref<2x1x32xf32, #tpu.memory_space<vmem>>, vector<1x1x32xf32>
    %208 = vector.shape_cast %207 : vector<1x1x32xf32> to vector<1x32xf32>
    %209 = vector.broadcast %208 : vector<1x32xf32> to vector<128x32xf32>
    %210 = arith.addf %206, %209 : vector<128x32xf32>
    %211 = arith.addf %194, %210 : vector<128x32xf32>
    %c0_98 = arith.constant 0 : index
    %c0_99 = arith.constant 0 : index
    %c0_100 = arith.constant 0 : index
    %212 = vector.load %arg16[%c0_98, %c0_99, %c0_100] : memref<2x1x32xf32, #tpu.memory_space<vmem>>, vector<1x1x32xf32>
    %213 = vector.shape_cast %212 : vector<1x1x32xf32> to vector<1x32xf32>
    %c0_101 = arith.constant 0 : index
    %c0_102 = arith.constant 0 : index
    %c0_103 = arith.constant 0 : index
    %214 = vector.load %arg17[%c0_101, %c0_102, %c0_103] : memref<2x1x32xf32, #tpu.memory_space<vmem>>, vector<1x1x32xf32>
    %215 = vector.shape_cast %214 : vector<1x1x32xf32> to vector<1x32xf32>
    %cst_104 = arith.constant dense<0.000000e+00> : vector<128xf32>
    %216 = vector.multi_reduction <add>, %211, %cst_104 [1] : vector<128x32xf32> to vector<128xf32>
    %217 = vector.shape_cast %216 : vector<128xf32> to vector<128x1xf32>
    %cst_105 = arith.constant 3.200000e+01 : f32
    %218 = vector.broadcast %cst_105 : f32 to vector<128x1xf32>
    %219 = arith.divf %217, %218 : vector<128x1xf32>
    %220 = vector.broadcast %219 : vector<128x1xf32> to vector<128x32xf32>
    %221 = arith.subf %211, %220 : vector<128x32xf32>
    %222 = arith.mulf %221, %221 : vector<128x32xf32>
    %cst_106 = arith.constant dense<0.000000e+00> : vector<128xf32>
    %223 = vector.multi_reduction <add>, %222, %cst_106 [1] : vector<128x32xf32> to vector<128xf32>
    %224 = vector.shape_cast %223 : vector<128xf32> to vector<128x1xf32>
    %cst_107 = arith.constant 3.200000e+01 : f32
    %225 = vector.broadcast %cst_107 : f32 to vector<128x1xf32>
    %226 = arith.divf %224, %225 : vector<128x1xf32>
    %227 = vector.broadcast %219 : vector<128x1xf32> to vector<128x32xf32>
    %228 = arith.subf %211, %227 : vector<128x32xf32>
    %cst_108 = arith.constant 9.99999974E-6 : f32
    %229 = vector.broadcast %cst_108 : f32 to vector<128x1xf32>
    %230 = arith.addf %226, %229 : vector<128x1xf32>
    %231 = math.rsqrt %230 : vector<128x1xf32>
    %232 = vector.broadcast %231 : vector<128x1xf32> to vector<128x32xf32>
    %233 = arith.mulf %228, %232 : vector<128x32xf32>
    %234 = vector.broadcast %213 : vector<1x32xf32> to vector<128x32xf32>
    %235 = arith.mulf %233, %234 : vector<128x32xf32>
    %236 = vector.broadcast %215 : vector<1x32xf32> to vector<128x32xf32>
    %237 = arith.addf %235, %236 : vector<128x32xf32>
    %c1 = arith.constant 1 : index
    %c0_109 = arith.constant 0 : index
    %c0_110 = arith.constant 0 : index
    %238 = vector.load %arg6[%c1, %c0_109, %c0_110] : memref<2x32x96xf32, #tpu.memory_space<vmem>>, vector<1x32x96xf32>
    %239 = vector.shape_cast %238 : vector<1x32x96xf32> to vector<32x96xf32>
    %cst_111 = arith.constant dense<0.000000e+00> : vector<128x96xf32>
    %240 = tpu.matmul %237, %239, %cst_111 {dimension_numbers = #tpu.dot_dimension_numbers<[1], [0], [0], [1], [0, 0, 1, 1], [], []>} : vector<128x32xf32>, vector<32x96xf32>, vector<128x96xf32> -> vector<128x96xf32>
    %c1_112 = arith.constant 1 : index
    %c0_113 = arith.constant 0 : index
    %c0_114 = arith.constant 0 : index
    %241 = vector.load %arg7[%c1_112, %c0_113, %c0_114] : memref<2x1x96xf32, #tpu.memory_space<vmem>>, vector<1x1x96xf32>
    %242 = vector.shape_cast %241 : vector<1x1x96xf32> to vector<1x96xf32>
    %243 = vector.broadcast %242 : vector<1x96xf32> to vector<128x96xf32>
    %244 = arith.addf %240, %243 : vector<128x96xf32>
    %245 = vector.extract_strided_slice %244 {offsets = [0, 0], sizes = [128, 32], strides = [1, 1]} : vector<128x96xf32> to vector<128x32xf32>
    %246 = vector.extract_strided_slice %244 {offsets = [0, 32], sizes = [128, 32], strides = [1, 1]} : vector<128x96xf32> to vector<128x32xf32>
    %247 = vector.extract_strided_slice %244 {offsets = [0, 64], sizes = [128, 32], strides = [1, 1]} : vector<128x96xf32> to vector<128x32xf32>
    %248 = vector.extract_strided_slice %245 {offsets = [0, 0], sizes = [64, 8], strides = [1, 1]} : vector<128x32xf32> to vector<64x8xf32>
    %249 = vector.extract_strided_slice %246 {offsets = [0, 0], sizes = [64, 8], strides = [1, 1]} : vector<128x32xf32> to vector<64x8xf32>
    %250 = vector.extract_strided_slice %247 {offsets = [0, 0], sizes = [64, 8], strides = [1, 1]} : vector<128x32xf32> to vector<64x8xf32>
    %251 = tpu.transpose %249, [1, 0] : vector<64x8xf32> -> vector<8x64xf32>
    %cst_115 = arith.constant dense<0.000000e+00> : vector<64x64xf32>
    %252 = tpu.matmul %248, %251, %cst_115 {dimension_numbers = #tpu.dot_dimension_numbers<[1], [0], [0], [1], [0, 0, 1, 1], [], []>} : vector<64x8xf32>, vector<8x64xf32>, vector<64x64xf32> -> vector<64x64xf32>
    %cst_116 = arith.constant dense<0xFF800000> : vector<64xf32>
    %253 = vector.multi_reduction <maximumf>, %252, %cst_116 [1] : vector<64x64xf32> to vector<64xf32>
    %254 = vector.shape_cast %253 : vector<64xf32> to vector<64x1xf32>
    %255 = vector.broadcast %254 : vector<64x1xf32> to vector<64x64xf32>
    %256 = arith.subf %252, %255 : vector<64x64xf32>
    %257 = math.exp %256 : vector<64x64xf32>
    %cst_117 = arith.constant dense<0.000000e+00> : vector<64xf32>
    %258 = vector.multi_reduction <add>, %257, %cst_117 [1] : vector<64x64xf32> to vector<64xf32>
    %259 = vector.shape_cast %258 : vector<64xf32> to vector<64x1xf32>
    %260 = tpu.reciprocal %259 {approx = true} : vector<64x1xf32> -> vector<64x1xf32>
    %261 = vector.broadcast %260 : vector<64x1xf32> to vector<64x64xf32>
    %262 = arith.mulf %257, %261 : vector<64x64xf32>
    %cst_118 = arith.constant dense<0.000000e+00> : vector<64x8xf32>
    %263 = tpu.matmul %262, %250, %cst_118 {dimension_numbers = #tpu.dot_dimension_numbers<[1], [0], [0], [1], [0, 0, 1, 1], [], []>} : vector<64x64xf32>, vector<64x8xf32>, vector<64x8xf32> -> vector<64x8xf32>
    %c0_119 = arith.constant 0 : index
    %c0_120 = arith.constant 0 : index
    %264 = vector.load %arg19[%c0_119, %c0_120] : memref<128x32xf32, #tpu.memory_space<vmem>>, vector<64x8xf32>
    tpu.vector_store %arg19[%c0_119, %c0_120], %263 {strides = array<i32>} : memref<128x32xf32, #tpu.memory_space<vmem>>, vector<64x8xf32>,
    %265 = vector.extract_strided_slice %245 {offsets = [0, 8], sizes = [64, 8], strides = [1, 1]} : vector<128x32xf32> to vector<64x8xf32>
    %266 = vector.extract_strided_slice %246 {offsets = [0, 8], sizes = [64, 8], strides = [1, 1]} : vector<128x32xf32> to vector<64x8xf32>
    %267 = vector.extract_strided_slice %247 {offsets = [0, 8], sizes = [64, 8], strides = [1, 1]} : vector<128x32xf32> to vector<64x8xf32>
    %268 = tpu.transpose %266, [1, 0] : vector<64x8xf32> -> vector<8x64xf32>
    %cst_121 = arith.constant dense<0.000000e+00> : vector<64x64xf32>
    %269 = tpu.matmul %265, %268, %cst_121 {dimension_numbers = #tpu.dot_dimension_numbers<[1], [0], [0], [1], [0, 0, 1, 1], [], []>} : vector<64x8xf32>, vector<8x64xf32>, vector<64x64xf32> -> vector<64x64xf32>
    %cst_122 = arith.constant dense<0xFF800000> : vector<64xf32>
    %270 = vector.multi_reduction <maximumf>, %269, %cst_122 [1] : vector<64x64xf32> to vector<64xf32>
    %271 = vector.shape_cast %270 : vector<64xf32> to vector<64x1xf32>
    %272 = vector.broadcast %271 : vector<64x1xf32> to vector<64x64xf32>
    %273 = arith.subf %269, %272 : vector<64x64xf32>
    %274 = math.exp %273 : vector<64x64xf32>
    %cst_123 = arith.constant dense<0.000000e+00> : vector<64xf32>
    %275 = vector.multi_reduction <add>, %274, %cst_123 [1] : vector<64x64xf32> to vector<64xf32>
    %276 = vector.shape_cast %275 : vector<64xf32> to vector<64x1xf32>
    %277 = tpu.reciprocal %276 {approx = true} : vector<64x1xf32> -> vector<64x1xf32>
    %278 = vector.broadcast %277 : vector<64x1xf32> to vector<64x64xf32>
    %279 = arith.mulf %274, %278 : vector<64x64xf32>
    %cst_124 = arith.constant dense<0.000000e+00> : vector<64x8xf32>
    %280 = tpu.matmul %279, %267, %cst_124 {dimension_numbers = #tpu.dot_dimension_numbers<[1], [0], [0], [1], [0, 0, 1, 1], [], []>} : vector<64x64xf32>, vector<64x8xf32>, vector<64x8xf32> -> vector<64x8xf32>
    %c0_125 = arith.constant 0 : index
    %c8_126 = arith.constant 8 : index
    %281 = vector.load %arg19[%c0_125, %c8_126] : memref<128x32xf32, #tpu.memory_space<vmem>>, vector<64x8xf32>
    tpu.vector_store %arg19[%c0_125, %c8_126], %280 {strides = array<i32>} : memref<128x32xf32, #tpu.memory_space<vmem>>, vector<64x8xf32>,
    %282 = vector.extract_strided_slice %245 {offsets = [0, 16], sizes = [64, 8], strides = [1, 1]} : vector<128x32xf32> to vector<64x8xf32>
    %283 = vector.extract_strided_slice %246 {offsets = [0, 16], sizes = [64, 8], strides = [1, 1]} : vector<128x32xf32> to vector<64x8xf32>
    %284 = vector.extract_strided_slice %247 {offsets = [0, 16], sizes = [64, 8], strides = [1, 1]} : vector<128x32xf32> to vector<64x8xf32>
    %285 = tpu.transpose %283, [1, 0] : vector<64x8xf32> -> vector<8x64xf32>
    %cst_127 = arith.constant dense<0.000000e+00> : vector<64x64xf32>
    %286 = tpu.matmul %282, %285, %cst_127 {dimension_numbers = #tpu.dot_dimension_numbers<[1], [0], [0], [1], [0, 0, 1, 1], [], []>} : vector<64x8xf32>, vector<8x64xf32>, vector<64x64xf32> -> vector<64x64xf32>
    %cst_128 = arith.constant dense<0xFF800000> : vector<64xf32>
    %287 = vector.multi_reduction <maximumf>, %286, %cst_128 [1] : vector<64x64xf32> to vector<64xf32>
    %288 = vector.shape_cast %287 : vector<64xf32> to vector<64x1xf32>
    %289 = vector.broadcast %288 : vector<64x1xf32> to vector<64x64xf32>
    %290 = arith.subf %286, %289 : vector<64x64xf32>
    %291 = math.exp %290 : vector<64x64xf32>
    %cst_129 = arith.constant dense<0.000000e+00> : vector<64xf32>
    %292 = vector.multi_reduction <add>, %291, %cst_129 [1] : vector<64x64xf32> to vector<64xf32>
    %293 = vector.shape_cast %292 : vector<64xf32> to vector<64x1xf32>
    %294 = tpu.reciprocal %293 {approx = true} : vector<64x1xf32> -> vector<64x1xf32>
    %295 = vector.broadcast %294 : vector<64x1xf32> to vector<64x64xf32>
    %296 = arith.mulf %291, %295 : vector<64x64xf32>
    %cst_130 = arith.constant dense<0.000000e+00> : vector<64x8xf32>
    %297 = tpu.matmul %296, %284, %cst_130 {dimension_numbers = #tpu.dot_dimension_numbers<[1], [0], [0], [1], [0, 0, 1, 1], [], []>} : vector<64x64xf32>, vector<64x8xf32>, vector<64x8xf32> -> vector<64x8xf32>
    %c0_131 = arith.constant 0 : index
    %c16_132 = arith.constant 16 : index
    %298 = vector.load %arg19[%c0_131, %c16_132] : memref<128x32xf32, #tpu.memory_space<vmem>>, vector<64x8xf32>
    tpu.vector_store %arg19[%c0_131, %c16_132], %297 {strides = array<i32>} : memref<128x32xf32, #tpu.memory_space<vmem>>, vector<64x8xf32>,
    %299 = vector.extract_strided_slice %245 {offsets = [0, 24], sizes = [64, 8], strides = [1, 1]} : vector<128x32xf32> to vector<64x8xf32>
    %300 = vector.extract_strided_slice %246 {offsets = [0, 24], sizes = [64, 8], strides = [1, 1]} : vector<128x32xf32> to vector<64x8xf32>
    %301 = vector.extract_strided_slice %247 {offsets = [0, 24], sizes = [64, 8], strides = [1, 1]} : vector<128x32xf32> to vector<64x8xf32>
    %302 = tpu.transpose %300, [1, 0] : vector<64x8xf32> -> vector<8x64xf32>
    %cst_133 = arith.constant dense<0.000000e+00> : vector<64x64xf32>
    %303 = tpu.matmul %299, %302, %cst_133 {dimension_numbers = #tpu.dot_dimension_numbers<[1], [0], [0], [1], [0, 0, 1, 1], [], []>} : vector<64x8xf32>, vector<8x64xf32>, vector<64x64xf32> -> vector<64x64xf32>
    %cst_134 = arith.constant dense<0xFF800000> : vector<64xf32>
    %304 = vector.multi_reduction <maximumf>, %303, %cst_134 [1] : vector<64x64xf32> to vector<64xf32>
    %305 = vector.shape_cast %304 : vector<64xf32> to vector<64x1xf32>
    %306 = vector.broadcast %305 : vector<64x1xf32> to vector<64x64xf32>
    %307 = arith.subf %303, %306 : vector<64x64xf32>
    %308 = math.exp %307 : vector<64x64xf32>
    %cst_135 = arith.constant dense<0.000000e+00> : vector<64xf32>
    %309 = vector.multi_reduction <add>, %308, %cst_135 [1] : vector<64x64xf32> to vector<64xf32>
    %310 = vector.shape_cast %309 : vector<64xf32> to vector<64x1xf32>
    %311 = tpu.reciprocal %310 {approx = true} : vector<64x1xf32> -> vector<64x1xf32>
    %312 = vector.broadcast %311 : vector<64x1xf32> to vector<64x64xf32>
    %313 = arith.mulf %308, %312 : vector<64x64xf32>
    %cst_136 = arith.constant dense<0.000000e+00> : vector<64x8xf32>
    %314 = tpu.matmul %313, %301, %cst_136 {dimension_numbers = #tpu.dot_dimension_numbers<[1], [0], [0], [1], [0, 0, 1, 1], [], []>} : vector<64x64xf32>, vector<64x8xf32>, vector<64x8xf32> -> vector<64x8xf32>
    %c0_137 = arith.constant 0 : index
    %c24_138 = arith.constant 24 : index
    %315 = vector.load %arg19[%c0_137, %c24_138] : memref<128x32xf32, #tpu.memory_space<vmem>>, vector<64x8xf32>
    tpu.vector_store %arg19[%c0_137, %c24_138], %314 {strides = array<i32>} : memref<128x32xf32, #tpu.memory_space<vmem>>, vector<64x8xf32>,
    %316 = vector.extract_strided_slice %245 {offsets = [64, 0], sizes = [64, 8], strides = [1, 1]} : vector<128x32xf32> to vector<64x8xf32>
    %317 = vector.extract_strided_slice %246 {offsets = [64, 0], sizes = [64, 8], strides = [1, 1]} : vector<128x32xf32> to vector<64x8xf32>
    %318 = vector.extract_strided_slice %247 {offsets = [64, 0], sizes = [64, 8], strides = [1, 1]} : vector<128x32xf32> to vector<64x8xf32>
    %319 = tpu.transpose %317, [1, 0] : vector<64x8xf32> -> vector<8x64xf32>
    %cst_139 = arith.constant dense<0.000000e+00> : vector<64x64xf32>
    %320 = tpu.matmul %316, %319, %cst_139 {dimension_numbers = #tpu.dot_dimension_numbers<[1], [0], [0], [1], [0, 0, 1, 1], [], []>} : vector<64x8xf32>, vector<8x64xf32>, vector<64x64xf32> -> vector<64x64xf32>
    %cst_140 = arith.constant dense<0xFF800000> : vector<64xf32>
    %321 = vector.multi_reduction <maximumf>, %320, %cst_140 [1] : vector<64x64xf32> to vector<64xf32>
    %322 = vector.shape_cast %321 : vector<64xf32> to vector<64x1xf32>
    %323 = vector.broadcast %322 : vector<64x1xf32> to vector<64x64xf32>
    %324 = arith.subf %320, %323 : vector<64x64xf32>
    %325 = math.exp %324 : vector<64x64xf32>
    %cst_141 = arith.constant dense<0.000000e+00> : vector<64xf32>
    %326 = vector.multi_reduction <add>, %325, %cst_141 [1] : vector<64x64xf32> to vector<64xf32>
    %327 = vector.shape_cast %326 : vector<64xf32> to vector<64x1xf32>
    %328 = tpu.reciprocal %327 {approx = true} : vector<64x1xf32> -> vector<64x1xf32>
    %329 = vector.broadcast %328 : vector<64x1xf32> to vector<64x64xf32>
    %330 = arith.mulf %325, %329 : vector<64x64xf32>
    %cst_142 = arith.constant dense<0.000000e+00> : vector<64x8xf32>
    %331 = tpu.matmul %330, %318, %cst_142 {dimension_numbers = #tpu.dot_dimension_numbers<[1], [0], [0], [1], [0, 0, 1, 1], [], []>} : vector<64x64xf32>, vector<64x8xf32>, vector<64x8xf32> -> vector<64x8xf32>
    %c64_143 = arith.constant 64 : index
    %c0_144 = arith.constant 0 : index
    %332 = vector.load %arg19[%c64_143, %c0_144] : memref<128x32xf32, #tpu.memory_space<vmem>>, vector<64x8xf32>
    tpu.vector_store %arg19[%c64_143, %c0_144], %331 {strides = array<i32>} : memref<128x32xf32, #tpu.memory_space<vmem>>, vector<64x8xf32>,
    %333 = vector.extract_strided_slice %245 {offsets = [64, 8], sizes = [64, 8], strides = [1, 1]} : vector<128x32xf32> to vector<64x8xf32>
    %334 = vector.extract_strided_slice %246 {offsets = [64, 8], sizes = [64, 8], strides = [1, 1]} : vector<128x32xf32> to vector<64x8xf32>
    %335 = vector.extract_strided_slice %247 {offsets = [64, 8], sizes = [64, 8], strides = [1, 1]} : vector<128x32xf32> to vector<64x8xf32>
    %336 = tpu.transpose %334, [1, 0] : vector<64x8xf32> -> vector<8x64xf32>
    %cst_145 = arith.constant dense<0.000000e+00> : vector<64x64xf32>
    %337 = tpu.matmul %333, %336, %cst_145 {dimension_numbers = #tpu.dot_dimension_numbers<[1], [0], [0], [1], [0, 0, 1, 1], [], []>} : vector<64x8xf32>, vector<8x64xf32>, vector<64x64xf32> -> vector<64x64xf32>
    %cst_146 = arith.constant dense<0xFF800000> : vector<64xf32>
    %338 = vector.multi_reduction <maximumf>, %337, %cst_146 [1] : vector<64x64xf32> to vector<64xf32>
    %339 = vector.shape_cast %338 : vector<64xf32> to vector<64x1xf32>
    %340 = vector.broadcast %339 : vector<64x1xf32> to vector<64x64xf32>
    %341 = arith.subf %337, %340 : vector<64x64xf32>
    %342 = math.exp %341 : vector<64x64xf32>
    %cst_147 = arith.constant dense<0.000000e+00> : vector<64xf32>
    %343 = vector.multi_reduction <add>, %342, %cst_147 [1] : vector<64x64xf32> to vector<64xf32>
    %344 = vector.shape_cast %343 : vector<64xf32> to vector<64x1xf32>
    %345 = tpu.reciprocal %344 {approx = true} : vector<64x1xf32> -> vector<64x1xf32>
    %346 = vector.broadcast %345 : vector<64x1xf32> to vector<64x64xf32>
    %347 = arith.mulf %342, %346 : vector<64x64xf32>
    %cst_148 = arith.constant dense<0.000000e+00> : vector<64x8xf32>
    %348 = tpu.matmul %347, %335, %cst_148 {dimension_numbers = #tpu.dot_dimension_numbers<[1], [0], [0], [1], [0, 0, 1, 1], [], []>} : vector<64x64xf32>, vector<64x8xf32>, vector<64x8xf32> -> vector<64x8xf32>
    %c64_149 = arith.constant 64 : index
    %c8_150 = arith.constant 8 : index
    %349 = vector.load %arg19[%c64_149, %c8_150] : memref<128x32xf32, #tpu.memory_space<vmem>>, vector<64x8xf32>
    tpu.vector_store %arg19[%c64_149, %c8_150], %348 {strides = array<i32>} : memref<128x32xf32, #tpu.memory_space<vmem>>, vector<64x8xf32>,
    %350 = vector.extract_strided_slice %245 {offsets = [64, 16], sizes = [64, 8], strides = [1, 1]} : vector<128x32xf32> to vector<64x8xf32>
    %351 = vector.extract_strided_slice %246 {offsets = [64, 16], sizes = [64, 8], strides = [1, 1]} : vector<128x32xf32> to vector<64x8xf32>
    %352 = vector.extract_strided_slice %247 {offsets = [64, 16], sizes = [64, 8], strides = [1, 1]} : vector<128x32xf32> to vector<64x8xf32>
    %353 = tpu.transpose %351, [1, 0] : vector<64x8xf32> -> vector<8x64xf32>
    %cst_151 = arith.constant dense<0.000000e+00> : vector<64x64xf32>
    %354 = tpu.matmul %350, %353, %cst_151 {dimension_numbers = #tpu.dot_dimension_numbers<[1], [0], [0], [1], [0, 0, 1, 1], [], []>} : vector<64x8xf32>, vector<8x64xf32>, vector<64x64xf32> -> vector<64x64xf32>
    %cst_152 = arith.constant dense<0xFF800000> : vector<64xf32>
    %355 = vector.multi_reduction <maximumf>, %354, %cst_152 [1] : vector<64x64xf32> to vector<64xf32>
    %356 = vector.shape_cast %355 : vector<64xf32> to vector<64x1xf32>
    %357 = vector.broadcast %356 : vector<64x1xf32> to vector<64x64xf32>
    %358 = arith.subf %354, %357 : vector<64x64xf32>
    %359 = math.exp %358 : vector<64x64xf32>
    %cst_153 = arith.constant dense<0.000000e+00> : vector<64xf32>
    %360 = vector.multi_reduction <add>, %359, %cst_153 [1] : vector<64x64xf32> to vector<64xf32>
    %361 = vector.shape_cast %360 : vector<64xf32> to vector<64x1xf32>
    %362 = tpu.reciprocal %361 {approx = true} : vector<64x1xf32> -> vector<64x1xf32>
    %363 = vector.broadcast %362 : vector<64x1xf32> to vector<64x64xf32>
    %364 = arith.mulf %359, %363 : vector<64x64xf32>
    %cst_154 = arith.constant dense<0.000000e+00> : vector<64x8xf32>
    %365 = tpu.matmul %364, %352, %cst_154 {dimension_numbers = #tpu.dot_dimension_numbers<[1], [0], [0], [1], [0, 0, 1, 1], [], []>} : vector<64x64xf32>, vector<64x8xf32>, vector<64x8xf32> -> vector<64x8xf32>
    %c64_155 = arith.constant 64 : index
    %c16_156 = arith.constant 16 : index
    %366 = vector.load %arg19[%c64_155, %c16_156] : memref<128x32xf32, #tpu.memory_space<vmem>>, vector<64x8xf32>
    tpu.vector_store %arg19[%c64_155, %c16_156], %365 {strides = array<i32>} : memref<128x32xf32, #tpu.memory_space<vmem>>, vector<64x8xf32>,
    %367 = vector.extract_strided_slice %245 {offsets = [64, 24], sizes = [64, 8], strides = [1, 1]} : vector<128x32xf32> to vector<64x8xf32>
    %368 = vector.extract_strided_slice %246 {offsets = [64, 24], sizes = [64, 8], strides = [1, 1]} : vector<128x32xf32> to vector<64x8xf32>
    %369 = vector.extract_strided_slice %247 {offsets = [64, 24], sizes = [64, 8], strides = [1, 1]} : vector<128x32xf32> to vector<64x8xf32>
    %370 = tpu.transpose %368, [1, 0] : vector<64x8xf32> -> vector<8x64xf32>
    %cst_157 = arith.constant dense<0.000000e+00> : vector<64x64xf32>
    %371 = tpu.matmul %367, %370, %cst_157 {dimension_numbers = #tpu.dot_dimension_numbers<[1], [0], [0], [1], [0, 0, 1, 1], [], []>} : vector<64x8xf32>, vector<8x64xf32>, vector<64x64xf32> -> vector<64x64xf32>
    %cst_158 = arith.constant dense<0xFF800000> : vector<64xf32>
    %372 = vector.multi_reduction <maximumf>, %371, %cst_158 [1] : vector<64x64xf32> to vector<64xf32>
    %373 = vector.shape_cast %372 : vector<64xf32> to vector<64x1xf32>
    %374 = vector.broadcast %373 : vector<64x1xf32> to vector<64x64xf32>
    %375 = arith.subf %371, %374 : vector<64x64xf32>
    %376 = math.exp %375 : vector<64x64xf32>
    %cst_159 = arith.constant dense<0.000000e+00> : vector<64xf32>
    %377 = vector.multi_reduction <add>, %376, %cst_159 [1] : vector<64x64xf32> to vector<64xf32>
    %378 = vector.shape_cast %377 : vector<64xf32> to vector<64x1xf32>
    %379 = tpu.reciprocal %378 {approx = true} : vector<64x1xf32> -> vector<64x1xf32>
    %380 = vector.broadcast %379 : vector<64x1xf32> to vector<64x64xf32>
    %381 = arith.mulf %376, %380 : vector<64x64xf32>
    %cst_160 = arith.constant dense<0.000000e+00> : vector<64x8xf32>
    %382 = tpu.matmul %381, %369, %cst_160 {dimension_numbers = #tpu.dot_dimension_numbers<[1], [0], [0], [1], [0, 0, 1, 1], [], []>} : vector<64x64xf32>, vector<64x8xf32>, vector<64x8xf32> -> vector<64x8xf32>
    %c64_161 = arith.constant 64 : index
    %c24_162 = arith.constant 24 : index
    %383 = vector.load %arg19[%c64_161, %c24_162] : memref<128x32xf32, #tpu.memory_space<vmem>>, vector<64x8xf32>
    tpu.vector_store %arg19[%c64_161, %c24_162], %382 {strides = array<i32>} : memref<128x32xf32, #tpu.memory_space<vmem>>, vector<64x8xf32>,
    %c0_163 = arith.constant 0 : index
    %c0_164 = arith.constant 0 : index
    %384 = vector.load %arg19[%c0_163, %c0_164] : memref<128x32xf32, #tpu.memory_space<vmem>>, vector<128x32xf32>
    %c1_165 = arith.constant 1 : index
    %c0_166 = arith.constant 0 : index
    %c0_167 = arith.constant 0 : index
    %385 = vector.load %arg8[%c1_165, %c0_166, %c0_167] : memref<2x32x32xf32, #tpu.memory_space<vmem>>, vector<1x32x32xf32>
    %386 = vector.shape_cast %385 : vector<1x32x32xf32> to vector<32x32xf32>
    %cst_168 = arith.constant dense<0.000000e+00> : vector<128x32xf32>
    %387 = tpu.matmul %384, %386, %cst_168 {dimension_numbers = #tpu.dot_dimension_numbers<[1], [0], [0], [1], [0, 0, 1, 1], [], []>} : vector<128x32xf32>, vector<32x32xf32>, vector<128x32xf32> -> vector<128x32xf32>
    %c1_169 = arith.constant 1 : index
    %c0_170 = arith.constant 0 : index
    %c0_171 = arith.constant 0 : index
    %388 = vector.load %arg9[%c1_169, %c0_170, %c0_171] : memref<2x1x32xf32, #tpu.memory_space<vmem>>, vector<1x1x32xf32>
    %389 = vector.shape_cast %388 : vector<1x1x32xf32> to vector<1x32xf32>
    %390 = vector.broadcast %389 : vector<1x32xf32> to vector<128x32xf32>
    %391 = arith.addf %387, %390 : vector<128x32xf32>
    %392 = arith.addf %237, %391 : vector<128x32xf32>
    %c1_172 = arith.constant 1 : index
    %c0_173 = arith.constant 0 : index
    %c0_174 = arith.constant 0 : index
    %393 = vector.load %arg14[%c1_172, %c0_173, %c0_174] : memref<2x1x32xf32, #tpu.memory_space<vmem>>, vector<1x1x32xf32>
    %394 = vector.shape_cast %393 : vector<1x1x32xf32> to vector<1x32xf32>
    %c1_175 = arith.constant 1 : index
    %c0_176 = arith.constant 0 : index
    %c0_177 = arith.constant 0 : index
    %395 = vector.load %arg15[%c1_175, %c0_176, %c0_177] : memref<2x1x32xf32, #tpu.memory_space<vmem>>, vector<1x1x32xf32>
    %396 = vector.shape_cast %395 : vector<1x1x32xf32> to vector<1x32xf32>
    %cst_178 = arith.constant dense<0.000000e+00> : vector<128xf32>
    %397 = vector.multi_reduction <add>, %392, %cst_178 [1] : vector<128x32xf32> to vector<128xf32>
    %398 = vector.shape_cast %397 : vector<128xf32> to vector<128x1xf32>
    %cst_179 = arith.constant 3.200000e+01 : f32
    %399 = vector.broadcast %cst_179 : f32 to vector<128x1xf32>
    %400 = arith.divf %398, %399 : vector<128x1xf32>
    %401 = vector.broadcast %400 : vector<128x1xf32> to vector<128x32xf32>
    %402 = arith.subf %392, %401 : vector<128x32xf32>
    %403 = arith.mulf %402, %402 : vector<128x32xf32>
    %cst_180 = arith.constant dense<0.000000e+00> : vector<128xf32>
    %404 = vector.multi_reduction <add>, %403, %cst_180 [1] : vector<128x32xf32> to vector<128xf32>
    %405 = vector.shape_cast %404 : vector<128xf32> to vector<128x1xf32>
    %cst_181 = arith.constant 3.200000e+01 : f32
    %406 = vector.broadcast %cst_181 : f32 to vector<128x1xf32>
    %407 = arith.divf %405, %406 : vector<128x1xf32>
    %408 = vector.broadcast %400 : vector<128x1xf32> to vector<128x32xf32>
    %409 = arith.subf %392, %408 : vector<128x32xf32>
    %cst_182 = arith.constant 9.99999974E-6 : f32
    %410 = vector.broadcast %cst_182 : f32 to vector<128x1xf32>
    %411 = arith.addf %407, %410 : vector<128x1xf32>
    %412 = math.rsqrt %411 : vector<128x1xf32>
    %413 = vector.broadcast %412 : vector<128x1xf32> to vector<128x32xf32>
    %414 = arith.mulf %409, %413 : vector<128x32xf32>
    %415 = vector.broadcast %394 : vector<1x32xf32> to vector<128x32xf32>
    %416 = arith.mulf %414, %415 : vector<128x32xf32>
    %417 = vector.broadcast %396 : vector<1x32xf32> to vector<128x32xf32>
    %418 = arith.addf %416, %417 : vector<128x32xf32>
    %c1_183 = arith.constant 1 : index
    %c0_184 = arith.constant 0 : index
    %c0_185 = arith.constant 0 : index
    %419 = vector.load %arg10[%c1_183, %c0_184, %c0_185] : memref<2x32x32xf32, #tpu.memory_space<vmem>>, vector<1x32x32xf32>
    %420 = vector.shape_cast %419 : vector<1x32x32xf32> to vector<32x32xf32>
    %cst_186 = arith.constant dense<0.000000e+00> : vector<128x32xf32>
    %421 = tpu.matmul %418, %420, %cst_186 {dimension_numbers = #tpu.dot_dimension_numbers<[1], [0], [0], [1], [0, 0, 1, 1], [], []>} : vector<128x32xf32>, vector<32x32xf32>, vector<128x32xf32> -> vector<128x32xf32>
    %c1_187 = arith.constant 1 : index
    %c0_188 = arith.constant 0 : index
    %c0_189 = arith.constant 0 : index
    %422 = vector.load %arg11[%c1_187, %c0_188, %c0_189] : memref<2x1x32xf32, #tpu.memory_space<vmem>>, vector<1x1x32xf32>
    %423 = vector.shape_cast %422 : vector<1x1x32xf32> to vector<1x32xf32>
    %424 = vector.broadcast %423 : vector<1x32xf32> to vector<128x32xf32>
    %425 = arith.addf %421, %424 : vector<128x32xf32>
    %cst_190 = arith.constant 0.000000e+00 : f32
    %426 = vector.broadcast %cst_190 : f32 to vector<128x32xf32>
    %427 = arith.maximumf %425, %426 : vector<128x32xf32>
    %c1_191 = arith.constant 1 : index
    %c0_192 = arith.constant 0 : index
    %c0_193 = arith.constant 0 : index
    %428 = vector.load %arg12[%c1_191, %c0_192, %c0_193] : memref<2x32x32xf32, #tpu.memory_space<vmem>>, vector<1x32x32xf32>
    %429 = vector.shape_cast %428 : vector<1x32x32xf32> to vector<32x32xf32>
    %cst_194 = arith.constant dense<0.000000e+00> : vector<128x32xf32>
    %430 = tpu.matmul %427, %429, %cst_194 {dimension_numbers = #tpu.dot_dimension_numbers<[1], [0], [0], [1], [0, 0, 1, 1], [], []>} : vector<128x32xf32>, vector<32x32xf32>, vector<128x32xf32> -> vector<128x32xf32>
    %c1_195 = arith.constant 1 : index
    %c0_196 = arith.constant 0 : index
    %c0_197 = arith.constant 0 : index
    %431 = vector.load %arg13[%c1_195, %c0_196, %c0_197] : memref<2x1x32xf32, #tpu.memory_space<vmem>>, vector<1x1x32xf32>
    %432 = vector.shape_cast %431 : vector<1x1x32xf32> to vector<1x32xf32>
    %433 = vector.broadcast %432 : vector<1x32xf32> to vector<128x32xf32>
    %434 = arith.addf %430, %433 : vector<128x32xf32>
    %435 = arith.addf %418, %434 : vector<128x32xf32>
    %c1_198 = arith.constant 1 : index
    %c0_199 = arith.constant 0 : index
    %c0_200 = arith.constant 0 : index
    %436 = vector.load %arg16[%c1_198, %c0_199, %c0_200] : memref<2x1x32xf32, #tpu.memory_space<vmem>>, vector<1x1x32xf32>
    %437 = vector.shape_cast %436 : vector<1x1x32xf32> to vector<1x32xf32>
    %c1_201 = arith.constant 1 : index
    %c0_202 = arith.constant 0 : index
    %c0_203 = arith.constant 0 : index
    %438 = vector.load %arg17[%c1_201, %c0_202, %c0_203] : memref<2x1x32xf32, #tpu.memory_space<vmem>>, vector<1x1x32xf32>
    %439 = vector.shape_cast %438 : vector<1x1x32xf32> to vector<1x32xf32>
    %cst_204 = arith.constant dense<0.000000e+00> : vector<128xf32>
    %440 = vector.multi_reduction <add>, %435, %cst_204 [1] : vector<128x32xf32> to vector<128xf32>
    %441 = vector.shape_cast %440 : vector<128xf32> to vector<128x1xf32>
    %cst_205 = arith.constant 3.200000e+01 : f32
    %442 = vector.broadcast %cst_205 : f32 to vector<128x1xf32>
    %443 = arith.divf %441, %442 : vector<128x1xf32>
    %444 = vector.broadcast %443 : vector<128x1xf32> to vector<128x32xf32>
    %445 = arith.subf %435, %444 : vector<128x32xf32>
    %446 = arith.mulf %445, %445 : vector<128x32xf32>
    %cst_206 = arith.constant dense<0.000000e+00> : vector<128xf32>
    %447 = vector.multi_reduction <add>, %446, %cst_206 [1] : vector<128x32xf32> to vector<128xf32>
    %448 = vector.shape_cast %447 : vector<128xf32> to vector<128x1xf32>
    %cst_207 = arith.constant 3.200000e+01 : f32
    %449 = vector.broadcast %cst_207 : f32 to vector<128x1xf32>
    %450 = arith.divf %448, %449 : vector<128x1xf32>
    %451 = vector.broadcast %443 : vector<128x1xf32> to vector<128x32xf32>
    %452 = arith.subf %435, %451 : vector<128x32xf32>
    %cst_208 = arith.constant 9.99999974E-6 : f32
    %453 = vector.broadcast %cst_208 : f32 to vector<128x1xf32>
    %454 = arith.addf %450, %453 : vector<128x1xf32>
    %455 = math.rsqrt %454 : vector<128x1xf32>
    %456 = vector.broadcast %455 : vector<128x1xf32> to vector<128x32xf32>
    %457 = arith.mulf %452, %456 : vector<128x32xf32>
    %458 = vector.broadcast %437 : vector<1x32xf32> to vector<128x32xf32>
    %459 = arith.mulf %457, %458 : vector<128x32xf32>
    %460 = vector.broadcast %439 : vector<1x32xf32> to vector<128x32xf32>
    %461 = arith.addf %459, %460 : vector<128x32xf32>
    %c0_209 = arith.constant 0 : index
    %c0_210 = arith.constant 0 : index
    %462 = vector.load %arg18[%c0_209, %c0_210] : memref<128x32xf32, #tpu.memory_space<vmem>>, vector<128x32xf32>
    tpu.vector_store %arg18[%c0_209, %c0_210], %461 {strides = array<i32>} : memref<128x32xf32, #tpu.memory_space<vmem>>, vector<128x32xf32>,
    return
  }
  func.func @transform_0(%arg0: i32) -> (i32, i32) {
    %c0_i32 = arith.constant 0 : i32
    %c0_i32_0 = arith.constant 0 : i32
    %c0_i32_1 = arith.constant 0 : i32
    return %c0_i32, %c0_i32_0 : i32, i32
  }
  func.func @transform_1(%arg0: i32) -> (i32, i32) {
    %c0_i32 = arith.constant 0 : i32
    %c0_i32_0 = arith.constant 0 : i32
    %c0_i32_1 = arith.constant 0 : i32
    return %c0_i32, %c0_i32_0 : i32, i32
  }
  func.func @transform_2(%arg0: i32) -> (i32, i32) {
    %c0_i32 = arith.constant 0 : i32
    %c0_i32_0 = arith.constant 0 : i32
    %c0_i32_1 = arith.constant 0 : i32
    return %c0_i32, %c0_i32_0 : i32, i32
  }
  func.func @transform_3(%arg0: i32) -> (i32, i32) {
    %c0_i32 = arith.constant 0 : i32
    %c0_i32_0 = arith.constant 0 : i32
    %c0_i32_1 = arith.constant 0 : i32
    return %c0_i32, %c0_i32_0 : i32, i32
  }
  func.func @transform_4(%arg0: i32) -> (i32, i32) {
    %c0_i32 = arith.constant 0 : i32
    %c0_i32_0 = arith.constant 0 : i32
    %c0_i32_1 = arith.constant 0 : i32
    return %c0_i32, %c0_i32_0 : i32, i32
  }
  func.func @transform_5(%arg0: i32) -> (i32, i32, i32) {
    %c0_i32 = arith.constant 0 : i32
    %c0_i32_0 = arith.constant 0 : i32
    %c0_i32_1 = arith.constant 0 : i32
    %c0_i32_2 = arith.constant 0 : i32
    return %c0_i32, %c0_i32_0, %c0_i32_1 : i32, i32, i32
  }
  func.func @transform_6(%arg0: i32) -> (i32, i32, i32) {
    %c0_i32 = arith.constant 0 : i32
    %c0_i32_0 = arith.constant 0 : i32
    %c0_i32_1 = arith.constant 0 : i32
    %c0_i32_2 = arith.constant 0 : i32
    return %c0_i32, %c0_i32_0, %c0_i32_1 : i32, i32, i32
  }
  func.func @transform_7(%arg0: i32) -> (i32, i32, i32) {
    %c0_i32 = arith.constant 0 : i32
    %c0_i32_0 = arith.constant 0 : i32
    %c0_i32_1 = arith.constant 0 : i32
    %c0_i32_2 = arith.constant 0 : i32
    return %c0_i32, %c0_i32_0, %c0_i32_1 : i32, i32, i32
  }
  func.func @transform_8(%arg0: i32) -> (i32, i32, i32) {
    %c0_i32 = arith.constant 0 : i32
    %c0_i32_0 = arith.constant 0 : i32
    %c0_i32_1 = arith.constant 0 : i32
    %c0_i32_2 = arith.constant 0 : i32
    return %c0_i32, %c0_i32_0, %c0_i32_1 : i32, i32, i32
  }
  func.func @transform_9(%arg0: i32) -> (i32, i32, i32) {
    %c0_i32 = arith.constant 0 : i32
    %c0_i32_0 = arith.constant 0 : i32
    %c0_i32_1 = arith.constant 0 : i32
    %c0_i32_2 = arith.constant 0 : i32
    return %c0_i32, %c0_i32_0, %c0_i32_1 : i32, i32, i32
  }
  func.func @transform_10(%arg0: i32) -> (i32, i32, i32) {
    %c0_i32 = arith.constant 0 : i32
    %c0_i32_0 = arith.constant 0 : i32
    %c0_i32_1 = arith.constant 0 : i32
    %c0_i32_2 = arith.constant 0 : i32
    return %c0_i32, %c0_i32_0, %c0_i32_1 : i32, i32, i32
  }
  func.func @transform_11(%arg0: i32) -> (i32, i32, i32) {
    %c0_i32 = arith.constant 0 : i32
    %c0_i32_0 = arith.constant 0 : i32
    %c0_i32_1 = arith.constant 0 : i32
    %c0_i32_2 = arith.constant 0 : i32
    return %c0_i32, %c0_i32_0, %c0_i32_1 : i32, i32, i32
  }
  func.func @transform_12(%arg0: i32) -> (i32, i32, i32) {
    %c0_i32 = arith.constant 0 : i32
    %c0_i32_0 = arith.constant 0 : i32
    %c0_i32_1 = arith.constant 0 : i32
    %c0_i32_2 = arith.constant 0 : i32
    return %c0_i32, %c0_i32_0, %c0_i32_1 : i32, i32, i32
  }
  func.func @transform_13(%arg0: i32) -> (i32, i32, i32) {
    %c0_i32 = arith.constant 0 : i32
    %c0_i32_0 = arith.constant 0 : i32
    %c0_i32_1 = arith.constant 0 : i32
    %c0_i32_2 = arith.constant 0 : i32
    return %c0_i32, %c0_i32_0, %c0_i32_1 : i32, i32, i32
  }
  func.func @transform_14(%arg0: i32) -> (i32, i32, i32) {
    %c0_i32 = arith.constant 0 : i32
    %c0_i32_0 = arith.constant 0 : i32
    %c0_i32_1 = arith.constant 0 : i32
    %c0_i32_2 = arith.constant 0 : i32
    return %c0_i32, %c0_i32_0, %c0_i32_1 : i32, i32, i32
  }
  func.func @transform_15(%arg0: i32) -> (i32, i32, i32) {
    %c0_i32 = arith.constant 0 : i32
    %c0_i32_0 = arith.constant 0 : i32
    %c0_i32_1 = arith.constant 0 : i32
    %c0_i32_2 = arith.constant 0 : i32
    return %c0_i32, %c0_i32_0, %c0_i32_1 : i32, i32, i32
  }
  func.func @transform_16(%arg0: i32) -> (i32, i32, i32) {
    %c0_i32 = arith.constant 0 : i32
    %c0_i32_0 = arith.constant 0 : i32
    %c0_i32_1 = arith.constant 0 : i32
    %c0_i32_2 = arith.constant 0 : i32
    return %c0_i32, %c0_i32_0, %c0_i32_1 : i32, i32, i32
  }
  func.func @transform_17(%arg0: i32) -> (i32, i32) {
    %c0_i32 = arith.constant 0 : i32
    %c0_i32_0 = arith.constant 0 : i32
    %c0_i32_1 = arith.constant 0 : i32
    return %c0_i32, %c0_i32_0 : i32, i32
  }
}

</mosaic_0001>

<llo_original>
// kernel: transformer_encoder_forward.1
$region0: #{transformer_encoder_forward.1}
  #allocation0 [shape = 'u32[]', space=smem, size = 0x4, offset = 0x4, fixed_abs, tag = 'smem constant byte address 0x4 - core index']
  #allocation1 [shape = 'u32[144,128]{1,0:T(1,128)}', space=vmem, size = 0x12000, scoped, tag = 'internal scratch']
  #allocation2 [shape = 'f32[128,32]{1,0:T(8,128)}', space=vmem, size = 0x10000, scoped, tag = 'scratch operand']
  %s0 = inlined_call_operand.vmem [shape: f32[128,32], index: 0, kind: input, shape index: {}]
  %s1 = inlined_call_operand.vmem [shape: f32[128,32], index: 1, kind: input, shape index: {}]
  %s2 = inlined_call_operand.hbm [shape: f32[32,32], index: 2, kind: input, shape index: {}]
  %s3 = inlined_call_operand.hbm [shape: f32[32,32], index: 3, kind: input, shape index: {}]
  %s4 = inlined_call_operand.hbm [shape: f32[1,32], index: 4, kind: input, shape index: {}]
  %s5 = inlined_call_operand.vmem [shape: f32[2,32,96], index: 5, kind: input, shape index: {}]
  %s6 = inlined_call_operand.vmem [shape: f32[2,1,96], index: 6, kind: input, shape index: {}]
  %s7 = inlined_call_operand.vmem [shape: f32[2,32,32], index: 7, kind: input, shape index: {}]
  %s8 = inlined_call_operand.hbm [shape: f32[2,1,32], index: 8, kind: input, shape index: {}]
  %s9 = inlined_call_operand.vmem [shape: f32[2,32,32], index: 9, kind: input, shape index: {}]
  %s10 = inlined_call_operand.hbm [shape: f32[2,1,32], index: 10, kind: input, shape index: {}]
  %s11 = inlined_call_operand.hbm [shape: f32[2,32,32], index: 11, kind: input, shape index: {}]
  %s12 = inlined_call_operand.hbm [shape: f32[2,1,32], index: 12, kind: input, shape index: {}]
  %s13 = inlined_call_operand.vmem [shape: f32[2,1,32], index: 13, kind: input, shape index: {}]
  %s14 = inlined_call_operand.hbm [shape: f32[2,1,32], index: 14, kind: input, shape index: {}]
  %s15 = inlined_call_operand.vmem [shape: f32[2,1,32], index: 15, kind: input, shape index: {}]
  %s16 = inlined_call_operand.hbm [shape: f32[2,1,32], index: 16, kind: input, shape index: {}]
  %s17 = inlined_call_operand.hbm [shape: f32[128,32], index: 17, kind: output, shape index: {}]
  %s18 = sld [smem:[#allocation0]]
  $region114: #{transformer_encoder_forward.1} parent=0
    _
  %s20 = ssub.s32 1, %s18
  %s21 = scalar_select 0, %s20, %s18
  $region1: #{transformer_encoder_forward.1} parent=0
    #allocation3 [shape = 'u8[16384]{0}', space=vmem, size = 0x4000, scoped, tag = 'input window, operand 2, single buffered']
    #allocation4 [shape = 's32[1]{0}', space=sflag, size = 0x4, scoped, tag = 'scoped memory for transformer_encoder_forward.1']
    #allocation5 [shape = 's32[1]{0}', space=sflag, size = 0x4, scoped, tag = 'scoped memory for transformer_encoder_forward.1']
    #allocation6 [shape = 'u8[16384]{0}', space=vmem, size = 0x4000, scoped, tag = 'input window, operand 3, single buffered']
    #allocation7 [shape = 's32[1]{0}', space=sflag, size = 0x4, scoped, tag = 'scoped memory for transformer_encoder_forward.1']
    #allocation8 [shape = 'u8[512]{0}', space=vmem, size = 0x400, scoped, tag = 'input window, operand 4, single buffered']
    #allocation9 [shape = 'u8[1024]{0}', space=vmem, size = 0x400, scoped, tag = 'input window, operand 8, single buffered']
    #allocation10 [shape = 's32[1]{0}', space=sflag, size = 0x4, scoped, tag = 'scoped memory for transformer_encoder_forward.1']
    #allocation11 [shape = 'u8[1024]{0}', space=vmem, size = 0x400, scoped, tag = 'input window, operand 10, single buffered']
    #allocation12 [shape = 'u8[32768]{0}', space=vmem, size = 0x8000, scoped, tag = 'input window, operand 11, single buffered']
    #allocation13 [shape = 's32[1]{0}', space=sflag, size = 0x4, scoped, tag = 'scoped memory for transformer_encoder_forward.1']
    #allocation14 [shape = 'u8[1024]{0}', space=vmem, size = 0x400, scoped, tag = 'input window, operand 12, single buffered']
    #allocation15 [shape = 'u8[1024]{0}', space=vmem, size = 0x400, scoped, tag = 'input window, operand 14, single buffered']
    #allocation16 [shape = 's32[1]{0}', space=sflag, size = 0x4, scoped, tag = 'scoped memory for transformer_encoder_forward.1']
    #allocation17 [shape = 'u8[1024]{0}', space=vmem, size = 0x400, scoped, tag = 'input window, operand 16, single buffered']
    #allocation18 [shape = 'u8[65536]{0}', space=vmem, size = 0x10000, scoped, tag = 'output window, operand 0, single buffered']
    %22 = vsyncpa [#allocation4], 0
    %23 = vsyncpa [#allocation7], 0
    %24 = vsyncpa [#allocation10], 0
    %25 = vsyncpa [#allocation13], 0
    %26 = vsyncpa [#allocation16], 0
    %27 = vsyncpa [#allocation5], 0
    // Predicated region
    $region2: #{transformer_encoder_forward.1} parent=1 // pred_check
      _
    $region3: #{transformer_encoder_forward.1} parent=1 // pred_check_branch
      %29 = sbr.rel (0) target = $region5
    $region4: #{transformer_encoder_forward.1} parent=1 // pred_region
      _
    $region5: #{transformer_encoder_forward.1} parent=1 // pred_fallthru
      _
    // Predicated region
    $region6: #{transformer_encoder_forward.1} parent=1 // pred_check
      _
    $region7: #{transformer_encoder_forward.1} parent=1 // pred_check_branch
      %31 = sbr.rel (0) target = $region9
    $region8: #{transformer_encoder_forward.1} parent=1 // pred_region
      _
    $region9: #{transformer_encoder_forward.1} parent=1 // pred_fallthru
      _
    // Predicated region
    $region10: #{transformer_encoder_forward.1} parent=1 // pred_check
      _
    $region11: #{transformer_encoder_forward.1} parent=1 // pred_check_branch
      %33 = sbr.rel (0) target = $region13
    $region12: #{transformer_encoder_forward.1} parent=1 // pred_region
      %s35 = ssub.s32 512, 512
      %36 = vsyncadd [#allocation4], %s35
      %s37 = sshll.u32 [#allocation3], 4
      %s38 = int_to_ptr.vmem [resolvable:$true] %s37
      %43 = dma.hbm_to_vmem [thread:$0]  %s2, 512, %s38, [#allocation4], 128, 128, 8
    $region13: #{transformer_encoder_forward.1} parent=1 // pred_fallthru
      _
    // Predicated region
    $region14: #{transformer_encoder_forward.1} parent=1 // pred_check
      _
    $region15: #{transformer_encoder_forward.1} parent=1 // pred_check_branch
      %45 = sbr.rel (0) target = $region17
    $region16: #{transformer_encoder_forward.1} parent=1 // pred_region
      %s47 = ssub.s32 512, 512
      %48 = vsyncadd [#allocation7], %s47
      %s49 = sshll.u32 [#allocation6], 4
      %s50 = int_to_ptr.vmem [resolvable:$true] %s49
      %55 = dma.hbm_to_vmem [thread:$0]  %s3, 512, %s50, [#allocation7], 128, 128, 8
    $region17: #{transformer_encoder_forward.1} parent=1 // pred_fallthru
      _
    // Predicated region
    $region18: #{transformer_encoder_forward.1} parent=1 // pred_check
      _
    $region19: #{transformer_encoder_forward.1} parent=1 // pred_check_branch
      %57 = sbr.rel (0) target = $region21
    $region20: #{transformer_encoder_forward.1} parent=1 // pred_region
      %s59 = ssub.s32 16, 16
      %60 = vsyncadd [#allocation7], %s59
      %s62 = sshll.u32 [#allocation8], 4
      %s63 = int_to_ptr.vmem [resolvable:$true] %s62
      %65 = dma.hbm_to_vmem [thread:$0]  %s4, 16, %s63, [#allocation7]
    $region21: #{transformer_encoder_forward.1} parent=1 // pred_fallthru
      _
    // Predicated region
    $region22: #{transformer_encoder_forward.1} parent=1 // pred_check
      _
    $region23: #{transformer_encoder_forward.1} parent=1 // pred_check_branch
      %67 = sbr.rel (0) target = $region25
    $region24: #{transformer_encoder_forward.1} parent=1 // pred_region
      _
    $region25: #{transformer_encoder_forward.1} parent=1 // pred_fallthru
      _
    // Predicated region
    $region26: #{transformer_encoder_forward.1} parent=1 // pred_check
      _
    $region27: #{transformer_encoder_forward.1} parent=1 // pred_check_branch
      %69 = sbr.rel (0) target = $region29
    $region28: #{transformer_encoder_forward.1} parent=1 // pred_region
      _
    $region29: #{transformer_encoder_forward.1} parent=1 // pred_fallthru
      _
    // Predicated region
    $region30: #{transformer_encoder_forward.1} parent=1 // pred_check
      _
    $region31: #{transformer_encoder_forward.1} parent=1 // pred_check_branch
      %71 = sbr.rel (0) target = $region33
    $region32: #{transformer_encoder_forward.1} parent=1 // pred_region
      _
    $region33: #{transformer_encoder_forward.1} parent=1 // pred_fallthru
      _
    // Predicated region
    $region34: #{transformer_encoder_forward.1} parent=1 // pred_check
      _
    $region35: #{transformer_encoder_forward.1} parent=1 // pred_check_branch
      %73 = sbr.rel (0) target = $region37
    $region36: #{transformer_encoder_forward.1} parent=1 // pred_region
      %s75 = ssub.s32 32, 32
      %76 = vsyncadd [#allocation10], %s75
      %s77 = sshll.u32 [#allocation9], 4
      %s78 = int_to_ptr.vmem [resolvable:$true] %s77
      %83 = dma.hbm_to_vmem [thread:$0]  %s8, 32, %s78, [#allocation10], 16, 16, 1
    $region37: #{transformer_encoder_forward.1} parent=1 // pred_fallthru
      _
    // Predicated region
    $region38: #{transformer_encoder_forward.1} parent=1 // pred_check
      _
    $region39: #{transformer_encoder_forward.1} parent=1 // pred_check_branch
      %85 = sbr.rel (0) target = $region41
    $region40: #{transformer_encoder_forward.1} parent=1 // pred_region
      _
    $region41: #{transformer_encoder_forward.1} parent=1 // pred_fallthru
      _
    // Predicated region
    $region42: #{transformer_encoder_forward.1} parent=1 // pred_check
      _
    $region43: #{transformer_encoder_forward.1} parent=1 // pred_check_branch
      %87 = sbr.rel (0) target = $region45
    $region44: #{transformer_encoder_forward.1} parent=1 // pred_region
      %s89 = ssub.s32 32, 32
      %90 = vsyncadd [#allocation10], %s89
      %s91 = sshll.u32 [#allocation11], 4
      %s92 = int_to_ptr.vmem [resolvable:$true] %s91
      %97 = dma.hbm_to_vmem [thread:$0]  %s10, 32, %s92, [#allocation10], 16, 16, 1
    $region45: #{transformer_encoder_forward.1} parent=1 // pred_fallthru
      _
    // Predicated region
    $region46: #{transformer_encoder_forward.1} parent=1 // pred_check
      _
    $region47: #{transformer_encoder_forward.1} parent=1 // pred_check_branch
      %99 = sbr.rel (0) target = $region49
    $region48: #{transformer_encoder_forward.1} parent=1 // pred_region
      %s101 = ssub.s32 1024, 1024
      %102 = vsyncadd [#allocation13], %s101
      %s103 = sshll.u32 [#allocation12], 4
      %s104 = int_to_ptr.vmem [resolvable:$true] %s103
      %109 = dma.hbm_to_vmem [thread:$0]  %s11, 1024, %s104, [#allocation13], 128, 128, 8
    $region49: #{transformer_encoder_forward.1} parent=1 // pred_fallthru
      _
    // Predicated region
    $region50: #{transformer_encoder_forward.1} parent=1 // pred_check
      _
    $region51: #{transformer_encoder_forward.1} parent=1 // pred_check_branch
      %111 = sbr.rel (0) target = $region53
    $region52: #{transformer_encoder_forward.1} parent=1 // pred_region
      %s113 = ssub.s32 32, 32
      %114 = vsyncadd [#allocation13], %s113
      %s115 = sshll.u32 [#allocation14], 4
      %s116 = int_to_ptr.vmem [resolvable:$true] %s115
      %121 = dma.hbm_to_vmem [thread:$0]  %s12, 32, %s116, [#allocation13], 16, 16, 1
    $region53: #{transformer_encoder_forward.1} parent=1 // pred_fallthru
      _
    // Predicated region
    $region54: #{transformer_encoder_forward.1} parent=1 // pred_check
      _
    $region55: #{transformer_encoder_forward.1} parent=1 // pred_check_branch
      %123 = sbr.rel (0) target = $region57
    $region56: #{transformer_encoder_forward.1} parent=1 // pred_region
      _
    $region57: #{transformer_encoder_forward.1} parent=1 // pred_fallthru
      _
    // Predicated region
    $region58: #{transformer_encoder_forward.1} parent=1 // pred_check
      _
    $region59: #{transformer_encoder_forward.1} parent=1 // pred_check_branch
      %125 = sbr.rel (0) target = $region61
    $region60: #{transformer_encoder_forward.1} parent=1 // pred_region
      %s127 = ssub.s32 32, 32
      %128 = vsyncadd [#allocation16], %s127
      %s129 = sshll.u32 [#allocation15], 4
      %s130 = int_to_ptr.vmem [resolvable:$true] %s129
      %135 = dma.hbm_to_vmem [thread:$0]  %s14, 32, %s130, [#allocation16], 16, 16, 1
    $region61: #{transformer_encoder_forward.1} parent=1 // pred_fallthru
      _
    // Predicated region
    $region62: #{transformer_encoder_forward.1} parent=1 // pred_check
      _
    $region63: #{transformer_encoder_forward.1} parent=1 // pred_check_branch
      %137 = sbr.rel (0) target = $region65
    $region64: #{transformer_encoder_forward.1} parent=1 // pred_region
      _
    $region65: #{transformer_encoder_forward.1} parent=1 // pred_fallthru
      _
    // Predicated region
    $region66: #{transformer_encoder_forward.1} parent=1 // pred_check
      _
    $region67: #{transformer_encoder_forward.1} parent=1 // pred_check_branch
      %139 = sbr.rel (0) target = $region69
    $region68: #{transformer_encoder_forward.1} parent=1 // pred_region
      %s141 = ssub.s32 32, 32
      %142 = vsyncadd [#allocation16], %s141
      %s143 = sshll.u32 [#allocation17], 4
      %s144 = int_to_ptr.vmem [resolvable:$true] %s143
      %149 = dma.hbm_to_vmem [thread:$0]  %s16, 32, %s144, [#allocation16], 16, 16, 1
    $region69: #{transformer_encoder_forward.1} parent=1 // pred_fallthru
      _
    // Predicated region
    $region70: #{transformer_encoder_forward.1} parent=1 // pred_check
      _
    $region71: #{transformer_encoder_forward.1} parent=1 // pred_check_branch
      %151 = sbr.rel (0) target = $region73
    $region72: #{transformer_encoder_forward.1} parent=1 // pred_region
      %152 = dma.done [#allocation4], 512
    $region73: #{transformer_encoder_forward.1} parent=1 // pred_fallthru
      _
    // Predicated region
    $region74: #{transformer_encoder_forward.1} parent=1 // pred_check
      _
    $region75: #{transformer_encoder_forward.1} parent=1 // pred_check_branch
      %154 = sbr.rel (0) target = $region77
    $region76: #{transformer_encoder_forward.1} parent=1 // pred_region
      %155 = dma.done [#allocation7], 512
    $region77: #{transformer_encoder_forward.1} parent=1 // pred_fallthru
      _
    // Predicated region
    $region78: #{transformer_encoder_forward.1} parent=1 // pred_check
      _
    $region79: #{transformer_encoder_forward.1} parent=1 // pred_check_branch
      %157 = sbr.rel (0) target = $region81
    $region80: #{transformer_encoder_forward.1} parent=1 // pred_region
      %158 = dma.done [#allocation7], 16
    $region81: #{transformer_encoder_forward.1} parent=1 // pred_fallthru
      _
    // Predicated region
    $region82: #{transformer_encoder_forward.1} parent=1 // pred_check
      _
    $region83: #{transformer_encoder_forward.1} parent=1 // pred_check_branch
      %160 = sbr.rel (0) target = $region85
    $region84: #{transformer_encoder_forward.1} parent=1 // pred_region
      %161 = dma.done [#allocation10], 32
    $region85: #{transformer_encoder_forward.1} parent=1 // pred_fallthru
      _
    // Predicated region
    $region86: #{transformer_encoder_forward.1} parent=1 // pred_check
      _
    $region87: #{transformer_encoder_forward.1} parent=1 // pred_check_branch
      %163 = sbr.rel (0) target = $region89
    $region88: #{transformer_encoder_forward.1} parent=1 // pred_region
      %164 = dma.done [#allocation10], 32
    $region89: #{transformer_encoder_forward.1} parent=1 // pred_fallthru
      _
    // Predicated region
    $region90: #{transformer_encoder_forward.1} parent=1 // pred_check
      _
    $region91: #{transformer_encoder_forward.1} parent=1 // pred_check_branch
      %166 = sbr.rel (0) target = $region93
    $region92: #{transformer_encoder_forward.1} parent=1 // pred_region
      %167 = dma.done [#allocation13], 1024
    $region93: #{transformer_encoder_forward.1} parent=1 // pred_fallthru
      _
    // Predicated region
    $region94: #{transformer_encoder_forward.1} parent=1 // pred_check
      _
    $region95: #{transformer_encoder_forward.1} parent=1 // pred_check_branch
      %169 = sbr.rel (0) target = $region97
    $region96: #{transformer_encoder_forward.1} parent=1 // pred_region
      %170 = dma.done [#allocation13], 32
    $region97: #{transformer_encoder_forward.1} parent=1 // pred_fallthru
      _
    // Predicated region
    $region98: #{transformer_encoder_forward.1} parent=1 // pred_check
      _
    $region99: #{transformer_encoder_forward.1} parent=1 // pred_check_branch
      %172 = sbr.rel (0) target = $region101
    $region100: #{transformer_encoder_forward.1} parent=1 // pred_region
      %173 = dma.done [#allocation16], 32
    $region101: #{transformer_encoder_forward.1} parent=1 // pred_fallthru
      _
    // Predicated region
    $region102: #{transformer_encoder_forward.1} parent=1 // pred_check
      _
    $region103: #{transformer_encoder_forward.1} parent=1 // pred_check_branch
      %175 = sbr.rel (0) target = $region105
    $region104: #{transformer_encoder_forward.1} parent=1 // pred_region
      %176 = dma.done [#allocation16], 32
    $region105: #{transformer_encoder_forward.1} parent=1 // pred_fallthru
      _
    %v177 = vld [vmem:[%s0] sm:$0xff]
    %v178 = vld [vmem:[%s0 + $0x8] sm:$0xff]
    %v179 = vld [vmem:[%s0 + $0x10] sm:$0xff]
    %v180 = vld [vmem:[%s0 + $0x18] sm:$0xff]
    %v181 = vld [vmem:[%s0 + $0x20] sm:$0xff]
    %v182 = vld [vmem:[%s0 + $0x28] sm:$0xff]
    %v183 = vld [vmem:[%s0 + $0x30] sm:$0xff]
    %v184 = vld [vmem:[%s0 + $0x38] sm:$0xff]
    %v185 = vld [vmem:[%s0 + $0x40] sm:$0xff]
    %v186 = vld [vmem:[%s0 + $0x48] sm:$0xff]
    %v187 = vld [vmem:[%s0 + $0x50] sm:$0xff]
    %v188 = vld [vmem:[%s0 + $0x58] sm:$0xff]
    %v189 = vld [vmem:[%s0 + $0x60] sm:$0xff]
    %v190 = vld [vmem:[%s0 + $0x68] sm:$0xff]
    %v191 = vld [vmem:[%s0 + $0x70] sm:$0xff]
    %v192 = vld [vmem:[%s0 + $0x78] sm:$0xff]
    %v193 = vld [vmem:[#allocation3] sm:$0xff]
    %v194 = vld [vmem:[#allocation3 + $0x8] sm:$0xff]
    %v195 = vld [vmem:[#allocation3 + $0x10] sm:$0xff]
    %v196 = vld [vmem:[#allocation3 + $0x18] sm:$0xff]
    %v197 = vld [vmem:[%s1] sm:$0xff]
    %v198 = vld [vmem:[%s1 + $0x8] sm:$0xff]
    %v199 = vld [vmem:[%s1 + $0x10] sm:$0xff]
    %v200 = vld [vmem:[%s1 + $0x18] sm:$0xff]
    %v201 = vld [vmem:[%s1 + $0x20] sm:$0xff]
    %v202 = vld [vmem:[%s1 + $0x28] sm:$0xff]
    %v203 = vld [vmem:[%s1 + $0x30] sm:$0xff]
    %v204 = vld [vmem:[%s1 + $0x38] sm:$0xff]
    %v205 = vld [vmem:[%s1 + $0x40] sm:$0xff]
    %v206 = vld [vmem:[%s1 + $0x48] sm:$0xff]
    %v207 = vld [vmem:[%s1 + $0x50] sm:$0xff]
    %v208 = vld [vmem:[%s1 + $0x58] sm:$0xff]
    %v209 = vld [vmem:[%s1 + $0x60] sm:$0xff]
    %v210 = vld [vmem:[%s1 + $0x68] sm:$0xff]
    %v211 = vld [vmem:[%s1 + $0x70] sm:$0xff]
    %v212 = vld [vmem:[%s1 + $0x78] sm:$0xff]
    %vm213 = vcmask 261120
    %v215 = vsel %vm213, %v177, 0
    %v218 = vsel %vm213, %v178, 0
    %v221 = vsel %vm213, %v179, 0
    %v224 = vsel %vm213, %v180, 0
    %v227 = vsel %vm213, %v181, 0
    %v230 = vsel %vm213, %v182, 0
    %v233 = vsel %vm213, %v183, 0
    %v236 = vsel %vm213, %v184, 0
    %v239 = vsel %vm213, %v185, 0
    %v242 = vsel %vm213, %v186, 0
    %v245 = vsel %vm213, %v187, 0
    %v248 = vsel %vm213, %v188, 0
    %v251 = vsel %vm213, %v189, 0
    %v254 = vsel %vm213, %v190, 0
    %v257 = vsel %vm213, %v191, 0
    %v260 = vsel %vm213, %v192, 0
    %262 = vmatprep.subr.mxu0 0.0
    %263 = vmatpush1.msra.mxu0 %v193
    %264 = vmatprep.subr.mxu0 0.0
    %265 = vmatpush1.msra.mxu0 %v194
    %266 = vmatprep.subr.mxu0 0.0
    %267 = vmatpush1.msra.mxu0 %v195
    %268 = vmatprep.subr.mxu0 0.0
    %269 = vmatpush1.msra.mxu0 %v196
    %270 = vmatprep.subr.mxu0 0.0
    %271 = vmatpush1.msra.mxu0 0.0
    %272 = vmatprep.subr.mxu0 0.0
    %273 = vmatpush1.msra.mxu0 0.0
    %274 = vmatprep.subr.mxu0 0.0
    %275 = vmatpush1.msra.mxu0 0.0
    %276 = vmatprep.subr.mxu0 0.0
    %277 = vmatpush1.msra.mxu0 0.0
    %278 = vmatprep.subr.mxu0 0.0
    %279 = vmatpush1.msra.mxu0 0.0
    %280 = vmatprep.subr.mxu0 0.0
    %281 = vmatpush1.msra.mxu0 0.0
    %282 = vmatprep.subr.mxu0 0.0
    %283 = vmatpush1.msra.mxu0 0.0
    %284 = vmatprep.subr.mxu0 0.0
    %285 = vmatpush1.msra.mxu0 0.0
    %286 = vmatprep.subr.mxu0 0.0
    %287 = vmatpush1.msra.mxu0 0.0
    %288 = vmatprep.subr.mxu0 0.0
    %289 = vmatpush1.msra.mxu0 0.0
    %290 = vmatprep.subr.mxu0 0.0
    %291 = vmatpush1.msra.mxu0 0.0
    %292 = vmatprep.subr.mxu0 0.0
    %293 = vmatpush1.msra.mxu0 0.0
    %294 = vmatprep.subr.mxu0 0.0
    %295 = vmatpush1.msra.mxu0 0.0
    %296 = vmatprep.subr.mxu0 0.0
    %297 = vmatpush1.msra.mxu0 0.0
    %298 = vmatprep.subr.mxu0 0.0
    %299 = vmatpush1.msra.mxu0 0.0
    %300 = vmatprep.subr.mxu0 0.0
    %301 = vmatpush1.msra.mxu0 0.0
    %302 = vmatprep.subr.mxu0 0.0
    %303 = vmatpush1.msra.mxu0 0.0
    %304 = vmatprep.subr.mxu0 0.0
    %305 = vmatpush1.msra.mxu0 0.0
    %306 = vmatprep.subr.mxu0 0.0
    %307 = vmatpush1.msra.mxu0 0.0
    %308 = vmatprep.subr.mxu0 0.0
    %309 = vmatpush1.msra.mxu0 0.0
    %310 = vmatprep.subr.mxu0 0.0
    %311 = vmatpush1.msra.mxu0 0.0
    %312 = vmatprep.subr.mxu0 0.0
    %313 = vmatpush1.msra.mxu0 0.0
    %314 = vmatprep.subr.mxu0 0.0
    %315 = vmatpush1.msra.mxu0 0.0
    %316 = vmatprep.subr.mxu0 0.0
    %317 = vmatpush1.msra.mxu0 0.0
    %318 = vmatprep.subr.mxu0 0.0
    %319 = vmatpush1.msra.mxu0 0.0
    %320 = vmatprep.subr.mxu0 0.0
    %321 = vmatpush1.msra.mxu0 0.0
    %322 = vmatprep.subr.mxu0 0.0
    %323 = vmatpush1.msra.mxu0 0.0
    %324 = vmatprep.subr.mxu0 0.0
    %325 = vmatpush1.msra.mxu0 0.0
    %326 = vmatprep.mubr.f32.mxu0 0.0
    %327 = vmatmul.mubr.f32.gmra.mrb[0].mxu0 %v215
    %v328 = vpop.f32.mrb[0].mxu0
    %v329 = vadd.f32 %v197, %v328
    %v330 = vpop.f32.mrb[0].mxu0
    %331 = vmatprep.mubr.f32.mxu0 0.0
    %332 = vmatmul.mubr.f32.gmra.mrb[0].mxu0 %v218
    %v333 = vpop.f32.mrb[0].mxu0
    %v334 = vadd.f32 %v198, %v333
    %v335 = vpop.f32.mrb[0].mxu0
    %336 = vmatprep.mubr.f32.mxu0 0.0
    %337 = vmatmul.mubr.f32.gmra.mrb[0].mxu0 %v221
    %v338 = vpop.f32.mrb[0].mxu0
    %v339 = vadd.f32 %v199, %v338
    %v340 = vpop.f32.mrb[0].mxu0
    %341 = vmatprep.mubr.f32.mxu0 0.0
    %342 = vmatmul.mubr.f32.gmra.mrb[0].mxu0 %v224
    %v343 = vpop.f32.mrb[0].mxu0
    %v344 = vadd.f32 %v200, %v343
    %v345 = vpop.f32.mrb[0].mxu0
    %346 = vmatprep.mubr.f32.mxu0 0.0
    %347 = vmatmul.mubr.f32.gmra.mrb[0].mxu0 %v227
    %v348 = vpop.f32.mrb[0].mxu0
    %v349 = vadd.f32 %v201, %v348
    %v350 = vpop.f32.mrb[0].mxu0
    %351 = vmatprep.mubr.f32.mxu0 0.0
    %352 = vmatmul.mubr.f32.gmra.mrb[0].mxu0 %v230
    %v353 = vpop.f32.mrb[0].mxu0
    %v354 = vadd.f32 %v202, %v353
    %v355 = vpop.f32.mrb[0].mxu0
    %356 = vmatprep.mubr.f32.mxu0 0.0
    %357 = vmatmul.mubr.f32.gmra.mrb[0].mxu0 %v233
    %v358 = vpop.f32.mrb[0].mxu0
    %v359 = vadd.f32 %v203, %v358
    %v360 = vpop.f32.mrb[0].mxu0
    %361 = vmatprep.mubr.f32.mxu0 0.0
    %362 = vmatmul.mubr.f32.gmra.mrb[0].mxu0 %v236
    %v363 = vpop.f32.mrb[0].mxu0
    %v364 = vadd.f32 %v204, %v363
    %v365 = vpop.f32.mrb[0].mxu0
    %366 = vmatprep.mubr.f32.mxu0 0.0
    %367 = vmatmul.mubr.f32.gmra.mrb[0].mxu0 %v239
    %v368 = vpop.f32.mrb[0].mxu0
    %v369 = vadd.f32 %v205, %v368
    %v370 = vpop.f32.mrb[0].mxu0
    %371 = vmatprep.mubr.f32.mxu0 0.0
    %372 = vmatmul.mubr.f32.gmra.mrb[0].mxu0 %v242
    %v373 = vpop.f32.mrb[0].mxu0
    %v374 = vadd.f32 %v206, %v373
    %v375 = vpop.f32.mrb[0].mxu0
    %376 = vmatprep.mubr.f32.mxu0 0.0
    %377 = vmatmul.mubr.f32.gmra.mrb[0].mxu0 %v245
    %v378 = vpop.f32.mrb[0].mxu0
    %v379 = vadd.f32 %v207, %v378
    %v380 = vpop.f32.mrb[0].mxu0
    %381 = vmatprep.mubr.f32.mxu0 0.0
    %382 = vmatmul.mubr.f32.gmra.mrb[0].mxu0 %v248
    %v383 = vpop.f32.mrb[0].mxu0
    %v384 = vadd.f32 %v208, %v383
    %v385 = vpop.f32.mrb[0].mxu0
    %386 = vmatprep.mubr.f32.mxu0 0.0
    %387 = vmatmul.mubr.f32.gmra.mrb[0].mxu0 %v251
    %v388 = vpop.f32.mrb[0].mxu0
    %v389 = vadd.f32 %v209, %v388
    %v390 = vpop.f32.mrb[0].mxu0
    %391 = vmatprep.mubr.f32.mxu0 0.0
    %392 = vmatmul.mubr.f32.gmra.mrb[0].mxu0 %v254
    %v393 = vpop.f32.mrb[0].mxu0
    %v394 = vadd.f32 %v210, %v393
    %v395 = vpop.f32.mrb[0].mxu0
    %396 = vmatprep.mubr.f32.mxu0 0.0
    %397 = vmatmul.mubr.f32.gmra.mrb[0].mxu0 %v257
    %v398 = vpop.f32.mrb[0].mxu0
    %v399 = vadd.f32 %v211, %v398
    %v400 = vpop.f32.mrb[0].mxu0
    %401 = vmatprep.mubr.f32.mxu0 0.0
    %402 = vmatmul.mubr.f32.gmra.mrb[0].mxu0 %v260
    %v403 = vpop.f32.mrb[0].mxu0
    %v404 = vadd.f32 %v212, %v403
    %v405 = vpop.f32.mrb[0].mxu0
    %406 = vdwg.mxu0
    %v407 = vmax.f32 %v329, 0.0
    %v408 = vmax.f32 %v334, 0.0
    %v409 = vmax.f32 %v339, 0.0
    %v410 = vmax.f32 %v344, 0.0
    %v411 = vmax.f32 %v349, 0.0
    %v412 = vmax.f32 %v354, 0.0
    %v413 = vmax.f32 %v359, 0.0
    %v414 = vmax.f32 %v364, 0.0
    %v415 = vmax.f32 %v369, 0.0
    %v416 = vmax.f32 %v374, 0.0
    %v417 = vmax.f32 %v379, 0.0
    %v418 = vmax.f32 %v384, 0.0
    %v419 = vmax.f32 %v389, 0.0
    %v420 = vmax.f32 %v394, 0.0
    %v421 = vmax.f32 %v399, 0.0
    %v422 = vmax.f32 %v404, 0.0
    %v423 = vld [vmem:[#allocation6] sm:$0xff]
    %v424 = vld [vmem:[#allocation6 + $0x8] sm:$0xff]
    %v425 = vld [vmem:[#allocation6 + $0x10] sm:$0xff]
    %v426 = vld [vmem:[#allocation6 + $0x18] sm:$0xff]
    %v427 = vld [vmem:[#allocation8] sm:$0x1]
    %v429 = vlaneseq
    %v430 = vshrl.u32 %v429, 7
    %v431 = vsub.s32 0, %v430
    %v432 = vrot.slane %v427, %v431
    %v435 = vsel %vm213, %v407, 0
    %v438 = vsel %vm213, %v408, 0
    %v441 = vsel %vm213, %v409, 0
    %v444 = vsel %vm213, %v410, 0
    %v447 = vsel %vm213, %v411, 0
    %v450 = vsel %vm213, %v412, 0
    %v453 = vsel %vm213, %v413, 0
    %v456 = vsel %vm213, %v414, 0
    %v459 = vsel %vm213, %v415, 0
    %v462 = vsel %vm213, %v416, 0
    %v465 = vsel %vm213, %v417, 0
    %v468 = vsel %vm213, %v418, 0
    %v471 = vsel %vm213, %v419, 0
    %v474 = vsel %vm213, %v420, 0
    %v477 = vsel %vm213, %v421, 0
    %v480 = vsel %vm213, %v422, 0
    %482 = vmatprep.subr.mxu0 0.0
    %483 = vmatpush1.msra.mxu0 %v423
    %484 = vmatprep.subr.mxu0 0.0
    %485 = vmatpush1.msra.mxu0 %v424
    %486 = vmatprep.subr.mxu0 0.0
    %487 = vmatpush1.msra.mxu0 %v425
    %488 = vmatprep.subr.mxu0 0.0
    %489 = vmatpush1.msra.mxu0 %v426
    %490 = vmatprep.subr.mxu0 0.0
    %491 = vmatpush1.msra.mxu0 0.0
    %492 = vmatprep.subr.mxu0 0.0
    %493 = vmatpush1.msra.mxu0 0.0
    %494 = vmatprep.subr.mxu0 0.0
    %495 = vmatpush1.msra.mxu0 0.0
    %496 = vmatprep.subr.mxu0 0.0
    %497 = vmatpush1.msra.mxu0 0.0
    %498 = vmatprep.subr.mxu0 0.0
    %499 = vmatpush1.msra.mxu0 0.0
    %500 = vmatprep.subr.mxu0 0.0
    %501 = vmatpush1.msra.mxu0 0.0
    %502 = vmatprep.subr.mxu0 0.0
    %503 = vmatpush1.msra.mxu0 0.0
    %504 = vmatprep.subr.mxu0 0.0
    %505 = vmatpush1.msra.mxu0 0.0
    %506 = vmatprep.subr.mxu0 0.0
    %507 = vmatpush1.msra.mxu0 0.0
    %508 = vmatprep.subr.mxu0 0.0
    %509 = vmatpush1.msra.mxu0 0.0
    %510 = vmatprep.subr.mxu0 0.0
    %511 = vmatpush1.msra.mxu0 0.0
    %512 = vmatprep.subr.mxu0 0.0
    %513 = vmatpush1.msra.mxu0 0.0
    %514 = vmatprep.subr.mxu0 0.0
    %515 = vmatpush1.msra.mxu0 0.0
    %516 = vmatprep.subr.mxu0 0.0
    %517 = vmatpush1.msra.mxu0 0.0
    %518 = vmatprep.subr.mxu0 0.0
    %519 = vmatpush1.msra.mxu0 0.0
    %520 = vmatprep.subr.mxu0 0.0
    %521 = vmatpush1.msra.mxu0 0.0
    %522 = vmatprep.subr.mxu0 0.0
    %523 = vmatpush1.msra.mxu0 0.0
    %524 = vmatprep.subr.mxu0 0.0
    %525 = vmatpush1.msra.mxu0 0.0
    %526 = vmatprep.subr.mxu0 0.0
    %527 = vmatpush1.msra.mxu0 0.0
    %528 = vmatprep.subr.mxu0 0.0
    %529 = vmatpush1.msra.mxu0 0.0
    %530 = vmatprep.subr.mxu0 0.0
    %531 = vmatpush1.msra.mxu0 0.0
    %532 = vmatprep.subr.mxu0 0.0
    %533 = vmatpush1.msra.mxu0 0.0
    %534 = vmatprep.subr.mxu0 0.0
    %535 = vmatpush1.msra.mxu0 0.0
    %536 = vmatprep.subr.mxu0 0.0
    %537 = vmatpush1.msra.mxu0 0.0
    %538 = vmatprep.subr.mxu0 0.0
    %539 = vmatpush1.msra.mxu0 0.0
    %540 = vmatprep.subr.mxu0 0.0
    %541 = vmatpush1.msra.mxu0 0.0
    %542 = vmatprep.subr.mxu0 0.0
    %543 = vmatpush1.msra.mxu0 0.0
    %544 = vmatprep.subr.mxu0 0.0
    %545 = vmatpush1.msra.mxu0 0.0
    %546 = vmatprep.mubr.f32.mxu0 0.0
    %547 = vmatmul.mubr.f32.gmra.mrb[0].mxu0 %v435
    %v548 = vpop.f32.mrb[0].mxu0
    %v549 = vadd.f32 %v432, %v548
    %v550 = vpop.f32.mrb[0].mxu0
    %551 = vmatprep.mubr.f32.mxu0 0.0
    %552 = vmatmul.mubr.f32.gmra.mrb[0].mxu0 %v438
    %v553 = vpop.f32.mrb[0].mxu0
    %v554 = vadd.f32 %v432, %v553
    %v555 = vpop.f32.mrb[0].mxu0
    %556 = vmatprep.mubr.f32.mxu0 0.0
    %557 = vmatmul.mubr.f32.gmra.mrb[0].mxu0 %v441
    %v558 = vpop.f32.mrb[0].mxu0
    %v559 = vadd.f32 %v432, %v558
    %v560 = vpop.f32.mrb[0].mxu0
    %561 = vmatprep.mubr.f32.mxu0 0.0
    %562 = vmatmul.mubr.f32.gmra.mrb[0].mxu0 %v444
    %v563 = vpop.f32.mrb[0].mxu0
    %v564 = vadd.f32 %v432, %v563
    %v565 = vpop.f32.mrb[0].mxu0
    %566 = vmatprep.mubr.f32.mxu0 0.0
    %567 = vmatmul.mubr.f32.gmra.mrb[0].mxu0 %v447
    %v568 = vpop.f32.mrb[0].mxu0
    %v569 = vadd.f32 %v432, %v568
    %v570 = vpop.f32.mrb[0].mxu0
    %571 = vmatprep.mubr.f32.mxu0 0.0
    %572 = vmatmul.mubr.f32.gmra.mrb[0].mxu0 %v450
    %v573 = vpop.f32.mrb[0].mxu0
    %v574 = vadd.f32 %v432, %v573
    %v575 = vpop.f32.mrb[0].mxu0
    %576 = vmatprep.mubr.f32.mxu0 0.0
    %577 = vmatmul.mubr.f32.gmra.mrb[0].mxu0 %v453
    %v578 = vpop.f32.mrb[0].mxu0
    %v579 = vadd.f32 %v432, %v578
    %v580 = vpop.f32.mrb[0].mxu0
    %581 = vmatprep.mubr.f32.mxu0 0.0
    %582 = vmatmul.mubr.f32.gmra.mrb[0].mxu0 %v456
    %v583 = vpop.f32.mrb[0].mxu0
    %v584 = vadd.f32 %v432, %v583
    %v585 = vpop.f32.mrb[0].mxu0
    %586 = vmatprep.mubr.f32.mxu0 0.0
    %587 = vmatmul.mubr.f32.gmra.mrb[0].mxu0 %v459
    %v588 = vpop.f32.mrb[0].mxu0
    %v589 = vadd.f32 %v432, %v588
    %v590 = vpop.f32.mrb[0].mxu0
    %591 = vmatprep.mubr.f32.mxu0 0.0
    %592 = vmatmul.mubr.f32.gmra.mrb[0].mxu0 %v462
    %v593 = vpop.f32.mrb[0].mxu0
    %v594 = vadd.f32 %v432, %v593
    %v595 = vpop.f32.mrb[0].mxu0
    %596 = vmatprep.mubr.f32.mxu0 0.0
    %597 = vmatmul.mubr.f32.gmra.mrb[0].mxu0 %v465
    %v598 = vpop.f32.mrb[0].mxu0
    %v599 = vadd.f32 %v432, %v598
    %v600 = vpop.f32.mrb[0].mxu0
    %601 = vmatprep.mubr.f32.mxu0 0.0
    %602 = vmatmul.mubr.f32.gmra.mrb[0].mxu0 %v468
    %v603 = vpop.f32.mrb[0].mxu0
    %v604 = vadd.f32 %v432, %v603
    %v605 = vpop.f32.mrb[0].mxu0
    %606 = vmatprep.mubr.f32.mxu0 0.0
    %607 = vmatmul.mubr.f32.gmra.mrb[0].mxu0 %v471
    %v608 = vpop.f32.mrb[0].mxu0
    %v609 = vadd.f32 %v432, %v608
    %v610 = vpop.f32.mrb[0].mxu0
    %611 = vmatprep.mubr.f32.mxu0 0.0
    %612 = vmatmul.mubr.f32.gmra.mrb[0].mxu0 %v474
    %v613 = vpop.f32.mrb[0].mxu0
    %v614 = vadd.f32 %v432, %v613
    %v615 = vpop.f32.mrb[0].mxu0
    %616 = vmatprep.mubr.f32.mxu0 0.0
    %617 = vmatmul.mubr.f32.gmra.mrb[0].mxu0 %v477
    %v618 = vpop.f32.mrb[0].mxu0
    %v619 = vadd.f32 %v432, %v618
    %v620 = vpop.f32.mrb[0].mxu0
    %621 = vmatprep.mubr.f32.mxu0 0.0
    %622 = vmatmul.mubr.f32.gmra.mrb[0].mxu0 %v480
    %v623 = vpop.f32.mrb[0].mxu0
    %v624 = vadd.f32 %v432, %v623
    %v625 = vpop.f32.mrb[0].mxu0
    %626 = vdwg.mxu0
    %v627 = vmax.f32 %v549, 0.0
    %v628 = vmax.f32 %v554, 0.0
    %v629 = vmax.f32 %v559, 0.0
    %v630 = vmax.f32 %v564, 0.0
    %v631 = vmax.f32 %v569, 0.0
    %v632 = vmax.f32 %v574, 0.0
    %v633 = vmax.f32 %v579, 0.0
    %v634 = vmax.f32 %v584, 0.0
    %v635 = vmax.f32 %v589, 0.0
    %v636 = vmax.f32 %v594, 0.0
    %v637 = vmax.f32 %v599, 0.0
    %v638 = vmax.f32 %v604, 0.0
    %v639 = vmax.f32 %v609, 0.0
    %v640 = vmax.f32 %v614, 0.0
    %v641 = vmax.f32 %v619, 0.0
    %v642 = vmax.f32 %v624, 0.0
    %v643 = vld [vmem:[%s5] sm:$0xff]
    %v644 = vld [vmem:[%s5 + $0x8] sm:$0xff]
    %v645 = vld [vmem:[%s5 + $0x10] sm:$0xff]
    %v646 = vld [vmem:[%s5 + $0x18] sm:$0xff]
    %v647 = vld [vmem:[%s6] sm:$0x1]
    %v649 = vlaneseq
    %v650 = vshrl.u32 %v649, 7
    %v651 = vsub.s32 0, %v650
    %v652 = vrot.slane %v647, %v651
    %v655 = vsel %vm213, %v627, 0
    %v658 = vsel %vm213, %v628, 0
    %v661 = vsel %vm213, %v629, 0
    %v664 = vsel %vm213, %v630, 0
    %v667 = vsel %vm213, %v631, 0
    %v670 = vsel %vm213, %v632, 0
    %v673 = vsel %vm213, %v633, 0
    %v676 = vsel %vm213, %v634, 0
    %v679 = vsel %vm213, %v635, 0
    %v682 = vsel %vm213, %v636, 0
    %v685 = vsel %vm213, %v637, 0
    %v688 = vsel %vm213, %v638, 0
    %v691 = vsel %vm213, %v639, 0
    %v694 = vsel %vm213, %v640, 0
    %v697 = vsel %vm213, %v641, 0
    %v700 = vsel %vm213, %v642, 0
    %702 = vmatprep.subr.mxu0 0.0
    %703 = vmatpush1.msra.mxu0 %v643
    %704 = vmatprep.subr.mxu0 0.0
    %705 = vmatpush1.msra.mxu0 %v644
    %706 = vmatprep.subr.mxu0 0.0
    %707 = vmatpush1.msra.mxu0 %v645
    %708 = vmatprep.subr.mxu0 0.0
    %709 = vmatpush1.msra.mxu0 %v646
    %710 = vmatprep.subr.mxu0 0.0
    %711 = vmatpush1.msra.mxu0 0.0
    %712 = vmatprep.subr.mxu0 0.0
    %713 = vmatpush1.msra.mxu0 0.0
    %714 = vmatprep.subr.mxu0 0.0
    %715 = vmatpush1.msra.mxu0 0.0
    %716 = vmatprep.subr.mxu0 0.0
    %717 = vmatpush1.msra.mxu0 0.0
    %718 = vmatprep.subr.mxu0 0.0
    %719 = vmatpush1.msra.mxu0 0.0
    %720 = vmatprep.subr.mxu0 0.0
    %721 = vmatpush1.msra.mxu0 0.0
    %722 = vmatprep.subr.mxu0 0.0
    %723 = vmatpush1.msra.mxu0 0.0
    %724 = vmatprep.subr.mxu0 0.0
    %725 = vmatpush1.msra.mxu0 0.0
    %726 = vmatprep.subr.mxu0 0.0
    %727 = vmatpush1.msra.mxu0 0.0
    %728 = vmatprep.subr.mxu0 0.0
    %729 = vmatpush1.msra.mxu0 0.0
    %730 = vmatprep.subr.mxu0 0.0
    %731 = vmatpush1.msra.mxu0 0.0
    %732 = vmatprep.subr.mxu0 0.0
    %733 = vmatpush1.msra.mxu0 0.0
    %734 = vmatprep.subr.mxu0 0.0
    %735 = vmatpush1.msra.mxu0 0.0
    %736 = vmatprep.subr.mxu0 0.0
    %737 = vmatpush1.msra.mxu0 0.0
    %738 = vmatprep.subr.mxu0 0.0
    %739 = vmatpush1.msra.mxu0 0.0
    %740 = vmatprep.subr.mxu0 0.0
    %741 = vmatpush1.msra.mxu0 0.0
    %742 = vmatprep.subr.mxu0 0.0
    %743 = vmatpush1.msra.mxu0 0.0
    %744 = vmatprep.subr.mxu0 0.0
    %745 = vmatpush1.msra.mxu0 0.0
    %746 = vmatprep.subr.mxu0 0.0
    %747 = vmatpush1.msra.mxu0 0.0
    %748 = vmatprep.subr.mxu0 0.0
    %749 = vmatpush1.msra.mxu0 0.0
    %750 = vmatprep.subr.mxu0 0.0
    %751 = vmatpush1.msra.mxu0 0.0
    %752 = vmatprep.subr.mxu0 0.0
    %753 = vmatpush1.msra.mxu0 0.0
    %754 = vmatprep.subr.mxu0 0.0
    %755 = vmatpush1.msra.mxu0 0.0
    %756 = vmatprep.subr.mxu0 0.0
    %757 = vmatpush1.msra.mxu0 0.0
    %758 = vmatprep.subr.mxu0 0.0
    %759 = vmatpush1.msra.mxu0 0.0
    %760 = vmatprep.subr.mxu0 0.0
    %761 = vmatpush1.msra.mxu0 0.0
    %762 = vmatprep.subr.mxu0 0.0
    %763 = vmatpush1.msra.mxu0 0.0
    %764 = vmatprep.subr.mxu0 0.0
    %765 = vmatpush1.msra.mxu0 0.0
    %766 = vmatprep.mubr.f32.mxu0 0.0
    %767 = vmatmul.mubr.f32.gmra.mrb[0].mxu0 %v655
    %v768 = vpop.f32.mrb[0].mxu0
    %v769 = vadd.f32 %v652, %v768
    %v770 = vpop.f32.mrb[0].mxu0
    %771 = vmatprep.mubr.f32.mxu0 0.0
    %772 = vmatmul.mubr.f32.gmra.mrb[0].mxu0 %v658
    %v773 = vpop.f32.mrb[0].mxu0
    %v774 = vadd.f32 %v652, %v773
    %v775 = vpop.f32.mrb[0].mxu0
    %776 = vmatprep.mubr.f32.mxu0 0.0
    %777 = vmatmul.mubr.f32.gmra.mrb[0].mxu0 %v661
    %v778 = vpop.f32.mrb[0].mxu0
    %v779 = vadd.f32 %v652, %v778
    %v780 = vpop.f32.mrb[0].mxu0
    %781 = vmatprep.mubr.f32.mxu0 0.0
    %782 = vmatmul.mubr.f32.gmra.mrb[0].mxu0 %v664
    %v783 = vpop.f32.mrb[0].mxu0
    %v784 = vadd.f32 %v652, %v783
    %v785 = vpop.f32.mrb[0].mxu0
    %786 = vmatprep.mubr.f32.mxu0 0.0
    %787 = vmatmul.mubr.f32.gmra.mrb[0].mxu0 %v667
    %v788 = vpop.f32.mrb[0].mxu0
    %v789 = vadd.f32 %v652, %v788
    %v790 = vpop.f32.mrb[0].mxu0
    %791 = vmatprep.mubr.f32.mxu0 0.0
    %792 = vmatmul.mubr.f32.gmra.mrb[0].mxu0 %v670
    %v793 = vpop.f32.mrb[0].mxu0
    %v794 = vadd.f32 %v652, %v793
    %v795 = vpop.f32.mrb[0].mxu0
    %796 = vmatprep.mubr.f32.mxu0 0.0
    %797 = vmatmul.mubr.f32.gmra.mrb[0].mxu0 %v673
    %v798 = vpop.f32.mrb[0].mxu0
    %v799 = vadd.f32 %v652, %v798
    %v800 = vpop.f32.mrb[0].mxu0
    %801 = vmatprep.mubr.f32.mxu0 0.0
    %802 = vmatmul.mubr.f32.gmra.mrb[0].mxu0 %v676
    %v803 = vpop.f32.mrb[0].mxu0
    %v804 = vadd.f32 %v652, %v803
    %v805 = vpop.f32.mrb[0].mxu0
    %806 = vmatprep.mubr.f32.mxu0 0.0
    %807 = vmatmul.mubr.f32.gmra.mrb[0].mxu0 %v679
    %v808 = vpop.f32.mrb[0].mxu0
    %v809 = vadd.f32 %v652, %v808
    %v810 = vpop.f32.mrb[0].mxu0
    %811 = vmatprep.mubr.f32.mxu0 0.0
    %812 = vmatmul.mubr.f32.gmra.mrb[0].mxu0 %v682
    %v813 = vpop.f32.mrb[0].mxu0
    %v814 = vadd.f32 %v652, %v813
    %v815 = vpop.f32.mrb[0].mxu0
    %816 = vmatprep.mubr.f32.mxu0 0.0
    %817 = vmatmul.mubr.f32.gmra.mrb[0].mxu0 %v685
    %v818 = vpop.f32.mrb[0].mxu0
    %v819 = vadd.f32 %v652, %v818
    %v820 = vpop.f32.mrb[0].mxu0
    %821 = vmatprep.mubr.f32.mxu0 0.0
    %822 = vmatmul.mubr.f32.gmra.mrb[0].mxu0 %v688
    %v823 = vpop.f32.mrb[0].mxu0
    %v824 = vadd.f32 %v652, %v823
    %v825 = vpop.f32.mrb[0].mxu0
    %826 = vmatprep.mubr.f32.mxu0 0.0
    %827 = vmatmul.mubr.f32.gmra.mrb[0].mxu0 %v691
    %v828 = vpop.f32.mrb[0].mxu0
    %v829 = vadd.f32 %v652, %v828
    %v830 = vpop.f32.mrb[0].mxu0
    %831 = vmatprep.mubr.f32.mxu0 0.0
    %832 = vmatmul.mubr.f32.gmra.mrb[0].mxu0 %v694
    %v833 = vpop.f32.mrb[0].mxu0
    %v834 = vadd.f32 %v652, %v833
    %v835 = vpop.f32.mrb[0].mxu0
    %836 = vmatprep.mubr.f32.mxu0 0.0
    %837 = vmatmul.mubr.f32.gmra.mrb[0].mxu0 %v697
    %v838 = vpop.f32.mrb[0].mxu0
    %v839 = vadd.f32 %v652, %v838
    %v840 = vpop.f32.mrb[0].mxu0
    %841 = vmatprep.mubr.f32.mxu0 0.0
    %842 = vmatmul.mubr.f32.gmra.mrb[0].mxu0 %v700
    %v843 = vpop.f32.mrb[0].mxu0
    %v844 = vadd.f32 %v652, %v843
    %v845 = vpop.f32.mrb[0].mxu0
    %846 = vdwg.mxu0
    %855 = vrot.lane.b32.xlu0 %v769, 96
    %v856 = vpop.permute.xlu0 %855
    %857 = vrot.lane.b32.xlu0 %v774, 96
    %v858 = vpop.permute.xlu0 %857
    %859 = vrot.lane.b32.xlu0 %v779, 96
    %v860 = vpop.permute.xlu0 %859
    %861 = vrot.lane.b32.xlu0 %v784, 96
    %v862 = vpop.permute.xlu0 %861
    %863 = vrot.lane.b32.xlu0 %v789, 96
    %v864 = vpop.permute.xlu0 %863
    %865 = vrot.lane.b32.xlu0 %v794, 96
    %v866 = vpop.permute.xlu0 %865
    %867 = vrot.lane.b32.xlu0 %v799, 96
    %v868 = vpop.permute.xlu0 %867
    %869 = vrot.lane.b32.xlu0 %v804, 96
    %v870 = vpop.permute.xlu0 %869
    %vm871 = vcmask 64512
    %v872 = vsel %vm871, %v769, 0
    %v874 = vsel %vm871, %v774, 0
    %v876 = vsel %vm871, %v779, 0
    %v878 = vsel %vm871, %v784, 0
    %v880 = vsel %vm871, %v789, 0
    %v882 = vsel %vm871, %v794, 0
    %v884 = vsel %vm871, %v799, 0
    %v886 = vsel %vm871, %v804, 0
    %v888 = vsel %vm871, %v856, 0
    %v890 = vsel %vm871, %v858, 0
    %v892 = vsel %vm871, %v860, 0
    %v894 = vsel %vm871, %v862, 0
    %v896 = vsel %vm871, %v864, 0
    %v898 = vsel %vm871, %v866, 0
    %v900 = vsel %vm871, %v868, 0
    %v902 = vsel %vm871, %v870, 0
    %904 = vmatprep.subr.mxu0 0.0
    %905 = vmatpush1.xpose.msra.mxu0 %v888
    %906 = vmatprep.subr.mxu0 0.0
    %907 = vmatpush1.xpose.msra.mxu0 %v890
    %908 = vmatprep.subr.mxu0 0.0
    %909 = vmatpush1.xpose.msra.mxu0 %v892
    %910 = vmatprep.subr.mxu0 0.0
    %911 = vmatpush1.xpose.msra.mxu0 %v894
    %912 = vmatprep.subr.mxu0 0.0
    %913 = vmatpush1.xpose.msra.mxu0 %v896
    %914 = vmatprep.subr.mxu0 0.0
    %915 = vmatpush1.xpose.msra.mxu0 %v898
    %916 = vmatprep.subr.mxu0 0.0
    %917 = vmatpush1.xpose.msra.mxu0 %v900
    %918 = vmatprep.subr.mxu0 0.0
    %919 = vmatpush1.xpose.msra.mxu0 %v902
    %920 = vmatprep.subr.mxu0 0.0
    %921 = vmatpush1.xpose.msra.mxu0 0.0
    %922 = vmatprep.subr.mxu0 0.0
    %923 = vmatpush1.xpose.msra.mxu0 0.0
    %924 = vmatprep.subr.mxu0 0.0
    %925 = vmatpush1.xpose.msra.mxu0 0.0
    %926 = vmatprep.subr.mxu0 0.0
    %927 = vmatpush1.xpose.msra.mxu0 0.0
    %928 = vmatprep.subr.mxu0 0.0
    %929 = vmatpush1.xpose.msra.mxu0 0.0
    %930 = vmatprep.subr.mxu0 0.0
    %931 = vmatpush1.xpose.msra.mxu0 0.0
    %932 = vmatprep.subr.mxu0 0.0
    %933 = vmatpush1.xpose.msra.mxu0 0.0
    %934 = vmatprep.subr.mxu0 0.0
    %935 = vmatpush1.xpose.msra.mxu0 0.0
    %936 = vmatprep.subr.mxu0 0.0
    %937 = vmatpush1.xpose.msra.mxu0 0.0
    %938 = vmatprep.subr.mxu0 0.0
    %939 = vmatpush1.xpose.msra.mxu0 0.0
    %940 = vmatprep.subr.mxu0 0.0
    %941 = vmatpush1.xpose.msra.mxu0 0.0
    %942 = vmatprep.subr.mxu0 0.0
    %943 = vmatpush1.xpose.msra.mxu0 0.0
    %944 = vmatprep.subr.mxu0 0.0
    %945 = vmatpush1.xpose.msra.mxu0 0.0
    %946 = vmatprep.subr.mxu0 0.0
    %947 = vmatpush1.xpose.msra.mxu0 0.0
    %948 = vmatprep.subr.mxu0 0.0
    %949 = vmatpush1.xpose.msra.mxu0 0.0
    %950 = vmatprep.subr.mxu0 0.0
    %951 = vmatpush1.xpose.msra.mxu0 0.0
    %952 = vmatprep.subr.mxu0 0.0
    %953 = vmatpush1.xpose.msra.mxu0 0.0
    %954 = vmatprep.subr.mxu0 0.0
    %955 = vmatpush1.xpose.msra.mxu0 0.0
    %956 = vmatprep.subr.mxu0 0.0
    %957 = vmatpush1.xpose.msra.mxu0 0.0
    %958 = vmatprep.subr.mxu0 0.0
    %959 = vmatpush1.xpose.msra.mxu0 0.0
    %960 = vmatprep.subr.mxu0 0.0
    %961 = vmatpush1.xpose.msra.mxu0 0.0
    %962 = vmatprep.subr.mxu0 0.0
    %963 = vmatpush1.xpose.msra.mxu0 0.0
    %964 = vmatprep.subr.mxu0 0.0
    %965 = vmatpush1.xpose.msra.mxu0 0.0
    %966 = vmatprep.subr.mxu0 0.0
    %967 = vmatpush1.xpose.msra.mxu0 0.0
    %968 = vmatprep.mubr.f32.mxu0 0.0
    %969 = vmatmul.mubr.f32.gmra.mrb[0].mxu0 %v872
    %v970 = vpop.f32.mrb[0].mxu0
    %v971 = vadd.f32 0.0, %v970
    %v972 = vpop.f32.mrb[0].mxu0
    %973 = vmatprep.mubr.f32.mxu0 0.0
    %974 = vmatmul.mubr.f32.gmra.mrb[0].mxu0 %v874
    %v975 = vpop.f32.mrb[0].mxu0
    %v976 = vadd.f32 0.0, %v975
    %v977 = vpop.f32.mrb[0].mxu0
    %978 = vmatprep.mubr.f32.mxu0 0.0
    %979 = vmatmul.mubr.f32.gmra.mrb[0].mxu0 %v876
    %v980 = vpop.f32.mrb[0].mxu0
    %v981 = vadd.f32 0.0, %v980
    %v982 = vpop.f32.mrb[0].mxu0
    %983 = vmatprep.mubr.f32.mxu0 0.0
    %984 = vmatmul.mubr.f32.gmra.mrb[0].mxu0 %v878
    %v985 = vpop.f32.mrb[0].mxu0
    %v986 = vadd.f32 0.0, %v985
    %v987 = vpop.f32.mrb[0].mxu0
    %988 = vmatprep.mubr.f32.mxu0 0.0
    %989 = vmatmul.mubr.f32.gmra.mrb[0].mxu0 %v880
    %v990 = vpop.f32.mrb[0].mxu0
    %v991 = vadd.f32 0.0, %v990
    %v992 = vpop.f32.mrb[0].mxu0
    %993 = vmatprep.mubr.f32.mxu0 0.0
    %994 = vmatmul.mubr.f32.gmra.mrb[0].mxu0 %v882
    %v995 = vpop.f32.mrb[0].mxu0
    %v996 = vadd.f32 0.0, %v995
    %v997 = vpop.f32.mrb[0].mxu0
    %998 = vmatprep.mubr.f32.mxu0 0.0
    %999 = vmatmul.mubr.f32.gmra.mrb[0].mxu0 %v884
    %v1000 = vpop.f32.mrb[0].mxu0
    %v1001 = vadd.f32 0.0, %v1000
    %v1002 = vpop.f32.mrb[0].mxu0
    %1003 = vmatprep.mubr.f32.mxu0 0.0
    %1004 = vmatmul.mubr.f32.gmra.mrb[0].mxu0 %v886
    %v1005 = vpop.f32.mrb[0].mxu0
    %v1006 = vadd.f32 0.0, %v1005
    %v1007 = vpop.f32.mrb[0].mxu0
    %1008 = vdwg.mxu0
    %vm1009 = vcmask 523264
    %v1010 = vsel %vm1009, %v971, -inf
    %1011 = vmax.xlane.f32.xlu0 %v1010
    %v1012 = vpop.xlane.xlu0 %1011
    %v1013 = vsel %vm1009, %v976, -inf
    %1014 = vmax.xlane.f32.xlu0 %v1013
    %v1015 = vpop.xlane.xlu0 %1014
    %v1016 = vsel %vm1009, %v981, -inf
    %1017 = vmax.xlane.f32.xlu0 %v1016
    %v1018 = vpop.xlane.xlu0 %1017
    %v1019 = vsel %vm1009, %v986, -inf
    %1020 = vmax.xlane.f32.xlu0 %v1019
    %v1021 = vpop.xlane.xlu0 %1020
    %v1022 = vsel %vm1009, %v991, -inf
    %1023 = vmax.xlane.f32.xlu0 %v1022
    %v1024 = vpop.xlane.xlu0 %1023
    %v1025 = vsel %vm1009, %v996, -inf
    %1026 = vmax.xlane.f32.xlu0 %v1025
    %v1027 = vpop.xlane.xlu0 %1026
    %v1028 = vsel %vm1009, %v1001, -inf
    %1029 = vmax.xlane.f32.xlu0 %v1028
    %v1030 = vpop.xlane.xlu0 %1029
    %v1031 = vsel %vm1009, %v1006, -inf
    %1032 = vmax.xlane.f32.xlu0 %v1031
    %v1033 = vpop.xlane.xlu0 %1032
    %v1034 = vsub.f32 %v971, %v1012
    %v1035 = vsub.f32 %v976, %v1015
    %v1036 = vsub.f32 %v981, %v1018
    %v1037 = vsub.f32 %v986, %v1021
    %v1038 = vsub.f32 %v991, %v1024
    %v1039 = vsub.f32 %v996, %v1027
    %v1040 = vsub.f32 %v1001, %v1030
    %v1041 = vsub.f32 %v1006, %v1033
    %v1042 = vmul.f32 %v1034, 1.442695
    %v1043 = vpow.pop %v1042
    %v1044 = vmul.f32 %v1035, 1.442695
    %v1045 = vpow.pop %v1044
    %v1046 = vmul.f32 %v1036, 1.442695
    %v1047 = vpow.pop %v1046
    %v1048 = vmul.f32 %v1037, 1.442695
    %v1049 = vpow.pop %v1048
    %v1050 = vmul.f32 %v1038, 1.442695
    %v1051 = vpow.pop %v1050
    %v1052 = vmul.f32 %v1039, 1.442695
    %v1053 = vpow.pop %v1052
    %v1054 = vmul.f32 %v1040, 1.442695
    %v1055 = vpow.pop %v1054
    %v1056 = vmul.f32 %v1041, 1.442695
    %v1057 = vpow.pop %v1056
    %v1058 = vsel %vm1009, %v1043, 0.0
    %1059 = vadd.xlane.f32.xlu0 %v1058
    %v1060 = vpop.xlane.xlu0 %1059
    %v1061 = vsel %vm1009, %v1045, 0.0
    %1062 = vadd.xlane.f32.xlu0 %v1061
    %v1063 = vpop.xlane.xlu0 %1062
    %v1064 = vsel %vm1009, %v1047, 0.0
    %1065 = vadd.xlane.f32.xlu0 %v1064
    %v1066 = vpop.xlane.xlu0 %1065
    %v1067 = vsel %vm1009, %v1049, 0.0
    %1068 = vadd.xlane.f32.xlu0 %v1067
    %v1069 = vpop.xlane.xlu0 %1068
    %v1070 = vsel %vm1009, %v1051, 0.0
    %1071 = vadd.xlane.f32.xlu0 %v1070
    %v1072 = vpop.xlane.xlu0 %1071
    %v1073 = vsel %vm1009, %v1053, 0.0
    %1074 = vadd.xlane.f32.xlu0 %v1073
    %v1075 = vpop.xlane.xlu0 %1074
    %v1076 = vsel %vm1009, %v1055, 0.0
    %1077 = vadd.xlane.f32.xlu0 %v1076
    %v1078 = vpop.xlane.xlu0 %1077
    %v1079 = vsel %vm1009, %v1057, 0.0
    %1080 = vadd.xlane.f32.xlu0 %v1079
    %v1081 = vpop.xlane.xlu0 %1080
    %v1082 = vrcp.pop %v1060
    %v1083 = vrcp.pop %v1063
    %v1084 = vrcp.pop %v1066
    %v1085 = vrcp.pop %v1069
    %v1086 = vrcp.pop %v1072
    %v1087 = vrcp.pop %v1075
    %v1088 = vrcp.pop %v1078
    %v1089 = vrcp.pop %v1081
    %v1090 = vmul.f32 %v1043, %v1082
    %v1091 = vmul.f32 %v1045, %v1083
    %v1092 = vmul.f32 %v1047, %v1084
    %v1093 = vmul.f32 %v1049, %v1085
    %v1094 = vmul.f32 %v1051, %v1086
    %v1095 = vmul.f32 %v1053, %v1087
    %v1096 = vmul.f32 %v1055, %v1088
    %v1097 = vmul.f32 %v1057, %v1089
    %1098 = vrot.lane.b32.xlu0 %v769, 64
    %v1099 = vpop.permute.xlu0 %1098
    %1100 = vrot.lane.b32.xlu0 %v774, 64
    %v1101 = vpop.permute.xlu0 %1100
    %1102 = vrot.lane.b32.xlu0 %v779, 64
    %v1103 = vpop.permute.xlu0 %1102
    %1104 = vrot.lane.b32.xlu0 %v784, 64
    %v1105 = vpop.permute.xlu0 %1104
    %1106 = vrot.lane.b32.xlu0 %v789, 64
    %v1107 = vpop.permute.xlu0 %1106
    %1108 = vrot.lane.b32.xlu0 %v794, 64
    %v1109 = vpop.permute.xlu0 %1108
    %1110 = vrot.lane.b32.xlu0 %v799, 64
    %v1111 = vpop.permute.xlu0 %1110
    %1112 = vrot.lane.b32.xlu0 %v804, 64
    %v1113 = vpop.permute.xlu0 %1112
    %v1123 = vsel %vm1009, %v1090, 0
    %v1126 = vsel %vm1009, %v1091, 0
    %v1129 = vsel %vm1009, %v1092, 0
    %v1132 = vsel %vm1009, %v1093, 0
    %v1135 = vsel %vm1009, %v1094, 0
    %v1138 = vsel %vm1009, %v1095, 0
    %v1141 = vsel %vm1009, %v1096, 0
    %v1144 = vsel %vm1009, %v1097, 0
    %1146 = vmatprep.subr.mxu0 0.0
    %1147 = vmatpush1.msra.mxu0 %v1099
    %1148 = vmatprep.subr.mxu0 0.0
    %1149 = vmatpush1.msra.mxu0 %v1101
    %1150 = vmatprep.subr.mxu0 0.0
    %1151 = vmatpush1.msra.mxu0 %v1103
    %1152 = vmatprep.subr.mxu0 0.0
    %1153 = vmatpush1.msra.mxu0 %v1105
    %1154 = vmatprep.subr.mxu0 0.0
    %1155 = vmatpush1.msra.mxu0 %v1107
    %1156 = vmatprep.subr.mxu0 0.0
    %1157 = vmatpush1.msra.mxu0 %v1109
    %1158 = vmatprep.subr.mxu0 0.0
    %1159 = vmatpush1.msra.mxu0 %v1111
    %1160 = vmatprep.subr.mxu0 0.0
    %1161 = vmatpush1.msra.mxu0 %v1113
    %1162 = vmatprep.subr.mxu0 0.0
    %1163 = vmatpush1.msra.mxu0 0.0
    %1164 = vmatprep.subr.mxu0 0.0
    %1165 = vmatpush1.msra.mxu0 0.0
    %1166 = vmatprep.subr.mxu0 0.0
    %1167 = vmatpush1.msra.mxu0 0.0
    %1168 = vmatprep.subr.mxu0 0.0
    %1169 = vmatpush1.msra.mxu0 0.0
    %1170 = vmatprep.subr.mxu0 0.0
    %1171 = vmatpush1.msra.mxu0 0.0
    %1172 = vmatprep.subr.mxu0 0.0
    %1173 = vmatpush1.msra.mxu0 0.0
    %1174 = vmatprep.subr.mxu0 0.0
    %1175 = vmatpush1.msra.mxu0 0.0
    %1176 = vmatprep.subr.mxu0 0.0
    %1177 = vmatpush1.msra.mxu0 0.0
    %1178 = vmatprep.subr.mxu0 0.0
    %1179 = vmatpush1.msra.mxu0 0.0
    %1180 = vmatprep.subr.mxu0 0.0
    %1181 = vmatpush1.msra.mxu0 0.0
    %1182 = vmatprep.subr.mxu0 0.0
    %1183 = vmatpush1.msra.mxu0 0.0
    %1184 = vmatprep.subr.mxu0 0.0
    %1185 = vmatpush1.msra.mxu0 0.0
    %1186 = vmatprep.subr.mxu0 0.0
    %1187 = vmatpush1.msra.mxu0 0.0
    %1188 = vmatprep.subr.mxu0 0.0
    %1189 = vmatpush1.msra.mxu0 0.0
    %1190 = vmatprep.subr.mxu0 0.0
    %1191 = vmatpush1.msra.mxu0 0.0
    %1192 = vmatprep.subr.mxu0 0.0
    %1193 = vmatpush1.msra.mxu0 0.0
    %1194 = vmatprep.subr.mxu0 0.0
    %1195 = vmatpush1.msra.mxu0 0.0
    %1196 = vmatprep.subr.mxu0 0.0
    %1197 = vmatpush1.msra.mxu0 0.0
    %1198 = vmatprep.subr.mxu0 0.0
    %1199 = vmatpush1.msra.mxu0 0.0
    %1200 = vmatprep.subr.mxu0 0.0
    %1201 = vmatpush1.msra.mxu0 0.0
    %1202 = vmatprep.subr.mxu0 0.0
    %1203 = vmatpush1.msra.mxu0 0.0
    %1204 = vmatprep.subr.mxu0 0.0
    %1205 = vmatpush1.msra.mxu0 0.0
    %1206 = vmatprep.subr.mxu0 0.0
    %1207 = vmatpush1.msra.mxu0 0.0
    %1208 = vmatprep.subr.mxu0 0.0
    %1209 = vmatpush1.msra.mxu0 0.0
    %1210 = vmatprep.mubr.f32.mxu0 0.0
    %1211 = vmatmul.mubr.f32.gmra.mrb[0].mxu0 %v1123
    %v1212 = vpop.f32.mrb[0].mxu0
    %v1213 = vadd.f32 0.0, %v1212
    %v1214 = vpop.f32.mrb[0].mxu0
    %1215 = vmatprep.mubr.f32.mxu0 0.0
    %1216 = vmatmul.mubr.f32.gmra.mrb[0].mxu0 %v1126
    %v1217 = vpop.f32.mrb[0].mxu0
    %v1218 = vadd.f32 0.0, %v1217
    %v1219 = vpop.f32.mrb[0].mxu0
    %1220 = vmatprep.mubr.f32.mxu0 0.0
    %1221 = vmatmul.mubr.f32.gmra.mrb[0].mxu0 %v1129
    %v1222 = vpop.f32.mrb[0].mxu0
    %v1223 = vadd.f32 0.0, %v1222
    %v1224 = vpop.f32.mrb[0].mxu0
    %1225 = vmatprep.mubr.f32.mxu0 0.0
    %1226 = vmatmul.mubr.f32.gmra.mrb[0].mxu0 %v1132
    %v1227 = vpop.f32.mrb[0].mxu0
    %v1228 = vadd.f32 0.0, %v1227
    %v1229 = vpop.f32.mrb[0].mxu0
    %1230 = vmatprep.mubr.f32.mxu0 0.0
    %1231 = vmatmul.mubr.f32.gmra.mrb[0].mxu0 %v1135
    %v1232 = vpop.f32.mrb[0].mxu0
    %v1233 = vadd.f32 0.0, %v1232
    %v1234 = vpop.f32.mrb[0].mxu0
    %1235 = vmatprep.mubr.f32.mxu0 0.0
    %1236 = vmatmul.mubr.f32.gmra.mrb[0].mxu0 %v1138
    %v1237 = vpop.f32.mrb[0].mxu0
    %v1238 = vadd.f32 0.0, %v1237
    %v1239 = vpop.f32.mrb[0].mxu0
    %1240 = vmatprep.mubr.f32.mxu0 0.0
    %1241 = vmatmul.mubr.f32.gmra.mrb[0].mxu0 %v1141
    %v1242 = vpop.f32.mrb[0].mxu0
    %v1243 = vadd.f32 0.0, %v1242
    %v1244 = vpop.f32.mrb[0].mxu0
    %1245 = vmatprep.mubr.f32.mxu0 0.0
    %1246 = vmatmul.mubr.f32.gmra.mrb[0].mxu0 %v1144
    %v1247 = vpop.f32.mrb[0].mxu0
    %v1248 = vadd.f32 0.0, %v1247
    %v1249 = vpop.f32.mrb[0].mxu0
    %1250 = vdwg.mxu0
    %1251 = vst.msk [vmem:[#allocation2] sm:$0xff] %vm871, %v1213
    %1252 = vst.msk [vmem:[#allocation2 + $0x8] sm:$0xff] %vm871, %v1218
    %1253 = vst.msk [vmem:[#allocation2 + $0x10] sm:$0xff] %vm871, %v1223
    %1254 = vst.msk [vmem:[#allocation2 + $0x18] sm:$0xff] %vm871, %v1228
    %1255 = vst.msk [vmem:[#allocation2 + $0x20] sm:$0xff] %vm871, %v1233
    %1256 = vst.msk [vmem:[#allocation2 + $0x28] sm:$0xff] %vm871, %v1238
    %1257 = vst.msk [vmem:[#allocation2 + $0x30] sm:$0xff] %vm871, %v1243
    %1258 = vst.msk [vmem:[#allocation2 + $0x38] sm:$0xff] %vm871, %v1248
    %1259 = vrot.lane.b32.xlu0 %v769, 120
    %v1260 = vpop.permute.xlu0 %1259
    %1261 = vrot.lane.b32.xlu0 %v774, 120
    %v1262 = vpop.permute.xlu0 %1261
    %1263 = vrot.lane.b32.xlu0 %v779, 120
    %v1264 = vpop.permute.xlu0 %1263
    %1265 = vrot.lane.b32.xlu0 %v784, 120
    %v1266 = vpop.permute.xlu0 %1265
    %1267 = vrot.lane.b32.xlu0 %v789, 120
    %v1268 = vpop.permute.xlu0 %1267
    %1269 = vrot.lane.b32.xlu0 %v794, 120
    %v1270 = vpop.permute.xlu0 %1269
    %1271 = vrot.lane.b32.xlu0 %v799, 120
    %v1272 = vpop.permute.xlu0 %1271
    %1273 = vrot.lane.b32.xlu0 %v804, 120
    %v1274 = vpop.permute.xlu0 %1273
    %1275 = vrot.lane.b32.xlu0 %v769, 88
    %v1276 = vpop.permute.xlu0 %1275
    %1277 = vrot.lane.b32.xlu0 %v774, 88
    %v1278 = vpop.permute.xlu0 %1277
    %1279 = vrot.lane.b32.xlu0 %v779, 88
    %v1280 = vpop.permute.xlu0 %1279
    %1281 = vrot.lane.b32.xlu0 %v784, 88
    %v1282 = vpop.permute.xlu0 %1281
    %1283 = vrot.lane.b32.xlu0 %v789, 88
    %v1284 = vpop.permute.xlu0 %1283
    %1285 = vrot.lane.b32.xlu0 %v794, 88
    %v1286 = vpop.permute.xlu0 %1285
    %1287 = vrot.lane.b32.xlu0 %v799, 88
    %v1288 = vpop.permute.xlu0 %1287
    %1289 = vrot.lane.b32.xlu0 %v804, 88
    %v1290 = vpop.permute.xlu0 %1289
    %v1291 = vsel %vm871, %v1260, 0
    %v1293 = vsel %vm871, %v1262, 0
    %v1295 = vsel %vm871, %v1264, 0
    %v1297 = vsel %vm871, %v1266, 0
    %v1299 = vsel %vm871, %v1268, 0
    %v1301 = vsel %vm871, %v1270, 0
    %v1303 = vsel %vm871, %v1272, 0
    %v1305 = vsel %vm871, %v1274, 0
    %v1307 = vsel %vm871, %v1276, 0
    %v1309 = vsel %vm871, %v1278, 0
    %v1311 = vsel %vm871, %v1280, 0
    %v1313 = vsel %vm871, %v1282, 0
    %v1315 = vsel %vm871, %v1284, 0
    %v1317 = vsel %vm871, %v1286, 0
    %v1319 = vsel %vm871, %v1288, 0
    %v1321 = vsel %vm871, %v1290, 0
    %1323 = vmatprep.subr.mxu0 0.0
    %1324 = vmatpush1.xpose.msra.mxu0 %v1307
    %1325 = vmatprep.subr.mxu0 0.0
    %1326 = vmatpush1.xpose.msra.mxu0 %v1309
    %1327 = vmatprep.subr.mxu0 0.0
    %1328 = vmatpush1.xpose.msra.mxu0 %v1311
    %1329 = vmatprep.subr.mxu0 0.0
    %1330 = vmatpush1.xpose.msra.mxu0 %v1313
    %1331 = vmatprep.subr.mxu0 0.0
    %1332 = vmatpush1.xpose.msra.mxu0 %v1315
    %1333 = vmatprep.subr.mxu0 0.0
    %1334 = vmatpush1.xpose.msra.mxu0 %v1317
    %1335 = vmatprep.subr.mxu0 0.0
    %1336 = vmatpush1.xpose.msra.mxu0 %v1319
    %1337 = vmatprep.subr.mxu0 0.0
    %1338 = vmatpush1.xpose.msra.mxu0 %v1321
    %1339 = vmatprep.subr.mxu0 0.0
    %1340 = vmatpush1.xpose.msra.mxu0 0.0
    %1341 = vmatprep.subr.mxu0 0.0
    %1342 = vmatpush1.xpose.msra.mxu0 0.0
    %1343 = vmatprep.subr.mxu0 0.0
    %1344 = vmatpush1.xpose.msra.mxu0 0.0
    %1345 = vmatprep.subr.mxu0 0.0
    %1346 = vmatpush1.xpose.msra.mxu0 0.0
    %1347 = vmatprep.subr.mxu0 0.0
    %1348 = vmatpush1.xpose.msra.mxu0 0.0
    %1349 = vmatprep.subr.mxu0 0.0
    %1350 = vmatpush1.xpose.msra.mxu0 0.0
    %1351 = vmatprep.subr.mxu0 0.0
    %1352 = vmatpush1.xpose.msra.mxu0 0.0
    %1353 = vmatprep.subr.mxu0 0.0
    %1354 = vmatpush1.xpose.msra.mxu0 0.0
    %1355 = vmatprep.subr.mxu0 0.0
    %1356 = vmatpush1.xpose.msra.mxu0 0.0
    %1357 = vmatprep.subr.mxu0 0.0
    %1358 = vmatpush1.xpose.msra.mxu0 0.0
    %1359 = vmatprep.subr.mxu0 0.0
    %1360 = vmatpush1.xpose.msra.mxu0 0.0
    %1361 = vmatprep.subr.mxu0 0.0
    %1362 = vmatpush1.xpose.msra.mxu0 0.0
    %1363 = vmatprep.subr.mxu0 0.0
    %1364 = vmatpush1.xpose.msra.mxu0 0.0
    %1365 = vmatprep.subr.mxu0 0.0
    %1366 = vmatpush1.xpose.msra.mxu0 0.0
    %1367 = vmatprep.subr.mxu0 0.0
    %1368 = vmatpush1.xpose.msra.mxu0 0.0
    %1369 = vmatprep.subr.mxu0 0.0
    %1370 = vmatpush1.xpose.msra.mxu0 0.0
    %1371 = vmatprep.subr.mxu0 0.0
    %1372 = vmatpush1.xpose.msra.mxu0 0.0
    %1373 = vmatprep.subr.mxu0 0.0
    %1374 = vmatpush1.xpose.msra.mxu0 0.0
    %1375 = vmatprep.subr.mxu0 0.0
    %1376 = vmatpush1.xpose.msra.mxu0 0.0
    %1377 = vmatprep.subr.mxu0 0.0
    %1378 = vmatpush1.xpose.msra.mxu0 0.0
    %1379 = vmatprep.subr.mxu0 0.0
    %1380 = vmatpush1.xpose.msra.mxu0 0.0
    %1381 = vmatprep.subr.mxu0 0.0
    %1382 = vmatpush1.xpose.msra.mxu0 0.0
    %1383 = vmatprep.subr.mxu0 0.0
    %1384 = vmatpush1.xpose.msra.mxu0 0.0
    %1385 = vmatprep.subr.mxu0 0.0
    %1386 = vmatpush1.xpose.msra.mxu0 0.0
    %1387 = vmatprep.mubr.f32.mxu0 0.0
    %1388 = vmatmul.mubr.f32.gmra.mrb[0].mxu0 %v1291
    %v1389 = vpop.f32.mrb[0].mxu0
    %v1390 = vadd.f32 0.0, %v1389
    %v1391 = vpop.f32.mrb[0].mxu0
    %1392 = vmatprep.mubr.f32.mxu0 0.0
    %1393 = vmatmul.mubr.f32.gmra.mrb[0].mxu0 %v1293
    %v1394 = vpop.f32.mrb[0].mxu0
    %v1395 = vadd.f32 0.0, %v1394
    %v1396 = vpop.f32.mrb[0].mxu0
    %1397 = vmatprep.mubr.f32.mxu0 0.0
    %1398 = vmatmul.mubr.f32.gmra.mrb[0].mxu0 %v1295
    %v1399 = vpop.f32.mrb[0].mxu0
    %v1400 = vadd.f32 0.0, %v1399
    %v1401 = vpop.f32.mrb[0].mxu0
    %1402 = vmatprep.mubr.f32.mxu0 0.0
    %1403 = vmatmul.mubr.f32.gmra.mrb[0].mxu0 %v1297
    %v1404 = vpop.f32.mrb[0].mxu0
    %v1405 = vadd.f32 0.0, %v1404
    %v1406 = vpop.f32.mrb[0].mxu0
    %1407 = vmatprep.mubr.f32.mxu0 0.0
    %1408 = vmatmul.mubr.f32.gmra.mrb[0].mxu0 %v1299
    %v1409 = vpop.f32.mrb[0].mxu0
    %v1410 = vadd.f32 0.0, %v1409
    %v1411 = vpop.f32.mrb[0].mxu0
    %1412 = vmatprep.mubr.f32.mxu0 0.0
    %1413 = vmatmul.mubr.f32.gmra.mrb[0].mxu0 %v1301
    %v1414 = vpop.f32.mrb[0].mxu0
    %v1415 = vadd.f32 0.0, %v1414
    %v1416 = vpop.f32.mrb[0].mxu0
    %1417 = vmatprep.mubr.f32.mxu0 0.0
    %1418 = vmatmul.mubr.f32.gmra.mrb[0].mxu0 %v1303
    %v1419 = vpop.f32.mrb[0].mxu0
    %v1420 = vadd.f32 0.0, %v1419
    %v1421 = vpop.f32.mrb[0].mxu0
    %1422 = vmatprep.mubr.f32.mxu0 0.0
    %1423 = vmatmul.mubr.f32.gmra.mrb[0].mxu0 %v1305
    %v1424 = vpop.f32.mrb[0].mxu0
    %v1425 = vadd.f32 0.0, %v1424
    %v1426 = vpop.f32.mrb[0].mxu0
    %1427 = vdwg.mxu0
    %v1428 = vsel %vm1009, %v1390, -inf
    %1429 = vmax.xlane.f32.xlu0 %v1428
    %v1430 = vpop.xlane.xlu0 %1429
    %v1431 = vsel %vm1009, %v1395, -inf
    %1432 = vmax.xlane.f32.xlu0 %v1431
    %v1433 = vpop.xlane.xlu0 %1432
    %v1434 = vsel %vm1009, %v1400, -inf
    %1435 = vmax.xlane.f32.xlu0 %v1434
    %v1436 = vpop.xlane.xlu0 %1435
    %v1437 = vsel %vm1009, %v1405, -inf
    %1438 = vmax.xlane.f32.xlu0 %v1437
    %v1439 = vpop.xlane.xlu0 %1438
    %v1440 = vsel %vm1009, %v1410, -inf
    %1441 = vmax.xlane.f32.xlu0 %v1440
    %v1442 = vpop.xlane.xlu0 %1441
    %v1443 = vsel %vm1009, %v1415, -inf
    %1444 = vmax.xlane.f32.xlu0 %v1443
    %v1445 = vpop.xlane.xlu0 %1444
    %v1446 = vsel %vm1009, %v1420, -inf
    %1447 = vmax.xlane.f32.xlu0 %v1446
    %v1448 = vpop.xlane.xlu0 %1447
    %v1449 = vsel %vm1009, %v1425, -inf
    %1450 = vmax.xlane.f32.xlu0 %v1449
    %v1451 = vpop.xlane.xlu0 %1450
    %v1452 = vsub.f32 %v1390, %v1430
    %v1453 = vsub.f32 %v1395, %v1433
    %v1454 = vsub.f32 %v1400, %v1436
    %v1455 = vsub.f32 %v1405, %v1439
    %v1456 = vsub.f32 %v1410, %v1442
    %v1457 = vsub.f32 %v1415, %v1445
    %v1458 = vsub.f32 %v1420, %v1448
    %v1459 = vsub.f32 %v1425, %v1451
    %v1460 = vmul.f32 %v1452, 1.442695
    %v1461 = vpow.pop %v1460
    %v1462 = vmul.f32 %v1453, 1.442695
    %v1463 = vpow.pop %v1462
    %v1464 = vmul.f32 %v1454, 1.442695
    %v1465 = vpow.pop %v1464
    %v1466 = vmul.f32 %v1455, 1.442695
    %v1467 = vpow.pop %v1466
    %v1468 = vmul.f32 %v1456, 1.442695
    %v1469 = vpow.pop %v1468
    %v1470 = vmul.f32 %v1457, 1.442695
    %v1471 = vpow.pop %v1470
    %v1472 = vmul.f32 %v1458, 1.442695
    %v1473 = vpow.pop %v1472
    %v1474 = vmul.f32 %v1459, 1.442695
    %v1475 = vpow.pop %v1474
    %v1476 = vsel %vm1009, %v1461, 0.0
    %1477 = vadd.xlane.f32.xlu0 %v1476
    %v1478 = vpop.xlane.xlu0 %1477
    %v1479 = vsel %vm1009, %v1463, 0.0
    %1480 = vadd.xlane.f32.xlu0 %v1479
    %v1481 = vpop.xlane.xlu0 %1480
    %v1482 = vsel %vm1009, %v1465, 0.0
    %1483 = vadd.xlane.f32.xlu0 %v1482
    %v1484 = vpop.xlane.xlu0 %1483
    %v1485 = vsel %vm1009, %v1467, 0.0
    %1486 = vadd.xlane.f32.xlu0 %v1485
    %v1487 = vpop.xlane.xlu0 %1486
    %v1488 = vsel %vm1009, %v1469, 0.0
    %1489 = vadd.xlane.f32.xlu0 %v1488
    %v1490 = vpop.xlane.xlu0 %1489
    %v1491 = vsel %vm1009, %v1471, 0.0
    %1492 = vadd.xlane.f32.xlu0 %v1491
    %v1493 = vpop.xlane.xlu0 %1492
    %v1494 = vsel %vm1009, %v1473, 0.0
    %1495 = vadd.xlane.f32.xlu0 %v1494
    %v1496 = vpop.xlane.xlu0 %1495
    %v1497 = vsel %vm1009, %v1475, 0.0
    %1498 = vadd.xlane.f32.xlu0 %v1497
    %v1499 = vpop.xlane.xlu0 %1498
    %v1500 = vrcp.pop %v1478
    %v1501 = vrcp.pop %v1481
    %v1502 = vrcp.pop %v1484
    %v1503 = vrcp.pop %v1487
    %v1504 = vrcp.pop %v1490
    %v1505 = vrcp.pop %v1493
    %v1506 = vrcp.pop %v1496
    %v1507 = vrcp.pop %v1499
    %v1508 = vmul.f32 %v1461, %v1500
    %v1509 = vmul.f32 %v1463, %v1501
    %v1510 = vmul.f32 %v1465, %v1502
    %v1511 = vmul.f32 %v1467, %v1503
    %v1512 = vmul.f32 %v1469, %v1504
    %v1513 = vmul.f32 %v1471, %v1505
    %v1514 = vmul.f32 %v1473, %v1506
    %v1515 = vmul.f32 %v1475, %v1507
    %1516 = vrot.lane.b32.xlu0 %v769, 56
    %v1517 = vpop.permute.xlu0 %1516
    %1518 = vrot.lane.b32.xlu0 %v774, 56
    %v1519 = vpop.permute.xlu0 %1518
    %1520 = vrot.lane.b32.xlu0 %v779, 56
    %v1521 = vpop.permute.xlu0 %1520
    %1522 = vrot.lane.b32.xlu0 %v784, 56
    %v1523 = vpop.permute.xlu0 %1522
    %1524 = vrot.lane.b32.xlu0 %v789, 56
    %v1525 = vpop.permute.xlu0 %1524
    %1526 = vrot.lane.b32.xlu0 %v794, 56
    %v1527 = vpop.permute.xlu0 %1526
    %1528 = vrot.lane.b32.xlu0 %v799, 56
    %v1529 = vpop.permute.xlu0 %1528
    %1530 = vrot.lane.b32.xlu0 %v804, 56
    %v1531 = vpop.permute.xlu0 %1530
    %v1541 = vsel %vm1009, %v1508, 0
    %v1544 = vsel %vm1009, %v1509, 0
    %v1547 = vsel %vm1009, %v1510, 0
    %v1550 = vsel %vm1009, %v1511, 0
    %v1553 = vsel %vm1009, %v1512, 0
    %v1556 = vsel %vm1009, %v1513, 0
    %v1559 = vsel %vm1009, %v1514, 0
    %v1562 = vsel %vm1009, %v1515, 0
    %1564 = vmatprep.subr.mxu0 0.0
    %1565 = vmatpush1.msra.mxu0 %v1517
    %1566 = vmatprep.subr.mxu0 0.0
    %1567 = vmatpush1.msra.mxu0 %v1519
    %1568 = vmatprep.subr.mxu0 0.0
    %1569 = vmatpush1.msra.mxu0 %v1521
    %1570 = vmatprep.subr.mxu0 0.0
    %1571 = vmatpush1.msra.mxu0 %v1523
    %1572 = vmatprep.subr.mxu0 0.0
    %1573 = vmatpush1.msra.mxu0 %v1525
    %1574 = vmatprep.subr.mxu0 0.0
    %1575 = vmatpush1.msra.mxu0 %v1527
    %1576 = vmatprep.subr.mxu0 0.0
    %1577 = vmatpush1.msra.mxu0 %v1529
    %1578 = vmatprep.subr.mxu0 0.0
    %1579 = vmatpush1.msra.mxu0 %v1531
    %1580 = vmatprep.subr.mxu0 0.0
    %1581 = vmatpush1.msra.mxu0 0.0
    %1582 = vmatprep.subr.mxu0 0.0
    %1583 = vmatpush1.msra.mxu0 0.0
    %1584 = vmatprep.subr.mxu0 0.0
    %1585 = vmatpush1.msra.mxu0 0.0
    %1586 = vmatprep.subr.mxu0 0.0
    %1587 = vmatpush1.msra.mxu0 0.0
    %1588 = vmatprep.subr.mxu0 0.0
    %1589 = vmatpush1.msra.mxu0 0.0
    %1590 = vmatprep.subr.mxu0 0.0
    %1591 = vmatpush1.msra.mxu0 0.0
    %1592 = vmatprep.subr.mxu0 0.0
    %1593 = vmatpush1.msra.mxu0 0.0
    %1594 = vmatprep.subr.mxu0 0.0
    %1595 = vmatpush1.msra.mxu0 0.0
    %1596 = vmatprep.subr.mxu0 0.0
    %1597 = vmatpush1.msra.mxu0 0.0
    %1598 = vmatprep.subr.mxu0 0.0
    %1599 = vmatpush1.msra.mxu0 0.0
    %1600 = vmatprep.subr.mxu0 0.0
    %1601 = vmatpush1.msra.mxu0 0.0
    %1602 = vmatprep.subr.mxu0 0.0
    %1603 = vmatpush1.msra.mxu0 0.0
    %1604 = vmatprep.subr.mxu0 0.0
    %1605 = vmatpush1.msra.mxu0 0.0
    %1606 = vmatprep.subr.mxu0 0.0
    %1607 = vmatpush1.msra.mxu0 0.0
    %1608 = vmatprep.subr.mxu0 0.0
    %1609 = vmatpush1.msra.mxu0 0.0
    %1610 = vmatprep.subr.mxu0 0.0
    %1611 = vmatpush1.msra.mxu0 0.0
    %1612 = vmatprep.subr.mxu0 0.0
    %1613 = vmatpush1.msra.mxu0 0.0
    %1614 = vmatprep.subr.mxu0 0.0
    %1615 = vmatpush1.msra.mxu0 0.0
    %1616 = vmatprep.subr.mxu0 0.0
    %1617 = vmatpush1.msra.mxu0 0.0
    %1618 = vmatprep.subr.mxu0 0.0
    %1619 = vmatpush1.msra.mxu0 0.0
    %1620 = vmatprep.subr.mxu0 0.0
    %1621 = vmatpush1.msra.mxu0 0.0
    %1622 = vmatprep.subr.mxu0 0.0
    %1623 = vmatpush1.msra.mxu0 0.0
    %1624 = vmatprep.subr.mxu0 0.0
    %1625 = vmatpush1.msra.mxu0 0.0
    %1626 = vmatprep.subr.mxu0 0.0
    %1627 = vmatpush1.msra.mxu0 0.0
    %1628 = vmatprep.mubr.f32.mxu0 0.0
    %1629 = vmatmul.mubr.f32.gmra.mrb[0].mxu0 %v1541
    %v1630 = vpop.f32.mrb[0].mxu0
    %v1631 = vadd.f32 0.0, %v1630
    %v1632 = vpop.f32.mrb[0].mxu0
    %1633 = vmatprep.mubr.f32.mxu0 0.0
    %1634 = vmatmul.mubr.f32.gmra.mrb[0].mxu0 %v1544
    %v1635 = vpop.f32.mrb[0].mxu0
    %v1636 = vadd.f32 0.0, %v1635
    %v1637 = vpop.f32.mrb[0].mxu0
    %1638 = vmatprep.mubr.f32.mxu0 0.0
    %1639 = vmatmul.mubr.f32.gmra.mrb[0].mxu0 %v1547
    %v1640 = vpop.f32.mrb[0].mxu0
    %v1641 = vadd.f32 0.0, %v1640
    %v1642 = vpop.f32.mrb[0].mxu0
    %1643 = vmatprep.mubr.f32.mxu0 0.0
    %1644 = vmatmul.mubr.f32.gmra.mrb[0].mxu0 %v1550
    %v1645 = vpop.f32.mrb[0].mxu0
    %v1646 = vadd.f32 0.0, %v1645
    %v1647 = vpop.f32.mrb[0].mxu0
    %1648 = vmatprep.mubr.f32.mxu0 0.0
    %1649 = vmatmul.mubr.f32.gmra.mrb[0].mxu0 %v1553
    %v1650 = vpop.f32.mrb[0].mxu0
    %v1651 = vadd.f32 0.0, %v1650
    %v1652 = vpop.f32.mrb[0].mxu0
    %1653 = vmatprep.mubr.f32.mxu0 0.0
    %1654 = vmatmul.mubr.f32.gmra.mrb[0].mxu0 %v1556
    %v1655 = vpop.f32.mrb[0].mxu0
    %v1656 = vadd.f32 0.0, %v1655
    %v1657 = vpop.f32.mrb[0].mxu0
    %1658 = vmatprep.mubr.f32.mxu0 0.0
    %1659 = vmatmul.mubr.f32.gmra.mrb[0].mxu0 %v1559
    %v1660 = vpop.f32.mrb[0].mxu0
    %v1661 = vadd.f32 0.0, %v1660
    %v1662 = vpop.f32.mrb[0].mxu0
    %1663 = vmatprep.mubr.f32.mxu0 0.0
    %1664 = vmatmul.mubr.f32.gmra.mrb[0].mxu0 %v1562
    %v1665 = vpop.f32.mrb[0].mxu0
    %v1666 = vadd.f32 0.0, %v1665
    %v1667 = vpop.f32.mrb[0].mxu0
    %1668 = vdwg.mxu0
    %1677 = vrot.lane.b32.xlu0 %v1631, 8
    %v1678 = vpop.permute.xlu0 %1677
    %1679 = vrot.lane.b32.xlu0 %v1636, 8
    %v1680 = vpop.permute.xlu0 %1679
    %1681 = vrot.lane.b32.xlu0 %v1641, 8
    %v1682 = vpop.permute.xlu0 %1681
    %1683 = vrot.lane.b32.xlu0 %v1646, 8
    %v1684 = vpop.permute.xlu0 %1683
    %1685 = vrot.lane.b32.xlu0 %v1651, 8
    %v1686 = vpop.permute.xlu0 %1685
    %1687 = vrot.lane.b32.xlu0 %v1656, 8
    %v1688 = vpop.permute.xlu0 %1687
    %1689 = vrot.lane.b32.xlu0 %v1661, 8
    %v1690 = vpop.permute.xlu0 %1689
    %1691 = vrot.lane.b32.xlu0 %v1666, 8
    %v1692 = vpop.permute.xlu0 %1691
    %vm1701 = vcmask 130112
    %1702 = vst.msk [vmem:[#allocation2] sm:$0xff] %vm1701, %v1678
    %1703 = vst.msk [vmem:[#allocation2 + $0x8] sm:$0xff] %vm1701, %v1680
    %1704 = vst.msk [vmem:[#allocation2 + $0x10] sm:$0xff] %vm1701, %v1682
    %1705 = vst.msk [vmem:[#allocation2 + $0x18] sm:$0xff] %vm1701, %v1684
    %1706 = vst.msk [vmem:[#allocation2 + $0x20] sm:$0xff] %vm1701, %v1686
    %1707 = vst.msk [vmem:[#allocation2 + $0x28] sm:$0xff] %vm1701, %v1688
    %1708 = vst.msk [vmem:[#allocation2 + $0x30] sm:$0xff] %vm1701, %v1690
    %1709 = vst.msk [vmem:[#allocation2 + $0x38] sm:$0xff] %vm1701, %v1692
    %1710 = vrot.lane.b32.xlu0 %v769, 112
    %v1711 = vpop.permute.xlu0 %1710
    %1712 = vrot.lane.b32.xlu0 %v774, 112
    %v1713 = vpop.permute.xlu0 %1712
    %1714 = vrot.lane.b32.xlu0 %v779, 112
    %v1715 = vpop.permute.xlu0 %1714
    %1716 = vrot.lane.b32.xlu0 %v784, 112
    %v1717 = vpop.permute.xlu0 %1716
    %1718 = vrot.lane.b32.xlu0 %v789, 112
    %v1719 = vpop.permute.xlu0 %1718
    %1720 = vrot.lane.b32.xlu0 %v794, 112
    %v1721 = vpop.permute.xlu0 %1720
    %1722 = vrot.lane.b32.xlu0 %v799, 112
    %v1723 = vpop.permute.xlu0 %1722
    %1724 = vrot.lane.b32.xlu0 %v804, 112
    %v1725 = vpop.permute.xlu0 %1724
    %1726 = vrot.lane.b32.xlu0 %v769, 80
    %v1727 = vpop.permute.xlu0 %1726
    %1728 = vrot.lane.b32.xlu0 %v774, 80
    %v1729 = vpop.permute.xlu0 %1728
    %1730 = vrot.lane.b32.xlu0 %v779, 80
    %v1731 = vpop.permute.xlu0 %1730
    %1732 = vrot.lane.b32.xlu0 %v784, 80
    %v1733 = vpop.permute.xlu0 %1732
    %1734 = vrot.lane.b32.xlu0 %v789, 80
    %v1735 = vpop.permute.xlu0 %1734
    %1736 = vrot.lane.b32.xlu0 %v794, 80
    %v1737 = vpop.permute.xlu0 %1736
    %1738 = vrot.lane.b32.xlu0 %v799, 80
    %v1739 = vpop.permute.xlu0 %1738
    %1740 = vrot.lane.b32.xlu0 %v804, 80
    %v1741 = vpop.permute.xlu0 %1740
    %v1742 = vsel %vm871, %v1711, 0
    %v1744 = vsel %vm871, %v1713, 0
    %v1746 = vsel %vm871, %v1715, 0
    %v1748 = vsel %vm871, %v1717, 0
    %v1750 = vsel %vm871, %v1719, 0
    %v1752 = vsel %vm871, %v1721, 0
    %v1754 = vsel %vm871, %v1723, 0
    %v1756 = vsel %vm871, %v1725, 0
    %v1758 = vsel %vm871, %v1727, 0
    %v1760 = vsel %vm871, %v1729, 0
    %v1762 = vsel %vm871, %v1731, 0
    %v1764 = vsel %vm871, %v1733, 0
    %v1766 = vsel %vm871, %v1735, 0
    %v1768 = vsel %vm871, %v1737, 0
    %v1770 = vsel %vm871, %v1739, 0
    %v1772 = vsel %vm871, %v1741, 0
    %1774 = vmatprep.subr.mxu0 0.0
    %1775 = vmatpush1.xpose.msra.mxu0 %v1758
    %1776 = vmatprep.subr.mxu0 0.0
    %1777 = vmatpush1.xpose.msra.mxu0 %v1760
    %1778 = vmatprep.subr.mxu0 0.0
    %1779 = vmatpush1.xpose.msra.mxu0 %v1762
    %1780 = vmatprep.subr.mxu0 0.0
    %1781 = vmatpush1.xpose.msra.mxu0 %v1764
    %1782 = vmatprep.subr.mxu0 0.0
    %1783 = vmatpush1.xpose.msra.mxu0 %v1766
    %1784 = vmatprep.subr.mxu0 0.0
    %1785 = vmatpush1.xpose.msra.mxu0 %v1768
    %1786 = vmatprep.subr.mxu0 0.0
    %1787 = vmatpush1.xpose.msra.mxu0 %v1770
    %1788 = vmatprep.subr.mxu0 0.0
    %1789 = vmatpush1.xpose.msra.mxu0 %v1772
    %1790 = vmatprep.subr.mxu0 0.0
    %1791 = vmatpush1.xpose.msra.mxu0 0.0
    %1792 = vmatprep.subr.mxu0 0.0
    %1793 = vmatpush1.xpose.msra.mxu0 0.0
    %1794 = vmatprep.subr.mxu0 0.0
    %1795 = vmatpush1.xpose.msra.mxu0 0.0
    %1796 = vmatprep.subr.mxu0 0.0
    %1797 = vmatpush1.xpose.msra.mxu0 0.0
    %1798 = vmatprep.subr.mxu0 0.0
    %1799 = vmatpush1.xpose.msra.mxu0 0.0
    %1800 = vmatprep.subr.mxu0 0.0
    %1801 = vmatpush1.xpose.msra.mxu0 0.0
    %1802 = vmatprep.subr.mxu0 0.0
    %1803 = vmatpush1.xpose.msra.mxu0 0.0
    %1804 = vmatprep.subr.mxu0 0.0
    %1805 = vmatpush1.xpose.msra.mxu0 0.0
    %1806 = vmatprep.subr.mxu0 0.0
    %1807 = vmatpush1.xpose.msra.mxu0 0.0
    %1808 = vmatprep.subr.mxu0 0.0
    %1809 = vmatpush1.xpose.msra.mxu0 0.0
    %1810 = vmatprep.subr.mxu0 0.0
    %1811 = vmatpush1.xpose.msra.mxu0 0.0
    %1812 = vmatprep.subr.mxu0 0.0
    %1813 = vmatpush1.xpose.msra.mxu0 0.0
    %1814 = vmatprep.subr.mxu0 0.0
    %1815 = vmatpush1.xpose.msra.mxu0 0.0
    %1816 = vmatprep.subr.mxu0 0.0
    %1817 = vmatpush1.xpose.msra.mxu0 0.0
    %1818 = vmatprep.subr.mxu0 0.0
    %1819 = vmatpush1.xpose.msra.mxu0 0.0
    %1820 = vmatprep.subr.mxu0 0.0
    %1821 = vmatpush1.xpose.msra.mxu0 0.0
    %1822 = vmatprep.subr.mxu0 0.0
    %1823 = vmatpush1.xpose.msra.mxu0 0.0
    %1824 = vmatprep.subr.mxu0 0.0
    %1825 = vmatpush1.xpose.msra.mxu0 0.0
    %1826 = vmatprep.subr.mxu0 0.0
    %1827 = vmatpush1.xpose.msra.mxu0 0.0
    %1828 = vmatprep.subr.mxu0 0.0
    %1829 = vmatpush1.xpose.msra.mxu0 0.0
    %1830 = vmatprep.subr.mxu0 0.0
    %1831 = vmatpush1.xpose.msra.mxu0 0.0
    %1832 = vmatprep.subr.mxu0 0.0
    %1833 = vmatpush1.xpose.msra.mxu0 0.0
    %1834 = vmatprep.subr.mxu0 0.0
    %1835 = vmatpush1.xpose.msra.mxu0 0.0
    %1836 = vmatprep.subr.mxu0 0.0
    %1837 = vmatpush1.xpose.msra.mxu0 0.0
    %1838 = vmatprep.mubr.f32.mxu0 0.0
    %1839 = vmatmul.mubr.f32.gmra.mrb[0].mxu0 %v1742
    %v1840 = vpop.f32.mrb[0].mxu0
    %v1841 = vadd.f32 0.0, %v1840
    %v1842 = vpop.f32.mrb[0].mxu0
    %1843 = vmatprep.mubr.f32.mxu0 0.0
    %1844 = vmatmul.mubr.f32.gmra.mrb[0].mxu0 %v1744
    %v1845 = vpop.f32.mrb[0].mxu0
    %v1846 = vadd.f32 0.0, %v1845
    %v1847 = vpop.f32.mrb[0].mxu0
    %1848 = vmatprep.mubr.f32.mxu0 0.0
    %1849 = vmatmul.mubr.f32.gmra.mrb[0].mxu0 %v1746
    %v1850 = vpop.f32.mrb[0].mxu0
    %v1851 = vadd.f32 0.0, %v1850
    %v1852 = vpop.f32.mrb[0].mxu0
    %1853 = vmatprep.mubr.f32.mxu0 0.0
    %1854 = vmatmul.mubr.f32.gmra.mrb[0].mxu0 %v1748
    %v1855 = vpop.f32.mrb[0].mxu0
    %v1856 = vadd.f32 0.0, %v1855
    %v1857 = vpop.f32.mrb[0].mxu0
    %1858 = vmatprep.mubr.f32.mxu0 0.0
    %1859 = vmatmul.mubr.f32.gmra.mrb[0].mxu0 %v1750
    %v1860 = vpop.f32.mrb[0].mxu0
    %v1861 = vadd.f32 0.0, %v1860
    %v1862 = vpop.f32.mrb[0].mxu0
    %1863 = vmatprep.mubr.f32.mxu0 0.0
    %1864 = vmatmul.mubr.f32.gmra.mrb[0].mxu0 %v1752
    %v1865 = vpop.f32.mrb[0].mxu0
    %v1866 = vadd.f32 0.0, %v1865
    %v1867 = vpop.f32.mrb[0].mxu0
    %1868 = vmatprep.mubr.f32.mxu0 0.0
    %1869 = vmatmul.mubr.f32.gmra.mrb[0].mxu0 %v1754
    %v1870 = vpop.f32.mrb[0].mxu0
    %v1871 = vadd.f32 0.0, %v1870
    %v1872 = vpop.f32.mrb[0].mxu0
    %1873 = vmatprep.mubr.f32.mxu0 0.0
    %1874 = vmatmul.mubr.f32.gmra.mrb[0].mxu0 %v1756
    %v1875 = vpop.f32.mrb[0].mxu0
    %v1876 = vadd.f32 0.0, %v1875
    %v1877 = vpop.f32.mrb[0].mxu0
    %1878 = vdwg.mxu0
    %v1879 = vsel %vm1009, %v1841, -inf
    %1880 = vmax.xlane.f32.xlu0 %v1879
    %v1881 = vpop.xlane.xlu0 %1880
    %v1882 = vsel %vm1009, %v1846, -inf
    %1883 = vmax.xlane.f32.xlu0 %v1882
    %v1884 = vpop.xlane.xlu0 %1883
    %v1885 = vsel %vm1009, %v1851, -inf
    %1886 = vmax.xlane.f32.xlu0 %v1885
    %v1887 = vpop.xlane.xlu0 %1886
    %v1888 = vsel %vm1009, %v1856, -inf
    %1889 = vmax.xlane.f32.xlu0 %v1888
    %v1890 = vpop.xlane.xlu0 %1889
    %v1891 = vsel %vm1009, %v1861, -inf
    %1892 = vmax.xlane.f32.xlu0 %v1891
    %v1893 = vpop.xlane.xlu0 %1892
    %v1894 = vsel %vm1009, %v1866, -inf
    %1895 = vmax.xlane.f32.xlu0 %v1894
    %v1896 = vpop.xlane.xlu0 %1895
    %v1897 = vsel %vm1009, %v1871, -inf
    %1898 = vmax.xlane.f32.xlu0 %v1897
    %v1899 = vpop.xlane.xlu0 %1898
    %v1900 = vsel %vm1009, %v1876, -inf
    %1901 = vmax.xlane.f32.xlu0 %v1900
    %v1902 = vpop.xlane.xlu0 %1901
    %v1903 = vsub.f32 %v1841, %v1881
    %v1904 = vsub.f32 %v1846, %v1884
    %v1905 = vsub.f32 %v1851, %v1887
    %v1906 = vsub.f32 %v1856, %v1890
    %v1907 = vsub.f32 %v1861, %v1893
    %v1908 = vsub.f32 %v1866, %v1896
    %v1909 = vsub.f32 %v1871, %v1899
    %v1910 = vsub.f32 %v1876, %v1902
    %v1911 = vmul.f32 %v1903, 1.442695
    %v1912 = vpow.pop %v1911
    %v1913 = vmul.f32 %v1904, 1.442695
    %v1914 = vpow.pop %v1913
    %v1915 = vmul.f32 %v1905, 1.442695
    %v1916 = vpow.pop %v1915
    %v1917 = vmul.f32 %v1906, 1.442695
    %v1918 = vpow.pop %v1917
    %v1919 = vmul.f32 %v1907, 1.442695
    %v1920 = vpow.pop %v1919
    %v1921 = vmul.f32 %v1908, 1.442695
    %v1922 = vpow.pop %v1921
    %v1923 = vmul.f32 %v1909, 1.442695
    %v1924 = vpow.pop %v1923
    %v1925 = vmul.f32 %v1910, 1.442695
    %v1926 = vpow.pop %v1925
    %v1927 = vsel %vm1009, %v1912, 0.0
    %1928 = vadd.xlane.f32.xlu0 %v1927
    %v1929 = vpop.xlane.xlu0 %1928
    %v1930 = vsel %vm1009, %v1914, 0.0
    %1931 = vadd.xlane.f32.xlu0 %v1930
    %v1932 = vpop.xlane.xlu0 %1931
    %v1933 = vsel %vm1009, %v1916, 0.0
    %1934 = vadd.xlane.f32.xlu0 %v1933
    %v1935 = vpop.xlane.xlu0 %1934
    %v1936 = vsel %vm1009, %v1918, 0.0
    %1937 = vadd.xlane.f32.xlu0 %v1936
    %v1938 = vpop.xlane.xlu0 %1937
    %v1939 = vsel %vm1009, %v1920, 0.0
    %1940 = vadd.xlane.f32.xlu0 %v1939
    %v1941 = vpop.xlane.xlu0 %1940
    %v1942 = vsel %vm1009, %v1922, 0.0
    %1943 = vadd.xlane.f32.xlu0 %v1942
    %v1944 = vpop.xlane.xlu0 %1943
    %v1945 = vsel %vm1009, %v1924, 0.0
    %1946 = vadd.xlane.f32.xlu0 %v1945
    %v1947 = vpop.xlane.xlu0 %1946
    %v1948 = vsel %vm1009, %v1926, 0.0
    %1949 = vadd.xlane.f32.xlu0 %v1948
    %v1950 = vpop.xlane.xlu0 %1949
    %v1951 = vrcp.pop %v1929
    %v1952 = vrcp.pop %v1932
    %v1953 = vrcp.pop %v1935
    %v1954 = vrcp.pop %v1938
    %v1955 = vrcp.pop %v1941
    %v1956 = vrcp.pop %v1944
    %v1957 = vrcp.pop %v1947
    %v1958 = vrcp.pop %v1950
    %v1959 = vmul.f32 %v1912, %v1951
    %v1960 = vmul.f32 %v1914, %v1952
    %v1961 = vmul.f32 %v1916, %v1953
    %v1962 = vmul.f32 %v1918, %v1954
    %v1963 = vmul.f32 %v1920, %v1955
    %v1964 = vmul.f32 %v1922, %v1956
    %v1965 = vmul.f32 %v1924, %v1957
    %v1966 = vmul.f32 %v1926, %v1958
    %1967 = vrot.lane.b32.xlu0 %v769, 48
    %v1968 = vpop.permute.xlu0 %1967
    %1969 = vrot.lane.b32.xlu0 %v774, 48
    %v1970 = vpop.permute.xlu0 %1969
    %1971 = vrot.lane.b32.xlu0 %v779, 48
    %v1972 = vpop.permute.xlu0 %1971
    %1973 = vrot.lane.b32.xlu0 %v784, 48
    %v1974 = vpop.permute.xlu0 %1973
    %1975 = vrot.lane.b32.xlu0 %v789, 48
    %v1976 = vpop.permute.xlu0 %1975
    %1977 = vrot.lane.b32.xlu0 %v794, 48
    %v1978 = vpop.permute.xlu0 %1977
    %1979 = vrot.lane.b32.xlu0 %v799, 48
    %v1980 = vpop.permute.xlu0 %1979
    %1981 = vrot.lane.b32.xlu0 %v804, 48
    %v1982 = vpop.permute.xlu0 %1981
    %v1992 = vsel %vm1009, %v1959, 0
    %v1995 = vsel %vm1009, %v1960, 0
    %v1998 = vsel %vm1009, %v1961, 0
    %v2001 = vsel %vm1009, %v1962, 0
    %v2004 = vsel %vm1009, %v1963, 0
    %v2007 = vsel %vm1009, %v1964, 0
    %v2010 = vsel %vm1009, %v1965, 0
    %v2013 = vsel %vm1009, %v1966, 0
    %2015 = vmatprep.subr.mxu0 0.0
    %2016 = vmatpush1.msra.mxu0 %v1968
    %2017 = vmatprep.subr.mxu0 0.0
    %2018 = vmatpush1.msra.mxu0 %v1970
    %2019 = vmatprep.subr.mxu0 0.0
    %2020 = vmatpush1.msra.mxu0 %v1972
    %2021 = vmatprep.subr.mxu0 0.0
    %2022 = vmatpush1.msra.mxu0 %v1974
    %2023 = vmatprep.subr.mxu0 0.0
    %2024 = vmatpush1.msra.mxu0 %v1976
    %2025 = vmatprep.subr.mxu0 0.0
    %2026 = vmatpush1.msra.mxu0 %v1978
    %2027 = vmatprep.subr.mxu0 0.0
    %2028 = vmatpush1.msra.mxu0 %v1980
    %2029 = vmatprep.subr.mxu0 0.0
    %2030 = vmatpush1.msra.mxu0 %v1982
    %2031 = vmatprep.subr.mxu0 0.0
    %2032 = vmatpush1.msra.mxu0 0.0
    %2033 = vmatprep.subr.mxu0 0.0
    %2034 = vmatpush1.msra.mxu0 0.0
    %2035 = vmatprep.subr.mxu0 0.0
    %2036 = vmatpush1.msra.mxu0 0.0
    %2037 = vmatprep.subr.mxu0 0.0
    %2038 = vmatpush1.msra.mxu0 0.0
    %2039 = vmatprep.subr.mxu0 0.0
    %2040 = vmatpush1.msra.mxu0 0.0
    %2041 = vmatprep.subr.mxu0 0.0
    %2042 = vmatpush1.msra.mxu0 0.0
    %2043 = vmatprep.subr.mxu0 0.0
    %2044 = vmatpush1.msra.mxu0 0.0
    %2045 = vmatprep.subr.mxu0 0.0
    %2046 = vmatpush1.msra.mxu0 0.0
    %2047 = vmatprep.subr.mxu0 0.0
    %2048 = vmatpush1.msra.mxu0 0.0
    %2049 = vmatprep.subr.mxu0 0.0
    %2050 = vmatpush1.msra.mxu0 0.0
    %2051 = vmatprep.subr.mxu0 0.0
    %2052 = vmatpush1.msra.mxu0 0.0
    %2053 = vmatprep.subr.mxu0 0.0
    %2054 = vmatpush1.msra.mxu0 0.0
    %2055 = vmatprep.subr.mxu0 0.0
    %2056 = vmatpush1.msra.mxu0 0.0
    %2057 = vmatprep.subr.mxu0 0.0
    %2058 = vmatpush1.msra.mxu0 0.0
    %2059 = vmatprep.subr.mxu0 0.0
    %2060 = vmatpush1.msra.mxu0 0.0
    %2061 = vmatprep.subr.mxu0 0.0
    %2062 = vmatpush1.msra.mxu0 0.0
    %2063 = vmatprep.subr.mxu0 0.0
    %2064 = vmatpush1.msra.mxu0 0.0
    %2065 = vmatprep.subr.mxu0 0.0
    %2066 = vmatpush1.msra.mxu0 0.0
    %2067 = vmatprep.subr.mxu0 0.0
    %2068 = vmatpush1.msra.mxu0 0.0
    %2069 = vmatprep.subr.mxu0 0.0
    %2070 = vmatpush1.msra.mxu0 0.0
    %2071 = vmatprep.subr.mxu0 0.0
    %2072 = vmatpush1.msra.mxu0 0.0
    %2073 = vmatprep.subr.mxu0 0.0
    %2074 = vmatpush1.msra.mxu0 0.0
    %2075 = vmatprep.subr.mxu0 0.0
    %2076 = vmatpush1.msra.mxu0 0.0
    %2077 = vmatprep.subr.mxu0 0.0
    %2078 = vmatpush1.msra.mxu0 0.0
    %2079 = vmatprep.mubr.f32.mxu0 0.0
    %2080 = vmatmul.mubr.f32.gmra.mrb[0].mxu0 %v1992
    %v2081 = vpop.f32.mrb[0].mxu0
    %v2082 = vadd.f32 0.0, %v2081
    %v2083 = vpop.f32.mrb[0].mxu0
    %2084 = vmatprep.mubr.f32.mxu0 0.0
    %2085 = vmatmul.mubr.f32.gmra.mrb[0].mxu0 %v1995
    %v2086 = vpop.f32.mrb[0].mxu0
    %v2087 = vadd.f32 0.0, %v2086
    %v2088 = vpop.f32.mrb[0].mxu0
    %2089 = vmatprep.mubr.f32.mxu0 0.0
    %2090 = vmatmul.mubr.f32.gmra.mrb[0].mxu0 %v1998
    %v2091 = vpop.f32.mrb[0].mxu0
    %v2092 = vadd.f32 0.0, %v2091
    %v2093 = vpop.f32.mrb[0].mxu0
    %2094 = vmatprep.mubr.f32.mxu0 0.0
    %2095 = vmatmul.mubr.f32.gmra.mrb[0].mxu0 %v2001
    %v2096 = vpop.f32.mrb[0].mxu0
    %v2097 = vadd.f32 0.0, %v2096
    %v2098 = vpop.f32.mrb[0].mxu0
    %2099 = vmatprep.mubr.f32.mxu0 0.0
    %2100 = vmatmul.mubr.f32.gmra.mrb[0].mxu0 %v2004
    %v2101 = vpop.f32.mrb[0].mxu0
    %v2102 = vadd.f32 0.0, %v2101
    %v2103 = vpop.f32.mrb[0].mxu0
    %2104 = vmatprep.mubr.f32.mxu0 0.0
    %2105 = vmatmul.mubr.f32.gmra.mrb[0].mxu0 %v2007
    %v2106 = vpop.f32.mrb[0].mxu0
    %v2107 = vadd.f32 0.0, %v2106
    %v2108 = vpop.f32.mrb[0].mxu0
    %2109 = vmatprep.mubr.f32.mxu0 0.0
    %2110 = vmatmul.mubr.f32.gmra.mrb[0].mxu0 %v2010
    %v2111 = vpop.f32.mrb[0].mxu0
    %v2112 = vadd.f32 0.0, %v2111
    %v2113 = vpop.f32.mrb[0].mxu0
    %2114 = vmatprep.mubr.f32.mxu0 0.0
    %2115 = vmatmul.mubr.f32.gmra.mrb[0].mxu0 %v2013
    %v2116 = vpop.f32.mrb[0].mxu0
    %v2117 = vadd.f32 0.0, %v2116
    %v2118 = vpop.f32.mrb[0].mxu0
    %2119 = vdwg.mxu0
    %2128 = vrot.lane.b32.xlu0 %v2082, 16
    %v2129 = vpop.permute.xlu0 %2128
    %2130 = vrot.lane.b32.xlu0 %v2087, 16
    %v2131 = vpop.permute.xlu0 %2130
    %2132 = vrot.lane.b32.xlu0 %v2092, 16
    %v2133 = vpop.permute.xlu0 %2132
    %2134 = vrot.lane.b32.xlu0 %v2097, 16
    %v2135 = vpop.permute.xlu0 %2134
    %2136 = vrot.lane.b32.xlu0 %v2102, 16
    %v2137 = vpop.permute.xlu0 %2136
    %2138 = vrot.lane.b32.xlu0 %v2107, 16
    %v2139 = vpop.permute.xlu0 %2138
    %2140 = vrot.lane.b32.xlu0 %v2112, 16
    %v2141 = vpop.permute.xlu0 %2140
    %2142 = vrot.lane.b32.xlu0 %v2117, 16
    %v2143 = vpop.permute.xlu0 %2142
    %vm2152 = vcmask 195712
    %2153 = vst.msk [vmem:[#allocation2] sm:$0xff] %vm2152, %v2129
    %2154 = vst.msk [vmem:[#allocation2 + $0x8] sm:$0xff] %vm2152, %v2131
    %2155 = vst.msk [vmem:[#allocation2 + $0x10] sm:$0xff] %vm2152, %v2133
    %2156 = vst.msk [vmem:[#allocation2 + $0x18] sm:$0xff] %vm2152, %v2135
    %2157 = vst.msk [vmem:[#allocation2 + $0x20] sm:$0xff] %vm2152, %v2137
    %2158 = vst.msk [vmem:[#allocation2 + $0x28] sm:$0xff] %vm2152, %v2139
    %2159 = vst.msk [vmem:[#allocation2 + $0x30] sm:$0xff] %vm2152, %v2141
    %2160 = vst.msk [vmem:[#allocation2 + $0x38] sm:$0xff] %vm2152, %v2143
    %2161 = vrot.lane.b32.xlu0 %v769, 104
    %v2162 = vpop.permute.xlu0 %2161
    %2163 = vrot.lane.b32.xlu0 %v774, 104
    %v2164 = vpop.permute.xlu0 %2163
    %2165 = vrot.lane.b32.xlu0 %v779, 104
    %v2166 = vpop.permute.xlu0 %2165
    %2167 = vrot.lane.b32.xlu0 %v784, 104
    %v2168 = vpop.permute.xlu0 %2167
    %2169 = vrot.lane.b32.xlu0 %v789, 104
    %v2170 = vpop.permute.xlu0 %2169
    %2171 = vrot.lane.b32.xlu0 %v794, 104
    %v2172 = vpop.permute.xlu0 %2171
    %2173 = vrot.lane.b32.xlu0 %v799, 104
    %v2174 = vpop.permute.xlu0 %2173
    %2175 = vrot.lane.b32.xlu0 %v804, 104
    %v2176 = vpop.permute.xlu0 %2175
    %2177 = vrot.lane.b32.xlu0 %v769, 72
    %v2178 = vpop.permute.xlu0 %2177
    %2179 = vrot.lane.b32.xlu0 %v774, 72
    %v2180 = vpop.permute.xlu0 %2179
    %2181 = vrot.lane.b32.xlu0 %v779, 72
    %v2182 = vpop.permute.xlu0 %2181
    %2183 = vrot.lane.b32.xlu0 %v784, 72
    %v2184 = vpop.permute.xlu0 %2183
    %2185 = vrot.lane.b32.xlu0 %v789, 72
    %v2186 = vpop.permute.xlu0 %2185
    %2187 = vrot.lane.b32.xlu0 %v794, 72
    %v2188 = vpop.permute.xlu0 %2187
    %2189 = vrot.lane.b32.xlu0 %v799, 72
    %v2190 = vpop.permute.xlu0 %2189
    %2191 = vrot.lane.b32.xlu0 %v804, 72
    %v2192 = vpop.permute.xlu0 %2191
    %v2193 = vsel %vm871, %v2162, 0
    %v2195 = vsel %vm871, %v2164, 0
    %v2197 = vsel %vm871, %v2166, 0
    %v2199 = vsel %vm871, %v2168, 0
    %v2201 = vsel %vm871, %v2170, 0
    %v2203 = vsel %vm871, %v2172, 0
    %v2205 = vsel %vm871, %v2174, 0
    %v2207 = vsel %vm871, %v2176, 0
    %v2209 = vsel %vm871, %v2178, 0
    %v2211 = vsel %vm871, %v2180, 0
    %v2213 = vsel %vm871, %v2182, 0
    %v2215 = vsel %vm871, %v2184, 0
    %v2217 = vsel %vm871, %v2186, 0
    %v2219 = vsel %vm871, %v2188, 0
    %v2221 = vsel %vm871, %v2190, 0
    %v2223 = vsel %vm871, %v2192, 0
    %2225 = vmatprep.subr.mxu0 0.0
    %2226 = vmatpush1.xpose.msra.mxu0 %v2209
    %2227 = vmatprep.subr.mxu0 0.0
    %2228 = vmatpush1.xpose.msra.mxu0 %v2211
    %2229 = vmatprep.subr.mxu0 0.0
    %2230 = vmatpush1.xpose.msra.mxu0 %v2213
    %2231 = vmatprep.subr.mxu0 0.0
    %2232 = vmatpush1.xpose.msra.mxu0 %v2215
    %2233 = vmatprep.subr.mxu0 0.0
    %2234 = vmatpush1.xpose.msra.mxu0 %v2217
    %2235 = vmatprep.subr.mxu0 0.0
    %2236 = vmatpush1.xpose.msra.mxu0 %v2219
    %2237 = vmatprep.subr.mxu0 0.0
    %2238 = vmatpush1.xpose.msra.mxu0 %v2221
    %2239 = vmatprep.subr.mxu0 0.0
    %2240 = vmatpush1.xpose.msra.mxu0 %v2223
    %2241 = vmatprep.subr.mxu0 0.0
    %2242 = vmatpush1.xpose.msra.mxu0 0.0
    %2243 = vmatprep.subr.mxu0 0.0
    %2244 = vmatpush1.xpose.msra.mxu0 0.0
    %2245 = vmatprep.subr.mxu0 0.0
    %2246 = vmatpush1.xpose.msra.mxu0 0.0
    %2247 = vmatprep.subr.mxu0 0.0
    %2248 = vmatpush1.xpose.msra.mxu0 0.0
    %2249 = vmatprep.subr.mxu0 0.0
    %2250 = vmatpush1.xpose.msra.mxu0 0.0
    %2251 = vmatprep.subr.mxu0 0.0
    %2252 = vmatpush1.xpose.msra.mxu0 0.0
    %2253 = vmatprep.subr.mxu0 0.0
    %2254 = vmatpush1.xpose.msra.mxu0 0.0
    %2255 = vmatprep.subr.mxu0 0.0
    %2256 = vmatpush1.xpose.msra.mxu0 0.0
    %2257 = vmatprep.subr.mxu0 0.0
    %2258 = vmatpush1.xpose.msra.mxu0 0.0
    %2259 = vmatprep.subr.mxu0 0.0
    %2260 = vmatpush1.xpose.msra.mxu0 0.0
    %2261 = vmatprep.subr.mxu0 0.0
    %2262 = vmatpush1.xpose.msra.mxu0 0.0
    %2263 = vmatprep.subr.mxu0 0.0
    %2264 = vmatpush1.xpose.msra.mxu0 0.0
    %2265 = vmatprep.subr.mxu0 0.0
    %2266 = vmatpush1.xpose.msra.mxu0 0.0
    %2267 = vmatprep.subr.mxu0 0.0
    %2268 = vmatpush1.xpose.msra.mxu0 0.0
    %2269 = vmatprep.subr.mxu0 0.0
    %2270 = vmatpush1.xpose.msra.mxu0 0.0
    %2271 = vmatprep.subr.mxu0 0.0
    %2272 = vmatpush1.xpose.msra.mxu0 0.0
    %2273 = vmatprep.subr.mxu0 0.0
    %2274 = vmatpush1.xpose.msra.mxu0 0.0
    %2275 = vmatprep.subr.mxu0 0.0
    %2276 = vmatpush1.xpose.msra.mxu0 0.0
    %2277 = vmatprep.subr.mxu0 0.0
    %2278 = vmatpush1.xpose.msra.mxu0 0.0
    %2279 = vmatprep.subr.mxu0 0.0
    %2280 = vmatpush1.xpose.msra.mxu0 0.0
    %2281 = vmatprep.subr.mxu0 0.0
    %2282 = vmatpush1.xpose.msra.mxu0 0.0
    %2283 = vmatprep.subr.mxu0 0.0
    %2284 = vmatpush1.xpose.msra.mxu0 0.0
    %2285 = vmatprep.subr.mxu0 0.0
    %2286 = vmatpush1.xpose.msra.mxu0 0.0
    %2287 = vmatprep.subr.mxu0 0.0
    %2288 = vmatpush1.xpose.msra.mxu0 0.0
    %2289 = vmatprep.mubr.f32.mxu0 0.0
    %2290 = vmatmul.mubr.f32.gmra.mrb[0].mxu0 %v2193
    %v2291 = vpop.f32.mrb[0].mxu0
    %v2292 = vadd.f32 0.0, %v2291
    %v2293 = vpop.f32.mrb[0].mxu0
    %2294 = vmatprep.mubr.f32.mxu0 0.0
    %2295 = vmatmul.mubr.f32.gmra.mrb[0].mxu0 %v2195
    %v2296 = vpop.f32.mrb[0].mxu0
    %v2297 = vadd.f32 0.0, %v2296
    %v2298 = vpop.f32.mrb[0].mxu0
    %2299 = vmatprep.mubr.f32.mxu0 0.0
    %2300 = vmatmul.mubr.f32.gmra.mrb[0].mxu0 %v2197
    %v2301 = vpop.f32.mrb[0].mxu0
    %v2302 = vadd.f32 0.0, %v2301
    %v2303 = vpop.f32.mrb[0].mxu0
    %2304 = vmatprep.mubr.f32.mxu0 0.0
    %2305 = vmatmul.mubr.f32.gmra.mrb[0].mxu0 %v2199
    %v2306 = vpop.f32.mrb[0].mxu0
    %v2307 = vadd.f32 0.0, %v2306
    %v2308 = vpop.f32.mrb[0].mxu0
    %2309 = vmatprep.mubr.f32.mxu0 0.0
    %2310 = vmatmul.mubr.f32.gmra.mrb[0].mxu0 %v2201
    %v2311 = vpop.f32.mrb[0].mxu0
    %v2312 = vadd.f32 0.0, %v2311
    %v2313 = vpop.f32.mrb[0].mxu0
    %2314 = vmatprep.mubr.f32.mxu0 0.0
    %2315 = vmatmul.mubr.f32.gmra.mrb[0].mxu0 %v2203
    %v2316 = vpop.f32.mrb[0].mxu0
    %v2317 = vadd.f32 0.0, %v2316
    %v2318 = vpop.f32.mrb[0].mxu0
    %2319 = vmatprep.mubr.f32.mxu0 0.0
    %2320 = vmatmul.mubr.f32.gmra.mrb[0].mxu0 %v2205
    %v2321 = vpop.f32.mrb[0].mxu0
    %v2322 = vadd.f32 0.0, %v2321
    %v2323 = vpop.f32.mrb[0].mxu0
    %2324 = vmatprep.mubr.f32.mxu0 0.0
    %2325 = vmatmul.mubr.f32.gmra.mrb[0].mxu0 %v2207
    %v2326 = vpop.f32.mrb[0].mxu0
    %v2327 = vadd.f32 0.0, %v2326
    %v2328 = vpop.f32.mrb[0].mxu0
    %2329 = vdwg.mxu0
    %v2330 = vsel %vm1009, %v2292, -inf
    %2331 = vmax.xlane.f32.xlu0 %v2330
    %v2332 = vpop.xlane.xlu0 %2331
    %v2333 = vsel %vm1009, %v2297, -inf
    %2334 = vmax.xlane.f32.xlu0 %v2333
    %v2335 = vpop.xlane.xlu0 %2334
    %v2336 = vsel %vm1009, %v2302, -inf
    %2337 = vmax.xlane.f32.xlu0 %v2336
    %v2338 = vpop.xlane.xlu0 %2337
    %v2339 = vsel %vm1009, %v2307, -inf
    %2340 = vmax.xlane.f32.xlu0 %v2339
    %v2341 = vpop.xlane.xlu0 %2340
    %v2342 = vsel %vm1009, %v2312, -inf
    %2343 = vmax.xlane.f32.xlu0 %v2342
    %v2344 = vpop.xlane.xlu0 %2343
    %v2345 = vsel %vm1009, %v2317, -inf
    %2346 = vmax.xlane.f32.xlu0 %v2345
    %v2347 = vpop.xlane.xlu0 %2346
    %v2348 = vsel %vm1009, %v2322, -inf
    %2349 = vmax.xlane.f32.xlu0 %v2348
    %v2350 = vpop.xlane.xlu0 %2349
    %v2351 = vsel %vm1009, %v2327, -inf
    %2352 = vmax.xlane.f32.xlu0 %v2351
    %v2353 = vpop.xlane.xlu0 %2352
    %v2354 = vsub.f32 %v2292, %v2332
    %v2355 = vsub.f32 %v2297, %v2335
    %v2356 = vsub.f32 %v2302, %v2338
    %v2357 = vsub.f32 %v2307, %v2341
    %v2358 = vsub.f32 %v2312, %v2344
    %v2359 = vsub.f32 %v2317, %v2347
    %v2360 = vsub.f32 %v2322, %v2350
    %v2361 = vsub.f32 %v2327, %v2353
    %v2362 = vmul.f32 %v2354, 1.442695
    %v2363 = vpow.pop %v2362
    %v2364 = vmul.f32 %v2355, 1.442695
    %v2365 = vpow.pop %v2364
    %v2366 = vmul.f32 %v2356, 1.442695
    %v2367 = vpow.pop %v2366
    %v2368 = vmul.f32 %v2357, 1.442695
    %v2369 = vpow.pop %v2368
    %v2370 = vmul.f32 %v2358, 1.442695
    %v2371 = vpow.pop %v2370
    %v2372 = vmul.f32 %v2359, 1.442695
    %v2373 = vpow.pop %v2372
    %v2374 = vmul.f32 %v2360, 1.442695
    %v2375 = vpow.pop %v2374
    %v2376 = vmul.f32 %v2361, 1.442695
    %v2377 = vpow.pop %v2376
    %v2378 = vsel %vm1009, %v2363, 0.0
    %2379 = vadd.xlane.f32.xlu0 %v2378
    %v2380 = vpop.xlane.xlu0 %2379
    %v2381 = vsel %vm1009, %v2365, 0.0
    %2382 = vadd.xlane.f32.xlu0 %v2381
    %v2383 = vpop.xlane.xlu0 %2382
    %v2384 = vsel %vm1009, %v2367, 0.0
    %2385 = vadd.xlane.f32.xlu0 %v2384
    %v2386 = vpop.xlane.xlu0 %2385
    %v2387 = vsel %vm1009, %v2369, 0.0
    %2388 = vadd.xlane.f32.xlu0 %v2387
    %v2389 = vpop.xlane.xlu0 %2388
    %v2390 = vsel %vm1009, %v2371, 0.0
    %2391 = vadd.xlane.f32.xlu0 %v2390
    %v2392 = vpop.xlane.xlu0 %2391
    %v2393 = vsel %vm1009, %v2373, 0.0
    %2394 = vadd.xlane.f32.xlu0 %v2393
    %v2395 = vpop.xlane.xlu0 %2394
    %v2396 = vsel %vm1009, %v2375, 0.0
    %2397 = vadd.xlane.f32.xlu0 %v2396
    %v2398 = vpop.xlane.xlu0 %2397
    %v2399 = vsel %vm1009, %v2377, 0.0
    %2400 = vadd.xlane.f32.xlu0 %v2399
    %v2401 = vpop.xlane.xlu0 %2400
    %v2402 = vrcp.pop %v2380
    %v2403 = vrcp.pop %v2383
    %v2404 = vrcp.pop %v2386
    %v2405 = vrcp.pop %v2389
    %v2406 = vrcp.pop %v2392
    %v2407 = vrcp.pop %v2395
    %v2408 = vrcp.pop %v2398
    %v2409 = vrcp.pop %v2401
    %v2410 = vmul.f32 %v2363, %v2402
    %v2411 = vmul.f32 %v2365, %v2403
    %v2412 = vmul.f32 %v2367, %v2404
    %v2413 = vmul.f32 %v2369, %v2405
    %v2414 = vmul.f32 %v2371, %v2406
    %v2415 = vmul.f32 %v2373, %v2407
    %v2416 = vmul.f32 %v2375, %v2408
    %v2417 = vmul.f32 %v2377, %v2409
    %2418 = vrot.lane.b32.xlu0 %v769, 40
    %v2419 = vpop.permute.xlu0 %2418
    %2420 = vrot.lane.b32.xlu0 %v774, 40
    %v2421 = vpop.permute.xlu0 %2420
    %2422 = vrot.lane.b32.xlu0 %v779, 40
    %v2423 = vpop.permute.xlu0 %2422
    %2424 = vrot.lane.b32.xlu0 %v784, 40
    %v2425 = vpop.permute.xlu0 %2424
    %2426 = vrot.lane.b32.xlu0 %v789, 40
    %v2427 = vpop.permute.xlu0 %2426
    %2428 = vrot.lane.b32.xlu0 %v794, 40
    %v2429 = vpop.permute.xlu0 %2428
    %2430 = vrot.lane.b32.xlu0 %v799, 40
    %v2431 = vpop.permute.xlu0 %2430
    %2432 = vrot.lane.b32.xlu0 %v804, 40
    %v2433 = vpop.permute.xlu0 %2432
    %v2443 = vsel %vm1009, %v2410, 0
    %v2446 = vsel %vm1009, %v2411, 0
    %v2449 = vsel %vm1009, %v2412, 0
    %v2452 = vsel %vm1009, %v2413, 0
    %v2455 = vsel %vm1009, %v2414, 0
    %v2458 = vsel %vm1009, %v2415, 0
    %v2461 = vsel %vm1009, %v2416, 0
    %v2464 = vsel %vm1009, %v2417, 0
    %2466 = vmatprep.subr.mxu0 0.0
    %2467 = vmatpush1.msra.mxu0 %v2419
    %2468 = vmatprep.subr.mxu0 0.0
    %2469 = vmatpush1.msra.mxu0 %v2421
    %2470 = vmatprep.subr.mxu0 0.0
    %2471 = vmatpush1.msra.mxu0 %v2423
    %2472 = vmatprep.subr.mxu0 0.0
    %2473 = vmatpush1.msra.mxu0 %v2425
    %2474 = vmatprep.subr.mxu0 0.0
    %2475 = vmatpush1.msra.mxu0 %v2427
    %2476 = vmatprep.subr.mxu0 0.0
    %2477 = vmatpush1.msra.mxu0 %v2429
    %2478 = vmatprep.subr.mxu0 0.0
    %2479 = vmatpush1.msra.mxu0 %v2431
    %2480 = vmatprep.subr.mxu0 0.0
    %2481 = vmatpush1.msra.mxu0 %v2433
    %2482 = vmatprep.subr.mxu0 0.0
    %2483 = vmatpush1.msra.mxu0 0.0
    %2484 = vmatprep.subr.mxu0 0.0
    %2485 = vmatpush1.msra.mxu0 0.0
    %2486 = vmatprep.subr.mxu0 0.0
    %2487 = vmatpush1.msra.mxu0 0.0
    %2488 = vmatprep.subr.mxu0 0.0
    %2489 = vmatpush1.msra.mxu0 0.0
    %2490 = vmatprep.subr.mxu0 0.0
    %2491 = vmatpush1.msra.mxu0 0.0
    %2492 = vmatprep.subr.mxu0 0.0
    %2493 = vmatpush1.msra.mxu0 0.0
    %2494 = vmatprep.subr.mxu0 0.0
    %2495 = vmatpush1.msra.mxu0 0.0
    %2496 = vmatprep.subr.mxu0 0.0
    %2497 = vmatpush1.msra.mxu0 0.0
    %2498 = vmatprep.subr.mxu0 0.0
    %2499 = vmatpush1.msra.mxu0 0.0
    %2500 = vmatprep.subr.mxu0 0.0
    %2501 = vmatpush1.msra.mxu0 0.0
    %2502 = vmatprep.subr.mxu0 0.0
    %2503 = vmatpush1.msra.mxu0 0.0
    %2504 = vmatprep.subr.mxu0 0.0
    %2505 = vmatpush1.msra.mxu0 0.0
    %2506 = vmatprep.subr.mxu0 0.0
    %2507 = vmatpush1.msra.mxu0 0.0
    %2508 = vmatprep.subr.mxu0 0.0
    %2509 = vmatpush1.msra.mxu0 0.0
    %2510 = vmatprep.subr.mxu0 0.0
    %2511 = vmatpush1.msra.mxu0 0.0
    %2512 = vmatprep.subr.mxu0 0.0
    %2513 = vmatpush1.msra.mxu0 0.0
    %2514 = vmatprep.subr.mxu0 0.0
    %2515 = vmatpush1.msra.mxu0 0.0
    %2516 = vmatprep.subr.mxu0 0.0
    %2517 = vmatpush1.msra.mxu0 0.0
    %2518 = vmatprep.subr.mxu0 0.0
    %2519 = vmatpush1.msra.mxu0 0.0
    %2520 = vmatprep.subr.mxu0 0.0
    %2521 = vmatpush1.msra.mxu0 0.0
    %2522 = vmatprep.subr.mxu0 0.0
    %2523 = vmatpush1.msra.mxu0 0.0
    %2524 = vmatprep.subr.mxu0 0.0
    %2525 = vmatpush1.msra.mxu0 0.0
    %2526 = vmatprep.subr.mxu0 0.0
    %2527 = vmatpush1.msra.mxu0 0.0
    %2528 = vmatprep.subr.mxu0 0.0
    %2529 = vmatpush1.msra.mxu0 0.0
    %2530 = vmatprep.mubr.f32.mxu0 0.0
    %2531 = vmatmul.mubr.f32.gmra.mrb[0].mxu0 %v2443
    %v2532 = vpop.f32.mrb[0].mxu0
    %v2533 = vadd.f32 0.0, %v2532
    %v2534 = vpop.f32.mrb[0].mxu0
    %2535 = vmatprep.mubr.f32.mxu0 0.0
    %2536 = vmatmul.mubr.f32.gmra.mrb[0].mxu0 %v2446
    %v2537 = vpop.f32.mrb[0].mxu0
    %v2538 = vadd.f32 0.0, %v2537
    %v2539 = vpop.f32.mrb[0].mxu0
    %2540 = vmatprep.mubr.f32.mxu0 0.0
    %2541 = vmatmul.mubr.f32.gmra.mrb[0].mxu0 %v2449
    %v2542 = vpop.f32.mrb[0].mxu0
    %v2543 = vadd.f32 0.0, %v2542
    %v2544 = vpop.f32.mrb[0].mxu0
    %2545 = vmatprep.mubr.f32.mxu0 0.0
    %2546 = vmatmul.mubr.f32.gmra.mrb[0].mxu0 %v2452
    %v2547 = vpop.f32.mrb[0].mxu0
    %v2548 = vadd.f32 0.0, %v2547
    %v2549 = vpop.f32.mrb[0].mxu0
    %2550 = vmatprep.mubr.f32.mxu0 0.0
    %2551 = vmatmul.mubr.f32.gmra.mrb[0].mxu0 %v2455
    %v2552 = vpop.f32.mrb[0].mxu0
    %v2553 = vadd.f32 0.0, %v2552
    %v2554 = vpop.f32.mrb[0].mxu0
    %2555 = vmatprep.mubr.f32.mxu0 0.0
    %2556 = vmatmul.mubr.f32.gmra.mrb[0].mxu0 %v2458
    %v2557 = vpop.f32.mrb[0].mxu0
    %v2558 = vadd.f32 0.0, %v2557
    %v2559 = vpop.f32.mrb[0].mxu0
    %2560 = vmatprep.mubr.f32.mxu0 0.0
    %2561 = vmatmul.mubr.f32.gmra.mrb[0].mxu0 %v2461
    %v2562 = vpop.f32.mrb[0].mxu0
    %v2563 = vadd.f32 0.0, %v2562
    %v2564 = vpop.f32.mrb[0].mxu0
    %2565 = vmatprep.mubr.f32.mxu0 0.0
    %2566 = vmatmul.mubr.f32.gmra.mrb[0].mxu0 %v2464
    %v2567 = vpop.f32.mrb[0].mxu0
    %v2568 = vadd.f32 0.0, %v2567
    %v2569 = vpop.f32.mrb[0].mxu0
    %2570 = vdwg.mxu0
    %2579 = vrot.lane.b32.xlu0 %v2533, 24
    %v2580 = vpop.permute.xlu0 %2579
    %2581 = vrot.lane.b32.xlu0 %v2538, 24
    %v2582 = vpop.permute.xlu0 %2581
    %2583 = vrot.lane.b32.xlu0 %v2543, 24
    %v2584 = vpop.permute.xlu0 %2583
    %2585 = vrot.lane.b32.xlu0 %v2548, 24
    %v2586 = vpop.permute.xlu0 %2585
    %2587 = vrot.lane.b32.xlu0 %v2553, 24
    %v2588 = vpop.permute.xlu0 %2587
    %2589 = vrot.lane.b32.xlu0 %v2558, 24
    %v2590 = vpop.permute.xlu0 %2589
    %2591 = vrot.lane.b32.xlu0 %v2563, 24
    %v2592 = vpop.permute.xlu0 %2591
    %2593 = vrot.lane.b32.xlu0 %v2568, 24
    %v2594 = vpop.permute.xlu0 %2593
    %vm2603 = vcmask 261312
    %2604 = vst.msk [vmem:[#allocation2] sm:$0xff] %vm2603, %v2580
    %2605 = vst.msk [vmem:[#allocation2 + $0x8] sm:$0xff] %vm2603, %v2582
    %2606 = vst.msk [vmem:[#allocation2 + $0x10] sm:$0xff] %vm2603, %v2584
    %2607 = vst.msk [vmem:[#allocation2 + $0x18] sm:$0xff] %vm2603, %v2586
    %2608 = vst.msk [vmem:[#allocation2 + $0x20] sm:$0xff] %vm2603, %v2588
    %2609 = vst.msk [vmem:[#allocation2 + $0x28] sm:$0xff] %vm2603, %v2590
    %2610 = vst.msk [vmem:[#allocation2 + $0x30] sm:$0xff] %vm2603, %v2592
    %2611 = vst.msk [vmem:[#allocation2 + $0x38] sm:$0xff] %vm2603, %v2594
    %2620 = vrot.lane.b32.xlu0 %v809, 96
    %v2621 = vpop.permute.xlu0 %2620
    %2622 = vrot.lane.b32.xlu0 %v814, 96
    %v2623 = vpop.permute.xlu0 %2622
    %2624 = vrot.lane.b32.xlu0 %v819, 96
    %v2625 = vpop.permute.xlu0 %2624
    %2626 = vrot.lane.b32.xlu0 %v824, 96
    %v2627 = vpop.permute.xlu0 %2626
    %2628 = vrot.lane.b32.xlu0 %v829, 96
    %v2629 = vpop.permute.xlu0 %2628
    %2630 = vrot.lane.b32.xlu0 %v834, 96
    %v2631 = vpop.permute.xlu0 %2630
    %2632 = vrot.lane.b32.xlu0 %v839, 96
    %v2633 = vpop.permute.xlu0 %2632
    %2634 = vrot.lane.b32.xlu0 %v844, 96
    %v2635 = vpop.permute.xlu0 %2634
    %v2636 = vsel %vm871, %v809, 0
    %v2638 = vsel %vm871, %v814, 0
    %v2640 = vsel %vm871, %v819, 0
    %v2642 = vsel %vm871, %v824, 0
    %v2644 = vsel %vm871, %v829, 0
    %v2646 = vsel %vm871, %v834, 0
    %v2648 = vsel %vm871, %v839, 0
    %v2650 = vsel %vm871, %v844, 0
    %v2652 = vsel %vm871, %v2621, 0
    %v2654 = vsel %vm871, %v2623, 0
    %v2656 = vsel %vm871, %v2625, 0
    %v2658 = vsel %vm871, %v2627, 0
    %v2660 = vsel %vm871, %v2629, 0
    %v2662 = vsel %vm871, %v2631, 0
    %v2664 = vsel %vm871, %v2633, 0
    %v2666 = vsel %vm871, %v2635, 0
    %2668 = vmatprep.subr.mxu0 0.0
    %2669 = vmatpush1.xpose.msra.mxu0 %v2652
    %2670 = vmatprep.subr.mxu0 0.0
    %2671 = vmatpush1.xpose.msra.mxu0 %v2654
    %2672 = vmatprep.subr.mxu0 0.0
    %2673 = vmatpush1.xpose.msra.mxu0 %v2656
    %2674 = vmatprep.subr.mxu0 0.0
    %2675 = vmatpush1.xpose.msra.mxu0 %v2658
    %2676 = vmatprep.subr.mxu0 0.0
    %2677 = vmatpush1.xpose.msra.mxu0 %v2660
    %2678 = vmatprep.subr.mxu0 0.0
    %2679 = vmatpush1.xpose.msra.mxu0 %v2662
    %2680 = vmatprep.subr.mxu0 0.0
    %2681 = vmatpush1.xpose.msra.mxu0 %v2664
    %2682 = vmatprep.subr.mxu0 0.0
    %2683 = vmatpush1.xpose.msra.mxu0 %v2666
    %2684 = vmatprep.subr.mxu0 0.0
    %2685 = vmatpush1.xpose.msra.mxu0 0.0
    %2686 = vmatprep.subr.mxu0 0.0
    %2687 = vmatpush1.xpose.msra.mxu0 0.0
    %2688 = vmatprep.subr.mxu0 0.0
    %2689 = vmatpush1.xpose.msra.mxu0 0.0
    %2690 = vmatprep.subr.mxu0 0.0
    %2691 = vmatpush1.xpose.msra.mxu0 0.0
    %2692 = vmatprep.subr.mxu0 0.0
    %2693 = vmatpush1.xpose.msra.mxu0 0.0
    %2694 = vmatprep.subr.mxu0 0.0
    %2695 = vmatpush1.xpose.msra.mxu0 0.0
    %2696 = vmatprep.subr.mxu0 0.0
    %2697 = vmatpush1.xpose.msra.mxu0 0.0
    %2698 = vmatprep.subr.mxu0 0.0
    %2699 = vmatpush1.xpose.msra.mxu0 0.0
    %2700 = vmatprep.subr.mxu0 0.0
    %2701 = vmatpush1.xpose.msra.mxu0 0.0
    %2702 = vmatprep.subr.mxu0 0.0
    %2703 = vmatpush1.xpose.msra.mxu0 0.0
    %2704 = vmatprep.subr.mxu0 0.0
    %2705 = vmatpush1.xpose.msra.mxu0 0.0
    %2706 = vmatprep.subr.mxu0 0.0
    %2707 = vmatpush1.xpose.msra.mxu0 0.0
    %2708 = vmatprep.subr.mxu0 0.0
    %2709 = vmatpush1.xpose.msra.mxu0 0.0
    %2710 = vmatprep.subr.mxu0 0.0
    %2711 = vmatpush1.xpose.msra.mxu0 0.0
    %2712 = vmatprep.subr.mxu0 0.0
    %2713 = vmatpush1.xpose.msra.mxu0 0.0
    %2714 = vmatprep.subr.mxu0 0.0
    %2715 = vmatpush1.xpose.msra.mxu0 0.0
    %2716 = vmatprep.subr.mxu0 0.0
    %2717 = vmatpush1.xpose.msra.mxu0 0.0
    %2718 = vmatprep.subr.mxu0 0.0
    %2719 = vmatpush1.xpose.msra.mxu0 0.0
    %2720 = vmatprep.subr.mxu0 0.0
    %2721 = vmatpush1.xpose.msra.mxu0 0.0
    %2722 = vmatprep.subr.mxu0 0.0
    %2723 = vmatpush1.xpose.msra.mxu0 0.0
    %2724 = vmatprep.subr.mxu0 0.0
    %2725 = vmatpush1.xpose.msra.mxu0 0.0
    %2726 = vmatprep.subr.mxu0 0.0
    %2727 = vmatpush1.xpose.msra.mxu0 0.0
    %2728 = vmatprep.subr.mxu0 0.0
    %2729 = vmatpush1.xpose.msra.mxu0 0.0
    %2730 = vmatprep.subr.mxu0 0.0
    %2731 = vmatpush1.xpose.msra.mxu0 0.0
    %2732 = vmatprep.mubr.f32.mxu0 0.0
    %2733 = vmatmul.mubr.f32.gmra.mrb[0].mxu0 %v2636
    %v2734 = vpop.f32.mrb[0].mxu0
    %v2735 = vadd.f32 0.0, %v2734
    %v2736 = vpop.f32.mrb[0].mxu0
    %2737 = vmatprep.mubr.f32.mxu0 0.0
    %2738 = vmatmul.mubr.f32.gmra.mrb[0].mxu0 %v2638
    %v2739 = vpop.f32.mrb[0].mxu0
    %v2740 = vadd.f32 0.0, %v2739
    %v2741 = vpop.f32.mrb[0].mxu0
    %2742 = vmatprep.mubr.f32.mxu0 0.0
    %2743 = vmatmul.mubr.f32.gmra.mrb[0].mxu0 %v2640
    %v2744 = vpop.f32.mrb[0].mxu0
    %v2745 = vadd.f32 0.0, %v2744
    %v2746 = vpop.f32.mrb[0].mxu0
    %2747 = vmatprep.mubr.f32.mxu0 0.0
    %2748 = vmatmul.mubr.f32.gmra.mrb[0].mxu0 %v2642
    %v2749 = vpop.f32.mrb[0].mxu0
    %v2750 = vadd.f32 0.0, %v2749
    %v2751 = vpop.f32.mrb[0].mxu0
    %2752 = vmatprep.mubr.f32.mxu0 0.0
    %2753 = vmatmul.mubr.f32.gmra.mrb[0].mxu0 %v2644
    %v2754 = vpop.f32.mrb[0].mxu0
    %v2755 = vadd.f32 0.0, %v2754
    %v2756 = vpop.f32.mrb[0].mxu0
    %2757 = vmatprep.mubr.f32.mxu0 0.0
    %2758 = vmatmul.mubr.f32.gmra.mrb[0].mxu0 %v2646
    %v2759 = vpop.f32.mrb[0].mxu0
    %v2760 = vadd.f32 0.0, %v2759
    %v2761 = vpop.f32.mrb[0].mxu0
    %2762 = vmatprep.mubr.f32.mxu0 0.0
    %2763 = vmatmul.mubr.f32.gmra.mrb[0].mxu0 %v2648
    %v2764 = vpop.f32.mrb[0].mxu0
    %v2765 = vadd.f32 0.0, %v2764
    %v2766 = vpop.f32.mrb[0].mxu0
    %2767 = vmatprep.mubr.f32.mxu0 0.0
    %2768 = vmatmul.mubr.f32.gmra.mrb[0].mxu0 %v2650
    %v2769 = vpop.f32.mrb[0].mxu0
    %v2770 = vadd.f32 0.0, %v2769
    %v2771 = vpop.f32.mrb[0].mxu0
    %2772 = vdwg.mxu0
    %v2773 = vsel %vm1009, %v2735, -inf
    %2774 = vmax.xlane.f32.xlu0 %v2773
    %v2775 = vpop.xlane.xlu0 %2774
    %v2776 = vsel %vm1009, %v2740, -inf
    %2777 = vmax.xlane.f32.xlu0 %v2776
    %v2778 = vpop.xlane.xlu0 %2777
    %v2779 = vsel %vm1009, %v2745, -inf
    %2780 = vmax.xlane.f32.xlu0 %v2779
    %v2781 = vpop.xlane.xlu0 %2780
    %v2782 = vsel %vm1009, %v2750, -inf
    %2783 = vmax.xlane.f32.xlu0 %v2782
    %v2784 = vpop.xlane.xlu0 %2783
    %v2785 = vsel %vm1009, %v2755, -inf
    %2786 = vmax.xlane.f32.xlu0 %v2785
    %v2787 = vpop.xlane.xlu0 %2786
    %v2788 = vsel %vm1009, %v2760, -inf
    %2789 = vmax.xlane.f32.xlu0 %v2788
    %v2790 = vpop.xlane.xlu0 %2789
    %v2791 = vsel %vm1009, %v2765, -inf
    %2792 = vmax.xlane.f32.xlu0 %v2791
    %v2793 = vpop.xlane.xlu0 %2792
    %v2794 = vsel %vm1009, %v2770, -inf
    %2795 = vmax.xlane.f32.xlu0 %v2794
    %v2796 = vpop.xlane.xlu0 %2795
    %v2797 = vsub.f32 %v2735, %v2775
    %v2798 = vsub.f32 %v2740, %v2778
    %v2799 = vsub.f32 %v2745, %v2781
    %v2800 = vsub.f32 %v2750, %v2784
    %v2801 = vsub.f32 %v2755, %v2787
    %v2802 = vsub.f32 %v2760, %v2790
    %v2803 = vsub.f32 %v2765, %v2793
    %v2804 = vsub.f32 %v2770, %v2796
    %v2805 = vmul.f32 %v2797, 1.442695
    %v2806 = vpow.pop %v2805
    %v2807 = vmul.f32 %v2798, 1.442695
    %v2808 = vpow.pop %v2807
    %v2809 = vmul.f32 %v2799, 1.442695
    %v2810 = vpow.pop %v2809
    %v2811 = vmul.f32 %v2800, 1.442695
    %v2812 = vpow.pop %v2811
    %v2813 = vmul.f32 %v2801, 1.442695
    %v2814 = vpow.pop %v2813
    %v2815 = vmul.f32 %v2802, 1.442695
    %v2816 = vpow.pop %v2815
    %v2817 = vmul.f32 %v2803, 1.442695
    %v2818 = vpow.pop %v2817
    %v2819 = vmul.f32 %v2804, 1.442695
    %v2820 = vpow.pop %v2819
    %v2821 = vsel %vm1009, %v2806, 0.0
    %2822 = vadd.xlane.f32.xlu0 %v2821
    %v2823 = vpop.xlane.xlu0 %2822
    %v2824 = vsel %vm1009, %v2808, 0.0
    %2825 = vadd.xlane.f32.xlu0 %v2824
    %v2826 = vpop.xlane.xlu0 %2825
    %v2827 = vsel %vm1009, %v2810, 0.0
    %2828 = vadd.xlane.f32.xlu0 %v2827
    %v2829 = vpop.xlane.xlu0 %2828
    %v2830 = vsel %vm1009, %v2812, 0.0
    %2831 = vadd.xlane.f32.xlu0 %v2830
    %v2832 = vpop.xlane.xlu0 %2831
    %v2833 = vsel %vm1009, %v2814, 0.0
    %2834 = vadd.xlane.f32.xlu0 %v2833
    %v2835 = vpop.xlane.xlu0 %2834
    %v2836 = vsel %vm1009, %v2816, 0.0
    %2837 = vadd.xlane.f32.xlu0 %v2836
    %v2838 = vpop.xlane.xlu0 %2837
    %v2839 = vsel %vm1009, %v2818, 0.0
    %2840 = vadd.xlane.f32.xlu0 %v2839
    %v2841 = vpop.xlane.xlu0 %2840
    %v2842 = vsel %vm1009, %v2820, 0.0
    %2843 = vadd.xlane.f32.xlu0 %v2842
    %v2844 = vpop.xlane.xlu0 %2843
    %v2845 = vrcp.pop %v2823
    %v2846 = vrcp.pop %v2826
    %v2847 = vrcp.pop %v2829
    %v2848 = vrcp.pop %v2832
    %v2849 = vrcp.pop %v2835
    %v2850 = vrcp.pop %v2838
    %v2851 = vrcp.pop %v2841
    %v2852 = vrcp.pop %v2844
    %v2853 = vmul.f32 %v2806, %v2845
    %v2854 = vmul.f32 %v2808, %v2846
    %v2855 = vmul.f32 %v2810, %v2847
    %v2856 = vmul.f32 %v2812, %v2848
    %v2857 = vmul.f32 %v2814, %v2849
    %v2858 = vmul.f32 %v2816, %v2850
    %v2859 = vmul.f32 %v2818, %v2851
    %v2860 = vmul.f32 %v2820, %v2852
    %2861 = vrot.lane.b32.xlu0 %v809, 64
    %v2862 = vpop.permute.xlu0 %2861
    %2863 = vrot.lane.b32.xlu0 %v814, 64
    %v2864 = vpop.permute.xlu0 %2863
    %2865 = vrot.lane.b32.xlu0 %v819, 64
    %v2866 = vpop.permute.xlu0 %2865
    %2867 = vrot.lane.b32.xlu0 %v824, 64
    %v2868 = vpop.permute.xlu0 %2867
    %2869 = vrot.lane.b32.xlu0 %v829, 64
    %v2870 = vpop.permute.xlu0 %2869
    %2871 = vrot.lane.b32.xlu0 %v834, 64
    %v2872 = vpop.permute.xlu0 %2871
    %2873 = vrot.lane.b32.xlu0 %v839, 64
    %v2874 = vpop.permute.xlu0 %2873
    %2875 = vrot.lane.b32.xlu0 %v844, 64
    %v2876 = vpop.permute.xlu0 %2875
    %v2886 = vsel %vm1009, %v2853, 0
    %v2889 = vsel %vm1009, %v2854, 0
    %v2892 = vsel %vm1009, %v2855, 0
    %v2895 = vsel %vm1009, %v2856, 0
    %v2898 = vsel %vm1009, %v2857, 0
    %v2901 = vsel %vm1009, %v2858, 0
    %v2904 = vsel %vm1009, %v2859, 0
    %v2907 = vsel %vm1009, %v2860, 0
    %2909 = vmatprep.subr.mxu0 0.0
    %2910 = vmatpush1.msra.mxu0 %v2862
    %2911 = vmatprep.subr.mxu0 0.0
    %2912 = vmatpush1.msra.mxu0 %v2864
    %2913 = vmatprep.subr.mxu0 0.0
    %2914 = vmatpush1.msra.mxu0 %v2866
    %2915 = vmatprep.subr.mxu0 0.0
    %2916 = vmatpush1.msra.mxu0 %v2868
    %2917 = vmatprep.subr.mxu0 0.0
    %2918 = vmatpush1.msra.mxu0 %v2870
    %2919 = vmatprep.subr.mxu0 0.0
    %2920 = vmatpush1.msra.mxu0 %v2872
    %2921 = vmatprep.subr.mxu0 0.0
    %2922 = vmatpush1.msra.mxu0 %v2874
    %2923 = vmatprep.subr.mxu0 0.0
    %2924 = vmatpush1.msra.mxu0 %v2876
    %2925 = vmatprep.subr.mxu0 0.0
    %2926 = vmatpush1.msra.mxu0 0.0
    %2927 = vmatprep.subr.mxu0 0.0
    %2928 = vmatpush1.msra.mxu0 0.0
    %2929 = vmatprep.subr.mxu0 0.0
    %2930 = vmatpush1.msra.mxu0 0.0
    %2931 = vmatprep.subr.mxu0 0.0
    %2932 = vmatpush1.msra.mxu0 0.0
    %2933 = vmatprep.subr.mxu0 0.0
    %2934 = vmatpush1.msra.mxu0 0.0
    %2935 = vmatprep.subr.mxu0 0.0
    %2936 = vmatpush1.msra.mxu0 0.0
    %2937 = vmatprep.subr.mxu0 0.0
    %2938 = vmatpush1.msra.mxu0 0.0
    %2939 = vmatprep.subr.mxu0 0.0
    %2940 = vmatpush1.msra.mxu0 0.0
    %2941 = vmatprep.subr.mxu0 0.0
    %2942 = vmatpush1.msra.mxu0 0.0
    %2943 = vmatprep.subr.mxu0 0.0
    %2944 = vmatpush1.msra.mxu0 0.0
    %2945 = vmatprep.subr.mxu0 0.0
    %2946 = vmatpush1.msra.mxu0 0.0
    %2947 = vmatprep.subr.mxu0 0.0
    %2948 = vmatpush1.msra.mxu0 0.0
    %2949 = vmatprep.subr.mxu0 0.0
    %2950 = vmatpush1.msra.mxu0 0.0
    %2951 = vmatprep.subr.mxu0 0.0
    %2952 = vmatpush1.msra.mxu0 0.0
    %2953 = vmatprep.subr.mxu0 0.0
    %2954 = vmatpush1.msra.mxu0 0.0
    %2955 = vmatprep.subr.mxu0 0.0
    %2956 = vmatpush1.msra.mxu0 0.0
    %2957 = vmatprep.subr.mxu0 0.0
    %2958 = vmatpush1.msra.mxu0 0.0
    %2959 = vmatprep.subr.mxu0 0.0
    %2960 = vmatpush1.msra.mxu0 0.0
    %2961 = vmatprep.subr.mxu0 0.0
    %2962 = vmatpush1.msra.mxu0 0.0
    %2963 = vmatprep.subr.mxu0 0.0
    %2964 = vmatpush1.msra.mxu0 0.0
    %2965 = vmatprep.subr.mxu0 0.0
    %2966 = vmatpush1.msra.mxu0 0.0
    %2967 = vmatprep.subr.mxu0 0.0
    %2968 = vmatpush1.msra.mxu0 0.0
    %2969 = vmatprep.subr.mxu0 0.0
    %2970 = vmatpush1.msra.mxu0 0.0
    %2971 = vmatprep.subr.mxu0 0.0
    %2972 = vmatpush1.msra.mxu0 0.0
    %2973 = vmatprep.mubr.f32.mxu0 0.0
    %2974 = vmatmul.mubr.f32.gmra.mrb[0].mxu0 %v2886
    %v2975 = vpop.f32.mrb[0].mxu0
    %v2976 = vadd.f32 0.0, %v2975
    %v2977 = vpop.f32.mrb[0].mxu0
    %2978 = vmatprep.mubr.f32.mxu0 0.0
    %2979 = vmatmul.mubr.f32.gmra.mrb[0].mxu0 %v2889
    %v2980 = vpop.f32.mrb[0].mxu0
    %v2981 = vadd.f32 0.0, %v2980
    %v2982 = vpop.f32.mrb[0].mxu0
    %2983 = vmatprep.mubr.f32.mxu0 0.0
    %2984 = vmatmul.mubr.f32.gmra.mrb[0].mxu0 %v2892
    %v2985 = vpop.f32.mrb[0].mxu0
    %v2986 = vadd.f32 0.0, %v2985
    %v2987 = vpop.f32.mrb[0].mxu0
    %2988 = vmatprep.mubr.f32.mxu0 0.0
    %2989 = vmatmul.mubr.f32.gmra.mrb[0].mxu0 %v2895
    %v2990 = vpop.f32.mrb[0].mxu0
    %v2991 = vadd.f32 0.0, %v2990
    %v2992 = vpop.f32.mrb[0].mxu0
    %2993 = vmatprep.mubr.f32.mxu0 0.0
    %2994 = vmatmul.mubr.f32.gmra.mrb[0].mxu0 %v2898
    %v2995 = vpop.f32.mrb[0].mxu0
    %v2996 = vadd.f32 0.0, %v2995
    %v2997 = vpop.f32.mrb[0].mxu0
    %2998 = vmatprep.mubr.f32.mxu0 0.0
    %2999 = vmatmul.mubr.f32.gmra.mrb[0].mxu0 %v2901
    %v3000 = vpop.f32.mrb[0].mxu0
    %v3001 = vadd.f32 0.0, %v3000
    %v3002 = vpop.f32.mrb[0].mxu0
    %3003 = vmatprep.mubr.f32.mxu0 0.0
    %3004 = vmatmul.mubr.f32.gmra.mrb[0].mxu0 %v2904
    %v3005 = vpop.f32.mrb[0].mxu0
    %v3006 = vadd.f32 0.0, %v3005
    %v3007 = vpop.f32.mrb[0].mxu0
    %3008 = vmatprep.mubr.f32.mxu0 0.0
    %3009 = vmatmul.mubr.f32.gmra.mrb[0].mxu0 %v2907
    %v3010 = vpop.f32.mrb[0].mxu0
    %v3011 = vadd.f32 0.0, %v3010
    %v3012 = vpop.f32.mrb[0].mxu0
    %3013 = vdwg.mxu0
    %3014 = vst.msk [vmem:[#allocation2 + $0x40] sm:$0xff] %vm871, %v2976
    %3015 = vst.msk [vmem:[#allocation2 + $0x48] sm:$0xff] %vm871, %v2981
    %3016 = vst.msk [vmem:[#allocation2 + $0x50] sm:$0xff] %vm871, %v2986
    %3017 = vst.msk [vmem:[#allocation2 + $0x58] sm:$0xff] %vm871, %v2991
    %3018 = vst.msk [vmem:[#allocation2 + $0x60] sm:$0xff] %vm871, %v2996
    %3019 = vst.msk [vmem:[#allocation2 + $0x68] sm:$0xff] %vm871, %v3001
    %3020 = vst.msk [vmem:[#allocation2 + $0x70] sm:$0xff] %vm871, %v3006
    %3021 = vst.msk [vmem:[#allocation2 + $0x78] sm:$0xff] %vm871, %v3011
    %3022 = vrot.lane.b32.xlu0 %v809, 120
    %v3023 = vpop.permute.xlu0 %3022
    %3024 = vrot.lane.b32.xlu0 %v814, 120
    %v3025 = vpop.permute.xlu0 %3024
    %3026 = vrot.lane.b32.xlu0 %v819, 120
    %v3027 = vpop.permute.xlu0 %3026
    %3028 = vrot.lane.b32.xlu0 %v824, 120
    %v3029 = vpop.permute.xlu0 %3028
    %3030 = vrot.lane.b32.xlu0 %v829, 120
    %v3031 = vpop.permute.xlu0 %3030
    %3032 = vrot.lane.b32.xlu0 %v834, 120
    %v3033 = vpop.permute.xlu0 %3032
    %3034 = vrot.lane.b32.xlu0 %v839, 120
    %v3035 = vpop.permute.xlu0 %3034
    %3036 = vrot.lane.b32.xlu0 %v844, 120
    %v3037 = vpop.permute.xlu0 %3036
    %3038 = vrot.lane.b32.xlu0 %v809, 88
    %v3039 = vpop.permute.xlu0 %3038
    %3040 = vrot.lane.b32.xlu0 %v814, 88
    %v3041 = vpop.permute.xlu0 %3040
    %3042 = vrot.lane.b32.xlu0 %v819, 88
    %v3043 = vpop.permute.xlu0 %3042
    %3044 = vrot.lane.b32.xlu0 %v824, 88
    %v3045 = vpop.permute.xlu0 %3044
    %3046 = vrot.lane.b32.xlu0 %v829, 88
    %v3047 = vpop.permute.xlu0 %3046
    %3048 = vrot.lane.b32.xlu0 %v834, 88
    %v3049 = vpop.permute.xlu0 %3048
    %3050 = vrot.lane.b32.xlu0 %v839, 88
    %v3051 = vpop.permute.xlu0 %3050
    %3052 = vrot.lane.b32.xlu0 %v844, 88
    %v3053 = vpop.permute.xlu0 %3052
    %v3054 = vsel %vm871, %v3023, 0
    %v3056 = vsel %vm871, %v3025, 0
    %v3058 = vsel %vm871, %v3027, 0
    %v3060 = vsel %vm871, %v3029, 0
    %v3062 = vsel %vm871, %v3031, 0
    %v3064 = vsel %vm871, %v3033, 0
    %v3066 = vsel %vm871, %v3035, 0
    %v3068 = vsel %vm871, %v3037, 0
    %v3070 = vsel %vm871, %v3039, 0
    %v3072 = vsel %vm871, %v3041, 0
    %v3074 = vsel %vm871, %v3043, 0
    %v3076 = vsel %vm871, %v3045, 0
    %v3078 = vsel %vm871, %v3047, 0
    %v3080 = vsel %vm871, %v3049, 0
    %v3082 = vsel %vm871, %v3051, 0
    %v3084 = vsel %vm871, %v3053, 0
    %3086 = vmatprep.subr.mxu0 0.0
    %3087 = vmatpush1.xpose.msra.mxu0 %v3070
    %3088 = vmatprep.subr.mxu0 0.0
    %3089 = vmatpush1.xpose.msra.mxu0 %v3072
    %3090 = vmatprep.subr.mxu0 0.0
    %3091 = vmatpush1.xpose.msra.mxu0 %v3074
    %3092 = vmatprep.subr.mxu0 0.0
    %3093 = vmatpush1.xpose.msra.mxu0 %v3076
    %3094 = vmatprep.subr.mxu0 0.0
    %3095 = vmatpush1.xpose.msra.mxu0 %v3078
    %3096 = vmatprep.subr.mxu0 0.0
    %3097 = vmatpush1.xpose.msra.mxu0 %v3080
    %3098 = vmatprep.subr.mxu0 0.0
    %3099 = vmatpush1.xpose.msra.mxu0 %v3082
    %3100 = vmatprep.subr.mxu0 0.0
    %3101 = vmatpush1.xpose.msra.mxu0 %v3084
    %3102 = vmatprep.subr.mxu0 0.0
    %3103 = vmatpush1.xpose.msra.mxu0 0.0
    %3104 = vmatprep.subr.mxu0 0.0
    %3105 = vmatpush1.xpose.msra.mxu0 0.0
    %3106 = vmatprep.subr.mxu0 0.0
    %3107 = vmatpush1.xpose.msra.mxu0 0.0
    %3108 = vmatprep.subr.mxu0 0.0
    %3109 = vmatpush1.xpose.msra.mxu0 0.0
    %3110 = vmatprep.subr.mxu0 0.0
    %3111 = vmatpush1.xpose.msra.mxu0 0.0
    %3112 = vmatprep.subr.mxu0 0.0
    %3113 = vmatpush1.xpose.msra.mxu0 0.0
    %3114 = vmatprep.subr.mxu0 0.0
    %3115 = vmatpush1.xpose.msra.mxu0 0.0
    %3116 = vmatprep.subr.mxu0 0.0
    %3117 = vmatpush1.xpose.msra.mxu0 0.0
    %3118 = vmatprep.subr.mxu0 0.0
    %3119 = vmatpush1.xpose.msra.mxu0 0.0
    %3120 = vmatprep.subr.mxu0 0.0
    %3121 = vmatpush1.xpose.msra.mxu0 0.0
    %3122 = vmatprep.subr.mxu0 0.0
    %3123 = vmatpush1.xpose.msra.mxu0 0.0
    %3124 = vmatprep.subr.mxu0 0.0
    %3125 = vmatpush1.xpose.msra.mxu0 0.0
    %3126 = vmatprep.subr.mxu0 0.0
    %3127 = vmatpush1.xpose.msra.mxu0 0.0
    %3128 = vmatprep.subr.mxu0 0.0
    %3129 = vmatpush1.xpose.msra.mxu0 0.0
    %3130 = vmatprep.subr.mxu0 0.0
    %3131 = vmatpush1.xpose.msra.mxu0 0.0
    %3132 = vmatprep.subr.mxu0 0.0
    %3133 = vmatpush1.xpose.msra.mxu0 0.0
    %3134 = vmatprep.subr.mxu0 0.0
    %3135 = vmatpush1.xpose.msra.mxu0 0.0
    %3136 = vmatprep.subr.mxu0 0.0
    %3137 = vmatpush1.xpose.msra.mxu0 0.0
    %3138 = vmatprep.subr.mxu0 0.0
    %3139 = vmatpush1.xpose.msra.mxu0 0.0
    %3140 = vmatprep.subr.mxu0 0.0
    %3141 = vmatpush1.xpose.msra.mxu0 0.0
    %3142 = vmatprep.subr.mxu0 0.0
    %3143 = vmatpush1.xpose.msra.mxu0 0.0
    %3144 = vmatprep.subr.mxu0 0.0
    %3145 = vmatpush1.xpose.msra.mxu0 0.0
    %3146 = vmatprep.subr.mxu0 0.0
    %3147 = vmatpush1.xpose.msra.mxu0 0.0
    %3148 = vmatprep.subr.mxu0 0.0
    %3149 = vmatpush1.xpose.msra.mxu0 0.0
    %3150 = vmatprep.mubr.f32.mxu0 0.0
    %3151 = vmatmul.mubr.f32.gmra.mrb[0].mxu0 %v3054
    %v3152 = vpop.f32.mrb[0].mxu0
    %v3153 = vadd.f32 0.0, %v3152
    %v3154 = vpop.f32.mrb[0].mxu0
    %3155 = vmatprep.mubr.f32.mxu0 0.0
    %3156 = vmatmul.mubr.f32.gmra.mrb[0].mxu0 %v3056
    %v3157 = vpop.f32.mrb[0].mxu0
    %v3158 = vadd.f32 0.0, %v3157
    %v3159 = vpop.f32.mrb[0].mxu0
    %3160 = vmatprep.mubr.f32.mxu0 0.0
    %3161 = vmatmul.mubr.f32.gmra.mrb[0].mxu0 %v3058
    %v3162 = vpop.f32.mrb[0].mxu0
    %v3163 = vadd.f32 0.0, %v3162
    %v3164 = vpop.f32.mrb[0].mxu0
    %3165 = vmatprep.mubr.f32.mxu0 0.0
    %3166 = vmatmul.mubr.f32.gmra.mrb[0].mxu0 %v3060
    %v3167 = vpop.f32.mrb[0].mxu0
    %v3168 = vadd.f32 0.0, %v3167
    %v3169 = vpop.f32.mrb[0].mxu0
    %3170 = vmatprep.mubr.f32.mxu0 0.0
    %3171 = vmatmul.mubr.f32.gmra.mrb[0].mxu0 %v3062
    %v3172 = vpop.f32.mrb[0].mxu0
    %v3173 = vadd.f32 0.0, %v3172
    %v3174 = vpop.f32.mrb[0].mxu0
    %3175 = vmatprep.mubr.f32.mxu0 0.0
    %3176 = vmatmul.mubr.f32.gmra.mrb[0].mxu0 %v3064
    %v3177 = vpop.f32.mrb[0].mxu0
    %v3178 = vadd.f32 0.0, %v3177
    %v3179 = vpop.f32.mrb[0].mxu0
    %3180 = vmatprep.mubr.f32.mxu0 0.0
    %3181 = vmatmul.mubr.f32.gmra.mrb[0].mxu0 %v3066
    %v3182 = vpop.f32.mrb[0].mxu0
    %v3183 = vadd.f32 0.0, %v3182
    %v3184 = vpop.f32.mrb[0].mxu0
    %3185 = vmatprep.mubr.f32.mxu0 0.0
    %3186 = vmatmul.mubr.f32.gmra.mrb[0].mxu0 %v3068
    %v3187 = vpop.f32.mrb[0].mxu0
    %v3188 = vadd.f32 0.0, %v3187
    %v3189 = vpop.f32.mrb[0].mxu0
    %3190 = vdwg.mxu0
    %v3191 = vsel %vm1009, %v3153, -inf
    %3192 = vmax.xlane.f32.xlu0 %v3191
    %v3193 = vpop.xlane.xlu0 %3192
    %v3194 = vsel %vm1009, %v3158, -inf
    %3195 = vmax.xlane.f32.xlu0 %v3194
    %v3196 = vpop.xlane.xlu0 %3195
    %v3197 = vsel %vm1009, %v3163, -inf
    %3198 = vmax.xlane.f32.xlu0 %v3197
    %v3199 = vpop.xlane.xlu0 %3198
    %v3200 = vsel %vm1009, %v3168, -inf
    %3201 = vmax.xlane.f32.xlu0 %v3200
    %v3202 = vpop.xlane.xlu0 %3201
    %v3203 = vsel %vm1009, %v3173, -inf
    %3204 = vmax.xlane.f32.xlu0 %v3203
    %v3205 = vpop.xlane.xlu0 %3204
    %v3206 = vsel %vm1009, %v3178, -inf
    %3207 = vmax.xlane.f32.xlu0 %v3206
    %v3208 = vpop.xlane.xlu0 %3207
    %v3209 = vsel %vm1009, %v3183, -inf
    %3210 = vmax.xlane.f32.xlu0 %v3209
    %v3211 = vpop.xlane.xlu0 %3210
    %v3212 = vsel %vm1009, %v3188, -inf
    %3213 = vmax.xlane.f32.xlu0 %v3212
    %v3214 = vpop.xlane.xlu0 %3213
    %v3215 = vsub.f32 %v3153, %v3193
    %v3216 = vsub.f32 %v3158, %v3196
    %v3217 = vsub.f32 %v3163, %v3199
    %v3218 = vsub.f32 %v3168, %v3202
    %v3219 = vsub.f32 %v3173, %v3205
    %v3220 = vsub.f32 %v3178, %v3208
    %v3221 = vsub.f32 %v3183, %v3211
    %v3222 = vsub.f32 %v3188, %v3214
    %v3223 = vmul.f32 %v3215, 1.442695
    %v3224 = vpow.pop %v3223
    %v3225 = vmul.f32 %v3216, 1.442695
    %v3226 = vpow.pop %v3225
    %v3227 = vmul.f32 %v3217, 1.442695
    %v3228 = vpow.pop %v3227
    %v3229 = vmul.f32 %v3218, 1.442695
    %v3230 = vpow.pop %v3229
    %v3231 = vmul.f32 %v3219, 1.442695
    %v3232 = vpow.pop %v3231
    %v3233 = vmul.f32 %v3220, 1.442695
    %v3234 = vpow.pop %v3233
    %v3235 = vmul.f32 %v3221, 1.442695
    %v3236 = vpow.pop %v3235
    %v3237 = vmul.f32 %v3222, 1.442695
    %v3238 = vpow.pop %v3237
    %v3239 = vsel %vm1009, %v3224, 0.0
    %3240 = vadd.xlane.f32.xlu0 %v3239
    %v3241 = vpop.xlane.xlu0 %3240
    %v3242 = vsel %vm1009, %v3226, 0.0
    %3243 = vadd.xlane.f32.xlu0 %v3242
    %v3244 = vpop.xlane.xlu0 %3243
    %v3245 = vsel %vm1009, %v3228, 0.0
    %3246 = vadd.xlane.f32.xlu0 %v3245
    %v3247 = vpop.xlane.xlu0 %3246
    %v3248 = vsel %vm1009, %v3230, 0.0
    %3249 = vadd.xlane.f32.xlu0 %v3248
    %v3250 = vpop.xlane.xlu0 %3249
    %v3251 = vsel %vm1009, %v3232, 0.0
    %3252 = vadd.xlane.f32.xlu0 %v3251
    %v3253 = vpop.xlane.xlu0 %3252
    %v3254 = vsel %vm1009, %v3234, 0.0
    %3255 = vadd.xlane.f32.xlu0 %v3254
    %v3256 = vpop.xlane.xlu0 %3255
    %v3257 = vsel %vm1009, %v3236, 0.0
    %3258 = vadd.xlane.f32.xlu0 %v3257
    %v3259 = vpop.xlane.xlu0 %3258
    %v3260 = vsel %vm1009, %v3238, 0.0
    %3261 = vadd.xlane.f32.xlu0 %v3260
    %v3262 = vpop.xlane.xlu0 %3261
    %v3263 = vrcp.pop %v3241
    %v3264 = vrcp.pop %v3244
    %v3265 = vrcp.pop %v3247
    %v3266 = vrcp.pop %v3250
    %v3267 = vrcp.pop %v3253
    %v3268 = vrcp.pop %v3256
    %v3269 = vrcp.pop %v3259
    %v3270 = vrcp.pop %v3262
    %v3271 = vmul.f32 %v3224, %v3263
    %v3272 = vmul.f32 %v3226, %v3264
    %v3273 = vmul.f32 %v3228, %v3265
    %v3274 = vmul.f32 %v3230, %v3266
    %v3275 = vmul.f32 %v3232, %v3267
    %v3276 = vmul.f32 %v3234, %v3268
    %v3277 = vmul.f32 %v3236, %v3269
    %v3278 = vmul.f32 %v3238, %v3270
    %3279 = vrot.lane.b32.xlu0 %v809, 56
    %v3280 = vpop.permute.xlu0 %3279
    %3281 = vrot.lane.b32.xlu0 %v814, 56
    %v3282 = vpop.permute.xlu0 %3281
    %3283 = vrot.lane.b32.xlu0 %v819, 56
    %v3284 = vpop.permute.xlu0 %3283
    %3285 = vrot.lane.b32.xlu0 %v824, 56
    %v3286 = vpop.permute.xlu0 %3285
    %3287 = vrot.lane.b32.xlu0 %v829, 56
    %v3288 = vpop.permute.xlu0 %3287
    %3289 = vrot.lane.b32.xlu0 %v834, 56
    %v3290 = vpop.permute.xlu0 %3289
    %3291 = vrot.lane.b32.xlu0 %v839, 56
    %v3292 = vpop.permute.xlu0 %3291
    %3293 = vrot.lane.b32.xlu0 %v844, 56
    %v3294 = vpop.permute.xlu0 %3293
    %v3304 = vsel %vm1009, %v3271, 0
    %v3307 = vsel %vm1009, %v3272, 0
    %v3310 = vsel %vm1009, %v3273, 0
    %v3313 = vsel %vm1009, %v3274, 0
    %v3316 = vsel %vm1009, %v3275, 0
    %v3319 = vsel %vm1009, %v3276, 0
    %v3322 = vsel %vm1009, %v3277, 0
    %v3325 = vsel %vm1009, %v3278, 0
    %3327 = vmatprep.subr.mxu0 0.0
    %3328 = vmatpush1.msra.mxu0 %v3280
    %3329 = vmatprep.subr.mxu0 0.0
    %3330 = vmatpush1.msra.mxu0 %v3282
    %3331 = vmatprep.subr.mxu0 0.0
    %3332 = vmatpush1.msra.mxu0 %v3284
    %3333 = vmatprep.subr.mxu0 0.0
    %3334 = vmatpush1.msra.mxu0 %v3286
    %3335 = vmatprep.subr.mxu0 0.0
    %3336 = vmatpush1.msra.mxu0 %v3288
    %3337 = vmatprep.subr.mxu0 0.0
    %3338 = vmatpush1.msra.mxu0 %v3290
    %3339 = vmatprep.subr.mxu0 0.0
    %3340 = vmatpush1.msra.mxu0 %v3292
    %3341 = vmatprep.subr.mxu0 0.0
    %3342 = vmatpush1.msra.mxu0 %v3294
    %3343 = vmatprep.subr.mxu0 0.0
    %3344 = vmatpush1.msra.mxu0 0.0
    %3345 = vmatprep.subr.mxu0 0.0
    %3346 = vmatpush1.msra.mxu0 0.0
    %3347 = vmatprep.subr.mxu0 0.0
    %3348 = vmatpush1.msra.mxu0 0.0
    %3349 = vmatprep.subr.mxu0 0.0
    %3350 = vmatpush1.msra.mxu0 0.0
    %3351 = vmatprep.subr.mxu0 0.0
    %3352 = vmatpush1.msra.mxu0 0.0
    %3353 = vmatprep.subr.mxu0 0.0
    %3354 = vmatpush1.msra.mxu0 0.0
    %3355 = vmatprep.subr.mxu0 0.0
    %3356 = vmatpush1.msra.mxu0 0.0
    %3357 = vmatprep.subr.mxu0 0.0
    %3358 = vmatpush1.msra.mxu0 0.0
    %3359 = vmatprep.subr.mxu0 0.0
    %3360 = vmatpush1.msra.mxu0 0.0
    %3361 = vmatprep.subr.mxu0 0.0
    %3362 = vmatpush1.msra.mxu0 0.0
    %3363 = vmatprep.subr.mxu0 0.0
    %3364 = vmatpush1.msra.mxu0 0.0
    %3365 = vmatprep.subr.mxu0 0.0
    %3366 = vmatpush1.msra.mxu0 0.0
    %3367 = vmatprep.subr.mxu0 0.0
    %3368 = vmatpush1.msra.mxu0 0.0
    %3369 = vmatprep.subr.mxu0 0.0
    %3370 = vmatpush1.msra.mxu0 0.0
    %3371 = vmatprep.subr.mxu0 0.0
    %3372 = vmatpush1.msra.mxu0 0.0
    %3373 = vmatprep.subr.mxu0 0.0
    %3374 = vmatpush1.msra.mxu0 0.0
    %3375 = vmatprep.subr.mxu0 0.0
    %3376 = vmatpush1.msra.mxu0 0.0
    %3377 = vmatprep.subr.mxu0 0.0
    %3378 = vmatpush1.msra.mxu0 0.0
    %3379 = vmatprep.subr.mxu0 0.0
    %3380 = vmatpush1.msra.mxu0 0.0
    %3381 = vmatprep.subr.mxu0 0.0
    %3382 = vmatpush1.msra.mxu0 0.0
    %3383 = vmatprep.subr.mxu0 0.0
    %3384 = vmatpush1.msra.mxu0 0.0
    %3385 = vmatprep.subr.mxu0 0.0
    %3386 = vmatpush1.msra.mxu0 0.0
    %3387 = vmatprep.subr.mxu0 0.0
    %3388 = vmatpush1.msra.mxu0 0.0
    %3389 = vmatprep.subr.mxu0 0.0
    %3390 = vmatpush1.msra.mxu0 0.0
    %3391 = vmatprep.mubr.f32.mxu0 0.0
    %3392 = vmatmul.mubr.f32.gmra.mrb[0].mxu0 %v3304
    %v3393 = vpop.f32.mrb[0].mxu0
    %v3394 = vadd.f32 0.0, %v3393
    %v3395 = vpop.f32.mrb[0].mxu0
    %3396 = vmatprep.mubr.f32.mxu0 0.0
    %3397 = vmatmul.mubr.f32.gmra.mrb[0].mxu0 %v3307
    %v3398 = vpop.f32.mrb[0].mxu0
    %v3399 = vadd.f32 0.0, %v3398
    %v3400 = vpop.f32.mrb[0].mxu0
    %3401 = vmatprep.mubr.f32.mxu0 0.0
    %3402 = vmatmul.mubr.f32.gmra.mrb[0].mxu0 %v3310
    %v3403 = vpop.f32.mrb[0].mxu0
    %v3404 = vadd.f32 0.0, %v3403
    %v3405 = vpop.f32.mrb[0].mxu0
    %3406 = vmatprep.mubr.f32.mxu0 0.0
    %3407 = vmatmul.mubr.f32.gmra.mrb[0].mxu0 %v3313
    %v3408 = vpop.f32.mrb[0].mxu0
    %v3409 = vadd.f32 0.0, %v3408
    %v3410 = vpop.f32.mrb[0].mxu0
    %3411 = vmatprep.mubr.f32.mxu0 0.0
    %3412 = vmatmul.mubr.f32.gmra.mrb[0].mxu0 %v3316
    %v3413 = vpop.f32.mrb[0].mxu0
    %v3414 = vadd.f32 0.0, %v3413
    %v3415 = vpop.f32.mrb[0].mxu0
    %3416 = vmatprep.mubr.f32.mxu0 0.0
    %3417 = vmatmul.mubr.f32.gmra.mrb[0].mxu0 %v3319
    %v3418 = vpop.f32.mrb[0].mxu0
    %v3419 = vadd.f32 0.0, %v3418
    %v3420 = vpop.f32.mrb[0].mxu0
    %3421 = vmatprep.mubr.f32.mxu0 0.0
    %3422 = vmatmul.mubr.f32.gmra.mrb[0].mxu0 %v3322
    %v3423 = vpop.f32.mrb[0].mxu0
    %v3424 = vadd.f32 0.0, %v3423
    %v3425 = vpop.f32.mrb[0].mxu0
    %3426 = vmatprep.mubr.f32.mxu0 0.0
    %3427 = vmatmul.mubr.f32.gmra.mrb[0].mxu0 %v3325
    %v3428 = vpop.f32.mrb[0].mxu0
    %v3429 = vadd.f32 0.0, %v3428
    %v3430 = vpop.f32.mrb[0].mxu0
    %3431 = vdwg.mxu0
    %3440 = vrot.lane.b32.xlu0 %v3394, 8
    %v3441 = vpop.permute.xlu0 %3440
    %3442 = vrot.lane.b32.xlu0 %v3399, 8
    %v3443 = vpop.permute.xlu0 %3442
    %3444 = vrot.lane.b32.xlu0 %v3404, 8
    %v3445 = vpop.permute.xlu0 %3444
    %3446 = vrot.lane.b32.xlu0 %v3409, 8
    %v3447 = vpop.permute.xlu0 %3446
    %3448 = vrot.lane.b32.xlu0 %v3414, 8
    %v3449 = vpop.permute.xlu0 %3448
    %3450 = vrot.lane.b32.xlu0 %v3419, 8
    %v3451 = vpop.permute.xlu0 %3450
    %3452 = vrot.lane.b32.xlu0 %v3424, 8
    %v3453 = vpop.permute.xlu0 %3452
    %3454 = vrot.lane.b32.xlu0 %v3429, 8
    %v3455 = vpop.permute.xlu0 %3454
    %3464 = vst.msk [vmem:[#allocation2 + $0x40] sm:$0xff] %vm1701, %v3441
    %3465 = vst.msk [vmem:[#allocation2 + $0x48] sm:$0xff] %vm1701, %v3443
    %3466 = vst.msk [vmem:[#allocation2 + $0x50] sm:$0xff] %vm1701, %v3445
    %3467 = vst.msk [vmem:[#allocation2 + $0x58] sm:$0xff] %vm1701, %v3447
    %3468 = vst.msk [vmem:[#allocation2 + $0x60] sm:$0xff] %vm1701, %v3449
    %3469 = vst.msk [vmem:[#allocation2 + $0x68] sm:$0xff] %vm1701, %v3451
    %3470 = vst.msk [vmem:[#allocation2 + $0x70] sm:$0xff] %vm1701, %v3453
    %3471 = vst.msk [vmem:[#allocation2 + $0x78] sm:$0xff] %vm1701, %v3455
    %3472 = vrot.lane.b32.xlu0 %v809, 112
    %v3473 = vpop.permute.xlu0 %3472
    %3474 = vrot.lane.b32.xlu0 %v814, 112
    %v3475 = vpop.permute.xlu0 %3474
    %3476 = vrot.lane.b32.xlu0 %v819, 112
    %v3477 = vpop.permute.xlu0 %3476
    %3478 = vrot.lane.b32.xlu0 %v824, 112
    %v3479 = vpop.permute.xlu0 %3478
    %3480 = vrot.lane.b32.xlu0 %v829, 112
    %v3481 = vpop.permute.xlu0 %3480
    %3482 = vrot.lane.b32.xlu0 %v834, 112
    %v3483 = vpop.permute.xlu0 %3482
    %3484 = vrot.lane.b32.xlu0 %v839, 112
    %v3485 = vpop.permute.xlu0 %3484
    %3486 = vrot.lane.b32.xlu0 %v844, 112
    %v3487 = vpop.permute.xlu0 %3486
    %3488 = vrot.lane.b32.xlu0 %v809, 80
    %v3489 = vpop.permute.xlu0 %3488
    %3490 = vrot.lane.b32.xlu0 %v814, 80
    %v3491 = vpop.permute.xlu0 %3490
    %3492 = vrot.lane.b32.xlu0 %v819, 80
    %v3493 = vpop.permute.xlu0 %3492
    %3494 = vrot.lane.b32.xlu0 %v824, 80
    %v3495 = vpop.permute.xlu0 %3494
    %3496 = vrot.lane.b32.xlu0 %v829, 80
    %v3497 = vpop.permute.xlu0 %3496
    %3498 = vrot.lane.b32.xlu0 %v834, 80
    %v3499 = vpop.permute.xlu0 %3498
    %3500 = vrot.lane.b32.xlu0 %v839, 80
    %v3501 = vpop.permute.xlu0 %3500
    %3502 = vrot.lane.b32.xlu0 %v844, 80
    %v3503 = vpop.permute.xlu0 %3502
    %v3504 = vsel %vm871, %v3473, 0
    %v3506 = vsel %vm871, %v3475, 0
    %v3508 = vsel %vm871, %v3477, 0
    %v3510 = vsel %vm871, %v3479, 0
    %v3512 = vsel %vm871, %v3481, 0
    %v3514 = vsel %vm871, %v3483, 0
    %v3516 = vsel %vm871, %v3485, 0
    %v3518 = vsel %vm871, %v3487, 0
    %v3520 = vsel %vm871, %v3489, 0
    %v3522 = vsel %vm871, %v3491, 0
    %v3524 = vsel %vm871, %v3493, 0
    %v3526 = vsel %vm871, %v3495, 0
    %v3528 = vsel %vm871, %v3497, 0
    %v3530 = vsel %vm871, %v3499, 0
    %v3532 = vsel %vm871, %v3501, 0
    %v3534 = vsel %vm871, %v3503, 0
    %3536 = vmatprep.subr.mxu0 0.0
    %3537 = vmatpush1.xpose.msra.mxu0 %v3520
    %3538 = vmatprep.subr.mxu0 0.0
    %3539 = vmatpush1.xpose.msra.mxu0 %v3522
    %3540 = vmatprep.subr.mxu0 0.0
    %3541 = vmatpush1.xpose.msra.mxu0 %v3524
    %3542 = vmatprep.subr.mxu0 0.0
    %3543 = vmatpush1.xpose.msra.mxu0 %v3526
    %3544 = vmatprep.subr.mxu0 0.0
    %3545 = vmatpush1.xpose.msra.mxu0 %v3528
    %3546 = vmatprep.subr.mxu0 0.0
    %3547 = vmatpush1.xpose.msra.mxu0 %v3530
    %3548 = vmatprep.subr.mxu0 0.0
    %3549 = vmatpush1.xpose.msra.mxu0 %v3532
    %3550 = vmatprep.subr.mxu0 0.0
    %3551 = vmatpush1.xpose.msra.mxu0 %v3534
    %3552 = vmatprep.subr.mxu0 0.0
    %3553 = vmatpush1.xpose.msra.mxu0 0.0
    %3554 = vmatprep.subr.mxu0 0.0
    %3555 = vmatpush1.xpose.msra.mxu0 0.0
    %3556 = vmatprep.subr.mxu0 0.0
    %3557 = vmatpush1.xpose.msra.mxu0 0.0
    %3558 = vmatprep.subr.mxu0 0.0
    %3559 = vmatpush1.xpose.msra.mxu0 0.0
    %3560 = vmatprep.subr.mxu0 0.0
    %3561 = vmatpush1.xpose.msra.mxu0 0.0
    %3562 = vmatprep.subr.mxu0 0.0
    %3563 = vmatpush1.xpose.msra.mxu0 0.0
    %3564 = vmatprep.subr.mxu0 0.0
    %3565 = vmatpush1.xpose.msra.mxu0 0.0
    %3566 = vmatprep.subr.mxu0 0.0
    %3567 = vmatpush1.xpose.msra.mxu0 0.0
    %3568 = vmatprep.subr.mxu0 0.0
    %3569 = vmatpush1.xpose.msra.mxu0 0.0
    %3570 = vmatprep.subr.mxu0 0.0
    %3571 = vmatpush1.xpose.msra.mxu0 0.0
    %3572 = vmatprep.subr.mxu0 0.0
    %3573 = vmatpush1.xpose.msra.mxu0 0.0
    %3574 = vmatprep.subr.mxu0 0.0
    %3575 = vmatpush1.xpose.msra.mxu0 0.0
    %3576 = vmatprep.subr.mxu0 0.0
    %3577 = vmatpush1.xpose.msra.mxu0 0.0
    %3578 = vmatprep.subr.mxu0 0.0
    %3579 = vmatpush1.xpose.msra.mxu0 0.0
    %3580 = vmatprep.subr.mxu0 0.0
    %3581 = vmatpush1.xpose.msra.mxu0 0.0
    %3582 = vmatprep.subr.mxu0 0.0
    %3583 = vmatpush1.xpose.msra.mxu0 0.0
    %3584 = vmatprep.subr.mxu0 0.0
    %3585 = vmatpush1.xpose.msra.mxu0 0.0
    %3586 = vmatprep.subr.mxu0 0.0
    %3587 = vmatpush1.xpose.msra.mxu0 0.0
    %3588 = vmatprep.subr.mxu0 0.0
    %3589 = vmatpush1.xpose.msra.mxu0 0.0
    %3590 = vmatprep.subr.mxu0 0.0
    %3591 = vmatpush1.xpose.msra.mxu0 0.0
    %3592 = vmatprep.subr.mxu0 0.0
    %3593 = vmatpush1.xpose.msra.mxu0 0.0
    %3594 = vmatprep.subr.mxu0 0.0
    %3595 = vmatpush1.xpose.msra.mxu0 0.0
    %3596 = vmatprep.subr.mxu0 0.0
    %3597 = vmatpush1.xpose.msra.mxu0 0.0
    %3598 = vmatprep.subr.mxu0 0.0
    %3599 = vmatpush1.xpose.msra.mxu0 0.0
    %3600 = vmatprep.mubr.f32.mxu0 0.0
    %3601 = vmatmul.mubr.f32.gmra.mrb[0].mxu0 %v3504
    %v3602 = vpop.f32.mrb[0].mxu0
    %v3603 = vadd.f32 0.0, %v3602
    %v3604 = vpop.f32.mrb[0].mxu0
    %3605 = vmatprep.mubr.f32.mxu0 0.0
    %3606 = vmatmul.mubr.f32.gmra.mrb[0].mxu0 %v3506
    %v3607 = vpop.f32.mrb[0].mxu0
    %v3608 = vadd.f32 0.0, %v3607
    %v3609 = vpop.f32.mrb[0].mxu0
    %3610 = vmatprep.mubr.f32.mxu0 0.0
    %3611 = vmatmul.mubr.f32.gmra.mrb[0].mxu0 %v3508
    %v3612 = vpop.f32.mrb[0].mxu0
    %v3613 = vadd.f32 0.0, %v3612
    %v3614 = vpop.f32.mrb[0].mxu0
    %3615 = vmatprep.mubr.f32.mxu0 0.0
    %3616 = vmatmul.mubr.f32.gmra.mrb[0].mxu0 %v3510
    %v3617 = vpop.f32.mrb[0].mxu0
    %v3618 = vadd.f32 0.0, %v3617
    %v3619 = vpop.f32.mrb[0].mxu0
    %3620 = vmatprep.mubr.f32.mxu0 0.0
    %3621 = vmatmul.mubr.f32.gmra.mrb[0].mxu0 %v3512
    %v3622 = vpop.f32.mrb[0].mxu0
    %v3623 = vadd.f32 0.0, %v3622
    %v3624 = vpop.f32.mrb[0].mxu0
    %3625 = vmatprep.mubr.f32.mxu0 0.0
    %3626 = vmatmul.mubr.f32.gmra.mrb[0].mxu0 %v3514
    %v3627 = vpop.f32.mrb[0].mxu0
    %v3628 = vadd.f32 0.0, %v3627
    %v3629 = vpop.f32.mrb[0].mxu0
    %3630 = vmatprep.mubr.f32.mxu0 0.0
    %3631 = vmatmul.mubr.f32.gmra.mrb[0].mxu0 %v3516
    %v3632 = vpop.f32.mrb[0].mxu0
    %v3633 = vadd.f32 0.0, %v3632
    %v3634 = vpop.f32.mrb[0].mxu0
    %3635 = vmatprep.mubr.f32.mxu0 0.0
    %3636 = vmatmul.mubr.f32.gmra.mrb[0].mxu0 %v3518
    %v3637 = vpop.f32.mrb[0].mxu0
    %v3638 = vadd.f32 0.0, %v3637
    %v3639 = vpop.f32.mrb[0].mxu0
    %3640 = vdwg.mxu0
    %v3641 = vsel %vm1009, %v3603, -inf
    %3642 = vmax.xlane.f32.xlu0 %v3641
    %v3643 = vpop.xlane.xlu0 %3642
    %v3644 = vsel %vm1009, %v3608, -inf
    %3645 = vmax.xlane.f32.xlu0 %v3644
    %v3646 = vpop.xlane.xlu0 %3645
    %v3647 = vsel %vm1009, %v3613, -inf
    %3648 = vmax.xlane.f32.xlu0 %v3647
    %v3649 = vpop.xlane.xlu0 %3648
    %v3650 = vsel %vm1009, %v3618, -inf
    %3651 = vmax.xlane.f32.xlu0 %v3650
    %v3652 = vpop.xlane.xlu0 %3651
    %v3653 = vsel %vm1009, %v3623, -inf
    %3654 = vmax.xlane.f32.xlu0 %v3653
    %v3655 = vpop.xlane.xlu0 %3654
    %v3656 = vsel %vm1009, %v3628, -inf
    %3657 = vmax.xlane.f32.xlu0 %v3656
    %v3658 = vpop.xlane.xlu0 %3657
    %v3659 = vsel %vm1009, %v3633, -inf
    %3660 = vmax.xlane.f32.xlu0 %v3659
    %v3661 = vpop.xlane.xlu0 %3660
    %v3662 = vsel %vm1009, %v3638, -inf
    %3663 = vmax.xlane.f32.xlu0 %v3662
    %v3664 = vpop.xlane.xlu0 %3663
    %v3665 = vsub.f32 %v3603, %v3643
    %v3666 = vsub.f32 %v3608, %v3646
    %v3667 = vsub.f32 %v3613, %v3649
    %v3668 = vsub.f32 %v3618, %v3652
    %v3669 = vsub.f32 %v3623, %v3655
    %v3670 = vsub.f32 %v3628, %v3658
    %v3671 = vsub.f32 %v3633, %v3661
    %v3672 = vsub.f32 %v3638, %v3664
    %v3673 = vmul.f32 %v3665, 1.442695
    %v3674 = vpow.pop %v3673
    %v3675 = vmul.f32 %v3666, 1.442695
    %v3676 = vpow.pop %v3675
    %v3677 = vmul.f32 %v3667, 1.442695
    %v3678 = vpow.pop %v3677
    %v3679 = vmul.f32 %v3668, 1.442695
    %v3680 = vpow.pop %v3679
    %v3681 = vmul.f32 %v3669, 1.442695
    %v3682 = vpow.pop %v3681
    %v3683 = vmul.f32 %v3670, 1.442695
    %v3684 = vpow.pop %v3683
    %v3685 = vmul.f32 %v3671, 1.442695
    %v3686 = vpow.pop %v3685
    %v3687 = vmul.f32 %v3672, 1.442695
    %v3688 = vpow.pop %v3687
    %v3689 = vsel %vm1009, %v3674, 0.0
    %3690 = vadd.xlane.f32.xlu0 %v3689
    %v3691 = vpop.xlane.xlu0 %3690
    %v3692 = vsel %vm1009, %v3676, 0.0
    %3693 = vadd.xlane.f32.xlu0 %v3692
    %v3694 = vpop.xlane.xlu0 %3693
    %v3695 = vsel %vm1009, %v3678, 0.0
    %3696 = vadd.xlane.f32.xlu0 %v3695
    %v3697 = vpop.xlane.xlu0 %3696
    %v3698 = vsel %vm1009, %v3680, 0.0
    %3699 = vadd.xlane.f32.xlu0 %v3698
    %v3700 = vpop.xlane.xlu0 %3699
    %v3701 = vsel %vm1009, %v3682, 0.0
    %3702 = vadd.xlane.f32.xlu0 %v3701
    %v3703 = vpop.xlane.xlu0 %3702
    %v3704 = vsel %vm1009, %v3684, 0.0
    %3705 = vadd.xlane.f32.xlu0 %v3704
    %v3706 = vpop.xlane.xlu0 %3705
    %v3707 = vsel %vm1009, %v3686, 0.0
    %3708 = vadd.xlane.f32.xlu0 %v3707
    %v3709 = vpop.xlane.xlu0 %3708
    %v3710 = vsel %vm1009, %v3688, 0.0
    %3711 = vadd.xlane.f32.xlu0 %v3710
    %v3712 = vpop.xlane.xlu0 %3711
    %v3713 = vrcp.pop %v3691
    %v3714 = vrcp.pop %v3694
    %v3715 = vrcp.pop %v3697
    %v3716 = vrcp.pop %v3700
    %v3717 = vrcp.pop %v3703
    %v3718 = vrcp.pop %v3706
    %v3719 = vrcp.pop %v3709
    %v3720 = vrcp.pop %v3712
    %v3721 = vmul.f32 %v3674, %v3713
    %v3722 = vmul.f32 %v3676, %v3714
    %v3723 = vmul.f32 %v3678, %v3715
    %v3724 = vmul.f32 %v3680, %v3716
    %v3725 = vmul.f32 %v3682, %v3717
    %v3726 = vmul.f32 %v3684, %v3718
    %v3727 = vmul.f32 %v3686, %v3719
    %v3728 = vmul.f32 %v3688, %v3720
    %3729 = vrot.lane.b32.xlu0 %v809, 48
    %v3730 = vpop.permute.xlu0 %3729
    %3731 = vrot.lane.b32.xlu0 %v814, 48
    %v3732 = vpop.permute.xlu0 %3731
    %3733 = vrot.lane.b32.xlu0 %v819, 48
    %v3734 = vpop.permute.xlu0 %3733
    %3735 = vrot.lane.b32.xlu0 %v824, 48
    %v3736 = vpop.permute.xlu0 %3735
    %3737 = vrot.lane.b32.xlu0 %v829, 48
    %v3738 = vpop.permute.xlu0 %3737
    %3739 = vrot.lane.b32.xlu0 %v834, 48
    %v3740 = vpop.permute.xlu0 %3739
    %3741 = vrot.lane.b32.xlu0 %v839, 48
    %v3742 = vpop.permute.xlu0 %3741
    %3743 = vrot.lane.b32.xlu0 %v844, 48
    %v3744 = vpop.permute.xlu0 %3743
    %v3754 = vsel %vm1009, %v3721, 0
    %v3757 = vsel %vm1009, %v3722, 0
    %v3760 = vsel %vm1009, %v3723, 0
    %v3763 = vsel %vm1009, %v3724, 0
    %v3766 = vsel %vm1009, %v3725, 0
    %v3769 = vsel %vm1009, %v3726, 0
    %v3772 = vsel %vm1009, %v3727, 0
    %v3775 = vsel %vm1009, %v3728, 0
    %3777 = vmatprep.subr.mxu0 0.0
    %3778 = vmatpush1.msra.mxu0 %v3730
    %3779 = vmatprep.subr.mxu0 0.0
    %3780 = vmatpush1.msra.mxu0 %v3732
    %3781 = vmatprep.subr.mxu0 0.0
    %3782 = vmatpush1.msra.mxu0 %v3734
    %3783 = vmatprep.subr.mxu0 0.0
    %3784 = vmatpush1.msra.mxu0 %v3736
    %3785 = vmatprep.subr.mxu0 0.0
    %3786 = vmatpush1.msra.mxu0 %v3738
    %3787 = vmatprep.subr.mxu0 0.0
    %3788 = vmatpush1.msra.mxu0 %v3740
    %3789 = vmatprep.subr.mxu0 0.0
    %3790 = vmatpush1.msra.mxu0 %v3742
    %3791 = vmatprep.subr.mxu0 0.0
    %3792 = vmatpush1.msra.mxu0 %v3744
    %3793 = vmatprep.subr.mxu0 0.0
    %3794 = vmatpush1.msra.mxu0 0.0
    %3795 = vmatprep.subr.mxu0 0.0
    %3796 = vmatpush1.msra.mxu0 0.0
    %3797 = vmatprep.subr.mxu0 0.0
    %3798 = vmatpush1.msra.mxu0 0.0
    %3799 = vmatprep.subr.mxu0 0.0
    %3800 = vmatpush1.msra.mxu0 0.0
    %3801 = vmatprep.subr.mxu0 0.0
    %3802 = vmatpush1.msra.mxu0 0.0
    %3803 = vmatprep.subr.mxu0 0.0
    %3804 = vmatpush1.msra.mxu0 0.0
    %3805 = vmatprep.subr.mxu0 0.0
    %3806 = vmatpush1.msra.mxu0 0.0
    %3807 = vmatprep.subr.mxu0 0.0
    %3808 = vmatpush1.msra.mxu0 0.0
    %3809 = vmatprep.subr.mxu0 0.0
    %3810 = vmatpush1.msra.mxu0 0.0
    %3811 = vmatprep.subr.mxu0 0.0
    %3812 = vmatpush1.msra.mxu0 0.0
    %3813 = vmatprep.subr.mxu0 0.0
    %3814 = vmatpush1.msra.mxu0 0.0
    %3815 = vmatprep.subr.mxu0 0.0
    %3816 = vmatpush1.msra.mxu0 0.0
    %3817 = vmatprep.subr.mxu0 0.0
    %3818 = vmatpush1.msra.mxu0 0.0
    %3819 = vmatprep.subr.mxu0 0.0
    %3820 = vmatpush1.msra.mxu0 0.0
    %3821 = vmatprep.subr.mxu0 0.0
    %3822 = vmatpush1.msra.mxu0 0.0
    %3823 = vmatprep.subr.mxu0 0.0
    %3824 = vmatpush1.msra.mxu0 0.0
    %3825 = vmatprep.subr.mxu0 0.0
    %3826 = vmatpush1.msra.mxu0 0.0
    %3827 = vmatprep.subr.mxu0 0.0
    %3828 = vmatpush1.msra.mxu0 0.0
    %3829 = vmatprep.subr.mxu0 0.0
    %3830 = vmatpush1.msra.mxu0 0.0
    %3831 = vmatprep.subr.mxu0 0.0
    %3832 = vmatpush1.msra.mxu0 0.0
    %3833 = vmatprep.subr.mxu0 0.0
    %3834 = vmatpush1.msra.mxu0 0.0
    %3835 = vmatprep.subr.mxu0 0.0
    %3836 = vmatpush1.msra.mxu0 0.0
    %3837 = vmatprep.subr.mxu0 0.0
    %3838 = vmatpush1.msra.mxu0 0.0
    %3839 = vmatprep.subr.mxu0 0.0
    %3840 = vmatpush1.msra.mxu0 0.0
    %3841 = vmatprep.mubr.f32.mxu0 0.0
    %3842 = vmatmul.mubr.f32.gmra.mrb[0].mxu0 %v3754
    %v3843 = vpop.f32.mrb[0].mxu0
    %v3844 = vadd.f32 0.0, %v3843
    %v3845 = vpop.f32.mrb[0].mxu0
    %3846 = vmatprep.mubr.f32.mxu0 0.0
    %3847 = vmatmul.mubr.f32.gmra.mrb[0].mxu0 %v3757
    %v3848 = vpop.f32.mrb[0].mxu0
    %v3849 = vadd.f32 0.0, %v3848
    %v3850 = vpop.f32.mrb[0].mxu0
    %3851 = vmatprep.mubr.f32.mxu0 0.0
    %3852 = vmatmul.mubr.f32.gmra.mrb[0].mxu0 %v3760
    %v3853 = vpop.f32.mrb[0].mxu0
    %v3854 = vadd.f32 0.0, %v3853
    %v3855 = vpop.f32.mrb[0].mxu0
    %3856 = vmatprep.mubr.f32.mxu0 0.0
    %3857 = vmatmul.mubr.f32.gmra.mrb[0].mxu0 %v3763
    %v3858 = vpop.f32.mrb[0].mxu0
    %v3859 = vadd.f32 0.0, %v3858
    %v3860 = vpop.f32.mrb[0].mxu0
    %3861 = vmatprep.mubr.f32.mxu0 0.0
    %3862 = vmatmul.mubr.f32.gmra.mrb[0].mxu0 %v3766
    %v3863 = vpop.f32.mrb[0].mxu0
    %v3864 = vadd.f32 0.0, %v3863
    %v3865 = vpop.f32.mrb[0].mxu0
    %3866 = vmatprep.mubr.f32.mxu0 0.0
    %3867 = vmatmul.mubr.f32.gmra.mrb[0].mxu0 %v3769
    %v3868 = vpop.f32.mrb[0].mxu0
    %v3869 = vadd.f32 0.0, %v3868
    %v3870 = vpop.f32.mrb[0].mxu0
    %3871 = vmatprep.mubr.f32.mxu0 0.0
    %3872 = vmatmul.mubr.f32.gmra.mrb[0].mxu0 %v3772
    %v3873 = vpop.f32.mrb[0].mxu0
    %v3874 = vadd.f32 0.0, %v3873
    %v3875 = vpop.f32.mrb[0].mxu0
    %3876 = vmatprep.mubr.f32.mxu0 0.0
    %3877 = vmatmul.mubr.f32.gmra.mrb[0].mxu0 %v3775
    %v3878 = vpop.f32.mrb[0].mxu0
    %v3879 = vadd.f32 0.0, %v3878
    %v3880 = vpop.f32.mrb[0].mxu0
    %3881 = vdwg.mxu0
    %3890 = vrot.lane.b32.xlu0 %v3844, 16
    %v3891 = vpop.permute.xlu0 %3890
    %3892 = vrot.lane.b32.xlu0 %v3849, 16
    %v3893 = vpop.permute.xlu0 %3892
    %3894 = vrot.lane.b32.xlu0 %v3854, 16
    %v3895 = vpop.permute.xlu0 %3894
    %3896 = vrot.lane.b32.xlu0 %v3859, 16
    %v3897 = vpop.permute.xlu0 %3896
    %3898 = vrot.lane.b32.xlu0 %v3864, 16
    %v3899 = vpop.permute.xlu0 %3898
    %3900 = vrot.lane.b32.xlu0 %v3869, 16
    %v3901 = vpop.permute.xlu0 %3900
    %3902 = vrot.lane.b32.xlu0 %v3874, 16
    %v3903 = vpop.permute.xlu0 %3902
    %3904 = vrot.lane.b32.xlu0 %v3879, 16
    %v3905 = vpop.permute.xlu0 %3904
    %3914 = vst.msk [vmem:[#allocation2 + $0x40] sm:$0xff] %vm2152, %v3891
    %3915 = vst.msk [vmem:[#allocation2 + $0x48] sm:$0xff] %vm2152, %v3893
    %3916 = vst.msk [vmem:[#allocation2 + $0x50] sm:$0xff] %vm2152, %v3895
    %3917 = vst.msk [vmem:[#allocation2 + $0x58] sm:$0xff] %vm2152, %v3897
    %3918 = vst.msk [vmem:[#allocation2 + $0x60] sm:$0xff] %vm2152, %v3899
    %3919 = vst.msk [vmem:[#allocation2 + $0x68] sm:$0xff] %vm2152, %v3901
    %3920 = vst.msk [vmem:[#allocation2 + $0x70] sm:$0xff] %vm2152, %v3903
    %3921 = vst.msk [vmem:[#allocation2 + $0x78] sm:$0xff] %vm2152, %v3905
    %3922 = vrot.lane.b32.xlu0 %v809, 104
    %v3923 = vpop.permute.xlu0 %3922
    %3924 = vrot.lane.b32.xlu0 %v814, 104
    %v3925 = vpop.permute.xlu0 %3924
    %3926 = vrot.lane.b32.xlu0 %v819, 104
    %v3927 = vpop.permute.xlu0 %3926
    %3928 = vrot.lane.b32.xlu0 %v824, 104
    %v3929 = vpop.permute.xlu0 %3928
    %3930 = vrot.lane.b32.xlu0 %v829, 104
    %v3931 = vpop.permute.xlu0 %3930
    %3932 = vrot.lane.b32.xlu0 %v834, 104
    %v3933 = vpop.permute.xlu0 %3932
    %3934 = vrot.lane.b32.xlu0 %v839, 104
    %v3935 = vpop.permute.xlu0 %3934
    %3936 = vrot.lane.b32.xlu0 %v844, 104
    %v3937 = vpop.permute.xlu0 %3936
    %3938 = vrot.lane.b32.xlu0 %v809, 72
    %v3939 = vpop.permute.xlu0 %3938
    %3940 = vrot.lane.b32.xlu0 %v814, 72
    %v3941 = vpop.permute.xlu0 %3940
    %3942 = vrot.lane.b32.xlu0 %v819, 72
    %v3943 = vpop.permute.xlu0 %3942
    %3944 = vrot.lane.b32.xlu0 %v824, 72
    %v3945 = vpop.permute.xlu0 %3944
    %3946 = vrot.lane.b32.xlu0 %v829, 72
    %v3947 = vpop.permute.xlu0 %3946
    %3948 = vrot.lane.b32.xlu0 %v834, 72
    %v3949 = vpop.permute.xlu0 %3948
    %3950 = vrot.lane.b32.xlu0 %v839, 72
    %v3951 = vpop.permute.xlu0 %3950
    %3952 = vrot.lane.b32.xlu0 %v844, 72
    %v3953 = vpop.permute.xlu0 %3952
    %v3954 = vsel %vm871, %v3923, 0
    %v3956 = vsel %vm871, %v3925, 0
    %v3958 = vsel %vm871, %v3927, 0
    %v3960 = vsel %vm871, %v3929, 0
    %v3962 = vsel %vm871, %v3931, 0
    %v3964 = vsel %vm871, %v3933, 0
    %v3966 = vsel %vm871, %v3935, 0
    %v3968 = vsel %vm871, %v3937, 0
    %v3970 = vsel %vm871, %v3939, 0
    %v3972 = vsel %vm871, %v3941, 0
    %v3974 = vsel %vm871, %v3943, 0
    %v3976 = vsel %vm871, %v3945, 0
    %v3978 = vsel %vm871, %v3947, 0
    %v3980 = vsel %vm871, %v3949, 0
    %v3982 = vsel %vm871, %v3951, 0
    %v3984 = vsel %vm871, %v3953, 0
    %3986 = vmatprep.subr.mxu0 0.0
    %3987 = vmatpush1.xpose.msra.mxu0 %v3970
    %3988 = vmatprep.subr.mxu0 0.0
    %3989 = vmatpush1.xpose.msra.mxu0 %v3972
    %3990 = vmatprep.subr.mxu0 0.0
    %3991 = vmatpush1.xpose.msra.mxu0 %v3974
    %3992 = vmatprep.subr.mxu0 0.0
    %3993 = vmatpush1.xpose.msra.mxu0 %v3976
    %3994 = vmatprep.subr.mxu0 0.0
    %3995 = vmatpush1.xpose.msra.mxu0 %v3978
    %3996 = vmatprep.subr.mxu0 0.0
    %3997 = vmatpush1.xpose.msra.mxu0 %v3980
    %3998 = vmatprep.subr.mxu0 0.0
    %3999 = vmatpush1.xpose.msra.mxu0 %v3982
    %4000 = vmatprep.subr.mxu0 0.0
    %4001 = vmatpush1.xpose.msra.mxu0 %v3984
    %4002 = vmatprep.subr.mxu0 0.0
    %4003 = vmatpush1.xpose.msra.mxu0 0.0
    %4004 = vmatprep.subr.mxu0 0.0
    %4005 = vmatpush1.xpose.msra.mxu0 0.0
    %4006 = vmatprep.subr.mxu0 0.0
    %4007 = vmatpush1.xpose.msra.mxu0 0.0
    %4008 = vmatprep.subr.mxu0 0.0
    %4009 = vmatpush1.xpose.msra.mxu0 0.0
    %4010 = vmatprep.subr.mxu0 0.0
    %4011 = vmatpush1.xpose.msra.mxu0 0.0
    %4012 = vmatprep.subr.mxu0 0.0
    %4013 = vmatpush1.xpose.msra.mxu0 0.0
    %4014 = vmatprep.subr.mxu0 0.0
    %4015 = vmatpush1.xpose.msra.mxu0 0.0
    %4016 = vmatprep.subr.mxu0 0.0
    %4017 = vmatpush1.xpose.msra.mxu0 0.0
    %4018 = vmatprep.subr.mxu0 0.0
    %4019 = vmatpush1.xpose.msra.mxu0 0.0
    %4020 = vmatprep.subr.mxu0 0.0
    %4021 = vmatpush1.xpose.msra.mxu0 0.0
    %4022 = vmatprep.subr.mxu0 0.0
    %4023 = vmatpush1.xpose.msra.mxu0 0.0
    %4024 = vmatprep.subr.mxu0 0.0
    %4025 = vmatpush1.xpose.msra.mxu0 0.0
    %4026 = vmatprep.subr.mxu0 0.0
    %4027 = vmatpush1.xpose.msra.mxu0 0.0
    %4028 = vmatprep.subr.mxu0 0.0
    %4029 = vmatpush1.xpose.msra.mxu0 0.0
    %4030 = vmatprep.subr.mxu0 0.0
    %4031 = vmatpush1.xpose.msra.mxu0 0.0
    %4032 = vmatprep.subr.mxu0 0.0
    %4033 = vmatpush1.xpose.msra.mxu0 0.0
    %4034 = vmatprep.subr.mxu0 0.0
    %4035 = vmatpush1.xpose.msra.mxu0 0.0
    %4036 = vmatprep.subr.mxu0 0.0
    %4037 = vmatpush1.xpose.msra.mxu0 0.0
    %4038 = vmatprep.subr.mxu0 0.0
    %4039 = vmatpush1.xpose.msra.mxu0 0.0
    %4040 = vmatprep.subr.mxu0 0.0
    %4041 = vmatpush1.xpose.msra.mxu0 0.0
    %4042 = vmatprep.subr.mxu0 0.0
    %4043 = vmatpush1.xpose.msra.mxu0 0.0
    %4044 = vmatprep.subr.mxu0 0.0
    %4045 = vmatpush1.xpose.msra.mxu0 0.0
    %4046 = vmatprep.subr.mxu0 0.0
    %4047 = vmatpush1.xpose.msra.mxu0 0.0
    %4048 = vmatprep.subr.mxu0 0.0
    %4049 = vmatpush1.xpose.msra.mxu0 0.0
    %4050 = vmatprep.mubr.f32.mxu0 0.0
    %4051 = vmatmul.mubr.f32.gmra.mrb[0].mxu0 %v3954
    %v4052 = vpop.f32.mrb[0].mxu0
    %v4053 = vadd.f32 0.0, %v4052
    %v4054 = vpop.f32.mrb[0].mxu0
    %4055 = vmatprep.mubr.f32.mxu0 0.0
    %4056 = vmatmul.mubr.f32.gmra.mrb[0].mxu0 %v3956
    %v4057 = vpop.f32.mrb[0].mxu0
    %v4058 = vadd.f32 0.0, %v4057
    %v4059 = vpop.f32.mrb[0].mxu0
    %4060 = vmatprep.mubr.f32.mxu0 0.0
    %4061 = vmatmul.mubr.f32.gmra.mrb[0].mxu0 %v3958
    %v4062 = vpop.f32.mrb[0].mxu0
    %v4063 = vadd.f32 0.0, %v4062
    %v4064 = vpop.f32.mrb[0].mxu0
    %4065 = vmatprep.mubr.f32.mxu0 0.0
    %4066 = vmatmul.mubr.f32.gmra.mrb[0].mxu0 %v3960
    %v4067 = vpop.f32.mrb[0].mxu0
    %v4068 = vadd.f32 0.0, %v4067
    %v4069 = vpop.f32.mrb[0].mxu0
    %4070 = vmatprep.mubr.f32.mxu0 0.0
    %4071 = vmatmul.mubr.f32.gmra.mrb[0].mxu0 %v3962
    %v4072 = vpop.f32.mrb[0].mxu0
    %v4073 = vadd.f32 0.0, %v4072
    %v4074 = vpop.f32.mrb[0].mxu0
    %4075 = vmatprep.mubr.f32.mxu0 0.0
    %4076 = vmatmul.mubr.f32.gmra.mrb[0].mxu0 %v3964
    %v4077 = vpop.f32.mrb[0].mxu0
    %v4078 = vadd.f32 0.0, %v4077
    %v4079 = vpop.f32.mrb[0].mxu0
    %4080 = vmatprep.mubr.f32.mxu0 0.0
    %4081 = vmatmul.mubr.f32.gmra.mrb[0].mxu0 %v3966
    %v4082 = vpop.f32.mrb[0].mxu0
    %v4083 = vadd.f32 0.0, %v4082
    %v4084 = vpop.f32.mrb[0].mxu0
    %4085 = vmatprep.mubr.f32.mxu0 0.0
    %4086 = vmatmul.mubr.f32.gmra.mrb[0].mxu0 %v3968
    %v4087 = vpop.f32.mrb[0].mxu0
    %v4088 = vadd.f32 0.0, %v4087
    %v4089 = vpop.f32.mrb[0].mxu0
    %4090 = vdwg.mxu0
    %v4091 = vsel %vm1009, %v4053, -inf
    %4092 = vmax.xlane.f32.xlu0 %v4091
    %v4093 = vpop.xlane.xlu0 %4092
    %v4094 = vsel %vm1009, %v4058, -inf
    %4095 = vmax.xlane.f32.xlu0 %v4094
    %v4096 = vpop.xlane.xlu0 %4095
    %v4097 = vsel %vm1009, %v4063, -inf
    %4098 = vmax.xlane.f32.xlu0 %v4097
    %v4099 = vpop.xlane.xlu0 %4098
    %v4100 = vsel %vm1009, %v4068, -inf
    %4101 = vmax.xlane.f32.xlu0 %v4100
    %v4102 = vpop.xlane.xlu0 %4101
    %v4103 = vsel %vm1009, %v4073, -inf
    %4104 = vmax.xlane.f32.xlu0 %v4103
    %v4105 = vpop.xlane.xlu0 %4104
    %v4106 = vsel %vm1009, %v4078, -inf
    %4107 = vmax.xlane.f32.xlu0 %v4106
    %v4108 = vpop.xlane.xlu0 %4107
    %v4109 = vsel %vm1009, %v4083, -inf
    %4110 = vmax.xlane.f32.xlu0 %v4109
    %v4111 = vpop.xlane.xlu0 %4110
    %v4112 = vsel %vm1009, %v4088, -inf
    %4113 = vmax.xlane.f32.xlu0 %v4112
    %v4114 = vpop.xlane.xlu0 %4113
    %v4115 = vsub.f32 %v4053, %v4093
    %v4116 = vsub.f32 %v4058, %v4096
    %v4117 = vsub.f32 %v4063, %v4099
    %v4118 = vsub.f32 %v4068, %v4102
    %v4119 = vsub.f32 %v4073, %v4105
    %v4120 = vsub.f32 %v4078, %v4108
    %v4121 = vsub.f32 %v4083, %v4111
    %v4122 = vsub.f32 %v4088, %v4114
    %v4123 = vmul.f32 %v4115, 1.442695
    %v4124 = vpow.pop %v4123
    %v4125 = vmul.f32 %v4116, 1.442695
    %v4126 = vpow.pop %v4125
    %v4127 = vmul.f32 %v4117, 1.442695
    %v4128 = vpow.pop %v4127
    %v4129 = vmul.f32 %v4118, 1.442695
    %v4130 = vpow.pop %v4129
    %v4131 = vmul.f32 %v4119, 1.442695
    %v4132 = vpow.pop %v4131
    %v4133 = vmul.f32 %v4120, 1.442695
    %v4134 = vpow.pop %v4133
    %v4135 = vmul.f32 %v4121, 1.442695
    %v4136 = vpow.pop %v4135
    %v4137 = vmul.f32 %v4122, 1.442695
    %v4138 = vpow.pop %v4137
    %v4139 = vsel %vm1009, %v4124, 0.0
    %4140 = vadd.xlane.f32.xlu0 %v4139
    %v4141 = vpop.xlane.xlu0 %4140
    %v4142 = vsel %vm1009, %v4126, 0.0
    %4143 = vadd.xlane.f32.xlu0 %v4142
    %v4144 = vpop.xlane.xlu0 %4143
    %v4145 = vsel %vm1009, %v4128, 0.0
    %4146 = vadd.xlane.f32.xlu0 %v4145
    %v4147 = vpop.xlane.xlu0 %4146
    %v4148 = vsel %vm1009, %v4130, 0.0
    %4149 = vadd.xlane.f32.xlu0 %v4148
    %v4150 = vpop.xlane.xlu0 %4149
    %v4151 = vsel %vm1009, %v4132, 0.0
    %4152 = vadd.xlane.f32.xlu0 %v4151
    %v4153 = vpop.xlane.xlu0 %4152
    %v4154 = vsel %vm1009, %v4134, 0.0
    %4155 = vadd.xlane.f32.xlu0 %v4154
    %v4156 = vpop.xlane.xlu0 %4155
    %v4157 = vsel %vm1009, %v4136, 0.0
    %4158 = vadd.xlane.f32.xlu0 %v4157
    %v4159 = vpop.xlane.xlu0 %4158
    %v4160 = vsel %vm1009, %v4138, 0.0
    %4161 = vadd.xlane.f32.xlu0 %v4160
    %v4162 = vpop.xlane.xlu0 %4161
    %v4163 = vrcp.pop %v4141
    %v4164 = vrcp.pop %v4144
    %v4165 = vrcp.pop %v4147
    %v4166 = vrcp.pop %v4150
    %v4167 = vrcp.pop %v4153
    %v4168 = vrcp.pop %v4156
    %v4169 = vrcp.pop %v4159
    %v4170 = vrcp.pop %v4162
    %v4171 = vmul.f32 %v4124, %v4163
    %v4172 = vmul.f32 %v4126, %v4164
    %v4173 = vmul.f32 %v4128, %v4165
    %v4174 = vmul.f32 %v4130, %v4166
    %v4175 = vmul.f32 %v4132, %v4167
    %v4176 = vmul.f32 %v4134, %v4168
    %v4177 = vmul.f32 %v4136, %v4169
    %v4178 = vmul.f32 %v4138, %v4170
    %4179 = vrot.lane.b32.xlu0 %v809, 40
    %v4180 = vpop.permute.xlu0 %4179
    %4181 = vrot.lane.b32.xlu0 %v814, 40
    %v4182 = vpop.permute.xlu0 %4181
    %4183 = vrot.lane.b32.xlu0 %v819, 40
    %v4184 = vpop.permute.xlu0 %4183
    %4185 = vrot.lane.b32.xlu0 %v824, 40
    %v4186 = vpop.permute.xlu0 %4185
    %4187 = vrot.lane.b32.xlu0 %v829, 40
    %v4188 = vpop.permute.xlu0 %4187
    %4189 = vrot.lane.b32.xlu0 %v834, 40
    %v4190 = vpop.permute.xlu0 %4189
    %4191 = vrot.lane.b32.xlu0 %v839, 40
    %v4192 = vpop.permute.xlu0 %4191
    %4193 = vrot.lane.b32.xlu0 %v844, 40
    %v4194 = vpop.permute.xlu0 %4193
    %v4204 = vsel %vm1009, %v4171, 0
    %v4207 = vsel %vm1009, %v4172, 0
    %v4210 = vsel %vm1009, %v4173, 0
    %v4213 = vsel %vm1009, %v4174, 0
    %v4216 = vsel %vm1009, %v4175, 0
    %v4219 = vsel %vm1009, %v4176, 0
    %v4222 = vsel %vm1009, %v4177, 0
    %v4225 = vsel %vm1009, %v4178, 0
    %4227 = vmatprep.subr.mxu0 0.0
    %4228 = vmatpush1.msra.mxu0 %v4180
    %4229 = vmatprep.subr.mxu0 0.0
    %4230 = vmatpush1.msra.mxu0 %v4182
    %4231 = vmatprep.subr.mxu0 0.0
    %4232 = vmatpush1.msra.mxu0 %v4184
    %4233 = vmatprep.subr.mxu0 0.0
    %4234 = vmatpush1.msra.mxu0 %v4186
    %4235 = vmatprep.subr.mxu0 0.0
    %4236 = vmatpush1.msra.mxu0 %v4188
    %4237 = vmatprep.subr.mxu0 0.0
    %4238 = vmatpush1.msra.mxu0 %v4190
    %4239 = vmatprep.subr.mxu0 0.0
    %4240 = vmatpush1.msra.mxu0 %v4192
    %4241 = vmatprep.subr.mxu0 0.0
    %4242 = vmatpush1.msra.mxu0 %v4194
    %4243 = vmatprep.subr.mxu0 0.0
    %4244 = vmatpush1.msra.mxu0 0.0
    %4245 = vmatprep.subr.mxu0 0.0
    %4246 = vmatpush1.msra.mxu0 0.0
    %4247 = vmatprep.subr.mxu0 0.0
    %4248 = vmatpush1.msra.mxu0 0.0
    %4249 = vmatprep.subr.mxu0 0.0
    %4250 = vmatpush1.msra.mxu0 0.0
    %4251 = vmatprep.subr.mxu0 0.0
    %4252 = vmatpush1.msra.mxu0 0.0
    %4253 = vmatprep.subr.mxu0 0.0
    %4254 = vmatpush1.msra.mxu0 0.0
    %4255 = vmatprep.subr.mxu0 0.0
    %4256 = vmatpush1.msra.mxu0 0.0
    %4257 = vmatprep.subr.mxu0 0.0
    %4258 = vmatpush1.msra.mxu0 0.0
    %4259 = vmatprep.subr.mxu0 0.0
    %4260 = vmatpush1.msra.mxu0 0.0
    %4261 = vmatprep.subr.mxu0 0.0
    %4262 = vmatpush1.msra.mxu0 0.0
    %4263 = vmatprep.subr.mxu0 0.0
    %4264 = vmatpush1.msra.mxu0 0.0
    %4265 = vmatprep.subr.mxu0 0.0
    %4266 = vmatpush1.msra.mxu0 0.0
    %4267 = vmatprep.subr.mxu0 0.0
    %4268 = vmatpush1.msra.mxu0 0.0
    %4269 = vmatprep.subr.mxu0 0.0
    %4270 = vmatpush1.msra.mxu0 0.0
    %4271 = vmatprep.subr.mxu0 0.0
    %4272 = vmatpush1.msra.mxu0 0.0
    %4273 = vmatprep.subr.mxu0 0.0
    %4274 = vmatpush1.msra.mxu0 0.0
    %4275 = vmatprep.subr.mxu0 0.0
    %4276 = vmatpush1.msra.mxu0 0.0
    %4277 = vmatprep.subr.mxu0 0.0
    %4278 = vmatpush1.msra.mxu0 0.0
    %4279 = vmatprep.subr.mxu0 0.0
    %4280 = vmatpush1.msra.mxu0 0.0
    %4281 = vmatprep.subr.mxu0 0.0
    %4282 = vmatpush1.msra.mxu0 0.0
    %4283 = vmatprep.subr.mxu0 0.0
    %4284 = vmatpush1.msra.mxu0 0.0
    %4285 = vmatprep.subr.mxu0 0.0
    %4286 = vmatpush1.msra.mxu0 0.0
    %4287 = vmatprep.subr.mxu0 0.0
    %4288 = vmatpush1.msra.mxu0 0.0
    %4289 = vmatprep.subr.mxu0 0.0
    %4290 = vmatpush1.msra.mxu0 0.0
    %4291 = vmatprep.mubr.f32.mxu0 0.0
    %4292 = vmatmul.mubr.f32.gmra.mrb[0].mxu0 %v4204
    %v4293 = vpop.f32.mrb[0].mxu0
    %v4294 = vadd.f32 0.0, %v4293
    %v4295 = vpop.f32.mrb[0].mxu0
    %4296 = vmatprep.mubr.f32.mxu0 0.0
    %4297 = vmatmul.mubr.f32.gmra.mrb[0].mxu0 %v4207
    %v4298 = vpop.f32.mrb[0].mxu0
    %v4299 = vadd.f32 0.0, %v4298
    %v4300 = vpop.f32.mrb[0].mxu0
    %4301 = vmatprep.mubr.f32.mxu0 0.0
    %4302 = vmatmul.mubr.f32.gmra.mrb[0].mxu0 %v4210
    %v4303 = vpop.f32.mrb[0].mxu0
    %v4304 = vadd.f32 0.0, %v4303
    %v4305 = vpop.f32.mrb[0].mxu0
    %4306 = vmatprep.mubr.f32.mxu0 0.0
    %4307 = vmatmul.mubr.f32.gmra.mrb[0].mxu0 %v4213
    %v4308 = vpop.f32.mrb[0].mxu0
    %v4309 = vadd.f32 0.0, %v4308
    %v4310 = vpop.f32.mrb[0].mxu0
    %4311 = vmatprep.mubr.f32.mxu0 0.0
    %4312 = vmatmul.mubr.f32.gmra.mrb[0].mxu0 %v4216
    %v4313 = vpop.f32.mrb[0].mxu0
    %v4314 = vadd.f32 0.0, %v4313
    %v4315 = vpop.f32.mrb[0].mxu0
    %4316 = vmatprep.mubr.f32.mxu0 0.0
    %4317 = vmatmul.mubr.f32.gmra.mrb[0].mxu0 %v4219
    %v4318 = vpop.f32.mrb[0].mxu0
    %v4319 = vadd.f32 0.0, %v4318
    %v4320 = vpop.f32.mrb[0].mxu0
    %4321 = vmatprep.mubr.f32.mxu0 0.0
    %4322 = vmatmul.mubr.f32.gmra.mrb[0].mxu0 %v4222
    %v4323 = vpop.f32.mrb[0].mxu0
    %v4324 = vadd.f32 0.0, %v4323
    %v4325 = vpop.f32.mrb[0].mxu0
    %4326 = vmatprep.mubr.f32.mxu0 0.0
    %4327 = vmatmul.mubr.f32.gmra.mrb[0].mxu0 %v4225
    %v4328 = vpop.f32.mrb[0].mxu0
    %v4329 = vadd.f32 0.0, %v4328
    %v4330 = vpop.f32.mrb[0].mxu0
    %4331 = vdwg.mxu0
    %4340 = vrot.lane.b32.xlu0 %v4294, 24
    %v4341 = vpop.permute.xlu0 %4340
    %4342 = vrot.lane.b32.xlu0 %v4299, 24
    %v4343 = vpop.permute.xlu0 %4342
    %4344 = vrot.lane.b32.xlu0 %v4304, 24
    %v4345 = vpop.permute.xlu0 %4344
    %4346 = vrot.lane.b32.xlu0 %v4309, 24
    %v4347 = vpop.permute.xlu0 %4346
    %4348 = vrot.lane.b32.xlu0 %v4314, 24
    %v4349 = vpop.permute.xlu0 %4348
    %4350 = vrot.lane.b32.xlu0 %v4319, 24
    %v4351 = vpop.permute.xlu0 %4350
    %4352 = vrot.lane.b32.xlu0 %v4324, 24
    %v4353 = vpop.permute.xlu0 %4352
    %4354 = vrot.lane.b32.xlu0 %v4329, 24
    %v4355 = vpop.permute.xlu0 %4354
    %4364 = vst.msk [vmem:[#allocation2 + $0x40] sm:$0xff] %vm2603, %v4341
    %4365 = vst.msk [vmem:[#allocation2 + $0x48] sm:$0xff] %vm2603, %v4343
    %4366 = vst.msk [vmem:[#allocation2 + $0x50] sm:$0xff] %vm2603, %v4345
    %4367 = vst.msk [vmem:[#allocation2 + $0x58] sm:$0xff] %vm2603, %v4347
    %4368 = vst.msk [vmem:[#allocation2 + $0x60] sm:$0xff] %vm2603, %v4349
    %4369 = vst.msk [vmem:[#allocation2 + $0x68] sm:$0xff] %vm2603, %v4351
    %4370 = vst.msk [vmem:[#allocation2 + $0x70] sm:$0xff] %vm2603, %v4353
    %4371 = vst.msk [vmem:[#allocation2 + $0x78] sm:$0xff] %vm2603, %v4355
    %v4372 = vld [vmem:[#allocation2] sm:$0xff]
    %v4373 = vld [vmem:[#allocation2 + $0x8] sm:$0xff]
    %v4374 = vld [vmem:[#allocation2 + $0x10] sm:$0xff]
    %v4375 = vld [vmem:[#allocation2 + $0x18] sm:$0xff]
    %v4376 = vld [vmem:[#allocation2 + $0x20] sm:$0xff]
    %v4377 = vld [vmem:[#allocation2 + $0x28] sm:$0xff]
    %v4378 = vld [vmem:[#allocation2 + $0x30] sm:$0xff]
    %v4379 = vld [vmem:[#allocation2 + $0x38] sm:$0xff]
    %v4380 = vld [vmem:[#allocation2 + $0x40] sm:$0xff]
    %v4381 = vld [vmem:[#allocation2 + $0x48] sm:$0xff]
    %v4382 = vld [vmem:[#allocation2 + $0x50] sm:$0xff]
    %v4383 = vld [vmem:[#allocation2 + $0x58] sm:$0xff]
    %v4384 = vld [vmem:[#allocation2 + $0x60] sm:$0xff]
    %v4385 = vld [vmem:[#allocation2 + $0x68] sm:$0xff]
    %v4386 = vld [vmem:[#allocation2 + $0x70] sm:$0xff]
    %v4387 = vld [vmem:[#allocation2 + $0x78] sm:$0xff]
    %v4388 = vld [vmem:[%s7] sm:$0xff]
    %v4389 = vld [vmem:[%s7 + $0x8] sm:$0xff]
    %v4390 = vld [vmem:[%s7 + $0x10] sm:$0xff]
    %v4391 = vld [vmem:[%s7 + $0x18] sm:$0xff]
    %v4392 = vld [vmem:[#allocation9] sm:$0x1]
    %v4394 = vlaneseq
    %v4395 = vshrl.u32 %v4394, 7
    %v4396 = vsub.s32 0, %v4395
    %v4397 = vrot.slane %v4392, %v4396
    %v4400 = vsel %vm213, %v4372, 0
    %v4403 = vsel %vm213, %v4373, 0
    %v4406 = vsel %vm213, %v4374, 0
    %v4409 = vsel %vm213, %v4375, 0
    %v4412 = vsel %vm213, %v4376, 0
    %v4415 = vsel %vm213, %v4377, 0
    %v4418 = vsel %vm213, %v4378, 0
    %v4421 = vsel %vm213, %v4379, 0
    %v4424 = vsel %vm213, %v4380, 0
    %v4427 = vsel %vm213, %v4381, 0
    %v4430 = vsel %vm213, %v4382, 0
    %v4433 = vsel %vm213, %v4383, 0
    %v4436 = vsel %vm213, %v4384, 0
    %v4439 = vsel %vm213, %v4385, 0
    %v4442 = vsel %vm213, %v4386, 0
    %v4445 = vsel %vm213, %v4387, 0
    %4447 = vmatprep.subr.mxu0 0.0
    %4448 = vmatpush1.msra.mxu0 %v4388
    %4449 = vmatprep.subr.mxu0 0.0
    %4450 = vmatpush1.msra.mxu0 %v4389
    %4451 = vmatprep.subr.mxu0 0.0
    %4452 = vmatpush1.msra.mxu0 %v4390
    %4453 = vmatprep.subr.mxu0 0.0
    %4454 = vmatpush1.msra.mxu0 %v4391
    %4455 = vmatprep.subr.mxu0 0.0
    %4456 = vmatpush1.msra.mxu0 0.0
    %4457 = vmatprep.subr.mxu0 0.0
    %4458 = vmatpush1.msra.mxu0 0.0
    %4459 = vmatprep.subr.mxu0 0.0
    %4460 = vmatpush1.msra.mxu0 0.0
    %4461 = vmatprep.subr.mxu0 0.0
    %4462 = vmatpush1.msra.mxu0 0.0
    %4463 = vmatprep.subr.mxu0 0.0
    %4464 = vmatpush1.msra.mxu0 0.0
    %4465 = vmatprep.subr.mxu0 0.0
    %4466 = vmatpush1.msra.mxu0 0.0
    %4467 = vmatprep.subr.mxu0 0.0
    %4468 = vmatpush1.msra.mxu0 0.0
    %4469 = vmatprep.subr.mxu0 0.0
    %4470 = vmatpush1.msra.mxu0 0.0
    %4471 = vmatprep.subr.mxu0 0.0
    %4472 = vmatpush1.msra.mxu0 0.0
    %4473 = vmatprep.subr.mxu0 0.0
    %4474 = vmatpush1.msra.mxu0 0.0
    %4475 = vmatprep.subr.mxu0 0.0
    %4476 = vmatpush1.msra.mxu0 0.0
    %4477 = vmatprep.subr.mxu0 0.0
    %4478 = vmatpush1.msra.mxu0 0.0
    %4479 = vmatprep.subr.mxu0 0.0
    %4480 = vmatpush1.msra.mxu0 0.0
    %4481 = vmatprep.subr.mxu0 0.0
    %4482 = vmatpush1.msra.mxu0 0.0
    %4483 = vmatprep.subr.mxu0 0.0
    %4484 = vmatpush1.msra.mxu0 0.0
    %4485 = vmatprep.subr.mxu0 0.0
    %4486 = vmatpush1.msra.mxu0 0.0
    %4487 = vmatprep.subr.mxu0 0.0
    %4488 = vmatpush1.msra.mxu0 0.0
    %4489 = vmatprep.subr.mxu0 0.0
    %4490 = vmatpush1.msra.mxu0 0.0
    %4491 = vmatprep.subr.mxu0 0.0
    %4492 = vmatpush1.msra.mxu0 0.0
    %4493 = vmatprep.subr.mxu0 0.0
    %4494 = vmatpush1.msra.mxu0 0.0
    %4495 = vmatprep.subr.mxu0 0.0
    %4496 = vmatpush1.msra.mxu0 0.0
    %4497 = vmatprep.subr.mxu0 0.0
    %4498 = vmatpush1.msra.mxu0 0.0
    %4499 = vmatprep.subr.mxu0 0.0
    %4500 = vmatpush1.msra.mxu0 0.0
    %4501 = vmatprep.subr.mxu0 0.0
    %4502 = vmatpush1.msra.mxu0 0.0
    %4503 = vmatprep.subr.mxu0 0.0
    %4504 = vmatpush1.msra.mxu0 0.0
    %4505 = vmatprep.subr.mxu0 0.0
    %4506 = vmatpush1.msra.mxu0 0.0
    %4507 = vmatprep.subr.mxu0 0.0
    %4508 = vmatpush1.msra.mxu0 0.0
    %4509 = vmatprep.subr.mxu0 0.0
    %4510 = vmatpush1.msra.mxu0 0.0
    %4511 = vmatprep.mubr.f32.mxu0 0.0
    %4512 = vmatmul.mubr.f32.gmra.mrb[0].mxu0 %v4400
    %v4513 = vpop.f32.mrb[0].mxu0
    %v4514 = vadd.f32 %v4397, %v4513
    %v4515 = vpop.f32.mrb[0].mxu0
    %4516 = vmatprep.mubr.f32.mxu0 0.0
    %4517 = vmatmul.mubr.f32.gmra.mrb[0].mxu0 %v4403
    %v4518 = vpop.f32.mrb[0].mxu0
    %v4519 = vadd.f32 %v4397, %v4518
    %v4520 = vpop.f32.mrb[0].mxu0
    %4521 = vmatprep.mubr.f32.mxu0 0.0
    %4522 = vmatmul.mubr.f32.gmra.mrb[0].mxu0 %v4406
    %v4523 = vpop.f32.mrb[0].mxu0
    %v4524 = vadd.f32 %v4397, %v4523
    %v4525 = vpop.f32.mrb[0].mxu0
    %4526 = vmatprep.mubr.f32.mxu0 0.0
    %4527 = vmatmul.mubr.f32.gmra.mrb[0].mxu0 %v4409
    %v4528 = vpop.f32.mrb[0].mxu0
    %v4529 = vadd.f32 %v4397, %v4528
    %v4530 = vpop.f32.mrb[0].mxu0
    %4531 = vmatprep.mubr.f32.mxu0 0.0
    %4532 = vmatmul.mubr.f32.gmra.mrb[0].mxu0 %v4412
    %v4533 = vpop.f32.mrb[0].mxu0
    %v4534 = vadd.f32 %v4397, %v4533
    %v4535 = vpop.f32.mrb[0].mxu0
    %4536 = vmatprep.mubr.f32.mxu0 0.0
    %4537 = vmatmul.mubr.f32.gmra.mrb[0].mxu0 %v4415
    %v4538 = vpop.f32.mrb[0].mxu0
    %v4539 = vadd.f32 %v4397, %v4538
    %v4540 = vpop.f32.mrb[0].mxu0
    %4541 = vmatprep.mubr.f32.mxu0 0.0
    %4542 = vmatmul.mubr.f32.gmra.mrb[0].mxu0 %v4418
    %v4543 = vpop.f32.mrb[0].mxu0
    %v4544 = vadd.f32 %v4397, %v4543
    %v4545 = vpop.f32.mrb[0].mxu0
    %4546 = vmatprep.mubr.f32.mxu0 0.0
    %4547 = vmatmul.mubr.f32.gmra.mrb[0].mxu0 %v4421
    %v4548 = vpop.f32.mrb[0].mxu0
    %v4549 = vadd.f32 %v4397, %v4548
    %v4550 = vpop.f32.mrb[0].mxu0
    %4551 = vmatprep.mubr.f32.mxu0 0.0
    %4552 = vmatmul.mubr.f32.gmra.mrb[0].mxu0 %v4424
    %v4553 = vpop.f32.mrb[0].mxu0
    %v4554 = vadd.f32 %v4397, %v4553
    %v4555 = vpop.f32.mrb[0].mxu0
    %4556 = vmatprep.mubr.f32.mxu0 0.0
    %4557 = vmatmul.mubr.f32.gmra.mrb[0].mxu0 %v4427
    %v4558 = vpop.f32.mrb[0].mxu0
    %v4559 = vadd.f32 %v4397, %v4558
    %v4560 = vpop.f32.mrb[0].mxu0
    %4561 = vmatprep.mubr.f32.mxu0 0.0
    %4562 = vmatmul.mubr.f32.gmra.mrb[0].mxu0 %v4430
    %v4563 = vpop.f32.mrb[0].mxu0
    %v4564 = vadd.f32 %v4397, %v4563
    %v4565 = vpop.f32.mrb[0].mxu0
    %4566 = vmatprep.mubr.f32.mxu0 0.0
    %4567 = vmatmul.mubr.f32.gmra.mrb[0].mxu0 %v4433
    %v4568 = vpop.f32.mrb[0].mxu0
    %v4569 = vadd.f32 %v4397, %v4568
    %v4570 = vpop.f32.mrb[0].mxu0
    %4571 = vmatprep.mubr.f32.mxu0 0.0
    %4572 = vmatmul.mubr.f32.gmra.mrb[0].mxu0 %v4436
    %v4573 = vpop.f32.mrb[0].mxu0
    %v4574 = vadd.f32 %v4397, %v4573
    %v4575 = vpop.f32.mrb[0].mxu0
    %4576 = vmatprep.mubr.f32.mxu0 0.0
    %4577 = vmatmul.mubr.f32.gmra.mrb[0].mxu0 %v4439
    %v4578 = vpop.f32.mrb[0].mxu0
    %v4579 = vadd.f32 %v4397, %v4578
    %v4580 = vpop.f32.mrb[0].mxu0
    %4581 = vmatprep.mubr.f32.mxu0 0.0
    %4582 = vmatmul.mubr.f32.gmra.mrb[0].mxu0 %v4442
    %v4583 = vpop.f32.mrb[0].mxu0
    %v4584 = vadd.f32 %v4397, %v4583
    %v4585 = vpop.f32.mrb[0].mxu0
    %4586 = vmatprep.mubr.f32.mxu0 0.0
    %4587 = vmatmul.mubr.f32.gmra.mrb[0].mxu0 %v4445
    %v4588 = vpop.f32.mrb[0].mxu0
    %v4589 = vadd.f32 %v4397, %v4588
    %v4590 = vpop.f32.mrb[0].mxu0
    %4591 = vdwg.mxu0
    %v4592 = vadd.f32 %v627, %v4514
    %v4593 = vadd.f32 %v628, %v4519
    %v4594 = vadd.f32 %v629, %v4524
    %v4595 = vadd.f32 %v630, %v4529
    %v4596 = vadd.f32 %v631, %v4534
    %v4597 = vadd.f32 %v632, %v4539
    %v4598 = vadd.f32 %v633, %v4544
    %v4599 = vadd.f32 %v634, %v4549
    %v4600 = vadd.f32 %v635, %v4554
    %v4601 = vadd.f32 %v636, %v4559
    %v4602 = vadd.f32 %v637, %v4564
    %v4603 = vadd.f32 %v638, %v4569
    %v4604 = vadd.f32 %v639, %v4574
    %v4605 = vadd.f32 %v640, %v4579
    %v4606 = vadd.f32 %v641, %v4584
    %v4607 = vadd.f32 %v642, %v4589
    %v4608 = vld [vmem:[%s13] sm:$0x1]
    %v4609 = vld [vmem:[#allocation15] sm:$0x1]
    %v4610 = vsel %vm213, %v4592, 0.0
    %4611 = vadd.xlane.f32.xlu0 %v4610
    %v4612 = vpop.xlane.xlu0 %4611
    %v4613 = vsel %vm213, %v4593, 0.0
    %4614 = vadd.xlane.f32.xlu0 %v4613
    %v4615 = vpop.xlane.xlu0 %4614
    %v4616 = vsel %vm213, %v4594, 0.0
    %4617 = vadd.xlane.f32.xlu0 %v4616
    %v4618 = vpop.xlane.xlu0 %4617
    %v4619 = vsel %vm213, %v4595, 0.0
    %4620 = vadd.xlane.f32.xlu0 %v4619
    %v4621 = vpop.xlane.xlu0 %4620
    %v4622 = vsel %vm213, %v4596, 0.0
    %4623 = vadd.xlane.f32.xlu0 %v4622
    %v4624 = vpop.xlane.xlu0 %4623
    %v4625 = vsel %vm213, %v4597, 0.0
    %4626 = vadd.xlane.f32.xlu0 %v4625
    %v4627 = vpop.xlane.xlu0 %4626
    %v4628 = vsel %vm213, %v4598, 0.0
    %4629 = vadd.xlane.f32.xlu0 %v4628
    %v4630 = vpop.xlane.xlu0 %4629
    %v4631 = vsel %vm213, %v4599, 0.0
    %4632 = vadd.xlane.f32.xlu0 %v4631
    %v4633 = vpop.xlane.xlu0 %4632
    %v4634 = vsel %vm213, %v4600, 0.0
    %4635 = vadd.xlane.f32.xlu0 %v4634
    %v4636 = vpop.xlane.xlu0 %4635
    %v4637 = vsel %vm213, %v4601, 0.0
    %4638 = vadd.xlane.f32.xlu0 %v4637
    %v4639 = vpop.xlane.xlu0 %4638
    %v4640 = vsel %vm213, %v4602, 0.0
    %4641 = vadd.xlane.f32.xlu0 %v4640
    %v4642 = vpop.xlane.xlu0 %4641
    %v4643 = vsel %vm213, %v4603, 0.0
    %4644 = vadd.xlane.f32.xlu0 %v4643
    %v4645 = vpop.xlane.xlu0 %4644
    %v4646 = vsel %vm213, %v4604, 0.0
    %4647 = vadd.xlane.f32.xlu0 %v4646
    %v4648 = vpop.xlane.xlu0 %4647
    %v4649 = vsel %vm213, %v4605, 0.0
    %4650 = vadd.xlane.f32.xlu0 %v4649
    %v4651 = vpop.xlane.xlu0 %4650
    %v4652 = vsel %vm213, %v4606, 0.0
    %4653 = vadd.xlane.f32.xlu0 %v4652
    %v4654 = vpop.xlane.xlu0 %4653
    %v4655 = vsel %vm213, %v4607, 0.0
    %4656 = vadd.xlane.f32.xlu0 %v4655
    %v4657 = vpop.xlane.xlu0 %4656
    %v4658 = vrcp.pop 32.0
    %v4659 = vmul.f32 %v4612, %v4658
    %v4660 = vmul.f32 %v4615, %v4658
    %v4661 = vmul.f32 %v4618, %v4658
    %v4662 = vmul.f32 %v4621, %v4658
    %v4663 = vmul.f32 %v4624, %v4658
    %v4664 = vmul.f32 %v4627, %v4658
    %v4665 = vmul.f32 %v4630, %v4658
    %v4666 = vmul.f32 %v4633, %v4658
    %v4667 = vmul.f32 %v4636, %v4658
    %v4668 = vmul.f32 %v4639, %v4658
    %v4669 = vmul.f32 %v4642, %v4658
    %v4670 = vmul.f32 %v4645, %v4658
    %v4671 = vmul.f32 %v4648, %v4658
    %v4672 = vmul.f32 %v4651, %v4658
    %v4673 = vmul.f32 %v4654, %v4658
    %v4674 = vmul.f32 %v4657, %v4658
    %v4675 = vsub.f32 %v4592, %v4659
    %v4676 = vsub.f32 %v4593, %v4660
    %v4677 = vsub.f32 %v4594, %v4661
    %v4678 = vsub.f32 %v4595, %v4662
    %v4679 = vsub.f32 %v4596, %v4663
    %v4680 = vsub.f32 %v4597, %v4664
    %v4681 = vsub.f32 %v4598, %v4665
    %v4682 = vsub.f32 %v4599, %v4666
    %v4683 = vsub.f32 %v4600, %v4667
    %v4684 = vsub.f32 %v4601, %v4668
    %v4685 = vsub.f32 %v4602, %v4669
    %v4686 = vsub.f32 %v4603, %v4670
    %v4687 = vsub.f32 %v4604, %v4671
    %v4688 = vsub.f32 %v4605, %v4672
    %v4689 = vsub.f32 %v4606, %v4673
    %v4690 = vsub.f32 %v4607, %v4674
    %v4691 = vmul.f32 %v4675, %v4675
    %v4692 = vmul.f32 %v4676, %v4676
    %v4693 = vmul.f32 %v4677, %v4677
    %v4694 = vmul.f32 %v4678, %v4678
    %v4695 = vmul.f32 %v4679, %v4679
    %v4696 = vmul.f32 %v4680, %v4680
    %v4697 = vmul.f32 %v4681, %v4681
    %v4698 = vmul.f32 %v4682, %v4682
    %v4699 = vmul.f32 %v4683, %v4683
    %v4700 = vmul.f32 %v4684, %v4684
    %v4701 = vmul.f32 %v4685, %v4685
    %v4702 = vmul.f32 %v4686, %v4686
    %v4703 = vmul.f32 %v4687, %v4687
    %v4704 = vmul.f32 %v4688, %v4688
    %v4705 = vmul.f32 %v4689, %v4689
    %v4706 = vmul.f32 %v4690, %v4690
    %v4707 = vsel %vm213, %v4691, 0.0
    %4708 = vadd.xlane.f32.xlu0 %v4707
    %v4709 = vpop.xlane.xlu0 %4708
    %v4710 = vsel %vm213, %v4692, 0.0
    %4711 = vadd.xlane.f32.xlu0 %v4710
    %v4712 = vpop.xlane.xlu0 %4711
    %v4713 = vsel %vm213, %v4693, 0.0
    %4714 = vadd.xlane.f32.xlu0 %v4713
    %v4715 = vpop.xlane.xlu0 %4714
    %v4716 = vsel %vm213, %v4694, 0.0
    %4717 = vadd.xlane.f32.xlu0 %v4716
    %v4718 = vpop.xlane.xlu0 %4717
    %v4719 = vsel %vm213, %v4695, 0.0
    %4720 = vadd.xlane.f32.xlu0 %v4719
    %v4721 = vpop.xlane.xlu0 %4720
    %v4722 = vsel %vm213, %v4696, 0.0
    %4723 = vadd.xlane.f32.xlu0 %v4722
    %v4724 = vpop.xlane.xlu0 %4723
    %v4725 = vsel %vm213, %v4697, 0.0
    %4726 = vadd.xlane.f32.xlu0 %v4725
    %v4727 = vpop.xlane.xlu0 %4726
    %v4728 = vsel %vm213, %v4698, 0.0
    %4729 = vadd.xlane.f32.xlu0 %v4728
    %v4730 = vpop.xlane.xlu0 %4729
    %v4731 = vsel %vm213, %v4699, 0.0
    %4732 = vadd.xlane.f32.xlu0 %v4731
    %v4733 = vpop.xlane.xlu0 %4732
    %v4734 = vsel %vm213, %v4700, 0.0
    %4735 = vadd.xlane.f32.xlu0 %v4734
    %v4736 = vpop.xlane.xlu0 %4735
    %v4737 = vsel %vm213, %v4701, 0.0
    %4738 = vadd.xlane.f32.xlu0 %v4737
    %v4739 = vpop.xlane.xlu0 %4738
    %v4740 = vsel %vm213, %v4702, 0.0
    %4741 = vadd.xlane.f32.xlu0 %v4740
    %v4742 = vpop.xlane.xlu0 %4741
    %v4743 = vsel %vm213, %v4703, 0.0
    %4744 = vadd.xlane.f32.xlu0 %v4743
    %v4745 = vpop.xlane.xlu0 %4744
    %v4746 = vsel %vm213, %v4704, 0.0
    %4747 = vadd.xlane.f32.xlu0 %v4746
    %v4748 = vpop.xlane.xlu0 %4747
    %v4749 = vsel %vm213, %v4705, 0.0
    %4750 = vadd.xlane.f32.xlu0 %v4749
    %v4751 = vpop.xlane.xlu0 %4750
    %v4752 = vsel %vm213, %v4706, 0.0
    %4753 = vadd.xlane.f32.xlu0 %v4752
    %v4754 = vpop.xlane.xlu0 %4753
    %v4755 = vmul.f32 %v4709, %v4658
    %v4756 = vmul.f32 %v4712, %v4658
    %v4757 = vmul.f32 %v4715, %v4658
    %v4758 = vmul.f32 %v4718, %v4658
    %v4759 = vmul.f32 %v4721, %v4658
    %v4760 = vmul.f32 %v4724, %v4658
    %v4761 = vmul.f32 %v4727, %v4658
    %v4762 = vmul.f32 %v4730, %v4658
    %v4763 = vmul.f32 %v4733, %v4658
    %v4764 = vmul.f32 %v4736, %v4658
    %v4765 = vmul.f32 %v4739, %v4658
    %v4766 = vmul.f32 %v4742, %v4658
    %v4767 = vmul.f32 %v4745, %v4658
    %v4768 = vmul.f32 %v4748, %v4658
    %v4769 = vmul.f32 %v4751, %v4658
    %v4770 = vmul.f32 %v4754, %v4658
    %v4771 = vadd.f32 %v4755, 1e-05
    %v4772 = vadd.f32 %v4756, 1e-05
    %v4773 = vadd.f32 %v4757, 1e-05
    %v4774 = vadd.f32 %v4758, 1e-05
    %v4775 = vadd.f32 %v4759, 1e-05
    %v4776 = vadd.f32 %v4760, 1e-05
    %v4777 = vadd.f32 %v4761, 1e-05
    %v4778 = vadd.f32 %v4762, 1e-05
    %v4779 = vadd.f32 %v4763, 1e-05
    %v4780 = vadd.f32 %v4764, 1e-05
    %v4781 = vadd.f32 %v4765, 1e-05
    %v4782 = vadd.f32 %v4766, 1e-05
    %v4783 = vadd.f32 %v4767, 1e-05
    %v4784 = vadd.f32 %v4768, 1e-05
    %v4785 = vadd.f32 %v4769, 1e-05
    %v4786 = vadd.f32 %v4770, 1e-05
    %v4787 = vrsqrt.pop %v4771
    %v4788 = vrsqrt.pop %v4772
    %v4789 = vrsqrt.pop %v4773
    %v4790 = vrsqrt.pop %v4774
    %v4791 = vrsqrt.pop %v4775
    %v4792 = vrsqrt.pop %v4776
    %v4793 = vrsqrt.pop %v4777
    %v4794 = vrsqrt.pop %v4778
    %v4795 = vrsqrt.pop %v4779
    %v4796 = vrsqrt.pop %v4780
    %v4797 = vrsqrt.pop %v4781
    %v4798 = vrsqrt.pop %v4782
    %v4799 = vrsqrt.pop %v4783
    %v4800 = vrsqrt.pop %v4784
    %v4801 = vrsqrt.pop %v4785
    %v4802 = vrsqrt.pop %v4786
    %v4803 = vmul.f32 %v4675, %v4787
    %v4804 = vmul.f32 %v4676, %v4788
    %v4805 = vmul.f32 %v4677, %v4789
    %v4806 = vmul.f32 %v4678, %v4790
    %v4807 = vmul.f32 %v4679, %v4791
    %v4808 = vmul.f32 %v4680, %v4792
    %v4809 = vmul.f32 %v4681, %v4793
    %v4810 = vmul.f32 %v4682, %v4794
    %v4811 = vmul.f32 %v4683, %v4795
    %v4812 = vmul.f32 %v4684, %v4796
    %v4813 = vmul.f32 %v4685, %v4797
    %v4814 = vmul.f32 %v4686, %v4798
    %v4815 = vmul.f32 %v4687, %v4799
    %v4816 = vmul.f32 %v4688, %v4800
    %v4817 = vmul.f32 %v4689, %v4801
    %v4818 = vmul.f32 %v4690, %v4802
    %v4820 = vlaneseq
    %v4821 = vshrl.u32 %v4820, 7
    %v4822 = vsub.s32 0, %v4821
    %v4823 = vrot.slane %v4608, %v4822
    %v4825 = vmul.f32 %v4803, %v4823
    %v4826 = vmul.f32 %v4804, %v4823
    %v4827 = vmul.f32 %v4805, %v4823
    %v4828 = vmul.f32 %v4806, %v4823
    %v4829 = vmul.f32 %v4807, %v4823
    %v4830 = vmul.f32 %v4808, %v4823
    %v4831 = vmul.f32 %v4809, %v4823
    %v4832 = vmul.f32 %v4810, %v4823
    %v4833 = vmul.f32 %v4811, %v4823
    %v4834 = vmul.f32 %v4812, %v4823
    %v4835 = vmul.f32 %v4813, %v4823
    %v4836 = vmul.f32 %v4814, %v4823
    %v4837 = vmul.f32 %v4815, %v4823
    %v4838 = vmul.f32 %v4816, %v4823
    %v4839 = vmul.f32 %v4817, %v4823
    %v4840 = vmul.f32 %v4818, %v4823
    %v4842 = vlaneseq
    %v4843 = vshrl.u32 %v4842, 7
    %v4844 = vsub.s32 0, %v4843
    %v4845 = vrot.slane %v4609, %v4844
    %v4847 = vadd.f32 %v4825, %v4845
    %v4848 = vadd.f32 %v4826, %v4845
    %v4849 = vadd.f32 %v4827, %v4845
    %v4850 = vadd.f32 %v4828, %v4845
    %v4851 = vadd.f32 %v4829, %v4845
    %v4852 = vadd.f32 %v4830, %v4845
    %v4853 = vadd.f32 %v4831, %v4845
    %v4854 = vadd.f32 %v4832, %v4845
    %v4855 = vadd.f32 %v4833, %v4845
    %v4856 = vadd.f32 %v4834, %v4845
    %v4857 = vadd.f32 %v4835, %v4845
    %v4858 = vadd.f32 %v4836, %v4845
    %v4859 = vadd.f32 %v4837, %v4845
    %v4860 = vadd.f32 %v4838, %v4845
    %v4861 = vadd.f32 %v4839, %v4845
    %v4862 = vadd.f32 %v4840, %v4845
    %v4863 = vld [vmem:[%s9] sm:$0xff]
    %v4864 = vld [vmem:[%s9 + $0x8] sm:$0xff]
    %v4865 = vld [vmem:[%s9 + $0x10] sm:$0xff]
    %v4866 = vld [vmem:[%s9 + $0x18] sm:$0xff]
    %v4867 = vld [vmem:[#allocation11] sm:$0x1]
    %v4869 = vlaneseq
    %v4870 = vshrl.u32 %v4869, 7
    %v4871 = vsub.s32 0, %v4870
    %v4872 = vrot.slane %v4867, %v4871
    %v4875 = vsel %vm213, %v4847, 0
    %v4878 = vsel %vm213, %v4848, 0
    %v4881 = vsel %vm213, %v4849, 0
    %v4884 = vsel %vm213, %v4850, 0
    %v4887 = vsel %vm213, %v4851, 0
    %v4890 = vsel %vm213, %v4852, 0
    %v4893 = vsel %vm213, %v4853, 0
    %v4896 = vsel %vm213, %v4854, 0
    %v4899 = vsel %vm213, %v4855, 0
    %v4902 = vsel %vm213, %v4856, 0
    %v4905 = vsel %vm213, %v4857, 0
    %v4908 = vsel %vm213, %v4858, 0
    %v4911 = vsel %vm213, %v4859, 0
    %v4914 = vsel %vm213, %v4860, 0
    %v4917 = vsel %vm213, %v4861, 0
    %v4920 = vsel %vm213, %v4862, 0
    %4922 = vmatprep.subr.mxu0 0.0
    %4923 = vmatpush1.msra.mxu0 %v4863
    %4924 = vmatprep.subr.mxu0 0.0
    %4925 = vmatpush1.msra.mxu0 %v4864
    %4926 = vmatprep.subr.mxu0 0.0
    %4927 = vmatpush1.msra.mxu0 %v4865
    %4928 = vmatprep.subr.mxu0 0.0
    %4929 = vmatpush1.msra.mxu0 %v4866
    %4930 = vmatprep.subr.mxu0 0.0
    %4931 = vmatpush1.msra.mxu0 0.0
    %4932 = vmatprep.subr.mxu0 0.0
    %4933 = vmatpush1.msra.mxu0 0.0
    %4934 = vmatprep.subr.mxu0 0.0
    %4935 = vmatpush1.msra.mxu0 0.0
    %4936 = vmatprep.subr.mxu0 0.0
    %4937 = vmatpush1.msra.mxu0 0.0
    %4938 = vmatprep.subr.mxu0 0.0
    %4939 = vmatpush1.msra.mxu0 0.0
    %4940 = vmatprep.subr.mxu0 0.0
    %4941 = vmatpush1.msra.mxu0 0.0
    %4942 = vmatprep.subr.mxu0 0.0
    %4943 = vmatpush1.msra.mxu0 0.0
    %4944 = vmatprep.subr.mxu0 0.0
    %4945 = vmatpush1.msra.mxu0 0.0
    %4946 = vmatprep.subr.mxu0 0.0
    %4947 = vmatpush1.msra.mxu0 0.0
    %4948 = vmatprep.subr.mxu0 0.0
    %4949 = vmatpush1.msra.mxu0 0.0
    %4950 = vmatprep.subr.mxu0 0.0
    %4951 = vmatpush1.msra.mxu0 0.0
    %4952 = vmatprep.subr.mxu0 0.0
    %4953 = vmatpush1.msra.mxu0 0.0
    %4954 = vmatprep.subr.mxu0 0.0
    %4955 = vmatpush1.msra.mxu0 0.0
    %4956 = vmatprep.subr.mxu0 0.0
    %4957 = vmatpush1.msra.mxu0 0.0
    %4958 = vmatprep.subr.mxu0 0.0
    %4959 = vmatpush1.msra.mxu0 0.0
    %4960 = vmatprep.subr.mxu0 0.0
    %4961 = vmatpush1.msra.mxu0 0.0
    %4962 = vmatprep.subr.mxu0 0.0
    %4963 = vmatpush1.msra.mxu0 0.0
    %4964 = vmatprep.subr.mxu0 0.0
    %4965 = vmatpush1.msra.mxu0 0.0
    %4966 = vmatprep.subr.mxu0 0.0
    %4967 = vmatpush1.msra.mxu0 0.0
    %4968 = vmatprep.subr.mxu0 0.0
    %4969 = vmatpush1.msra.mxu0 0.0
    %4970 = vmatprep.subr.mxu0 0.0
    %4971 = vmatpush1.msra.mxu0 0.0
    %4972 = vmatprep.subr.mxu0 0.0
    %4973 = vmatpush1.msra.mxu0 0.0
    %4974 = vmatprep.subr.mxu0 0.0
    %4975 = vmatpush1.msra.mxu0 0.0
    %4976 = vmatprep.subr.mxu0 0.0
    %4977 = vmatpush1.msra.mxu0 0.0
    %4978 = vmatprep.subr.mxu0 0.0
    %4979 = vmatpush1.msra.mxu0 0.0
    %4980 = vmatprep.subr.mxu0 0.0
    %4981 = vmatpush1.msra.mxu0 0.0
    %4982 = vmatprep.subr.mxu0 0.0
    %4983 = vmatpush1.msra.mxu0 0.0
    %4984 = vmatprep.subr.mxu0 0.0
    %4985 = vmatpush1.msra.mxu0 0.0
    %4986 = vmatprep.mubr.f32.mxu0 0.0
    %4987 = vmatmul.mubr.f32.gmra.mrb[0].mxu0 %v4875
    %v4988 = vpop.f32.mrb[0].mxu0
    %v4989 = vadd.f32 %v4872, %v4988
    %v4990 = vpop.f32.mrb[0].mxu0
    %4991 = vmatprep.mubr.f32.mxu0 0.0
    %4992 = vmatmul.mubr.f32.gmra.mrb[0].mxu0 %v4878
    %v4993 = vpop.f32.mrb[0].mxu0
    %v4994 = vadd.f32 %v4872, %v4993
    %v4995 = vpop.f32.mrb[0].mxu0
    %4996 = vmatprep.mubr.f32.mxu0 0.0
    %4997 = vmatmul.mubr.f32.gmra.mrb[0].mxu0 %v4881
    %v4998 = vpop.f32.mrb[0].mxu0
    %v4999 = vadd.f32 %v4872, %v4998
    %v5000 = vpop.f32.mrb[0].mxu0
    %5001 = vmatprep.mubr.f32.mxu0 0.0
    %5002 = vmatmul.mubr.f32.gmra.mrb[0].mxu0 %v4884
    %v5003 = vpop.f32.mrb[0].mxu0
    %v5004 = vadd.f32 %v4872, %v5003
    %v5005 = vpop.f32.mrb[0].mxu0
    %5006 = vmatprep.mubr.f32.mxu0 0.0
    %5007 = vmatmul.mubr.f32.gmra.mrb[0].mxu0 %v4887
    %v5008 = vpop.f32.mrb[0].mxu0
    %v5009 = vadd.f32 %v4872, %v5008
    %v5010 = vpop.f32.mrb[0].mxu0
    %5011 = vmatprep.mubr.f32.mxu0 0.0
    %5012 = vmatmul.mubr.f32.gmra.mrb[0].mxu0 %v4890
    %v5013 = vpop.f32.mrb[0].mxu0
    %v5014 = vadd.f32 %v4872, %v5013
    %v5015 = vpop.f32.mrb[0].mxu0
    %5016 = vmatprep.mubr.f32.mxu0 0.0
    %5017 = vmatmul.mubr.f32.gmra.mrb[0].mxu0 %v4893
    %v5018 = vpop.f32.mrb[0].mxu0
    %v5019 = vadd.f32 %v4872, %v5018
    %v5020 = vpop.f32.mrb[0].mxu0
    %5021 = vmatprep.mubr.f32.mxu0 0.0
    %5022 = vmatmul.mubr.f32.gmra.mrb[0].mxu0 %v4896
    %v5023 = vpop.f32.mrb[0].mxu0
    %v5024 = vadd.f32 %v4872, %v5023
    %v5025 = vpop.f32.mrb[0].mxu0
    %5026 = vmatprep.mubr.f32.mxu0 0.0
    %5027 = vmatmul.mubr.f32.gmra.mrb[0].mxu0 %v4899
    %v5028 = vpop.f32.mrb[0].mxu0
    %v5029 = vadd.f32 %v4872, %v5028
    %v5030 = vpop.f32.mrb[0].mxu0
    %5031 = vmatprep.mubr.f32.mxu0 0.0
    %5032 = vmatmul.mubr.f32.gmra.mrb[0].mxu0 %v4902
    %v5033 = vpop.f32.mrb[0].mxu0
    %v5034 = vadd.f32 %v4872, %v5033
    %v5035 = vpop.f32.mrb[0].mxu0
    %5036 = vmatprep.mubr.f32.mxu0 0.0
    %5037 = vmatmul.mubr.f32.gmra.mrb[0].mxu0 %v4905
    %v5038 = vpop.f32.mrb[0].mxu0
    %v5039 = vadd.f32 %v4872, %v5038
    %v5040 = vpop.f32.mrb[0].mxu0
    %5041 = vmatprep.mubr.f32.mxu0 0.0
    %5042 = vmatmul.mubr.f32.gmra.mrb[0].mxu0 %v4908
    %v5043 = vpop.f32.mrb[0].mxu0
    %v5044 = vadd.f32 %v4872, %v5043
    %v5045 = vpop.f32.mrb[0].mxu0
    %5046 = vmatprep.mubr.f32.mxu0 0.0
    %5047 = vmatmul.mubr.f32.gmra.mrb[0].mxu0 %v4911
    %v5048 = vpop.f32.mrb[0].mxu0
    %v5049 = vadd.f32 %v4872, %v5048
    %v5050 = vpop.f32.mrb[0].mxu0
    %5051 = vmatprep.mubr.f32.mxu0 0.0
    %5052 = vmatmul.mubr.f32.gmra.mrb[0].mxu0 %v4914
    %v5053 = vpop.f32.mrb[0].mxu0
    %v5054 = vadd.f32 %v4872, %v5053
    %v5055 = vpop.f32.mrb[0].mxu0
    %5056 = vmatprep.mubr.f32.mxu0 0.0
    %5057 = vmatmul.mubr.f32.gmra.mrb[0].mxu0 %v4917
    %v5058 = vpop.f32.mrb[0].mxu0
    %v5059 = vadd.f32 %v4872, %v5058
    %v5060 = vpop.f32.mrb[0].mxu0
    %5061 = vmatprep.mubr.f32.mxu0 0.0
    %5062 = vmatmul.mubr.f32.gmra.mrb[0].mxu0 %v4920
    %v5063 = vpop.f32.mrb[0].mxu0
    %v5064 = vadd.f32 %v4872, %v5063
    %v5065 = vpop.f32.mrb[0].mxu0
    %5066 = vdwg.mxu0
    %v5067 = vmax.f32 %v4989, 0.0
    %v5068 = vmax.f32 %v4994, 0.0
    %v5069 = vmax.f32 %v4999, 0.0
    %v5070 = vmax.f32 %v5004, 0.0
    %v5071 = vmax.f32 %v5009, 0.0
    %v5072 = vmax.f32 %v5014, 0.0
    %v5073 = vmax.f32 %v5019, 0.0
    %v5074 = vmax.f32 %v5024, 0.0
    %v5075 = vmax.f32 %v5029, 0.0
    %v5076 = vmax.f32 %v5034, 0.0
    %v5077 = vmax.f32 %v5039, 0.0
    %v5078 = vmax.f32 %v5044, 0.0
    %v5079 = vmax.f32 %v5049, 0.0
    %v5080 = vmax.f32 %v5054, 0.0
    %v5081 = vmax.f32 %v5059, 0.0
    %v5082 = vmax.f32 %v5064, 0.0
    %v5083 = vld [vmem:[#allocation12] sm:$0xff]
    %v5084 = vld [vmem:[#allocation12 + $0x8] sm:$0xff]
    %v5085 = vld [vmem:[#allocation12 + $0x10] sm:$0xff]
    %v5086 = vld [vmem:[#allocation12 + $0x18] sm:$0xff]
    %v5087 = vld [vmem:[#allocation14] sm:$0x1]
    %v5089 = vlaneseq
    %v5090 = vshrl.u32 %v5089, 7
    %v5091 = vsub.s32 0, %v5090
    %v5092 = vrot.slane %v5087, %v5091
    %v5095 = vsel %vm213, %v5067, 0
    %v5098 = vsel %vm213, %v5068, 0
    %v5101 = vsel %vm213, %v5069, 0
    %v5104 = vsel %vm213, %v5070, 0
    %v5107 = vsel %vm213, %v5071, 0
    %v5110 = vsel %vm213, %v5072, 0
    %v5113 = vsel %vm213, %v5073, 0
    %v5116 = vsel %vm213, %v5074, 0
    %v5119 = vsel %vm213, %v5075, 0
    %v5122 = vsel %vm213, %v5076, 0
    %v5125 = vsel %vm213, %v5077, 0
    %v5128 = vsel %vm213, %v5078, 0
    %v5131 = vsel %vm213, %v5079, 0
    %v5134 = vsel %vm213, %v5080, 0
    %v5137 = vsel %vm213, %v5081, 0
    %v5140 = vsel %vm213, %v5082, 0
    %5142 = vmatprep.subr.mxu0 0.0
    %5143 = vmatpush1.msra.mxu0 %v5083
    %5144 = vmatprep.subr.mxu0 0.0
    %5145 = vmatpush1.msra.mxu0 %v5084
    %5146 = vmatprep.subr.mxu0 0.0
    %5147 = vmatpush1.msra.mxu0 %v5085
    %5148 = vmatprep.subr.mxu0 0.0
    %5149 = vmatpush1.msra.mxu0 %v5086
    %5150 = vmatprep.subr.mxu0 0.0
    %5151 = vmatpush1.msra.mxu0 0.0
    %5152 = vmatprep.subr.mxu0 0.0
    %5153 = vmatpush1.msra.mxu0 0.0
    %5154 = vmatprep.subr.mxu0 0.0
    %5155 = vmatpush1.msra.mxu0 0.0
    %5156 = vmatprep.subr.mxu0 0.0
    %5157 = vmatpush1.msra.mxu0 0.0
    %5158 = vmatprep.subr.mxu0 0.0
    %5159 = vmatpush1.msra.mxu0 0.0
    %5160 = vmatprep.subr.mxu0 0.0
    %5161 = vmatpush1.msra.mxu0 0.0
    %5162 = vmatprep.subr.mxu0 0.0
    %5163 = vmatpush1.msra.mxu0 0.0
    %5164 = vmatprep.subr.mxu0 0.0
    %5165 = vmatpush1.msra.mxu0 0.0
    %5166 = vmatprep.subr.mxu0 0.0
    %5167 = vmatpush1.msra.mxu0 0.0
    %5168 = vmatprep.subr.mxu0 0.0
    %5169 = vmatpush1.msra.mxu0 0.0
    %5170 = vmatprep.subr.mxu0 0.0
    %5171 = vmatpush1.msra.mxu0 0.0
    %5172 = vmatprep.subr.mxu0 0.0
    %5173 = vmatpush1.msra.mxu0 0.0
    %5174 = vmatprep.subr.mxu0 0.0
    %5175 = vmatpush1.msra.mxu0 0.0
    %5176 = vmatprep.subr.mxu0 0.0
    %5177 = vmatpush1.msra.mxu0 0.0
    %5178 = vmatprep.subr.mxu0 0.0
    %5179 = vmatpush1.msra.mxu0 0.0
    %5180 = vmatprep.subr.mxu0 0.0
    %5181 = vmatpush1.msra.mxu0 0.0
    %5182 = vmatprep.subr.mxu0 0.0
    %5183 = vmatpush1.msra.mxu0 0.0
    %5184 = vmatprep.subr.mxu0 0.0
    %5185 = vmatpush1.msra.mxu0 0.0
    %5186 = vmatprep.subr.mxu0 0.0
    %5187 = vmatpush1.msra.mxu0 0.0
    %5188 = vmatprep.subr.mxu0 0.0
    %5189 = vmatpush1.msra.mxu0 0.0
    %5190 = vmatprep.subr.mxu0 0.0
    %5191 = vmatpush1.msra.mxu0 0.0
    %5192 = vmatprep.subr.mxu0 0.0
    %5193 = vmatpush1.msra.mxu0 0.0
    %5194 = vmatprep.subr.mxu0 0.0
    %5195 = vmatpush1.msra.mxu0 0.0
    %5196 = vmatprep.subr.mxu0 0.0
    %5197 = vmatpush1.msra.mxu0 0.0
    %5198 = vmatprep.subr.mxu0 0.0
    %5199 = vmatpush1.msra.mxu0 0.0
    %5200 = vmatprep.subr.mxu0 0.0
    %5201 = vmatpush1.msra.mxu0 0.0
    %5202 = vmatprep.subr.mxu0 0.0
    %5203 = vmatpush1.msra.mxu0 0.0
    %5204 = vmatprep.subr.mxu0 0.0
    %5205 = vmatpush1.msra.mxu0 0.0
    %5206 = vmatprep.mubr.f32.mxu0 0.0
    %5207 = vmatmul.mubr.f32.gmra.mrb[0].mxu0 %v5095
    %v5208 = vpop.f32.mrb[0].mxu0
    %v5209 = vadd.f32 %v5092, %v5208
    %v5210 = vpop.f32.mrb[0].mxu0
    %5211 = vmatprep.mubr.f32.mxu0 0.0
    %5212 = vmatmul.mubr.f32.gmra.mrb[0].mxu0 %v5098
    %v5213 = vpop.f32.mrb[0].mxu0
    %v5214 = vadd.f32 %v5092, %v5213
    %v5215 = vpop.f32.mrb[0].mxu0
    %5216 = vmatprep.mubr.f32.mxu0 0.0
    %5217 = vmatmul.mubr.f32.gmra.mrb[0].mxu0 %v5101
    %v5218 = vpop.f32.mrb[0].mxu0
    %v5219 = vadd.f32 %v5092, %v5218
    %v5220 = vpop.f32.mrb[0].mxu0
    %5221 = vmatprep.mubr.f32.mxu0 0.0
    %5222 = vmatmul.mubr.f32.gmra.mrb[0].mxu0 %v5104
    %v5223 = vpop.f32.mrb[0].mxu0
    %v5224 = vadd.f32 %v5092, %v5223
    %v5225 = vpop.f32.mrb[0].mxu0
    %5226 = vmatprep.mubr.f32.mxu0 0.0
    %5227 = vmatmul.mubr.f32.gmra.mrb[0].mxu0 %v5107
    %v5228 = vpop.f32.mrb[0].mxu0
    %v5229 = vadd.f32 %v5092, %v5228
    %v5230 = vpop.f32.mrb[0].mxu0
    %5231 = vmatprep.mubr.f32.mxu0 0.0
    %5232 = vmatmul.mubr.f32.gmra.mrb[0].mxu0 %v5110
    %v5233 = vpop.f32.mrb[0].mxu0
    %v5234 = vadd.f32 %v5092, %v5233
    %v5235 = vpop.f32.mrb[0].mxu0
    %5236 = vmatprep.mubr.f32.mxu0 0.0
    %5237 = vmatmul.mubr.f32.gmra.mrb[0].mxu0 %v5113
    %v5238 = vpop.f32.mrb[0].mxu0
    %v5239 = vadd.f32 %v5092, %v5238
    %v5240 = vpop.f32.mrb[0].mxu0
    %5241 = vmatprep.mubr.f32.mxu0 0.0
    %5242 = vmatmul.mubr.f32.gmra.mrb[0].mxu0 %v5116
    %v5243 = vpop.f32.mrb[0].mxu0
    %v5244 = vadd.f32 %v5092, %v5243
    %v5245 = vpop.f32.mrb[0].mxu0
    %5246 = vmatprep.mubr.f32.mxu0 0.0
    %5247 = vmatmul.mubr.f32.gmra.mrb[0].mxu0 %v5119
    %v5248 = vpop.f32.mrb[0].mxu0
    %v5249 = vadd.f32 %v5092, %v5248
    %v5250 = vpop.f32.mrb[0].mxu0
    %5251 = vmatprep.mubr.f32.mxu0 0.0
    %5252 = vmatmul.mubr.f32.gmra.mrb[0].mxu0 %v5122
    %v5253 = vpop.f32.mrb[0].mxu0
    %v5254 = vadd.f32 %v5092, %v5253
    %v5255 = vpop.f32.mrb[0].mxu0
    %5256 = vmatprep.mubr.f32.mxu0 0.0
    %5257 = vmatmul.mubr.f32.gmra.mrb[0].mxu0 %v5125
    %v5258 = vpop.f32.mrb[0].mxu0
    %v5259 = vadd.f32 %v5092, %v5258
    %v5260 = vpop.f32.mrb[0].mxu0
    %5261 = vmatprep.mubr.f32.mxu0 0.0
    %5262 = vmatmul.mubr.f32.gmra.mrb[0].mxu0 %v5128
    %v5263 = vpop.f32.mrb[0].mxu0
    %v5264 = vadd.f32 %v5092, %v5263
    %v5265 = vpop.f32.mrb[0].mxu0
    %5266 = vmatprep.mubr.f32.mxu0 0.0
    %5267 = vmatmul.mubr.f32.gmra.mrb[0].mxu0 %v5131
    %v5268 = vpop.f32.mrb[0].mxu0
    %v5269 = vadd.f32 %v5092, %v5268
    %v5270 = vpop.f32.mrb[0].mxu0
    %5271 = vmatprep.mubr.f32.mxu0 0.0
    %5272 = vmatmul.mubr.f32.gmra.mrb[0].mxu0 %v5134
    %v5273 = vpop.f32.mrb[0].mxu0
    %v5274 = vadd.f32 %v5092, %v5273
    %v5275 = vpop.f32.mrb[0].mxu0
    %5276 = vmatprep.mubr.f32.mxu0 0.0
    %5277 = vmatmul.mubr.f32.gmra.mrb[0].mxu0 %v5137
    %v5278 = vpop.f32.mrb[0].mxu0
    %v5279 = vadd.f32 %v5092, %v5278
    %v5280 = vpop.f32.mrb[0].mxu0
    %5281 = vmatprep.mubr.f32.mxu0 0.0
    %5282 = vmatmul.mubr.f32.gmra.mrb[0].mxu0 %v5140
    %v5283 = vpop.f32.mrb[0].mxu0
    %v5284 = vadd.f32 %v5092, %v5283
    %v5285 = vpop.f32.mrb[0].mxu0
    %5286 = vdwg.mxu0
    %v5287 = vadd.f32 %v4847, %v5209
    %v5288 = vadd.f32 %v4848, %v5214
    %v5289 = vadd.f32 %v4849, %v5219
    %v5290 = vadd.f32 %v4850, %v5224
    %v5291 = vadd.f32 %v4851, %v5229
    %v5292 = vadd.f32 %v4852, %v5234
    %v5293 = vadd.f32 %v4853, %v5239
    %v5294 = vadd.f32 %v4854, %v5244
    %v5295 = vadd.f32 %v4855, %v5249
    %v5296 = vadd.f32 %v4856, %v5254
    %v5297 = vadd.f32 %v4857, %v5259
    %v5298 = vadd.f32 %v4858, %v5264
    %v5299 = vadd.f32 %v4859, %v5269
    %v5300 = vadd.f32 %v4860, %v5274
    %v5301 = vadd.f32 %v4861, %v5279
    %v5302 = vadd.f32 %v4862, %v5284
    %v5303 = vld [vmem:[%s15] sm:$0x1]
    %v5304 = vld [vmem:[#allocation17] sm:$0x1]
    %v5305 = vsel %vm213, %v5287, 0.0
    %5306 = vadd.xlane.f32.xlu0 %v5305
    %v5307 = vpop.xlane.xlu0 %5306
    %v5308 = vsel %vm213, %v5288, 0.0
    %5309 = vadd.xlane.f32.xlu0 %v5308
    %v5310 = vpop.xlane.xlu0 %5309
    %v5311 = vsel %vm213, %v5289, 0.0
    %5312 = vadd.xlane.f32.xlu0 %v5311
    %v5313 = vpop.xlane.xlu0 %5312
    %v5314 = vsel %vm213, %v5290, 0.0
    %5315 = vadd.xlane.f32.xlu0 %v5314
    %v5316 = vpop.xlane.xlu0 %5315
    %v5317 = vsel %vm213, %v5291, 0.0
    %5318 = vadd.xlane.f32.xlu0 %v5317
    %v5319 = vpop.xlane.xlu0 %5318
    %v5320 = vsel %vm213, %v5292, 0.0
    %5321 = vadd.xlane.f32.xlu0 %v5320
    %v5322 = vpop.xlane.xlu0 %5321
    %v5323 = vsel %vm213, %v5293, 0.0
    %5324 = vadd.xlane.f32.xlu0 %v5323
    %v5325 = vpop.xlane.xlu0 %5324
    %v5326 = vsel %vm213, %v5294, 0.0
    %5327 = vadd.xlane.f32.xlu0 %v5326
    %v5328 = vpop.xlane.xlu0 %5327
    %v5329 = vsel %vm213, %v5295, 0.0
    %5330 = vadd.xlane.f32.xlu0 %v5329
    %v5331 = vpop.xlane.xlu0 %5330
    %v5332 = vsel %vm213, %v5296, 0.0
    %5333 = vadd.xlane.f32.xlu0 %v5332
    %v5334 = vpop.xlane.xlu0 %5333
    %v5335 = vsel %vm213, %v5297, 0.0
    %5336 = vadd.xlane.f32.xlu0 %v5335
    %v5337 = vpop.xlane.xlu0 %5336
    %v5338 = vsel %vm213, %v5298, 0.0
    %5339 = vadd.xlane.f32.xlu0 %v5338
    %v5340 = vpop.xlane.xlu0 %5339
    %v5341 = vsel %vm213, %v5299, 0.0
    %5342 = vadd.xlane.f32.xlu0 %v5341
    %v5343 = vpop.xlane.xlu0 %5342
    %v5344 = vsel %vm213, %v5300, 0.0
    %5345 = vadd.xlane.f32.xlu0 %v5344
    %v5346 = vpop.xlane.xlu0 %5345
    %v5347 = vsel %vm213, %v5301, 0.0
    %5348 = vadd.xlane.f32.xlu0 %v5347
    %v5349 = vpop.xlane.xlu0 %5348
    %v5350 = vsel %vm213, %v5302, 0.0
    %5351 = vadd.xlane.f32.xlu0 %v5350
    %v5352 = vpop.xlane.xlu0 %5351
    %v5353 = vmul.f32 %v5307, %v4658
    %v5354 = vmul.f32 %v5310, %v4658
    %v5355 = vmul.f32 %v5313, %v4658
    %v5356 = vmul.f32 %v5316, %v4658
    %v5357 = vmul.f32 %v5319, %v4658
    %v5358 = vmul.f32 %v5322, %v4658
    %v5359 = vmul.f32 %v5325, %v4658
    %v5360 = vmul.f32 %v5328, %v4658
    %v5361 = vmul.f32 %v5331, %v4658
    %v5362 = vmul.f32 %v5334, %v4658
    %v5363 = vmul.f32 %v5337, %v4658
    %v5364 = vmul.f32 %v5340, %v4658
    %v5365 = vmul.f32 %v5343, %v4658
    %v5366 = vmul.f32 %v5346, %v4658
    %v5367 = vmul.f32 %v5349, %v4658
    %v5368 = vmul.f32 %v5352, %v4658
    %v5369 = vsub.f32 %v5287, %v5353
    %v5370 = vsub.f32 %v5288, %v5354
    %v5371 = vsub.f32 %v5289, %v5355
    %v5372 = vsub.f32 %v5290, %v5356
    %v5373 = vsub.f32 %v5291, %v5357
    %v5374 = vsub.f32 %v5292, %v5358
    %v5375 = vsub.f32 %v5293, %v5359
    %v5376 = vsub.f32 %v5294, %v5360
    %v5377 = vsub.f32 %v5295, %v5361
    %v5378 = vsub.f32 %v5296, %v5362
    %v5379 = vsub.f32 %v5297, %v5363
    %v5380 = vsub.f32 %v5298, %v5364
    %v5381 = vsub.f32 %v5299, %v5365
    %v5382 = vsub.f32 %v5300, %v5366
    %v5383 = vsub.f32 %v5301, %v5367
    %v5384 = vsub.f32 %v5302, %v5368
    %v5385 = vmul.f32 %v5369, %v5369
    %v5386 = vmul.f32 %v5370, %v5370
    %v5387 = vmul.f32 %v5371, %v5371
    %v5388 = vmul.f32 %v5372, %v5372
    %v5389 = vmul.f32 %v5373, %v5373
    %v5390 = vmul.f32 %v5374, %v5374
    %v5391 = vmul.f32 %v5375, %v5375
    %v5392 = vmul.f32 %v5376, %v5376
    %v5393 = vmul.f32 %v5377, %v5377
    %v5394 = vmul.f32 %v5378, %v5378
    %v5395 = vmul.f32 %v5379, %v5379
    %v5396 = vmul.f32 %v5380, %v5380
    %v5397 = vmul.f32 %v5381, %v5381
    %v5398 = vmul.f32 %v5382, %v5382
    %v5399 = vmul.f32 %v5383, %v5383
    %v5400 = vmul.f32 %v5384, %v5384
    %v5401 = vsel %vm213, %v5385, 0.0
    %5402 = vadd.xlane.f32.xlu0 %v5401
    %v5403 = vpop.xlane.xlu0 %5402
    %v5404 = vsel %vm213, %v5386, 0.0
    %5405 = vadd.xlane.f32.xlu0 %v5404
    %v5406 = vpop.xlane.xlu0 %5405
    %v5407 = vsel %vm213, %v5387, 0.0
    %5408 = vadd.xlane.f32.xlu0 %v5407
    %v5409 = vpop.xlane.xlu0 %5408
    %v5410 = vsel %vm213, %v5388, 0.0
    %5411 = vadd.xlane.f32.xlu0 %v5410
    %v5412 = vpop.xlane.xlu0 %5411
    %v5413 = vsel %vm213, %v5389, 0.0
    %5414 = vadd.xlane.f32.xlu0 %v5413
    %v5415 = vpop.xlane.xlu0 %5414
    %v5416 = vsel %vm213, %v5390, 0.0
    %5417 = vadd.xlane.f32.xlu0 %v5416
    %v5418 = vpop.xlane.xlu0 %5417
    %v5419 = vsel %vm213, %v5391, 0.0
    %5420 = vadd.xlane.f32.xlu0 %v5419
    %v5421 = vpop.xlane.xlu0 %5420
    %v5422 = vsel %vm213, %v5392, 0.0
    %5423 = vadd.xlane.f32.xlu0 %v5422
    %v5424 = vpop.xlane.xlu0 %5423
    %v5425 = vsel %vm213, %v5393, 0.0
    %5426 = vadd.xlane.f32.xlu0 %v5425
    %v5427 = vpop.xlane.xlu0 %5426
    %v5428 = vsel %vm213, %v5394, 0.0
    %5429 = vadd.xlane.f32.xlu0 %v5428
    %v5430 = vpop.xlane.xlu0 %5429
    %v5431 = vsel %vm213, %v5395, 0.0
    %5432 = vadd.xlane.f32.xlu0 %v5431
    %v5433 = vpop.xlane.xlu0 %5432
    %v5434 = vsel %vm213, %v5396, 0.0
    %5435 = vadd.xlane.f32.xlu0 %v5434
    %v5436 = vpop.xlane.xlu0 %5435
    %v5437 = vsel %vm213, %v5397, 0.0
    %5438 = vadd.xlane.f32.xlu0 %v5437
    %v5439 = vpop.xlane.xlu0 %5438
    %v5440 = vsel %vm213, %v5398, 0.0
    %5441 = vadd.xlane.f32.xlu0 %v5440
    %v5442 = vpop.xlane.xlu0 %5441
    %v5443 = vsel %vm213, %v5399, 0.0
    %5444 = vadd.xlane.f32.xlu0 %v5443
    %v5445 = vpop.xlane.xlu0 %5444
    %v5446 = vsel %vm213, %v5400, 0.0
    %5447 = vadd.xlane.f32.xlu0 %v5446
    %v5448 = vpop.xlane.xlu0 %5447
    %v5449 = vmul.f32 %v5403, %v4658
    %v5450 = vmul.f32 %v5406, %v4658
    %v5451 = vmul.f32 %v5409, %v4658
    %v5452 = vmul.f32 %v5412, %v4658
    %v5453 = vmul.f32 %v5415, %v4658
    %v5454 = vmul.f32 %v5418, %v4658
    %v5455 = vmul.f32 %v5421, %v4658
    %v5456 = vmul.f32 %v5424, %v4658
    %v5457 = vmul.f32 %v5427, %v4658
    %v5458 = vmul.f32 %v5430, %v4658
    %v5459 = vmul.f32 %v5433, %v4658
    %v5460 = vmul.f32 %v5436, %v4658
    %v5461 = vmul.f32 %v5439, %v4658
    %v5462 = vmul.f32 %v5442, %v4658
    %v5463 = vmul.f32 %v5445, %v4658
    %v5464 = vmul.f32 %v5448, %v4658
    %v5465 = vadd.f32 %v5449, 1e-05
    %v5466 = vadd.f32 %v5450, 1e-05
    %v5467 = vadd.f32 %v5451, 1e-05
    %v5468 = vadd.f32 %v5452, 1e-05
    %v5469 = vadd.f32 %v5453, 1e-05
    %v5470 = vadd.f32 %v5454, 1e-05
    %v5471 = vadd.f32 %v5455, 1e-05
    %v5472 = vadd.f32 %v5456, 1e-05
    %v5473 = vadd.f32 %v5457, 1e-05
    %v5474 = vadd.f32 %v5458, 1e-05
    %v5475 = vadd.f32 %v5459, 1e-05
    %v5476 = vadd.f32 %v5460, 1e-05
    %v5477 = vadd.f32 %v5461, 1e-05
    %v5478 = vadd.f32 %v5462, 1e-05
    %v5479 = vadd.f32 %v5463, 1e-05
    %v5480 = vadd.f32 %v5464, 1e-05
    %v5481 = vrsqrt.pop %v5465
    %v5482 = vrsqrt.pop %v5466
    %v5483 = vrsqrt.pop %v5467
    %v5484 = vrsqrt.pop %v5468
    %v5485 = vrsqrt.pop %v5469
    %v5486 = vrsqrt.pop %v5470
    %v5487 = vrsqrt.pop %v5471
    %v5488 = vrsqrt.pop %v5472
    %v5489 = vrsqrt.pop %v5473
    %v5490 = vrsqrt.pop %v5474
    %v5491 = vrsqrt.pop %v5475
    %v5492 = vrsqrt.pop %v5476
    %v5493 = vrsqrt.pop %v5477
    %v5494 = vrsqrt.pop %v5478
    %v5495 = vrsqrt.pop %v5479
    %v5496 = vrsqrt.pop %v5480
    %v5497 = vmul.f32 %v5369, %v5481
    %v5498 = vmul.f32 %v5370, %v5482
    %v5499 = vmul.f32 %v5371, %v5483
    %v5500 = vmul.f32 %v5372, %v5484
    %v5501 = vmul.f32 %v5373, %v5485
    %v5502 = vmul.f32 %v5374, %v5486
    %v5503 = vmul.f32 %v5375, %v5487
    %v5504 = vmul.f32 %v5376, %v5488
    %v5505 = vmul.f32 %v5377, %v5489
    %v5506 = vmul.f32 %v5378, %v5490
    %v5507 = vmul.f32 %v5379, %v5491
    %v5508 = vmul.f32 %v5380, %v5492
    %v5509 = vmul.f32 %v5381, %v5493
    %v5510 = vmul.f32 %v5382, %v5494
    %v5511 = vmul.f32 %v5383, %v5495
    %v5512 = vmul.f32 %v5384, %v5496
    %v5514 = vlaneseq
    %v5515 = vshrl.u32 %v5514, 7
    %v5516 = vsub.s32 0, %v5515
    %v5517 = vrot.slane %v5303, %v5516
    %v5519 = vmul.f32 %v5497, %v5517
    %v5520 = vmul.f32 %v5498, %v5517
    %v5521 = vmul.f32 %v5499, %v5517
    %v5522 = vmul.f32 %v5500, %v5517
    %v5523 = vmul.f32 %v5501, %v5517
    %v5524 = vmul.f32 %v5502, %v5517
    %v5525 = vmul.f32 %v5503, %v5517
    %v5526 = vmul.f32 %v5504, %v5517
    %v5527 = vmul.f32 %v5505, %v5517
    %v5528 = vmul.f32 %v5506, %v5517
    %v5529 = vmul.f32 %v5507, %v5517
    %v5530 = vmul.f32 %v5508, %v5517
    %v5531 = vmul.f32 %v5509, %v5517
    %v5532 = vmul.f32 %v5510, %v5517
    %v5533 = vmul.f32 %v5511, %v5517
    %v5534 = vmul.f32 %v5512, %v5517
    %v5536 = vlaneseq
    %v5537 = vshrl.u32 %v5536, 7
    %v5538 = vsub.s32 0, %v5537
    %v5539 = vrot.slane %v5304, %v5538
    %v5541 = vadd.f32 %v5519, %v5539
    %v5542 = vadd.f32 %v5520, %v5539
    %v5543 = vadd.f32 %v5521, %v5539
    %v5544 = vadd.f32 %v5522, %v5539
    %v5545 = vadd.f32 %v5523, %v5539
    %v5546 = vadd.f32 %v5524, %v5539
    %v5547 = vadd.f32 %v5525, %v5539
    %v5548 = vadd.f32 %v5526, %v5539
    %v5549 = vadd.f32 %v5527, %v5539
    %v5550 = vadd.f32 %v5528, %v5539
    %v5551 = vadd.f32 %v5529, %v5539
    %v5552 = vadd.f32 %v5530, %v5539
    %v5553 = vadd.f32 %v5531, %v5539
    %v5554 = vadd.f32 %v5532, %v5539
    %v5555 = vadd.f32 %v5533, %v5539
    %v5556 = vadd.f32 %v5534, %v5539
    %s5557 = scalar_lea.vmem %s5, 32
    %v5558 = vld [vmem:[%s5557] sm:$0xff]
    %v5559 = vld [vmem:[%s5557 + $0x8] sm:$0xff]
    %v5560 = vld [vmem:[%s5557 + $0x10] sm:$0xff]
    %v5561 = vld [vmem:[%s5557 + $0x18] sm:$0xff]
    %s5562 = scalar_lea.vmem %s6, 1
    %v5563 = vld [vmem:[%s5562] sm:$0x1]
    %v5565 = vlaneseq
    %v5566 = vshrl.u32 %v5565, 7
    %v5567 = vsub.s32 0, %v5566
    %v5568 = vrot.slane %v5563, %v5567
    %v5571 = vsel %vm213, %v5541, 0
    %v5574 = vsel %vm213, %v5542, 0
    %v5577 = vsel %vm213, %v5543, 0
    %v5580 = vsel %vm213, %v5544, 0
    %v5583 = vsel %vm213, %v5545, 0
    %v5586 = vsel %vm213, %v5546, 0
    %v5589 = vsel %vm213, %v5547, 0
    %v5592 = vsel %vm213, %v5548, 0
    %v5595 = vsel %vm213, %v5549, 0
    %v5598 = vsel %vm213, %v5550, 0
    %v5601 = vsel %vm213, %v5551, 0
    %v5604 = vsel %vm213, %v5552, 0
    %v5607 = vsel %vm213, %v5553, 0
    %v5610 = vsel %vm213, %v5554, 0
    %v5613 = vsel %vm213, %v5555, 0
    %v5616 = vsel %vm213, %v5556, 0
    %5618 = vmatprep.subr.mxu0 0.0
    %5619 = vmatpush1.msra.mxu0 %v5558
    %5620 = vmatprep.subr.mxu0 0.0
    %5621 = vmatpush1.msra.mxu0 %v5559
    %5622 = vmatprep.subr.mxu0 0.0
    %5623 = vmatpush1.msra.mxu0 %v5560
    %5624 = vmatprep.subr.mxu0 0.0
    %5625 = vmatpush1.msra.mxu0 %v5561
    %5626 = vmatprep.subr.mxu0 0.0
    %5627 = vmatpush1.msra.mxu0 0.0
    %5628 = vmatprep.subr.mxu0 0.0
    %5629 = vmatpush1.msra.mxu0 0.0
    %5630 = vmatprep.subr.mxu0 0.0
    %5631 = vmatpush1.msra.mxu0 0.0
    %5632 = vmatprep.subr.mxu0 0.0
    %5633 = vmatpush1.msra.mxu0 0.0
    %5634 = vmatprep.subr.mxu0 0.0
    %5635 = vmatpush1.msra.mxu0 0.0
    %5636 = vmatprep.subr.mxu0 0.0
    %5637 = vmatpush1.msra.mxu0 0.0
    %5638 = vmatprep.subr.mxu0 0.0
    %5639 = vmatpush1.msra.mxu0 0.0
    %5640 = vmatprep.subr.mxu0 0.0
    %5641 = vmatpush1.msra.mxu0 0.0
    %5642 = vmatprep.subr.mxu0 0.0
    %5643 = vmatpush1.msra.mxu0 0.0
    %5644 = vmatprep.subr.mxu0 0.0
    %5645 = vmatpush1.msra.mxu0 0.0
    %5646 = vmatprep.subr.mxu0 0.0
    %5647 = vmatpush1.msra.mxu0 0.0
    %5648 = vmatprep.subr.mxu0 0.0
    %5649 = vmatpush1.msra.mxu0 0.0
    %5650 = vmatprep.subr.mxu0 0.0
    %5651 = vmatpush1.msra.mxu0 0.0
    %5652 = vmatprep.subr.mxu0 0.0
    %5653 = vmatpush1.msra.mxu0 0.0
    %5654 = vmatprep.subr.mxu0 0.0
    %5655 = vmatpush1.msra.mxu0 0.0
    %5656 = vmatprep.subr.mxu0 0.0
    %5657 = vmatpush1.msra.mxu0 0.0
    %5658 = vmatprep.subr.mxu0 0.0
    %5659 = vmatpush1.msra.mxu0 0.0
    %5660 = vmatprep.subr.mxu0 0.0
    %5661 = vmatpush1.msra.mxu0 0.0
    %5662 = vmatprep.subr.mxu0 0.0
    %5663 = vmatpush1.msra.mxu0 0.0
    %5664 = vmatprep.subr.mxu0 0.0
    %5665 = vmatpush1.msra.mxu0 0.0
    %5666 = vmatprep.subr.mxu0 0.0
    %5667 = vmatpush1.msra.mxu0 0.0
    %5668 = vmatprep.subr.mxu0 0.0
    %5669 = vmatpush1.msra.mxu0 0.0
    %5670 = vmatprep.subr.mxu0 0.0
    %5671 = vmatpush1.msra.mxu0 0.0
    %5672 = vmatprep.subr.mxu0 0.0
    %5673 = vmatpush1.msra.mxu0 0.0
    %5674 = vmatprep.subr.mxu0 0.0
    %5675 = vmatpush1.msra.mxu0 0.0
    %5676 = vmatprep.subr.mxu0 0.0
    %5677 = vmatpush1.msra.mxu0 0.0
    %5678 = vmatprep.subr.mxu0 0.0
    %5679 = vmatpush1.msra.mxu0 0.0
    %5680 = vmatprep.subr.mxu0 0.0
    %5681 = vmatpush1.msra.mxu0 0.0
    %5682 = vmatprep.mubr.f32.mxu0 0.0
    %5683 = vmatmul.mubr.f32.gmra.mrb[0].mxu0 %v5571
    %v5684 = vpop.f32.mrb[0].mxu0
    %v5685 = vadd.f32 %v5568, %v5684
    %v5686 = vpop.f32.mrb[0].mxu0
    %5687 = vmatprep.mubr.f32.mxu0 0.0
    %5688 = vmatmul.mubr.f32.gmra.mrb[0].mxu0 %v5574
    %v5689 = vpop.f32.mrb[0].mxu0
    %v5690 = vadd.f32 %v5568, %v5689
    %v5691 = vpop.f32.mrb[0].mxu0
    %5692 = vmatprep.mubr.f32.mxu0 0.0
    %5693 = vmatmul.mubr.f32.gmra.mrb[0].mxu0 %v5577
    %v5694 = vpop.f32.mrb[0].mxu0
    %v5695 = vadd.f32 %v5568, %v5694
    %v5696 = vpop.f32.mrb[0].mxu0
    %5697 = vmatprep.mubr.f32.mxu0 0.0
    %5698 = vmatmul.mubr.f32.gmra.mrb[0].mxu0 %v5580
    %v5699 = vpop.f32.mrb[0].mxu0
    %v5700 = vadd.f32 %v5568, %v5699
    %v5701 = vpop.f32.mrb[0].mxu0
    %5702 = vmatprep.mubr.f32.mxu0 0.0
    %5703 = vmatmul.mubr.f32.gmra.mrb[0].mxu0 %v5583
    %v5704 = vpop.f32.mrb[0].mxu0
    %v5705 = vadd.f32 %v5568, %v5704
    %v5706 = vpop.f32.mrb[0].mxu0
    %5707 = vmatprep.mubr.f32.mxu0 0.0
    %5708 = vmatmul.mubr.f32.gmra.mrb[0].mxu0 %v5586
    %v5709 = vpop.f32.mrb[0].mxu0
    %v5710 = vadd.f32 %v5568, %v5709
    %v5711 = vpop.f32.mrb[0].mxu0
    %5712 = vmatprep.mubr.f32.mxu0 0.0
    %5713 = vmatmul.mubr.f32.gmra.mrb[0].mxu0 %v5589
    %v5714 = vpop.f32.mrb[0].mxu0
    %v5715 = vadd.f32 %v5568, %v5714
    %v5716 = vpop.f32.mrb[0].mxu0
    %5717 = vmatprep.mubr.f32.mxu0 0.0
    %5718 = vmatmul.mubr.f32.gmra.mrb[0].mxu0 %v5592
    %v5719 = vpop.f32.mrb[0].mxu0
    %v5720 = vadd.f32 %v5568, %v5719
    %v5721 = vpop.f32.mrb[0].mxu0
    %5722 = vmatprep.mubr.f32.mxu0 0.0
    %5723 = vmatmul.mubr.f32.gmra.mrb[0].mxu0 %v5595
    %v5724 = vpop.f32.mrb[0].mxu0
    %v5725 = vadd.f32 %v5568, %v5724
    %v5726 = vpop.f32.mrb[0].mxu0
    %5727 = vmatprep.mubr.f32.mxu0 0.0
    %5728 = vmatmul.mubr.f32.gmra.mrb[0].mxu0 %v5598
    %v5729 = vpop.f32.mrb[0].mxu0
    %v5730 = vadd.f32 %v5568, %v5729
    %v5731 = vpop.f32.mrb[0].mxu0
    %5732 = vmatprep.mubr.f32.mxu0 0.0
    %5733 = vmatmul.mubr.f32.gmra.mrb[0].mxu0 %v5601
    %v5734 = vpop.f32.mrb[0].mxu0
    %v5735 = vadd.f32 %v5568, %v5734
    %v5736 = vpop.f32.mrb[0].mxu0
    %5737 = vmatprep.mubr.f32.mxu0 0.0
    %5738 = vmatmul.mubr.f32.gmra.mrb[0].mxu0 %v5604
    %v5739 = vpop.f32.mrb[0].mxu0
    %v5740 = vadd.f32 %v5568, %v5739
    %v5741 = vpop.f32.mrb[0].mxu0
    %5742 = vmatprep.mubr.f32.mxu0 0.0
    %5743 = vmatmul.mubr.f32.gmra.mrb[0].mxu0 %v5607
    %v5744 = vpop.f32.mrb[0].mxu0
    %v5745 = vadd.f32 %v5568, %v5744
    %v5746 = vpop.f32.mrb[0].mxu0
    %5747 = vmatprep.mubr.f32.mxu0 0.0
    %5748 = vmatmul.mubr.f32.gmra.mrb[0].mxu0 %v5610
    %v5749 = vpop.f32.mrb[0].mxu0
    %v5750 = vadd.f32 %v5568, %v5749
    %v5751 = vpop.f32.mrb[0].mxu0
    %5752 = vmatprep.mubr.f32.mxu0 0.0
    %5753 = vmatmul.mubr.f32.gmra.mrb[0].mxu0 %v5613
    %v5754 = vpop.f32.mrb[0].mxu0
    %v5755 = vadd.f32 %v5568, %v5754
    %v5756 = vpop.f32.mrb[0].mxu0
    %5757 = vmatprep.mubr.f32.mxu0 0.0
    %5758 = vmatmul.mubr.f32.gmra.mrb[0].mxu0 %v5616
    %v5759 = vpop.f32.mrb[0].mxu0
    %v5760 = vadd.f32 %v5568, %v5759
    %v5761 = vpop.f32.mrb[0].mxu0
    %5762 = vdwg.mxu0
    %5771 = vrot.lane.b32.xlu0 %v5685, 96
    %v5772 = vpop.permute.xlu0 %5771
    %5773 = vrot.lane.b32.xlu0 %v5690, 96
    %v5774 = vpop.permute.xlu0 %5773
    %5775 = vrot.lane.b32.xlu0 %v5695, 96
    %v5776 = vpop.permute.xlu0 %5775
    %5777 = vrot.lane.b32.xlu0 %v5700, 96
    %v5778 = vpop.permute.xlu0 %5777
    %5779 = vrot.lane.b32.xlu0 %v5705, 96
    %v5780 = vpop.permute.xlu0 %5779
    %5781 = vrot.lane.b32.xlu0 %v5710, 96
    %v5782 = vpop.permute.xlu0 %5781
    %5783 = vrot.lane.b32.xlu0 %v5715, 96
    %v5784 = vpop.permute.xlu0 %5783
    %5785 = vrot.lane.b32.xlu0 %v5720, 96
    %v5786 = vpop.permute.xlu0 %5785
    %v5787 = vsel %vm871, %v5685, 0
    %v5789 = vsel %vm871, %v5690, 0
    %v5791 = vsel %vm871, %v5695, 0
    %v5793 = vsel %vm871, %v5700, 0
    %v5795 = vsel %vm871, %v5705, 0
    %v5797 = vsel %vm871, %v5710, 0
    %v5799 = vsel %vm871, %v5715, 0
    %v5801 = vsel %vm871, %v5720, 0
    %v5803 = vsel %vm871, %v5772, 0
    %v5805 = vsel %vm871, %v5774, 0
    %v5807 = vsel %vm871, %v5776, 0
    %v5809 = vsel %vm871, %v5778, 0
    %v5811 = vsel %vm871, %v5780, 0
    %v5813 = vsel %vm871, %v5782, 0
    %v5815 = vsel %vm871, %v5784, 0
    %v5817 = vsel %vm871, %v5786, 0
    %5819 = vmatprep.subr.mxu0 0.0
    %5820 = vmatpush1.xpose.msra.mxu0 %v5803
    %5821 = vmatprep.subr.mxu0 0.0
    %5822 = vmatpush1.xpose.msra.mxu0 %v5805
    %5823 = vmatprep.subr.mxu0 0.0
    %5824 = vmatpush1.xpose.msra.mxu0 %v5807
    %5825 = vmatprep.subr.mxu0 0.0
    %5826 = vmatpush1.xpose.msra.mxu0 %v5809
    %5827 = vmatprep.subr.mxu0 0.0
    %5828 = vmatpush1.xpose.msra.mxu0 %v5811
    %5829 = vmatprep.subr.mxu0 0.0
    %5830 = vmatpush1.xpose.msra.mxu0 %v5813
    %5831 = vmatprep.subr.mxu0 0.0
    %5832 = vmatpush1.xpose.msra.mxu0 %v5815
    %5833 = vmatprep.subr.mxu0 0.0
    %5834 = vmatpush1.xpose.msra.mxu0 %v5817
    %5835 = vmatprep.subr.mxu0 0.0
    %5836 = vmatpush1.xpose.msra.mxu0 0.0
    %5837 = vmatprep.subr.mxu0 0.0
    %5838 = vmatpush1.xpose.msra.mxu0 0.0
    %5839 = vmatprep.subr.mxu0 0.0
    %5840 = vmatpush1.xpose.msra.mxu0 0.0
    %5841 = vmatprep.subr.mxu0 0.0
    %5842 = vmatpush1.xpose.msra.mxu0 0.0
    %5843 = vmatprep.subr.mxu0 0.0
    %5844 = vmatpush1.xpose.msra.mxu0 0.0
    %5845 = vmatprep.subr.mxu0 0.0
    %5846 = vmatpush1.xpose.msra.mxu0 0.0
    %5847 = vmatprep.subr.mxu0 0.0
    %5848 = vmatpush1.xpose.msra.mxu0 0.0
    %5849 = vmatprep.subr.mxu0 0.0
    %5850 = vmatpush1.xpose.msra.mxu0 0.0
    %5851 = vmatprep.subr.mxu0 0.0
    %5852 = vmatpush1.xpose.msra.mxu0 0.0
    %5853 = vmatprep.subr.mxu0 0.0
    %5854 = vmatpush1.xpose.msra.mxu0 0.0
    %5855 = vmatprep.subr.mxu0 0.0
    %5856 = vmatpush1.xpose.msra.mxu0 0.0
    %5857 = vmatprep.subr.mxu0 0.0
    %5858 = vmatpush1.xpose.msra.mxu0 0.0
    %5859 = vmatprep.subr.mxu0 0.0
    %5860 = vmatpush1.xpose.msra.mxu0 0.0
    %5861 = vmatprep.subr.mxu0 0.0
    %5862 = vmatpush1.xpose.msra.mxu0 0.0
    %5863 = vmatprep.subr.mxu0 0.0
    %5864 = vmatpush1.xpose.msra.mxu0 0.0
    %5865 = vmatprep.subr.mxu0 0.0
    %5866 = vmatpush1.xpose.msra.mxu0 0.0
    %5867 = vmatprep.subr.mxu0 0.0
    %5868 = vmatpush1.xpose.msra.mxu0 0.0
    %5869 = vmatprep.subr.mxu0 0.0
    %5870 = vmatpush1.xpose.msra.mxu0 0.0
    %5871 = vmatprep.subr.mxu0 0.0
    %5872 = vmatpush1.xpose.msra.mxu0 0.0
    %5873 = vmatprep.subr.mxu0 0.0
    %5874 = vmatpush1.xpose.msra.mxu0 0.0
    %5875 = vmatprep.subr.mxu0 0.0
    %5876 = vmatpush1.xpose.msra.mxu0 0.0
    %5877 = vmatprep.subr.mxu0 0.0
    %5878 = vmatpush1.xpose.msra.mxu0 0.0
    %5879 = vmatprep.subr.mxu0 0.0
    %5880 = vmatpush1.xpose.msra.mxu0 0.0
    %5881 = vmatprep.subr.mxu0 0.0
    %5882 = vmatpush1.xpose.msra.mxu0 0.0
    %5883 = vmatprep.mubr.f32.mxu0 0.0
    %5884 = vmatmul.mubr.f32.gmra.mrb[0].mxu0 %v5787
    %v5885 = vpop.f32.mrb[0].mxu0
    %v5886 = vadd.f32 0.0, %v5885
    %v5887 = vpop.f32.mrb[0].mxu0
    %5888 = vmatprep.mubr.f32.mxu0 0.0
    %5889 = vmatmul.mubr.f32.gmra.mrb[0].mxu0 %v5789
    %v5890 = vpop.f32.mrb[0].mxu0
    %v5891 = vadd.f32 0.0, %v5890
    %v5892 = vpop.f32.mrb[0].mxu0
    %5893 = vmatprep.mubr.f32.mxu0 0.0
    %5894 = vmatmul.mubr.f32.gmra.mrb[0].mxu0 %v5791
    %v5895 = vpop.f32.mrb[0].mxu0
    %v5896 = vadd.f32 0.0, %v5895
    %v5897 = vpop.f32.mrb[0].mxu0
    %5898 = vmatprep.mubr.f32.mxu0 0.0
    %5899 = vmatmul.mubr.f32.gmra.mrb[0].mxu0 %v5793
    %v5900 = vpop.f32.mrb[0].mxu0
    %v5901 = vadd.f32 0.0, %v5900
    %v5902 = vpop.f32.mrb[0].mxu0
    %5903 = vmatprep.mubr.f32.mxu0 0.0
    %5904 = vmatmul.mubr.f32.gmra.mrb[0].mxu0 %v5795
    %v5905 = vpop.f32.mrb[0].mxu0
    %v5906 = vadd.f32 0.0, %v5905
    %v5907 = vpop.f32.mrb[0].mxu0
    %5908 = vmatprep.mubr.f32.mxu0 0.0
    %5909 = vmatmul.mubr.f32.gmra.mrb[0].mxu0 %v5797
    %v5910 = vpop.f32.mrb[0].mxu0
    %v5911 = vadd.f32 0.0, %v5910
    %v5912 = vpop.f32.mrb[0].mxu0
    %5913 = vmatprep.mubr.f32.mxu0 0.0
    %5914 = vmatmul.mubr.f32.gmra.mrb[0].mxu0 %v5799
    %v5915 = vpop.f32.mrb[0].mxu0
    %v5916 = vadd.f32 0.0, %v5915
    %v5917 = vpop.f32.mrb[0].mxu0
    %5918 = vmatprep.mubr.f32.mxu0 0.0
    %5919 = vmatmul.mubr.f32.gmra.mrb[0].mxu0 %v5801
    %v5920 = vpop.f32.mrb[0].mxu0
    %v5921 = vadd.f32 0.0, %v5920
    %v5922 = vpop.f32.mrb[0].mxu0
    %5923 = vdwg.mxu0
    %v5924 = vsel %vm1009, %v5886, -inf
    %5925 = vmax.xlane.f32.xlu0 %v5924
    %v5926 = vpop.xlane.xlu0 %5925
    %v5927 = vsel %vm1009, %v5891, -inf
    %5928 = vmax.xlane.f32.xlu0 %v5927
    %v5929 = vpop.xlane.xlu0 %5928
    %v5930 = vsel %vm1009, %v5896, -inf
    %5931 = vmax.xlane.f32.xlu0 %v5930
    %v5932 = vpop.xlane.xlu0 %5931
    %v5933 = vsel %vm1009, %v5901, -inf
    %5934 = vmax.xlane.f32.xlu0 %v5933
    %v5935 = vpop.xlane.xlu0 %5934
    %v5936 = vsel %vm1009, %v5906, -inf
    %5937 = vmax.xlane.f32.xlu0 %v5936
    %v5938 = vpop.xlane.xlu0 %5937
    %v5939 = vsel %vm1009, %v5911, -inf
    %5940 = vmax.xlane.f32.xlu0 %v5939
    %v5941 = vpop.xlane.xlu0 %5940
    %v5942 = vsel %vm1009, %v5916, -inf
    %5943 = vmax.xlane.f32.xlu0 %v5942
    %v5944 = vpop.xlane.xlu0 %5943
    %v5945 = vsel %vm1009, %v5921, -inf
    %5946 = vmax.xlane.f32.xlu0 %v5945
    %v5947 = vpop.xlane.xlu0 %5946
    %v5948 = vsub.f32 %v5886, %v5926
    %v5949 = vsub.f32 %v5891, %v5929
    %v5950 = vsub.f32 %v5896, %v5932
    %v5951 = vsub.f32 %v5901, %v5935
    %v5952 = vsub.f32 %v5906, %v5938
    %v5953 = vsub.f32 %v5911, %v5941
    %v5954 = vsub.f32 %v5916, %v5944
    %v5955 = vsub.f32 %v5921, %v5947
    %v5956 = vmul.f32 %v5948, 1.442695
    %v5957 = vpow.pop %v5956
    %v5958 = vmul.f32 %v5949, 1.442695
    %v5959 = vpow.pop %v5958
    %v5960 = vmul.f32 %v5950, 1.442695
    %v5961 = vpow.pop %v5960
    %v5962 = vmul.f32 %v5951, 1.442695
    %v5963 = vpow.pop %v5962
    %v5964 = vmul.f32 %v5952, 1.442695
    %v5965 = vpow.pop %v5964
    %v5966 = vmul.f32 %v5953, 1.442695
    %v5967 = vpow.pop %v5966
    %v5968 = vmul.f32 %v5954, 1.442695
    %v5969 = vpow.pop %v5968
    %v5970 = vmul.f32 %v5955, 1.442695
    %v5971 = vpow.pop %v5970
    %v5972 = vsel %vm1009, %v5957, 0.0
    %5973 = vadd.xlane.f32.xlu0 %v5972
    %v5974 = vpop.xlane.xlu0 %5973
    %v5975 = vsel %vm1009, %v5959, 0.0
    %5976 = vadd.xlane.f32.xlu0 %v5975
    %v5977 = vpop.xlane.xlu0 %5976
    %v5978 = vsel %vm1009, %v5961, 0.0
    %5979 = vadd.xlane.f32.xlu0 %v5978
    %v5980 = vpop.xlane.xlu0 %5979
    %v5981 = vsel %vm1009, %v5963, 0.0
    %5982 = vadd.xlane.f32.xlu0 %v5981
    %v5983 = vpop.xlane.xlu0 %5982
    %v5984 = vsel %vm1009, %v5965, 0.0
    %5985 = vadd.xlane.f32.xlu0 %v5984
    %v5986 = vpop.xlane.xlu0 %5985
    %v5987 = vsel %vm1009, %v5967, 0.0
    %5988 = vadd.xlane.f32.xlu0 %v5987
    %v5989 = vpop.xlane.xlu0 %5988
    %v5990 = vsel %vm1009, %v5969, 0.0
    %5991 = vadd.xlane.f32.xlu0 %v5990
    %v5992 = vpop.xlane.xlu0 %5991
    %v5993 = vsel %vm1009, %v5971, 0.0
    %5994 = vadd.xlane.f32.xlu0 %v5993
    %v5995 = vpop.xlane.xlu0 %5994
    %v5996 = vrcp.pop %v5974
    %v5997 = vrcp.pop %v5977
    %v5998 = vrcp.pop %v5980
    %v5999 = vrcp.pop %v5983
    %v6000 = vrcp.pop %v5986
    %v6001 = vrcp.pop %v5989
    %v6002 = vrcp.pop %v5992
    %v6003 = vrcp.pop %v5995
    %v6004 = vmul.f32 %v5957, %v5996
    %v6005 = vmul.f32 %v5959, %v5997
    %v6006 = vmul.f32 %v5961, %v5998
    %v6007 = vmul.f32 %v5963, %v5999
    %v6008 = vmul.f32 %v5965, %v6000
    %v6009 = vmul.f32 %v5967, %v6001
    %v6010 = vmul.f32 %v5969, %v6002
    %v6011 = vmul.f32 %v5971, %v6003
    %6012 = vrot.lane.b32.xlu0 %v5685, 64
    %v6013 = vpop.permute.xlu0 %6012
    %6014 = vrot.lane.b32.xlu0 %v5690, 64
    %v6015 = vpop.permute.xlu0 %6014
    %6016 = vrot.lane.b32.xlu0 %v5695, 64
    %v6017 = vpop.permute.xlu0 %6016
    %6018 = vrot.lane.b32.xlu0 %v5700, 64
    %v6019 = vpop.permute.xlu0 %6018
    %6020 = vrot.lane.b32.xlu0 %v5705, 64
    %v6021 = vpop.permute.xlu0 %6020
    %6022 = vrot.lane.b32.xlu0 %v5710, 64
    %v6023 = vpop.permute.xlu0 %6022
    %6024 = vrot.lane.b32.xlu0 %v5715, 64
    %v6025 = vpop.permute.xlu0 %6024
    %6026 = vrot.lane.b32.xlu0 %v5720, 64
    %v6027 = vpop.permute.xlu0 %6026
    %v6037 = vsel %vm1009, %v6004, 0
    %v6040 = vsel %vm1009, %v6005, 0
    %v6043 = vsel %vm1009, %v6006, 0
    %v6046 = vsel %vm1009, %v6007, 0
    %v6049 = vsel %vm1009, %v6008, 0
    %v6052 = vsel %vm1009, %v6009, 0
    %v6055 = vsel %vm1009, %v6010, 0
    %v6058 = vsel %vm1009, %v6011, 0
    %6060 = vmatprep.subr.mxu0 0.0
    %6061 = vmatpush1.msra.mxu0 %v6013
    %6062 = vmatprep.subr.mxu0 0.0
    %6063 = vmatpush1.msra.mxu0 %v6015
    %6064 = vmatprep.subr.mxu0 0.0
    %6065 = vmatpush1.msra.mxu0 %v6017
    %6066 = vmatprep.subr.mxu0 0.0
    %6067 = vmatpush1.msra.mxu0 %v6019
    %6068 = vmatprep.subr.mxu0 0.0
    %6069 = vmatpush1.msra.mxu0 %v6021
    %6070 = vmatprep.subr.mxu0 0.0
    %6071 = vmatpush1.msra.mxu0 %v6023
    %6072 = vmatprep.subr.mxu0 0.0
    %6073 = vmatpush1.msra.mxu0 %v6025
    %6074 = vmatprep.subr.mxu0 0.0
    %6075 = vmatpush1.msra.mxu0 %v6027
    %6076 = vmatprep.subr.mxu0 0.0
    %6077 = vmatpush1.msra.mxu0 0.0
    %6078 = vmatprep.subr.mxu0 0.0
    %6079 = vmatpush1.msra.mxu0 0.0
    %6080 = vmatprep.subr.mxu0 0.0
    %6081 = vmatpush1.msra.mxu0 0.0
    %6082 = vmatprep.subr.mxu0 0.0
    %6083 = vmatpush1.msra.mxu0 0.0
    %6084 = vmatprep.subr.mxu0 0.0
    %6085 = vmatpush1.msra.mxu0 0.0
    %6086 = vmatprep.subr.mxu0 0.0
    %6087 = vmatpush1.msra.mxu0 0.0
    %6088 = vmatprep.subr.mxu0 0.0
    %6089 = vmatpush1.msra.mxu0 0.0
    %6090 = vmatprep.subr.mxu0 0.0
    %6091 = vmatpush1.msra.mxu0 0.0
    %6092 = vmatprep.subr.mxu0 0.0
    %6093 = vmatpush1.msra.mxu0 0.0
    %6094 = vmatprep.subr.mxu0 0.0
    %6095 = vmatpush1.msra.mxu0 0.0
    %6096 = vmatprep.subr.mxu0 0.0
    %6097 = vmatpush1.msra.mxu0 0.0
    %6098 = vmatprep.subr.mxu0 0.0
    %6099 = vmatpush1.msra.mxu0 0.0
    %6100 = vmatprep.subr.mxu0 0.0
    %6101 = vmatpush1.msra.mxu0 0.0
    %6102 = vmatprep.subr.mxu0 0.0
    %6103 = vmatpush1.msra.mxu0 0.0
    %6104 = vmatprep.subr.mxu0 0.0
    %6105 = vmatpush1.msra.mxu0 0.0
    %6106 = vmatprep.subr.mxu0 0.0
    %6107 = vmatpush1.msra.mxu0 0.0
    %6108 = vmatprep.subr.mxu0 0.0
    %6109 = vmatpush1.msra.mxu0 0.0
    %6110 = vmatprep.subr.mxu0 0.0
    %6111 = vmatpush1.msra.mxu0 0.0
    %6112 = vmatprep.subr.mxu0 0.0
    %6113 = vmatpush1.msra.mxu0 0.0
    %6114 = vmatprep.subr.mxu0 0.0
    %6115 = vmatpush1.msra.mxu0 0.0
    %6116 = vmatprep.subr.mxu0 0.0
    %6117 = vmatpush1.msra.mxu0 0.0
    %6118 = vmatprep.subr.mxu0 0.0
    %6119 = vmatpush1.msra.mxu0 0.0
    %6120 = vmatprep.subr.mxu0 0.0
    %6121 = vmatpush1.msra.mxu0 0.0
    %6122 = vmatprep.subr.mxu0 0.0
    %6123 = vmatpush1.msra.mxu0 0.0
    %6124 = vmatprep.mubr.f32.mxu0 0.0
    %6125 = vmatmul.mubr.f32.gmra.mrb[0].mxu0 %v6037
    %v6126 = vpop.f32.mrb[0].mxu0
    %v6127 = vadd.f32 0.0, %v6126
    %v6128 = vpop.f32.mrb[0].mxu0
    %6129 = vmatprep.mubr.f32.mxu0 0.0
    %6130 = vmatmul.mubr.f32.gmra.mrb[0].mxu0 %v6040
    %v6131 = vpop.f32.mrb[0].mxu0
    %v6132 = vadd.f32 0.0, %v6131
    %v6133 = vpop.f32.mrb[0].mxu0
    %6134 = vmatprep.mubr.f32.mxu0 0.0
    %6135 = vmatmul.mubr.f32.gmra.mrb[0].mxu0 %v6043
    %v6136 = vpop.f32.mrb[0].mxu0
    %v6137 = vadd.f32 0.0, %v6136
    %v6138 = vpop.f32.mrb[0].mxu0
    %6139 = vmatprep.mubr.f32.mxu0 0.0
    %6140 = vmatmul.mubr.f32.gmra.mrb[0].mxu0 %v6046
    %v6141 = vpop.f32.mrb[0].mxu0
    %v6142 = vadd.f32 0.0, %v6141
    %v6143 = vpop.f32.mrb[0].mxu0
    %6144 = vmatprep.mubr.f32.mxu0 0.0
    %6145 = vmatmul.mubr.f32.gmra.mrb[0].mxu0 %v6049
    %v6146 = vpop.f32.mrb[0].mxu0
    %v6147 = vadd.f32 0.0, %v6146
    %v6148 = vpop.f32.mrb[0].mxu0
    %6149 = vmatprep.mubr.f32.mxu0 0.0
    %6150 = vmatmul.mubr.f32.gmra.mrb[0].mxu0 %v6052
    %v6151 = vpop.f32.mrb[0].mxu0
    %v6152 = vadd.f32 0.0, %v6151
    %v6153 = vpop.f32.mrb[0].mxu0
    %6154 = vmatprep.mubr.f32.mxu0 0.0
    %6155 = vmatmul.mubr.f32.gmra.mrb[0].mxu0 %v6055
    %v6156 = vpop.f32.mrb[0].mxu0
    %v6157 = vadd.f32 0.0, %v6156
    %v6158 = vpop.f32.mrb[0].mxu0
    %6159 = vmatprep.mubr.f32.mxu0 0.0
    %6160 = vmatmul.mubr.f32.gmra.mrb[0].mxu0 %v6058
    %v6161 = vpop.f32.mrb[0].mxu0
    %v6162 = vadd.f32 0.0, %v6161
    %v6163 = vpop.f32.mrb[0].mxu0
    %6164 = vdwg.mxu0
    %6165 = vst.msk [vmem:[#allocation2] sm:$0xff] %vm871, %v6127
    %6166 = vst.msk [vmem:[#allocation2 + $0x8] sm:$0xff] %vm871, %v6132
    %6167 = vst.msk [vmem:[#allocation2 + $0x10] sm:$0xff] %vm871, %v6137
    %6168 = vst.msk [vmem:[#allocation2 + $0x18] sm:$0xff] %vm871, %v6142
    %6169 = vst.msk [vmem:[#allocation2 + $0x20] sm:$0xff] %vm871, %v6147
    %6170 = vst.msk [vmem:[#allocation2 + $0x28] sm:$0xff] %vm871, %v6152
    %6171 = vst.msk [vmem:[#allocation2 + $0x30] sm:$0xff] %vm871, %v6157
    %6172 = vst.msk [vmem:[#allocation2 + $0x38] sm:$0xff] %vm871, %v6162
    %6173 = vrot.lane.b32.xlu0 %v5685, 120
    %v6174 = vpop.permute.xlu0 %6173
    %6175 = vrot.lane.b32.xlu0 %v5690, 120
    %v6176 = vpop.permute.xlu0 %6175
    %6177 = vrot.lane.b32.xlu0 %v5695, 120
    %v6178 = vpop.permute.xlu0 %6177
    %6179 = vrot.lane.b32.xlu0 %v5700, 120
    %v6180 = vpop.permute.xlu0 %6179
    %6181 = vrot.lane.b32.xlu0 %v5705, 120
    %v6182 = vpop.permute.xlu0 %6181
    %6183 = vrot.lane.b32.xlu0 %v5710, 120
    %v6184 = vpop.permute.xlu0 %6183
    %6185 = vrot.lane.b32.xlu0 %v5715, 120
    %v6186 = vpop.permute.xlu0 %6185
    %6187 = vrot.lane.b32.xlu0 %v5720, 120
    %v6188 = vpop.permute.xlu0 %6187
    %6189 = vrot.lane.b32.xlu0 %v5685, 88
    %v6190 = vpop.permute.xlu0 %6189
    %6191 = vrot.lane.b32.xlu0 %v5690, 88
    %v6192 = vpop.permute.xlu0 %6191
    %6193 = vrot.lane.b32.xlu0 %v5695, 88
    %v6194 = vpop.permute.xlu0 %6193
    %6195 = vrot.lane.b32.xlu0 %v5700, 88
    %v6196 = vpop.permute.xlu0 %6195
    %6197 = vrot.lane.b32.xlu0 %v5705, 88
    %v6198 = vpop.permute.xlu0 %6197
    %6199 = vrot.lane.b32.xlu0 %v5710, 88
    %v6200 = vpop.permute.xlu0 %6199
    %6201 = vrot.lane.b32.xlu0 %v5715, 88
    %v6202 = vpop.permute.xlu0 %6201
    %6203 = vrot.lane.b32.xlu0 %v5720, 88
    %v6204 = vpop.permute.xlu0 %6203
    %v6205 = vsel %vm871, %v6174, 0
    %v6207 = vsel %vm871, %v6176, 0
    %v6209 = vsel %vm871, %v6178, 0
    %v6211 = vsel %vm871, %v6180, 0
    %v6213 = vsel %vm871, %v6182, 0
    %v6215 = vsel %vm871, %v6184, 0
    %v6217 = vsel %vm871, %v6186, 0
    %v6219 = vsel %vm871, %v6188, 0
    %v6221 = vsel %vm871, %v6190, 0
    %v6223 = vsel %vm871, %v6192, 0
    %v6225 = vsel %vm871, %v6194, 0
    %v6227 = vsel %vm871, %v6196, 0
    %v6229 = vsel %vm871, %v6198, 0
    %v6231 = vsel %vm871, %v6200, 0
    %v6233 = vsel %vm871, %v6202, 0
    %v6235 = vsel %vm871, %v6204, 0
    %6237 = vmatprep.subr.mxu0 0.0
    %6238 = vmatpush1.xpose.msra.mxu0 %v6221
    %6239 = vmatprep.subr.mxu0 0.0
    %6240 = vmatpush1.xpose.msra.mxu0 %v6223
    %6241 = vmatprep.subr.mxu0 0.0
    %6242 = vmatpush1.xpose.msra.mxu0 %v6225
    %6243 = vmatprep.subr.mxu0 0.0
    %6244 = vmatpush1.xpose.msra.mxu0 %v6227
    %6245 = vmatprep.subr.mxu0 0.0
    %6246 = vmatpush1.xpose.msra.mxu0 %v6229
    %6247 = vmatprep.subr.mxu0 0.0
    %6248 = vmatpush1.xpose.msra.mxu0 %v6231
    %6249 = vmatprep.subr.mxu0 0.0
    %6250 = vmatpush1.xpose.msra.mxu0 %v6233
    %6251 = vmatprep.subr.mxu0 0.0
    %6252 = vmatpush1.xpose.msra.mxu0 %v6235
    %6253 = vmatprep.subr.mxu0 0.0
    %6254 = vmatpush1.xpose.msra.mxu0 0.0
    %6255 = vmatprep.subr.mxu0 0.0
    %6256 = vmatpush1.xpose.msra.mxu0 0.0
    %6257 = vmatprep.subr.mxu0 0.0
    %6258 = vmatpush1.xpose.msra.mxu0 0.0
    %6259 = vmatprep.subr.mxu0 0.0
    %6260 = vmatpush1.xpose.msra.mxu0 0.0
    %6261 = vmatprep.subr.mxu0 0.0
    %6262 = vmatpush1.xpose.msra.mxu0 0.0
    %6263 = vmatprep.subr.mxu0 0.0
    %6264 = vmatpush1.xpose.msra.mxu0 0.0
    %6265 = vmatprep.subr.mxu0 0.0
    %6266 = vmatpush1.xpose.msra.mxu0 0.0
    %6267 = vmatprep.subr.mxu0 0.0
    %6268 = vmatpush1.xpose.msra.mxu0 0.0
    %6269 = vmatprep.subr.mxu0 0.0
    %6270 = vmatpush1.xpose.msra.mxu0 0.0
    %6271 = vmatprep.subr.mxu0 0.0
    %6272 = vmatpush1.xpose.msra.mxu0 0.0
    %6273 = vmatprep.subr.mxu0 0.0
    %6274 = vmatpush1.xpose.msra.mxu0 0.0
    %6275 = vmatprep.subr.mxu0 0.0
    %6276 = vmatpush1.xpose.msra.mxu0 0.0
    %6277 = vmatprep.subr.mxu0 0.0
    %6278 = vmatpush1.xpose.msra.mxu0 0.0
    %6279 = vmatprep.subr.mxu0 0.0
    %6280 = vmatpush1.xpose.msra.mxu0 0.0
    %6281 = vmatprep.subr.mxu0 0.0
    %6282 = vmatpush1.xpose.msra.mxu0 0.0
    %6283 = vmatprep.subr.mxu0 0.0
    %6284 = vmatpush1.xpose.msra.mxu0 0.0
    %6285 = vmatprep.subr.mxu0 0.0
    %6286 = vmatpush1.xpose.msra.mxu0 0.0
    %6287 = vmatprep.subr.mxu0 0.0
    %6288 = vmatpush1.xpose.msra.mxu0 0.0
    %6289 = vmatprep.subr.mxu0 0.0
    %6290 = vmatpush1.xpose.msra.mxu0 0.0
    %6291 = vmatprep.subr.mxu0 0.0
    %6292 = vmatpush1.xpose.msra.mxu0 0.0
    %6293 = vmatprep.subr.mxu0 0.0
    %6294 = vmatpush1.xpose.msra.mxu0 0.0
    %6295 = vmatprep.subr.mxu0 0.0
    %6296 = vmatpush1.xpose.msra.mxu0 0.0
    %6297 = vmatprep.subr.mxu0 0.0
    %6298 = vmatpush1.xpose.msra.mxu0 0.0
    %6299 = vmatprep.subr.mxu0 0.0
    %6300 = vmatpush1.xpose.msra.mxu0 0.0
    %6301 = vmatprep.mubr.f32.mxu0 0.0
    %6302 = vmatmul.mubr.f32.gmra.mrb[0].mxu0 %v6205
    %v6303 = vpop.f32.mrb[0].mxu0
    %v6304 = vadd.f32 0.0, %v6303
    %v6305 = vpop.f32.mrb[0].mxu0
    %6306 = vmatprep.mubr.f32.mxu0 0.0
    %6307 = vmatmul.mubr.f32.gmra.mrb[0].mxu0 %v6207
    %v6308 = vpop.f32.mrb[0].mxu0
    %v6309 = vadd.f32 0.0, %v6308
    %v6310 = vpop.f32.mrb[0].mxu0
    %6311 = vmatprep.mubr.f32.mxu0 0.0
    %6312 = vmatmul.mubr.f32.gmra.mrb[0].mxu0 %v6209
    %v6313 = vpop.f32.mrb[0].mxu0
    %v6314 = vadd.f32 0.0, %v6313
    %v6315 = vpop.f32.mrb[0].mxu0
    %6316 = vmatprep.mubr.f32.mxu0 0.0
    %6317 = vmatmul.mubr.f32.gmra.mrb[0].mxu0 %v6211
    %v6318 = vpop.f32.mrb[0].mxu0
    %v6319 = vadd.f32 0.0, %v6318
    %v6320 = vpop.f32.mrb[0].mxu0
    %6321 = vmatprep.mubr.f32.mxu0 0.0
    %6322 = vmatmul.mubr.f32.gmra.mrb[0].mxu0 %v6213
    %v6323 = vpop.f32.mrb[0].mxu0
    %v6324 = vadd.f32 0.0, %v6323
    %v6325 = vpop.f32.mrb[0].mxu0
    %6326 = vmatprep.mubr.f32.mxu0 0.0
    %6327 = vmatmul.mubr.f32.gmra.mrb[0].mxu0 %v6215
    %v6328 = vpop.f32.mrb[0].mxu0
    %v6329 = vadd.f32 0.0, %v6328
    %v6330 = vpop.f32.mrb[0].mxu0
    %6331 = vmatprep.mubr.f32.mxu0 0.0
    %6332 = vmatmul.mubr.f32.gmra.mrb[0].mxu0 %v6217
    %v6333 = vpop.f32.mrb[0].mxu0
    %v6334 = vadd.f32 0.0, %v6333
    %v6335 = vpop.f32.mrb[0].mxu0
    %6336 = vmatprep.mubr.f32.mxu0 0.0
    %6337 = vmatmul.mubr.f32.gmra.mrb[0].mxu0 %v6219
    %v6338 = vpop.f32.mrb[0].mxu0
    %v6339 = vadd.f32 0.0, %v6338
    %v6340 = vpop.f32.mrb[0].mxu0
    %6341 = vdwg.mxu0
    %v6342 = vsel %vm1009, %v6304, -inf
    %6343 = vmax.xlane.f32.xlu0 %v6342
    %v6344 = vpop.xlane.xlu0 %6343
    %v6345 = vsel %vm1009, %v6309, -inf
    %6346 = vmax.xlane.f32.xlu0 %v6345
    %v6347 = vpop.xlane.xlu0 %6346
    %v6348 = vsel %vm1009, %v6314, -inf
    %6349 = vmax.xlane.f32.xlu0 %v6348
    %v6350 = vpop.xlane.xlu0 %6349
    %v6351 = vsel %vm1009, %v6319, -inf
    %6352 = vmax.xlane.f32.xlu0 %v6351
    %v6353 = vpop.xlane.xlu0 %6352
    %v6354 = vsel %vm1009, %v6324, -inf
    %6355 = vmax.xlane.f32.xlu0 %v6354
    %v6356 = vpop.xlane.xlu0 %6355
    %v6357 = vsel %vm1009, %v6329, -inf
    %6358 = vmax.xlane.f32.xlu0 %v6357
    %v6359 = vpop.xlane.xlu0 %6358
    %v6360 = vsel %vm1009, %v6334, -inf
    %6361 = vmax.xlane.f32.xlu0 %v6360
    %v6362 = vpop.xlane.xlu0 %6361
    %v6363 = vsel %vm1009, %v6339, -inf
    %6364 = vmax.xlane.f32.xlu0 %v6363
    %v6365 = vpop.xlane.xlu0 %6364
    %v6366 = vsub.f32 %v6304, %v6344
    %v6367 = vsub.f32 %v6309, %v6347
    %v6368 = vsub.f32 %v6314, %v6350
    %v6369 = vsub.f32 %v6319, %v6353
    %v6370 = vsub.f32 %v6324, %v6356
    %v6371 = vsub.f32 %v6329, %v6359
    %v6372 = vsub.f32 %v6334, %v6362
    %v6373 = vsub.f32 %v6339, %v6365
    %v6374 = vmul.f32 %v6366, 1.442695
    %v6375 = vpow.pop %v6374
    %v6376 = vmul.f32 %v6367, 1.442695
    %v6377 = vpow.pop %v6376
    %v6378 = vmul.f32 %v6368, 1.442695
    %v6379 = vpow.pop %v6378
    %v6380 = vmul.f32 %v6369, 1.442695
    %v6381 = vpow.pop %v6380
    %v6382 = vmul.f32 %v6370, 1.442695
    %v6383 = vpow.pop %v6382
    %v6384 = vmul.f32 %v6371, 1.442695
    %v6385 = vpow.pop %v6384
    %v6386 = vmul.f32 %v6372, 1.442695
    %v6387 = vpow.pop %v6386
    %v6388 = vmul.f32 %v6373, 1.442695
    %v6389 = vpow.pop %v6388
    %v6390 = vsel %vm1009, %v6375, 0.0
    %6391 = vadd.xlane.f32.xlu0 %v6390
    %v6392 = vpop.xlane.xlu0 %6391
    %v6393 = vsel %vm1009, %v6377, 0.0
    %6394 = vadd.xlane.f32.xlu0 %v6393
    %v6395 = vpop.xlane.xlu0 %6394
    %v6396 = vsel %vm1009, %v6379, 0.0
    %6397 = vadd.xlane.f32.xlu0 %v6396
    %v6398 = vpop.xlane.xlu0 %6397
    %v6399 = vsel %vm1009, %v6381, 0.0
    %6400 = vadd.xlane.f32.xlu0 %v6399
    %v6401 = vpop.xlane.xlu0 %6400
    %v6402 = vsel %vm1009, %v6383, 0.0
    %6403 = vadd.xlane.f32.xlu0 %v6402
    %v6404 = vpop.xlane.xlu0 %6403
    %v6405 = vsel %vm1009, %v6385, 0.0
    %6406 = vadd.xlane.f32.xlu0 %v6405
    %v6407 = vpop.xlane.xlu0 %6406
    %v6408 = vsel %vm1009, %v6387, 0.0
    %6409 = vadd.xlane.f32.xlu0 %v6408
    %v6410 = vpop.xlane.xlu0 %6409
    %v6411 = vsel %vm1009, %v6389, 0.0
    %6412 = vadd.xlane.f32.xlu0 %v6411
    %v6413 = vpop.xlane.xlu0 %6412
    %v6414 = vrcp.pop %v6392
    %v6415 = vrcp.pop %v6395
    %v6416 = vrcp.pop %v6398
    %v6417 = vrcp.pop %v6401
    %v6418 = vrcp.pop %v6404
    %v6419 = vrcp.pop %v6407
    %v6420 = vrcp.pop %v6410
    %v6421 = vrcp.pop %v6413
    %v6422 = vmul.f32 %v6375, %v6414
    %v6423 = vmul.f32 %v6377, %v6415
    %v6424 = vmul.f32 %v6379, %v6416
    %v6425 = vmul.f32 %v6381, %v6417
    %v6426 = vmul.f32 %v6383, %v6418
    %v6427 = vmul.f32 %v6385, %v6419
    %v6428 = vmul.f32 %v6387, %v6420
    %v6429 = vmul.f32 %v6389, %v6421
    %6430 = vrot.lane.b32.xlu0 %v5685, 56
    %v6431 = vpop.permute.xlu0 %6430
    %6432 = vrot.lane.b32.xlu0 %v5690, 56
    %v6433 = vpop.permute.xlu0 %6432
    %6434 = vrot.lane.b32.xlu0 %v5695, 56
    %v6435 = vpop.permute.xlu0 %6434
    %6436 = vrot.lane.b32.xlu0 %v5700, 56
    %v6437 = vpop.permute.xlu0 %6436
    %6438 = vrot.lane.b32.xlu0 %v5705, 56
    %v6439 = vpop.permute.xlu0 %6438
    %6440 = vrot.lane.b32.xlu0 %v5710, 56
    %v6441 = vpop.permute.xlu0 %6440
    %6442 = vrot.lane.b32.xlu0 %v5715, 56
    %v6443 = vpop.permute.xlu0 %6442
    %6444 = vrot.lane.b32.xlu0 %v5720, 56
    %v6445 = vpop.permute.xlu0 %6444
    %v6455 = vsel %vm1009, %v6422, 0
    %v6458 = vsel %vm1009, %v6423, 0
    %v6461 = vsel %vm1009, %v6424, 0
    %v6464 = vsel %vm1009, %v6425, 0
    %v6467 = vsel %vm1009, %v6426, 0
    %v6470 = vsel %vm1009, %v6427, 0
    %v6473 = vsel %vm1009, %v6428, 0
    %v6476 = vsel %vm1009, %v6429, 0
    %6478 = vmatprep.subr.mxu0 0.0
    %6479 = vmatpush1.msra.mxu0 %v6431
    %6480 = vmatprep.subr.mxu0 0.0
    %6481 = vmatpush1.msra.mxu0 %v6433
    %6482 = vmatprep.subr.mxu0 0.0
    %6483 = vmatpush1.msra.mxu0 %v6435
    %6484 = vmatprep.subr.mxu0 0.0
    %6485 = vmatpush1.msra.mxu0 %v6437
    %6486 = vmatprep.subr.mxu0 0.0
    %6487 = vmatpush1.msra.mxu0 %v6439
    %6488 = vmatprep.subr.mxu0 0.0
    %6489 = vmatpush1.msra.mxu0 %v6441
    %6490 = vmatprep.subr.mxu0 0.0
    %6491 = vmatpush1.msra.mxu0 %v6443
    %6492 = vmatprep.subr.mxu0 0.0
    %6493 = vmatpush1.msra.mxu0 %v6445
    %6494 = vmatprep.subr.mxu0 0.0
    %6495 = vmatpush1.msra.mxu0 0.0
    %6496 = vmatprep.subr.mxu0 0.0
    %6497 = vmatpush1.msra.mxu0 0.0
    %6498 = vmatprep.subr.mxu0 0.0
    %6499 = vmatpush1.msra.mxu0 0.0
    %6500 = vmatprep.subr.mxu0 0.0
    %6501 = vmatpush1.msra.mxu0 0.0
    %6502 = vmatprep.subr.mxu0 0.0
    %6503 = vmatpush1.msra.mxu0 0.0
    %6504 = vmatprep.subr.mxu0 0.0
    %6505 = vmatpush1.msra.mxu0 0.0
    %6506 = vmatprep.subr.mxu0 0.0
    %6507 = vmatpush1.msra.mxu0 0.0
    %6508 = vmatprep.subr.mxu0 0.0
    %6509 = vmatpush1.msra.mxu0 0.0
    %6510 = vmatprep.subr.mxu0 0.0
    %6511 = vmatpush1.msra.mxu0 0.0
    %6512 = vmatprep.subr.mxu0 0.0
    %6513 = vmatpush1.msra.mxu0 0.0
    %6514 = vmatprep.subr.mxu0 0.0
    %6515 = vmatpush1.msra.mxu0 0.0
    %6516 = vmatprep.subr.mxu0 0.0
    %6517 = vmatpush1.msra.mxu0 0.0
    %6518 = vmatprep.subr.mxu0 0.0
    %6519 = vmatpush1.msra.mxu0 0.0
    %6520 = vmatprep.subr.mxu0 0.0
    %6521 = vmatpush1.msra.mxu0 0.0
    %6522 = vmatprep.subr.mxu0 0.0
    %6523 = vmatpush1.msra.mxu0 0.0
    %6524 = vmatprep.subr.mxu0 0.0
    %6525 = vmatpush1.msra.mxu0 0.0
    %6526 = vmatprep.subr.mxu0 0.0
    %6527 = vmatpush1.msra.mxu0 0.0
    %6528 = vmatprep.subr.mxu0 0.0
    %6529 = vmatpush1.msra.mxu0 0.0
    %6530 = vmatprep.subr.mxu0 0.0
    %6531 = vmatpush1.msra.mxu0 0.0
    %6532 = vmatprep.subr.mxu0 0.0
    %6533 = vmatpush1.msra.mxu0 0.0
    %6534 = vmatprep.subr.mxu0 0.0
    %6535 = vmatpush1.msra.mxu0 0.0
    %6536 = vmatprep.subr.mxu0 0.0
    %6537 = vmatpush1.msra.mxu0 0.0
    %6538 = vmatprep.subr.mxu0 0.0
    %6539 = vmatpush1.msra.mxu0 0.0
    %6540 = vmatprep.subr.mxu0 0.0
    %6541 = vmatpush1.msra.mxu0 0.0
    %6542 = vmatprep.mubr.f32.mxu0 0.0
    %6543 = vmatmul.mubr.f32.gmra.mrb[0].mxu0 %v6455
    %v6544 = vpop.f32.mrb[0].mxu0
    %v6545 = vadd.f32 0.0, %v6544
    %v6546 = vpop.f32.mrb[0].mxu0
    %6547 = vmatprep.mubr.f32.mxu0 0.0
    %6548 = vmatmul.mubr.f32.gmra.mrb[0].mxu0 %v6458
    %v6549 = vpop.f32.mrb[0].mxu0
    %v6550 = vadd.f32 0.0, %v6549
    %v6551 = vpop.f32.mrb[0].mxu0
    %6552 = vmatprep.mubr.f32.mxu0 0.0
    %6553 = vmatmul.mubr.f32.gmra.mrb[0].mxu0 %v6461
    %v6554 = vpop.f32.mrb[0].mxu0
    %v6555 = vadd.f32 0.0, %v6554
    %v6556 = vpop.f32.mrb[0].mxu0
    %6557 = vmatprep.mubr.f32.mxu0 0.0
    %6558 = vmatmul.mubr.f32.gmra.mrb[0].mxu0 %v6464
    %v6559 = vpop.f32.mrb[0].mxu0
    %v6560 = vadd.f32 0.0, %v6559
    %v6561 = vpop.f32.mrb[0].mxu0
    %6562 = vmatprep.mubr.f32.mxu0 0.0
    %6563 = vmatmul.mubr.f32.gmra.mrb[0].mxu0 %v6467
    %v6564 = vpop.f32.mrb[0].mxu0
    %v6565 = vadd.f32 0.0, %v6564
    %v6566 = vpop.f32.mrb[0].mxu0
    %6567 = vmatprep.mubr.f32.mxu0 0.0
    %6568 = vmatmul.mubr.f32.gmra.mrb[0].mxu0 %v6470
    %v6569 = vpop.f32.mrb[0].mxu0
    %v6570 = vadd.f32 0.0, %v6569
    %v6571 = vpop.f32.mrb[0].mxu0
    %6572 = vmatprep.mubr.f32.mxu0 0.0
    %6573 = vmatmul.mubr.f32.gmra.mrb[0].mxu0 %v6473
    %v6574 = vpop.f32.mrb[0].mxu0
    %v6575 = vadd.f32 0.0, %v6574
    %v6576 = vpop.f32.mrb[0].mxu0
    %6577 = vmatprep.mubr.f32.mxu0 0.0
    %6578 = vmatmul.mubr.f32.gmra.mrb[0].mxu0 %v6476
    %v6579 = vpop.f32.mrb[0].mxu0
    %v6580 = vadd.f32 0.0, %v6579
    %v6581 = vpop.f32.mrb[0].mxu0
    %6582 = vdwg.mxu0
    %6591 = vrot.lane.b32.xlu0 %v6545, 8
    %v6592 = vpop.permute.xlu0 %6591
    %6593 = vrot.lane.b32.xlu0 %v6550, 8
    %v6594 = vpop.permute.xlu0 %6593
    %6595 = vrot.lane.b32.xlu0 %v6555, 8
    %v6596 = vpop.permute.xlu0 %6595
    %6597 = vrot.lane.b32.xlu0 %v6560, 8
    %v6598 = vpop.permute.xlu0 %6597
    %6599 = vrot.lane.b32.xlu0 %v6565, 8
    %v6600 = vpop.permute.xlu0 %6599
    %6601 = vrot.lane.b32.xlu0 %v6570, 8
    %v6602 = vpop.permute.xlu0 %6601
    %6603 = vrot.lane.b32.xlu0 %v6575, 8
    %v6604 = vpop.permute.xlu0 %6603
    %6605 = vrot.lane.b32.xlu0 %v6580, 8
    %v6606 = vpop.permute.xlu0 %6605
    %6615 = vst.msk [vmem:[#allocation2] sm:$0xff] %vm1701, %v6592
    %6616 = vst.msk [vmem:[#allocation2 + $0x8] sm:$0xff] %vm1701, %v6594
    %6617 = vst.msk [vmem:[#allocation2 + $0x10] sm:$0xff] %vm1701, %v6596
    %6618 = vst.msk [vmem:[#allocation2 + $0x18] sm:$0xff] %vm1701, %v6598
    %6619 = vst.msk [vmem:[#allocation2 + $0x20] sm:$0xff] %vm1701, %v6600
    %6620 = vst.msk [vmem:[#allocation2 + $0x28] sm:$0xff] %vm1701, %v6602
    %6621 = vst.msk [vmem:[#allocation2 + $0x30] sm:$0xff] %vm1701, %v6604
    %6622 = vst.msk [vmem:[#allocation2 + $0x38] sm:$0xff] %vm1701, %v6606
    %6623 = vrot.lane.b32.xlu0 %v5685, 112
    %v6624 = vpop.permute.xlu0 %6623
    %6625 = vrot.lane.b32.xlu0 %v5690, 112
    %v6626 = vpop.permute.xlu0 %6625
    %6627 = vrot.lane.b32.xlu0 %v5695, 112
    %v6628 = vpop.permute.xlu0 %6627
    %6629 = vrot.lane.b32.xlu0 %v5700, 112
    %v6630 = vpop.permute.xlu0 %6629
    %6631 = vrot.lane.b32.xlu0 %v5705, 112
    %v6632 = vpop.permute.xlu0 %6631
    %6633 = vrot.lane.b32.xlu0 %v5710, 112
    %v6634 = vpop.permute.xlu0 %6633
    %6635 = vrot.lane.b32.xlu0 %v5715, 112
    %v6636 = vpop.permute.xlu0 %6635
    %6637 = vrot.lane.b32.xlu0 %v5720, 112
    %v6638 = vpop.permute.xlu0 %6637
    %6639 = vrot.lane.b32.xlu0 %v5685, 80
    %v6640 = vpop.permute.xlu0 %6639
    %6641 = vrot.lane.b32.xlu0 %v5690, 80
    %v6642 = vpop.permute.xlu0 %6641
    %6643 = vrot.lane.b32.xlu0 %v5695, 80
    %v6644 = vpop.permute.xlu0 %6643
    %6645 = vrot.lane.b32.xlu0 %v5700, 80
    %v6646 = vpop.permute.xlu0 %6645
    %6647 = vrot.lane.b32.xlu0 %v5705, 80
    %v6648 = vpop.permute.xlu0 %6647
    %6649 = vrot.lane.b32.xlu0 %v5710, 80
    %v6650 = vpop.permute.xlu0 %6649
    %6651 = vrot.lane.b32.xlu0 %v5715, 80
    %v6652 = vpop.permute.xlu0 %6651
    %6653 = vrot.lane.b32.xlu0 %v5720, 80
    %v6654 = vpop.permute.xlu0 %6653
    %v6655 = vsel %vm871, %v6624, 0
    %v6657 = vsel %vm871, %v6626, 0
    %v6659 = vsel %vm871, %v6628, 0
    %v6661 = vsel %vm871, %v6630, 0
    %v6663 = vsel %vm871, %v6632, 0
    %v6665 = vsel %vm871, %v6634, 0
    %v6667 = vsel %vm871, %v6636, 0
    %v6669 = vsel %vm871, %v6638, 0
    %v6671 = vsel %vm871, %v6640, 0
    %v6673 = vsel %vm871, %v6642, 0
    %v6675 = vsel %vm871, %v6644, 0
    %v6677 = vsel %vm871, %v6646, 0
    %v6679 = vsel %vm871, %v6648, 0
    %v6681 = vsel %vm871, %v6650, 0
    %v6683 = vsel %vm871, %v6652, 0
    %v6685 = vsel %vm871, %v6654, 0
    %6687 = vmatprep.subr.mxu0 0.0
    %6688 = vmatpush1.xpose.msra.mxu0 %v6671
    %6689 = vmatprep.subr.mxu0 0.0
    %6690 = vmatpush1.xpose.msra.mxu0 %v6673
    %6691 = vmatprep.subr.mxu0 0.0
    %6692 = vmatpush1.xpose.msra.mxu0 %v6675
    %6693 = vmatprep.subr.mxu0 0.0
    %6694 = vmatpush1.xpose.msra.mxu0 %v6677
    %6695 = vmatprep.subr.mxu0 0.0
    %6696 = vmatpush1.xpose.msra.mxu0 %v6679
    %6697 = vmatprep.subr.mxu0 0.0
    %6698 = vmatpush1.xpose.msra.mxu0 %v6681
    %6699 = vmatprep.subr.mxu0 0.0
    %6700 = vmatpush1.xpose.msra.mxu0 %v6683
    %6701 = vmatprep.subr.mxu0 0.0
    %6702 = vmatpush1.xpose.msra.mxu0 %v6685
    %6703 = vmatprep.subr.mxu0 0.0
    %6704 = vmatpush1.xpose.msra.mxu0 0.0
    %6705 = vmatprep.subr.mxu0 0.0
    %6706 = vmatpush1.xpose.msra.mxu0 0.0
    %6707 = vmatprep.subr.mxu0 0.0
    %6708 = vmatpush1.xpose.msra.mxu0 0.0
    %6709 = vmatprep.subr.mxu0 0.0
    %6710 = vmatpush1.xpose.msra.mxu0 0.0
    %6711 = vmatprep.subr.mxu0 0.0
    %6712 = vmatpush1.xpose.msra.mxu0 0.0
    %6713 = vmatprep.subr.mxu0 0.0
    %6714 = vmatpush1.xpose.msra.mxu0 0.0
    %6715 = vmatprep.subr.mxu0 0.0
    %6716 = vmatpush1.xpose.msra.mxu0 0.0
    %6717 = vmatprep.subr.mxu0 0.0
    %6718 = vmatpush1.xpose.msra.mxu0 0.0
    %6719 = vmatprep.subr.mxu0 0.0
    %6720 = vmatpush1.xpose.msra.mxu0 0.0
    %6721 = vmatprep.subr.mxu0 0.0
    %6722 = vmatpush1.xpose.msra.mxu0 0.0
    %6723 = vmatprep.subr.mxu0 0.0
    %6724 = vmatpush1.xpose.msra.mxu0 0.0
    %6725 = vmatprep.subr.mxu0 0.0
    %6726 = vmatpush1.xpose.msra.mxu0 0.0
    %6727 = vmatprep.subr.mxu0 0.0
    %6728 = vmatpush1.xpose.msra.mxu0 0.0
    %6729 = vmatprep.subr.mxu0 0.0
    %6730 = vmatpush1.xpose.msra.mxu0 0.0
    %6731 = vmatprep.subr.mxu0 0.0
    %6732 = vmatpush1.xpose.msra.mxu0 0.0
    %6733 = vmatprep.subr.mxu0 0.0
    %6734 = vmatpush1.xpose.msra.mxu0 0.0
    %6735 = vmatprep.subr.mxu0 0.0
    %6736 = vmatpush1.xpose.msra.mxu0 0.0
    %6737 = vmatprep.subr.mxu0 0.0
    %6738 = vmatpush1.xpose.msra.mxu0 0.0
    %6739 = vmatprep.subr.mxu0 0.0
    %6740 = vmatpush1.xpose.msra.mxu0 0.0
    %6741 = vmatprep.subr.mxu0 0.0
    %6742 = vmatpush1.xpose.msra.mxu0 0.0
    %6743 = vmatprep.subr.mxu0 0.0
    %6744 = vmatpush1.xpose.msra.mxu0 0.0
    %6745 = vmatprep.subr.mxu0 0.0
    %6746 = vmatpush1.xpose.msra.mxu0 0.0
    %6747 = vmatprep.subr.mxu0 0.0
    %6748 = vmatpush1.xpose.msra.mxu0 0.0
    %6749 = vmatprep.subr.mxu0 0.0
    %6750 = vmatpush1.xpose.msra.mxu0 0.0
    %6751 = vmatprep.mubr.f32.mxu0 0.0
    %6752 = vmatmul.mubr.f32.gmra.mrb[0].mxu0 %v6655
    %v6753 = vpop.f32.mrb[0].mxu0
    %v6754 = vadd.f32 0.0, %v6753
    %v6755 = vpop.f32.mrb[0].mxu0
    %6756 = vmatprep.mubr.f32.mxu0 0.0
    %6757 = vmatmul.mubr.f32.gmra.mrb[0].mxu0 %v6657
    %v6758 = vpop.f32.mrb[0].mxu0
    %v6759 = vadd.f32 0.0, %v6758
    %v6760 = vpop.f32.mrb[0].mxu0
    %6761 = vmatprep.mubr.f32.mxu0 0.0
    %6762 = vmatmul.mubr.f32.gmra.mrb[0].mxu0 %v6659
    %v6763 = vpop.f32.mrb[0].mxu0
    %v6764 = vadd.f32 0.0, %v6763
    %v6765 = vpop.f32.mrb[0].mxu0
    %6766 = vmatprep.mubr.f32.mxu0 0.0
    %6767 = vmatmul.mubr.f32.gmra.mrb[0].mxu0 %v6661
    %v6768 = vpop.f32.mrb[0].mxu0
    %v6769 = vadd.f32 0.0, %v6768
    %v6770 = vpop.f32.mrb[0].mxu0
    %6771 = vmatprep.mubr.f32.mxu0 0.0
    %6772 = vmatmul.mubr.f32.gmra.mrb[0].mxu0 %v6663
    %v6773 = vpop.f32.mrb[0].mxu0
    %v6774 = vadd.f32 0.0, %v6773
    %v6775 = vpop.f32.mrb[0].mxu0
    %6776 = vmatprep.mubr.f32.mxu0 0.0
    %6777 = vmatmul.mubr.f32.gmra.mrb[0].mxu0 %v6665
    %v6778 = vpop.f32.mrb[0].mxu0
    %v6779 = vadd.f32 0.0, %v6778
    %v6780 = vpop.f32.mrb[0].mxu0
    %6781 = vmatprep.mubr.f32.mxu0 0.0
    %6782 = vmatmul.mubr.f32.gmra.mrb[0].mxu0 %v6667
    %v6783 = vpop.f32.mrb[0].mxu0
    %v6784 = vadd.f32 0.0, %v6783
    %v6785 = vpop.f32.mrb[0].mxu0
    %6786 = vmatprep.mubr.f32.mxu0 0.0
    %6787 = vmatmul.mubr.f32.gmra.mrb[0].mxu0 %v6669
    %v6788 = vpop.f32.mrb[0].mxu0
    %v6789 = vadd.f32 0.0, %v6788
    %v6790 = vpop.f32.mrb[0].mxu0
    %6791 = vdwg.mxu0
    %v6792 = vsel %vm1009, %v6754, -inf
    %6793 = vmax.xlane.f32.xlu0 %v6792
    %v6794 = vpop.xlane.xlu0 %6793
    %v6795 = vsel %vm1009, %v6759, -inf
    %6796 = vmax.xlane.f32.xlu0 %v6795
    %v6797 = vpop.xlane.xlu0 %6796
    %v6798 = vsel %vm1009, %v6764, -inf
    %6799 = vmax.xlane.f32.xlu0 %v6798
    %v6800 = vpop.xlane.xlu0 %6799
    %v6801 = vsel %vm1009, %v6769, -inf
    %6802 = vmax.xlane.f32.xlu0 %v6801
    %v6803 = vpop.xlane.xlu0 %6802
    %v6804 = vsel %vm1009, %v6774, -inf
    %6805 = vmax.xlane.f32.xlu0 %v6804
    %v6806 = vpop.xlane.xlu0 %6805
    %v6807 = vsel %vm1009, %v6779, -inf
    %6808 = vmax.xlane.f32.xlu0 %v6807
    %v6809 = vpop.xlane.xlu0 %6808
    %v6810 = vsel %vm1009, %v6784, -inf
    %6811 = vmax.xlane.f32.xlu0 %v6810
    %v6812 = vpop.xlane.xlu0 %6811
    %v6813 = vsel %vm1009, %v6789, -inf
    %6814 = vmax.xlane.f32.xlu0 %v6813
    %v6815 = vpop.xlane.xlu0 %6814
    %v6816 = vsub.f32 %v6754, %v6794
    %v6817 = vsub.f32 %v6759, %v6797
    %v6818 = vsub.f32 %v6764, %v6800
    %v6819 = vsub.f32 %v6769, %v6803
    %v6820 = vsub.f32 %v6774, %v6806
    %v6821 = vsub.f32 %v6779, %v6809
    %v6822 = vsub.f32 %v6784, %v6812
    %v6823 = vsub.f32 %v6789, %v6815
    %v6824 = vmul.f32 %v6816, 1.442695
    %v6825 = vpow.pop %v6824
    %v6826 = vmul.f32 %v6817, 1.442695
    %v6827 = vpow.pop %v6826
    %v6828 = vmul.f32 %v6818, 1.442695
    %v6829 = vpow.pop %v6828
    %v6830 = vmul.f32 %v6819, 1.442695
    %v6831 = vpow.pop %v6830
    %v6832 = vmul.f32 %v6820, 1.442695
    %v6833 = vpow.pop %v6832
    %v6834 = vmul.f32 %v6821, 1.442695
    %v6835 = vpow.pop %v6834
    %v6836 = vmul.f32 %v6822, 1.442695
    %v6837 = vpow.pop %v6836
    %v6838 = vmul.f32 %v6823, 1.442695
    %v6839 = vpow.pop %v6838
    %v6840 = vsel %vm1009, %v6825, 0.0
    %6841 = vadd.xlane.f32.xlu0 %v6840
    %v6842 = vpop.xlane.xlu0 %6841
    %v6843 = vsel %vm1009, %v6827, 0.0
    %6844 = vadd.xlane.f32.xlu0 %v6843
    %v6845 = vpop.xlane.xlu0 %6844
    %v6846 = vsel %vm1009, %v6829, 0.0
    %6847 = vadd.xlane.f32.xlu0 %v6846
    %v6848 = vpop.xlane.xlu0 %6847
    %v6849 = vsel %vm1009, %v6831, 0.0
    %6850 = vadd.xlane.f32.xlu0 %v6849
    %v6851 = vpop.xlane.xlu0 %6850
    %v6852 = vsel %vm1009, %v6833, 0.0
    %6853 = vadd.xlane.f32.xlu0 %v6852
    %v6854 = vpop.xlane.xlu0 %6853
    %v6855 = vsel %vm1009, %v6835, 0.0
    %6856 = vadd.xlane.f32.xlu0 %v6855
    %v6857 = vpop.xlane.xlu0 %6856
    %v6858 = vsel %vm1009, %v6837, 0.0
    %6859 = vadd.xlane.f32.xlu0 %v6858
    %v6860 = vpop.xlane.xlu0 %6859
    %v6861 = vsel %vm1009, %v6839, 0.0
    %6862 = vadd.xlane.f32.xlu0 %v6861
    %v6863 = vpop.xlane.xlu0 %6862
    %v6864 = vrcp.pop %v6842
    %v6865 = vrcp.pop %v6845
    %v6866 = vrcp.pop %v6848
    %v6867 = vrcp.pop %v6851
    %v6868 = vrcp.pop %v6854
    %v6869 = vrcp.pop %v6857
    %v6870 = vrcp.pop %v6860
    %v6871 = vrcp.pop %v6863
    %v6872 = vmul.f32 %v6825, %v6864
    %v6873 = vmul.f32 %v6827, %v6865
    %v6874 = vmul.f32 %v6829, %v6866
    %v6875 = vmul.f32 %v6831, %v6867
    %v6876 = vmul.f32 %v6833, %v6868
    %v6877 = vmul.f32 %v6835, %v6869
    %v6878 = vmul.f32 %v6837, %v6870
    %v6879 = vmul.f32 %v6839, %v6871
    %6880 = vrot.lane.b32.xlu0 %v5685, 48
    %v6881 = vpop.permute.xlu0 %6880
    %6882 = vrot.lane.b32.xlu0 %v5690, 48
    %v6883 = vpop.permute.xlu0 %6882
    %6884 = vrot.lane.b32.xlu0 %v5695, 48
    %v6885 = vpop.permute.xlu0 %6884
    %6886 = vrot.lane.b32.xlu0 %v5700, 48
    %v6887 = vpop.permute.xlu0 %6886
    %6888 = vrot.lane.b32.xlu0 %v5705, 48
    %v6889 = vpop.permute.xlu0 %6888
    %6890 = vrot.lane.b32.xlu0 %v5710, 48
    %v6891 = vpop.permute.xlu0 %6890
    %6892 = vrot.lane.b32.xlu0 %v5715, 48
    %v6893 = vpop.permute.xlu0 %6892
    %6894 = vrot.lane.b32.xlu0 %v5720, 48
    %v6895 = vpop.permute.xlu0 %6894
    %v6905 = vsel %vm1009, %v6872, 0
    %v6908 = vsel %vm1009, %v6873, 0
    %v6911 = vsel %vm1009, %v6874, 0
    %v6914 = vsel %vm1009, %v6875, 0
    %v6917 = vsel %vm1009, %v6876, 0
    %v6920 = vsel %vm1009, %v6877, 0
    %v6923 = vsel %vm1009, %v6878, 0
    %v6926 = vsel %vm1009, %v6879, 0
    %6928 = vmatprep.subr.mxu0 0.0
    %6929 = vmatpush1.msra.mxu0 %v6881
    %6930 = vmatprep.subr.mxu0 0.0
    %6931 = vmatpush1.msra.mxu0 %v6883
    %6932 = vmatprep.subr.mxu0 0.0
    %6933 = vmatpush1.msra.mxu0 %v6885
    %6934 = vmatprep.subr.mxu0 0.0
    %6935 = vmatpush1.msra.mxu0 %v6887
    %6936 = vmatprep.subr.mxu0 0.0
    %6937 = vmatpush1.msra.mxu0 %v6889
    %6938 = vmatprep.subr.mxu0 0.0
    %6939 = vmatpush1.msra.mxu0 %v6891
    %6940 = vmatprep.subr.mxu0 0.0
    %6941 = vmatpush1.msra.mxu0 %v6893
    %6942 = vmatprep.subr.mxu0 0.0
    %6943 = vmatpush1.msra.mxu0 %v6895
    %6944 = vmatprep.subr.mxu0 0.0
    %6945 = vmatpush1.msra.mxu0 0.0
    %6946 = vmatprep.subr.mxu0 0.0
    %6947 = vmatpush1.msra.mxu0 0.0
    %6948 = vmatprep.subr.mxu0 0.0
    %6949 = vmatpush1.msra.mxu0 0.0
    %6950 = vmatprep.subr.mxu0 0.0
    %6951 = vmatpush1.msra.mxu0 0.0
    %6952 = vmatprep.subr.mxu0 0.0
    %6953 = vmatpush1.msra.mxu0 0.0
    %6954 = vmatprep.subr.mxu0 0.0
    %6955 = vmatpush1.msra.mxu0 0.0
    %6956 = vmatprep.subr.mxu0 0.0
    %6957 = vmatpush1.msra.mxu0 0.0
    %6958 = vmatprep.subr.mxu0 0.0
    %6959 = vmatpush1.msra.mxu0 0.0
    %6960 = vmatprep.subr.mxu0 0.0
    %6961 = vmatpush1.msra.mxu0 0.0
    %6962 = vmatprep.subr.mxu0 0.0
    %6963 = vmatpush1.msra.mxu0 0.0
    %6964 = vmatprep.subr.mxu0 0.0
    %6965 = vmatpush1.msra.mxu0 0.0
    %6966 = vmatprep.subr.mxu0 0.0
    %6967 = vmatpush1.msra.mxu0 0.0
    %6968 = vmatprep.subr.mxu0 0.0
    %6969 = vmatpush1.msra.mxu0 0.0
    %6970 = vmatprep.subr.mxu0 0.0
    %6971 = vmatpush1.msra.mxu0 0.0
    %6972 = vmatprep.subr.mxu0 0.0
    %6973 = vmatpush1.msra.mxu0 0.0
    %6974 = vmatprep.subr.mxu0 0.0
    %6975 = vmatpush1.msra.mxu0 0.0
    %6976 = vmatprep.subr.mxu0 0.0
    %6977 = vmatpush1.msra.mxu0 0.0
    %6978 = vmatprep.subr.mxu0 0.0
    %6979 = vmatpush1.msra.mxu0 0.0
    %6980 = vmatprep.subr.mxu0 0.0
    %6981 = vmatpush1.msra.mxu0 0.0
    %6982 = vmatprep.subr.mxu0 0.0
    %6983 = vmatpush1.msra.mxu0 0.0
    %6984 = vmatprep.subr.mxu0 0.0
    %6985 = vmatpush1.msra.mxu0 0.0
    %6986 = vmatprep.subr.mxu0 0.0
    %6987 = vmatpush1.msra.mxu0 0.0
    %6988 = vmatprep.subr.mxu0 0.0
    %6989 = vmatpush1.msra.mxu0 0.0
    %6990 = vmatprep.subr.mxu0 0.0
    %6991 = vmatpush1.msra.mxu0 0.0
    %6992 = vmatprep.mubr.f32.mxu0 0.0
    %6993 = vmatmul.mubr.f32.gmra.mrb[0].mxu0 %v6905
    %v6994 = vpop.f32.mrb[0].mxu0
    %v6995 = vadd.f32 0.0, %v6994
    %v6996 = vpop.f32.mrb[0].mxu0
    %6997 = vmatprep.mubr.f32.mxu0 0.0
    %6998 = vmatmul.mubr.f32.gmra.mrb[0].mxu0 %v6908
    %v6999 = vpop.f32.mrb[0].mxu0
    %v7000 = vadd.f32 0.0, %v6999
    %v7001 = vpop.f32.mrb[0].mxu0
    %7002 = vmatprep.mubr.f32.mxu0 0.0
    %7003 = vmatmul.mubr.f32.gmra.mrb[0].mxu0 %v6911
    %v7004 = vpop.f32.mrb[0].mxu0
    %v7005 = vadd.f32 0.0, %v7004
    %v7006 = vpop.f32.mrb[0].mxu0
    %7007 = vmatprep.mubr.f32.mxu0 0.0
    %7008 = vmatmul.mubr.f32.gmra.mrb[0].mxu0 %v6914
    %v7009 = vpop.f32.mrb[0].mxu0
    %v7010 = vadd.f32 0.0, %v7009
    %v7011 = vpop.f32.mrb[0].mxu0
    %7012 = vmatprep.mubr.f32.mxu0 0.0
    %7013 = vmatmul.mubr.f32.gmra.mrb[0].mxu0 %v6917
    %v7014 = vpop.f32.mrb[0].mxu0
    %v7015 = vadd.f32 0.0, %v7014
    %v7016 = vpop.f32.mrb[0].mxu0
    %7017 = vmatprep.mubr.f32.mxu0 0.0
    %7018 = vmatmul.mubr.f32.gmra.mrb[0].mxu0 %v6920
    %v7019 = vpop.f32.mrb[0].mxu0
    %v7020 = vadd.f32 0.0, %v7019
    %v7021 = vpop.f32.mrb[0].mxu0
    %7022 = vmatprep.mubr.f32.mxu0 0.0
    %7023 = vmatmul.mubr.f32.gmra.mrb[0].mxu0 %v6923
    %v7024 = vpop.f32.mrb[0].mxu0
    %v7025 = vadd.f32 0.0, %v7024
    %v7026 = vpop.f32.mrb[0].mxu0
    %7027 = vmatprep.mubr.f32.mxu0 0.0
    %7028 = vmatmul.mubr.f32.gmra.mrb[0].mxu0 %v6926
    %v7029 = vpop.f32.mrb[0].mxu0
    %v7030 = vadd.f32 0.0, %v7029
    %v7031 = vpop.f32.mrb[0].mxu0
    %7032 = vdwg.mxu0
    %7041 = vrot.lane.b32.xlu0 %v6995, 16
    %v7042 = vpop.permute.xlu0 %7041
    %7043 = vrot.lane.b32.xlu0 %v7000, 16
    %v7044 = vpop.permute.xlu0 %7043
    %7045 = vrot.lane.b32.xlu0 %v7005, 16
    %v7046 = vpop.permute.xlu0 %7045
    %7047 = vrot.lane.b32.xlu0 %v7010, 16
    %v7048 = vpop.permute.xlu0 %7047
    %7049 = vrot.lane.b32.xlu0 %v7015, 16
    %v7050 = vpop.permute.xlu0 %7049
    %7051 = vrot.lane.b32.xlu0 %v7020, 16
    %v7052 = vpop.permute.xlu0 %7051
    %7053 = vrot.lane.b32.xlu0 %v7025, 16
    %v7054 = vpop.permute.xlu0 %7053
    %7055 = vrot.lane.b32.xlu0 %v7030, 16
    %v7056 = vpop.permute.xlu0 %7055
    %7065 = vst.msk [vmem:[#allocation2] sm:$0xff] %vm2152, %v7042
    %7066 = vst.msk [vmem:[#allocation2 + $0x8] sm:$0xff] %vm2152, %v7044
    %7067 = vst.msk [vmem:[#allocation2 + $0x10] sm:$0xff] %vm2152, %v7046
    %7068 = vst.msk [vmem:[#allocation2 + $0x18] sm:$0xff] %vm2152, %v7048
    %7069 = vst.msk [vmem:[#allocation2 + $0x20] sm:$0xff] %vm2152, %v7050
    %7070 = vst.msk [vmem:[#allocation2 + $0x28] sm:$0xff] %vm2152, %v7052
    %7071 = vst.msk [vmem:[#allocation2 + $0x30] sm:$0xff] %vm2152, %v7054
    %7072 = vst.msk [vmem:[#allocation2 + $0x38] sm:$0xff] %vm2152, %v7056
    %7073 = vrot.lane.b32.xlu0 %v5685, 104
    %v7074 = vpop.permute.xlu0 %7073
    %7075 = vrot.lane.b32.xlu0 %v5690, 104
    %v7076 = vpop.permute.xlu0 %7075
    %7077 = vrot.lane.b32.xlu0 %v5695, 104
    %v7078 = vpop.permute.xlu0 %7077
    %7079 = vrot.lane.b32.xlu0 %v5700, 104
    %v7080 = vpop.permute.xlu0 %7079
    %7081 = vrot.lane.b32.xlu0 %v5705, 104
    %v7082 = vpop.permute.xlu0 %7081
    %7083 = vrot.lane.b32.xlu0 %v5710, 104
    %v7084 = vpop.permute.xlu0 %7083
    %7085 = vrot.lane.b32.xlu0 %v5715, 104
    %v7086 = vpop.permute.xlu0 %7085
    %7087 = vrot.lane.b32.xlu0 %v5720, 104
    %v7088 = vpop.permute.xlu0 %7087
    %7089 = vrot.lane.b32.xlu0 %v5685, 72
    %v7090 = vpop.permute.xlu0 %7089
    %7091 = vrot.lane.b32.xlu0 %v5690, 72
    %v7092 = vpop.permute.xlu0 %7091
    %7093 = vrot.lane.b32.xlu0 %v5695, 72
    %v7094 = vpop.permute.xlu0 %7093
    %7095 = vrot.lane.b32.xlu0 %v5700, 72
    %v7096 = vpop.permute.xlu0 %7095
    %7097 = vrot.lane.b32.xlu0 %v5705, 72
    %v7098 = vpop.permute.xlu0 %7097
    %7099 = vrot.lane.b32.xlu0 %v5710, 72
    %v7100 = vpop.permute.xlu0 %7099
    %7101 = vrot.lane.b32.xlu0 %v5715, 72
    %v7102 = vpop.permute.xlu0 %7101
    %7103 = vrot.lane.b32.xlu0 %v5720, 72
    %v7104 = vpop.permute.xlu0 %7103
    %v7105 = vsel %vm871, %v7074, 0
    %v7107 = vsel %vm871, %v7076, 0
    %v7109 = vsel %vm871, %v7078, 0
    %v7111 = vsel %vm871, %v7080, 0
    %v7113 = vsel %vm871, %v7082, 0
    %v7115 = vsel %vm871, %v7084, 0
    %v7117 = vsel %vm871, %v7086, 0
    %v7119 = vsel %vm871, %v7088, 0
    %v7121 = vsel %vm871, %v7090, 0
    %v7123 = vsel %vm871, %v7092, 0
    %v7125 = vsel %vm871, %v7094, 0
    %v7127 = vsel %vm871, %v7096, 0
    %v7129 = vsel %vm871, %v7098, 0
    %v7131 = vsel %vm871, %v7100, 0
    %v7133 = vsel %vm871, %v7102, 0
    %v7135 = vsel %vm871, %v7104, 0
    %7137 = vmatprep.subr.mxu0 0.0
    %7138 = vmatpush1.xpose.msra.mxu0 %v7121
    %7139 = vmatprep.subr.mxu0 0.0
    %7140 = vmatpush1.xpose.msra.mxu0 %v7123
    %7141 = vmatprep.subr.mxu0 0.0
    %7142 = vmatpush1.xpose.msra.mxu0 %v7125
    %7143 = vmatprep.subr.mxu0 0.0
    %7144 = vmatpush1.xpose.msra.mxu0 %v7127
    %7145 = vmatprep.subr.mxu0 0.0
    %7146 = vmatpush1.xpose.msra.mxu0 %v7129
    %7147 = vmatprep.subr.mxu0 0.0
    %7148 = vmatpush1.xpose.msra.mxu0 %v7131
    %7149 = vmatprep.subr.mxu0 0.0
    %7150 = vmatpush1.xpose.msra.mxu0 %v7133
    %7151 = vmatprep.subr.mxu0 0.0
    %7152 = vmatpush1.xpose.msra.mxu0 %v7135
    %7153 = vmatprep.subr.mxu0 0.0
    %7154 = vmatpush1.xpose.msra.mxu0 0.0
    %7155 = vmatprep.subr.mxu0 0.0
    %7156 = vmatpush1.xpose.msra.mxu0 0.0
    %7157 = vmatprep.subr.mxu0 0.0
    %7158 = vmatpush1.xpose.msra.mxu0 0.0
    %7159 = vmatprep.subr.mxu0 0.0
    %7160 = vmatpush1.xpose.msra.mxu0 0.0
    %7161 = vmatprep.subr.mxu0 0.0
    %7162 = vmatpush1.xpose.msra.mxu0 0.0
    %7163 = vmatprep.subr.mxu0 0.0
    %7164 = vmatpush1.xpose.msra.mxu0 0.0
    %7165 = vmatprep.subr.mxu0 0.0
    %7166 = vmatpush1.xpose.msra.mxu0 0.0
    %7167 = vmatprep.subr.mxu0 0.0
    %7168 = vmatpush1.xpose.msra.mxu0 0.0
    %7169 = vmatprep.subr.mxu0 0.0
    %7170 = vmatpush1.xpose.msra.mxu0 0.0
    %7171 = vmatprep.subr.mxu0 0.0
    %7172 = vmatpush1.xpose.msra.mxu0 0.0
    %7173 = vmatprep.subr.mxu0 0.0
    %7174 = vmatpush1.xpose.msra.mxu0 0.0
    %7175 = vmatprep.subr.mxu0 0.0
    %7176 = vmatpush1.xpose.msra.mxu0 0.0
    %7177 = vmatprep.subr.mxu0 0.0
    %7178 = vmatpush1.xpose.msra.mxu0 0.0
    %7179 = vmatprep.subr.mxu0 0.0
    %7180 = vmatpush1.xpose.msra.mxu0 0.0
    %7181 = vmatprep.subr.mxu0 0.0
    %7182 = vmatpush1.xpose.msra.mxu0 0.0
    %7183 = vmatprep.subr.mxu0 0.0
    %7184 = vmatpush1.xpose.msra.mxu0 0.0
    %7185 = vmatprep.subr.mxu0 0.0
    %7186 = vmatpush1.xpose.msra.mxu0 0.0
    %7187 = vmatprep.subr.mxu0 0.0
    %7188 = vmatpush1.xpose.msra.mxu0 0.0
    %7189 = vmatprep.subr.mxu0 0.0
    %7190 = vmatpush1.xpose.msra.mxu0 0.0
    %7191 = vmatprep.subr.mxu0 0.0
    %7192 = vmatpush1.xpose.msra.mxu0 0.0
    %7193 = vmatprep.subr.mxu0 0.0
    %7194 = vmatpush1.xpose.msra.mxu0 0.0
    %7195 = vmatprep.subr.mxu0 0.0
    %7196 = vmatpush1.xpose.msra.mxu0 0.0
    %7197 = vmatprep.subr.mxu0 0.0
    %7198 = vmatpush1.xpose.msra.mxu0 0.0
    %7199 = vmatprep.subr.mxu0 0.0
    %7200 = vmatpush1.xpose.msra.mxu0 0.0
    %7201 = vmatprep.mubr.f32.mxu0 0.0
    %7202 = vmatmul.mubr.f32.gmra.mrb[0].mxu0 %v7105
    %v7203 = vpop.f32.mrb[0].mxu0
    %v7204 = vadd.f32 0.0, %v7203
    %v7205 = vpop.f32.mrb[0].mxu0
    %7206 = vmatprep.mubr.f32.mxu0 0.0
    %7207 = vmatmul.mubr.f32.gmra.mrb[0].mxu0 %v7107
    %v7208 = vpop.f32.mrb[0].mxu0
    %v7209 = vadd.f32 0.0, %v7208
    %v7210 = vpop.f32.mrb[0].mxu0
    %7211 = vmatprep.mubr.f32.mxu0 0.0
    %7212 = vmatmul.mubr.f32.gmra.mrb[0].mxu0 %v7109
    %v7213 = vpop.f32.mrb[0].mxu0
    %v7214 = vadd.f32 0.0, %v7213
    %v7215 = vpop.f32.mrb[0].mxu0
    %7216 = vmatprep.mubr.f32.mxu0 0.0
    %7217 = vmatmul.mubr.f32.gmra.mrb[0].mxu0 %v7111
    %v7218 = vpop.f32.mrb[0].mxu0
    %v7219 = vadd.f32 0.0, %v7218
    %v7220 = vpop.f32.mrb[0].mxu0
    %7221 = vmatprep.mubr.f32.mxu0 0.0
    %7222 = vmatmul.mubr.f32.gmra.mrb[0].mxu0 %v7113
    %v7223 = vpop.f32.mrb[0].mxu0
    %v7224 = vadd.f32 0.0, %v7223
    %v7225 = vpop.f32.mrb[0].mxu0
    %7226 = vmatprep.mubr.f32.mxu0 0.0
    %7227 = vmatmul.mubr.f32.gmra.mrb[0].mxu0 %v7115
    %v7228 = vpop.f32.mrb[0].mxu0
    %v7229 = vadd.f32 0.0, %v7228
    %v7230 = vpop.f32.mrb[0].mxu0
    %7231 = vmatprep.mubr.f32.mxu0 0.0
    %7232 = vmatmul.mubr.f32.gmra.mrb[0].mxu0 %v7117
    %v7233 = vpop.f32.mrb[0].mxu0
    %v7234 = vadd.f32 0.0, %v7233
    %v7235 = vpop.f32.mrb[0].mxu0
    %7236 = vmatprep.mubr.f32.mxu0 0.0
    %7237 = vmatmul.mubr.f32.gmra.mrb[0].mxu0 %v7119
    %v7238 = vpop.f32.mrb[0].mxu0
    %v7239 = vadd.f32 0.0, %v7238
    %v7240 = vpop.f32.mrb[0].mxu0
    %7241 = vdwg.mxu0
    %v7242 = vsel %vm1009, %v7204, -inf
    %7243 = vmax.xlane.f32.xlu0 %v7242
    %v7244 = vpop.xlane.xlu0 %7243
    %v7245 = vsel %vm1009, %v7209, -inf
    %7246 = vmax.xlane.f32.xlu0 %v7245
    %v7247 = vpop.xlane.xlu0 %7246
    %v7248 = vsel %vm1009, %v7214, -inf
    %7249 = vmax.xlane.f32.xlu0 %v7248
    %v7250 = vpop.xlane.xlu0 %7249
    %v7251 = vsel %vm1009, %v7219, -inf
    %7252 = vmax.xlane.f32.xlu0 %v7251
    %v7253 = vpop.xlane.xlu0 %7252
    %v7254 = vsel %vm1009, %v7224, -inf
    %7255 = vmax.xlane.f32.xlu0 %v7254
    %v7256 = vpop.xlane.xlu0 %7255
    %v7257 = vsel %vm1009, %v7229, -inf
    %7258 = vmax.xlane.f32.xlu0 %v7257
    %v7259 = vpop.xlane.xlu0 %7258
    %v7260 = vsel %vm1009, %v7234, -inf
    %7261 = vmax.xlane.f32.xlu0 %v7260
    %v7262 = vpop.xlane.xlu0 %7261
    %v7263 = vsel %vm1009, %v7239, -inf
    %7264 = vmax.xlane.f32.xlu0 %v7263
    %v7265 = vpop.xlane.xlu0 %7264
    %v7266 = vsub.f32 %v7204, %v7244
    %v7267 = vsub.f32 %v7209, %v7247
    %v7268 = vsub.f32 %v7214, %v7250
    %v7269 = vsub.f32 %v7219, %v7253
    %v7270 = vsub.f32 %v7224, %v7256
    %v7271 = vsub.f32 %v7229, %v7259
    %v7272 = vsub.f32 %v7234, %v7262
    %v7273 = vsub.f32 %v7239, %v7265
    %v7274 = vmul.f32 %v7266, 1.442695
    %v7275 = vpow.pop %v7274
    %v7276 = vmul.f32 %v7267, 1.442695
    %v7277 = vpow.pop %v7276
    %v7278 = vmul.f32 %v7268, 1.442695
    %v7279 = vpow.pop %v7278
    %v7280 = vmul.f32 %v7269, 1.442695
    %v7281 = vpow.pop %v7280
    %v7282 = vmul.f32 %v7270, 1.442695
    %v7283 = vpow.pop %v7282
    %v7284 = vmul.f32 %v7271, 1.442695
    %v7285 = vpow.pop %v7284
    %v7286 = vmul.f32 %v7272, 1.442695
    %v7287 = vpow.pop %v7286
    %v7288 = vmul.f32 %v7273, 1.442695
    %v7289 = vpow.pop %v7288
    %v7290 = vsel %vm1009, %v7275, 0.0
    %7291 = vadd.xlane.f32.xlu0 %v7290
    %v7292 = vpop.xlane.xlu0 %7291
    %v7293 = vsel %vm1009, %v7277, 0.0
    %7294 = vadd.xlane.f32.xlu0 %v7293
    %v7295 = vpop.xlane.xlu0 %7294
    %v7296 = vsel %vm1009, %v7279, 0.0
    %7297 = vadd.xlane.f32.xlu0 %v7296
    %v7298 = vpop.xlane.xlu0 %7297
    %v7299 = vsel %vm1009, %v7281, 0.0
    %7300 = vadd.xlane.f32.xlu0 %v7299
    %v7301 = vpop.xlane.xlu0 %7300
    %v7302 = vsel %vm1009, %v7283, 0.0
    %7303 = vadd.xlane.f32.xlu0 %v7302
    %v7304 = vpop.xlane.xlu0 %7303
    %v7305 = vsel %vm1009, %v7285, 0.0
    %7306 = vadd.xlane.f32.xlu0 %v7305
    %v7307 = vpop.xlane.xlu0 %7306
    %v7308 = vsel %vm1009, %v7287, 0.0
    %7309 = vadd.xlane.f32.xlu0 %v7308
    %v7310 = vpop.xlane.xlu0 %7309
    %v7311 = vsel %vm1009, %v7289, 0.0
    %7312 = vadd.xlane.f32.xlu0 %v7311
    %v7313 = vpop.xlane.xlu0 %7312
    %v7314 = vrcp.pop %v7292
    %v7315 = vrcp.pop %v7295
    %v7316 = vrcp.pop %v7298
    %v7317 = vrcp.pop %v7301
    %v7318 = vrcp.pop %v7304
    %v7319 = vrcp.pop %v7307
    %v7320 = vrcp.pop %v7310
    %v7321 = vrcp.pop %v7313
    %v7322 = vmul.f32 %v7275, %v7314
    %v7323 = vmul.f32 %v7277, %v7315
    %v7324 = vmul.f32 %v7279, %v7316
    %v7325 = vmul.f32 %v7281, %v7317
    %v7326 = vmul.f32 %v7283, %v7318
    %v7327 = vmul.f32 %v7285, %v7319
    %v7328 = vmul.f32 %v7287, %v7320
    %v7329 = vmul.f32 %v7289, %v7321
    %7330 = vrot.lane.b32.xlu0 %v5685, 40
    %v7331 = vpop.permute.xlu0 %7330
    %7332 = vrot.lane.b32.xlu0 %v5690, 40
    %v7333 = vpop.permute.xlu0 %7332
    %7334 = vrot.lane.b32.xlu0 %v5695, 40
    %v7335 = vpop.permute.xlu0 %7334
    %7336 = vrot.lane.b32.xlu0 %v5700, 40
    %v7337 = vpop.permute.xlu0 %7336
    %7338 = vrot.lane.b32.xlu0 %v5705, 40
    %v7339 = vpop.permute.xlu0 %7338
    %7340 = vrot.lane.b32.xlu0 %v5710, 40
    %v7341 = vpop.permute.xlu0 %7340
    %7342 = vrot.lane.b32.xlu0 %v5715, 40
    %v7343 = vpop.permute.xlu0 %7342
    %7344 = vrot.lane.b32.xlu0 %v5720, 40
    %v7345 = vpop.permute.xlu0 %7344
    %v7355 = vsel %vm1009, %v7322, 0
    %v7358 = vsel %vm1009, %v7323, 0
    %v7361 = vsel %vm1009, %v7324, 0
    %v7364 = vsel %vm1009, %v7325, 0
    %v7367 = vsel %vm1009, %v7326, 0
    %v7370 = vsel %vm1009, %v7327, 0
    %v7373 = vsel %vm1009, %v7328, 0
    %v7376 = vsel %vm1009, %v7329, 0
    %7378 = vmatprep.subr.mxu0 0.0
    %7379 = vmatpush1.msra.mxu0 %v7331
    %7380 = vmatprep.subr.mxu0 0.0
    %7381 = vmatpush1.msra.mxu0 %v7333
    %7382 = vmatprep.subr.mxu0 0.0
    %7383 = vmatpush1.msra.mxu0 %v7335
    %7384 = vmatprep.subr.mxu0 0.0
    %7385 = vmatpush1.msra.mxu0 %v7337
    %7386 = vmatprep.subr.mxu0 0.0
    %7387 = vmatpush1.msra.mxu0 %v7339
    %7388 = vmatprep.subr.mxu0 0.0
    %7389 = vmatpush1.msra.mxu0 %v7341
    %7390 = vmatprep.subr.mxu0 0.0
    %7391 = vmatpush1.msra.mxu0 %v7343
    %7392 = vmatprep.subr.mxu0 0.0
    %7393 = vmatpush1.msra.mxu0 %v7345
    %7394 = vmatprep.subr.mxu0 0.0
    %7395 = vmatpush1.msra.mxu0 0.0
    %7396 = vmatprep.subr.mxu0 0.0
    %7397 = vmatpush1.msra.mxu0 0.0
    %7398 = vmatprep.subr.mxu0 0.0
    %7399 = vmatpush1.msra.mxu0 0.0
    %7400 = vmatprep.subr.mxu0 0.0
    %7401 = vmatpush1.msra.mxu0 0.0
    %7402 = vmatprep.subr.mxu0 0.0
    %7403 = vmatpush1.msra.mxu0 0.0
    %7404 = vmatprep.subr.mxu0 0.0
    %7405 = vmatpush1.msra.mxu0 0.0
    %7406 = vmatprep.subr.mxu0 0.0
    %7407 = vmatpush1.msra.mxu0 0.0
    %7408 = vmatprep.subr.mxu0 0.0
    %7409 = vmatpush1.msra.mxu0 0.0
    %7410 = vmatprep.subr.mxu0 0.0
    %7411 = vmatpush1.msra.mxu0 0.0
    %7412 = vmatprep.subr.mxu0 0.0
    %7413 = vmatpush1.msra.mxu0 0.0
    %7414 = vmatprep.subr.mxu0 0.0
    %7415 = vmatpush1.msra.mxu0 0.0
    %7416 = vmatprep.subr.mxu0 0.0
    %7417 = vmatpush1.msra.mxu0 0.0
    %7418 = vmatprep.subr.mxu0 0.0
    %7419 = vmatpush1.msra.mxu0 0.0
    %7420 = vmatprep.subr.mxu0 0.0
    %7421 = vmatpush1.msra.mxu0 0.0
    %7422 = vmatprep.subr.mxu0 0.0
    %7423 = vmatpush1.msra.mxu0 0.0
    %7424 = vmatprep.subr.mxu0 0.0
    %7425 = vmatpush1.msra.mxu0 0.0
    %7426 = vmatprep.subr.mxu0 0.0
    %7427 = vmatpush1.msra.mxu0 0.0
    %7428 = vmatprep.subr.mxu0 0.0
    %7429 = vmatpush1.msra.mxu0 0.0
    %7430 = vmatprep.subr.mxu0 0.0
    %7431 = vmatpush1.msra.mxu0 0.0
    %7432 = vmatprep.subr.mxu0 0.0
    %7433 = vmatpush1.msra.mxu0 0.0
    %7434 = vmatprep.subr.mxu0 0.0
    %7435 = vmatpush1.msra.mxu0 0.0
    %7436 = vmatprep.subr.mxu0 0.0
    %7437 = vmatpush1.msra.mxu0 0.0
    %7438 = vmatprep.subr.mxu0 0.0
    %7439 = vmatpush1.msra.mxu0 0.0
    %7440 = vmatprep.subr.mxu0 0.0
    %7441 = vmatpush1.msra.mxu0 0.0
    %7442 = vmatprep.mubr.f32.mxu0 0.0
    %7443 = vmatmul.mubr.f32.gmra.mrb[0].mxu0 %v7355
    %v7444 = vpop.f32.mrb[0].mxu0
    %v7445 = vadd.f32 0.0, %v7444
    %v7446 = vpop.f32.mrb[0].mxu0
    %7447 = vmatprep.mubr.f32.mxu0 0.0
    %7448 = vmatmul.mubr.f32.gmra.mrb[0].mxu0 %v7358
    %v7449 = vpop.f32.mrb[0].mxu0
    %v7450 = vadd.f32 0.0, %v7449
    %v7451 = vpop.f32.mrb[0].mxu0
    %7452 = vmatprep.mubr.f32.mxu0 0.0
    %7453 = vmatmul.mubr.f32.gmra.mrb[0].mxu0 %v7361
    %v7454 = vpop.f32.mrb[0].mxu0
    %v7455 = vadd.f32 0.0, %v7454
    %v7456 = vpop.f32.mrb[0].mxu0
    %7457 = vmatprep.mubr.f32.mxu0 0.0
    %7458 = vmatmul.mubr.f32.gmra.mrb[0].mxu0 %v7364
    %v7459 = vpop.f32.mrb[0].mxu0
    %v7460 = vadd.f32 0.0, %v7459
    %v7461 = vpop.f32.mrb[0].mxu0
    %7462 = vmatprep.mubr.f32.mxu0 0.0
    %7463 = vmatmul.mubr.f32.gmra.mrb[0].mxu0 %v7367
    %v7464 = vpop.f32.mrb[0].mxu0
    %v7465 = vadd.f32 0.0, %v7464
    %v7466 = vpop.f32.mrb[0].mxu0
    %7467 = vmatprep.mubr.f32.mxu0 0.0
    %7468 = vmatmul.mubr.f32.gmra.mrb[0].mxu0 %v7370
    %v7469 = vpop.f32.mrb[0].mxu0
    %v7470 = vadd.f32 0.0, %v7469
    %v7471 = vpop.f32.mrb[0].mxu0
    %7472 = vmatprep.mubr.f32.mxu0 0.0
    %7473 = vmatmul.mubr.f32.gmra.mrb[0].mxu0 %v7373
    %v7474 = vpop.f32.mrb[0].mxu0
    %v7475 = vadd.f32 0.0, %v7474
    %v7476 = vpop.f32.mrb[0].mxu0
    %7477 = vmatprep.mubr.f32.mxu0 0.0
    %7478 = vmatmul.mubr.f32.gmra.mrb[0].mxu0 %v7376
    %v7479 = vpop.f32.mrb[0].mxu0
    %v7480 = vadd.f32 0.0, %v7479
    %v7481 = vpop.f32.mrb[0].mxu0
    %7482 = vdwg.mxu0
    %7491 = vrot.lane.b32.xlu0 %v7445, 24
    %v7492 = vpop.permute.xlu0 %7491
    %7493 = vrot.lane.b32.xlu0 %v7450, 24
    %v7494 = vpop.permute.xlu0 %7493
    %7495 = vrot.lane.b32.xlu0 %v7455, 24
    %v7496 = vpop.permute.xlu0 %7495
    %7497 = vrot.lane.b32.xlu0 %v7460, 24
    %v7498 = vpop.permute.xlu0 %7497
    %7499 = vrot.lane.b32.xlu0 %v7465, 24
    %v7500 = vpop.permute.xlu0 %7499
    %7501 = vrot.lane.b32.xlu0 %v7470, 24
    %v7502 = vpop.permute.xlu0 %7501
    %7503 = vrot.lane.b32.xlu0 %v7475, 24
    %v7504 = vpop.permute.xlu0 %7503
    %7505 = vrot.lane.b32.xlu0 %v7480, 24
    %v7506 = vpop.permute.xlu0 %7505
    %7515 = vst.msk [vmem:[#allocation2] sm:$0xff] %vm2603, %v7492
    %7516 = vst.msk [vmem:[#allocation2 + $0x8] sm:$0xff] %vm2603, %v7494
    %7517 = vst.msk [vmem:[#allocation2 + $0x10] sm:$0xff] %vm2603, %v7496
    %7518 = vst.msk [vmem:[#allocation2 + $0x18] sm:$0xff] %vm2603, %v7498
    %7519 = vst.msk [vmem:[#allocation2 + $0x20] sm:$0xff] %vm2603, %v7500
    %7520 = vst.msk [vmem:[#allocation2 + $0x28] sm:$0xff] %vm2603, %v7502
    %7521 = vst.msk [vmem:[#allocation2 + $0x30] sm:$0xff] %vm2603, %v7504
    %7522 = vst.msk [vmem:[#allocation2 + $0x38] sm:$0xff] %vm2603, %v7506
    %7531 = vrot.lane.b32.xlu0 %v5725, 96
    %v7532 = vpop.permute.xlu0 %7531
    %7533 = vrot.lane.b32.xlu0 %v5730, 96
    %v7534 = vpop.permute.xlu0 %7533
    %7535 = vrot.lane.b32.xlu0 %v5735, 96
    %v7536 = vpop.permute.xlu0 %7535
    %7537 = vrot.lane.b32.xlu0 %v5740, 96
    %v7538 = vpop.permute.xlu0 %7537
    %7539 = vrot.lane.b32.xlu0 %v5745, 96
    %v7540 = vpop.permute.xlu0 %7539
    %7541 = vrot.lane.b32.xlu0 %v5750, 96
    %v7542 = vpop.permute.xlu0 %7541
    %7543 = vrot.lane.b32.xlu0 %v5755, 96
    %v7544 = vpop.permute.xlu0 %7543
    %7545 = vrot.lane.b32.xlu0 %v5760, 96
    %v7546 = vpop.permute.xlu0 %7545
    %v7547 = vsel %vm871, %v5725, 0
    %v7549 = vsel %vm871, %v5730, 0
    %v7551 = vsel %vm871, %v5735, 0
    %v7553 = vsel %vm871, %v5740, 0
    %v7555 = vsel %vm871, %v5745, 0
    %v7557 = vsel %vm871, %v5750, 0
    %v7559 = vsel %vm871, %v5755, 0
    %v7561 = vsel %vm871, %v5760, 0
    %v7563 = vsel %vm871, %v7532, 0
    %v7565 = vsel %vm871, %v7534, 0
    %v7567 = vsel %vm871, %v7536, 0
    %v7569 = vsel %vm871, %v7538, 0
    %v7571 = vsel %vm871, %v7540, 0
    %v7573 = vsel %vm871, %v7542, 0
    %v7575 = vsel %vm871, %v7544, 0
    %v7577 = vsel %vm871, %v7546, 0
    %7579 = vmatprep.subr.mxu0 0.0
    %7580 = vmatpush1.xpose.msra.mxu0 %v7563
    %7581 = vmatprep.subr.mxu0 0.0
    %7582 = vmatpush1.xpose.msra.mxu0 %v7565
    %7583 = vmatprep.subr.mxu0 0.0
    %7584 = vmatpush1.xpose.msra.mxu0 %v7567
    %7585 = vmatprep.subr.mxu0 0.0
    %7586 = vmatpush1.xpose.msra.mxu0 %v7569
    %7587 = vmatprep.subr.mxu0 0.0
    %7588 = vmatpush1.xpose.msra.mxu0 %v7571
    %7589 = vmatprep.subr.mxu0 0.0
    %7590 = vmatpush1.xpose.msra.mxu0 %v7573
    %7591 = vmatprep.subr.mxu0 0.0
    %7592 = vmatpush1.xpose.msra.mxu0 %v7575
    %7593 = vmatprep.subr.mxu0 0.0
    %7594 = vmatpush1.xpose.msra.mxu0 %v7577
    %7595 = vmatprep.subr.mxu0 0.0
    %7596 = vmatpush1.xpose.msra.mxu0 0.0
    %7597 = vmatprep.subr.mxu0 0.0
    %7598 = vmatpush1.xpose.msra.mxu0 0.0
    %7599 = vmatprep.subr.mxu0 0.0
    %7600 = vmatpush1.xpose.msra.mxu0 0.0
    %7601 = vmatprep.subr.mxu0 0.0
    %7602 = vmatpush1.xpose.msra.mxu0 0.0
    %7603 = vmatprep.subr.mxu0 0.0
    %7604 = vmatpush1.xpose.msra.mxu0 0.0
    %7605 = vmatprep.subr.mxu0 0.0
    %7606 = vmatpush1.xpose.msra.mxu0 0.0
    %7607 = vmatprep.subr.mxu0 0.0
    %7608 = vmatpush1.xpose.msra.mxu0 0.0
    %7609 = vmatprep.subr.mxu0 0.0
    %7610 = vmatpush1.xpose.msra.mxu0 0.0
    %7611 = vmatprep.subr.mxu0 0.0
    %7612 = vmatpush1.xpose.msra.mxu0 0.0
    %7613 = vmatprep.subr.mxu0 0.0
    %7614 = vmatpush1.xpose.msra.mxu0 0.0
    %7615 = vmatprep.subr.mxu0 0.0
    %7616 = vmatpush1.xpose.msra.mxu0 0.0
    %7617 = vmatprep.subr.mxu0 0.0
    %7618 = vmatpush1.xpose.msra.mxu0 0.0
    %7619 = vmatprep.subr.mxu0 0.0
    %7620 = vmatpush1.xpose.msra.mxu0 0.0
    %7621 = vmatprep.subr.mxu0 0.0
    %7622 = vmatpush1.xpose.msra.mxu0 0.0
    %7623 = vmatprep.subr.mxu0 0.0
    %7624 = vmatpush1.xpose.msra.mxu0 0.0
    %7625 = vmatprep.subr.mxu0 0.0
    %7626 = vmatpush1.xpose.msra.mxu0 0.0
    %7627 = vmatprep.subr.mxu0 0.0
    %7628 = vmatpush1.xpose.msra.mxu0 0.0
    %7629 = vmatprep.subr.mxu0 0.0
    %7630 = vmatpush1.xpose.msra.mxu0 0.0
    %7631 = vmatprep.subr.mxu0 0.0
    %7632 = vmatpush1.xpose.msra.mxu0 0.0
    %7633 = vmatprep.subr.mxu0 0.0
    %7634 = vmatpush1.xpose.msra.mxu0 0.0
    %7635 = vmatprep.subr.mxu0 0.0
    %7636 = vmatpush1.xpose.msra.mxu0 0.0
    %7637 = vmatprep.subr.mxu0 0.0
    %7638 = vmatpush1.xpose.msra.mxu0 0.0
    %7639 = vmatprep.subr.mxu0 0.0
    %7640 = vmatpush1.xpose.msra.mxu0 0.0
    %7641 = vmatprep.subr.mxu0 0.0
    %7642 = vmatpush1.xpose.msra.mxu0 0.0
    %7643 = vmatprep.mubr.f32.mxu0 0.0
    %7644 = vmatmul.mubr.f32.gmra.mrb[0].mxu0 %v7547
    %v7645 = vpop.f32.mrb[0].mxu0
    %v7646 = vadd.f32 0.0, %v7645
    %v7647 = vpop.f32.mrb[0].mxu0
    %7648 = vmatprep.mubr.f32.mxu0 0.0
    %7649 = vmatmul.mubr.f32.gmra.mrb[0].mxu0 %v7549
    %v7650 = vpop.f32.mrb[0].mxu0
    %v7651 = vadd.f32 0.0, %v7650
    %v7652 = vpop.f32.mrb[0].mxu0
    %7653 = vmatprep.mubr.f32.mxu0 0.0
    %7654 = vmatmul.mubr.f32.gmra.mrb[0].mxu0 %v7551
    %v7655 = vpop.f32.mrb[0].mxu0
    %v7656 = vadd.f32 0.0, %v7655
    %v7657 = vpop.f32.mrb[0].mxu0
    %7658 = vmatprep.mubr.f32.mxu0 0.0
    %7659 = vmatmul.mubr.f32.gmra.mrb[0].mxu0 %v7553
    %v7660 = vpop.f32.mrb[0].mxu0
    %v7661 = vadd.f32 0.0, %v7660
    %v7662 = vpop.f32.mrb[0].mxu0
    %7663 = vmatprep.mubr.f32.mxu0 0.0
    %7664 = vmatmul.mubr.f32.gmra.mrb[0].mxu0 %v7555
    %v7665 = vpop.f32.mrb[0].mxu0
    %v7666 = vadd.f32 0.0, %v7665
    %v7667 = vpop.f32.mrb[0].mxu0
    %7668 = vmatprep.mubr.f32.mxu0 0.0
    %7669 = vmatmul.mubr.f32.gmra.mrb[0].mxu0 %v7557
    %v7670 = vpop.f32.mrb[0].mxu0
    %v7671 = vadd.f32 0.0, %v7670
    %v7672 = vpop.f32.mrb[0].mxu0
    %7673 = vmatprep.mubr.f32.mxu0 0.0
    %7674 = vmatmul.mubr.f32.gmra.mrb[0].mxu0 %v7559
    %v7675 = vpop.f32.mrb[0].mxu0
    %v7676 = vadd.f32 0.0, %v7675
    %v7677 = vpop.f32.mrb[0].mxu0
    %7678 = vmatprep.mubr.f32.mxu0 0.0
    %7679 = vmatmul.mubr.f32.gmra.mrb[0].mxu0 %v7561
    %v7680 = vpop.f32.mrb[0].mxu0
    %v7681 = vadd.f32 0.0, %v7680
    %v7682 = vpop.f32.mrb[0].mxu0
    %7683 = vdwg.mxu0
    %v7684 = vsel %vm1009, %v7646, -inf
    %7685 = vmax.xlane.f32.xlu0 %v7684
    %v7686 = vpop.xlane.xlu0 %7685
    %v7687 = vsel %vm1009, %v7651, -inf
    %7688 = vmax.xlane.f32.xlu0 %v7687
    %v7689 = vpop.xlane.xlu0 %7688
    %v7690 = vsel %vm1009, %v7656, -inf
    %7691 = vmax.xlane.f32.xlu0 %v7690
    %v7692 = vpop.xlane.xlu0 %7691
    %v7693 = vsel %vm1009, %v7661, -inf
    %7694 = vmax.xlane.f32.xlu0 %v7693
    %v7695 = vpop.xlane.xlu0 %7694
    %v7696 = vsel %vm1009, %v7666, -inf
    %7697 = vmax.xlane.f32.xlu0 %v7696
    %v7698 = vpop.xlane.xlu0 %7697
    %v7699 = vsel %vm1009, %v7671, -inf
    %7700 = vmax.xlane.f32.xlu0 %v7699
    %v7701 = vpop.xlane.xlu0 %7700
    %v7702 = vsel %vm1009, %v7676, -inf
    %7703 = vmax.xlane.f32.xlu0 %v7702
    %v7704 = vpop.xlane.xlu0 %7703
    %v7705 = vsel %vm1009, %v7681, -inf
    %7706 = vmax.xlane.f32.xlu0 %v7705
    %v7707 = vpop.xlane.xlu0 %7706
    %v7708 = vsub.f32 %v7646, %v7686
    %v7709 = vsub.f32 %v7651, %v7689
    %v7710 = vsub.f32 %v7656, %v7692
    %v7711 = vsub.f32 %v7661, %v7695
    %v7712 = vsub.f32 %v7666, %v7698
    %v7713 = vsub.f32 %v7671, %v7701
    %v7714 = vsub.f32 %v7676, %v7704
    %v7715 = vsub.f32 %v7681, %v7707
    %v7716 = vmul.f32 %v7708, 1.442695
    %v7717 = vpow.pop %v7716
    %v7718 = vmul.f32 %v7709, 1.442695
    %v7719 = vpow.pop %v7718
    %v7720 = vmul.f32 %v7710, 1.442695
    %v7721 = vpow.pop %v7720
    %v7722 = vmul.f32 %v7711, 1.442695
    %v7723 = vpow.pop %v7722
    %v7724 = vmul.f32 %v7712, 1.442695
    %v7725 = vpow.pop %v7724
    %v7726 = vmul.f32 %v7713, 1.442695
    %v7727 = vpow.pop %v7726
    %v7728 = vmul.f32 %v7714, 1.442695
    %v7729 = vpow.pop %v7728
    %v7730 = vmul.f32 %v7715, 1.442695
    %v7731 = vpow.pop %v7730
    %v7732 = vsel %vm1009, %v7717, 0.0
    %7733 = vadd.xlane.f32.xlu0 %v7732
    %v7734 = vpop.xlane.xlu0 %7733
    %v7735 = vsel %vm1009, %v7719, 0.0
    %7736 = vadd.xlane.f32.xlu0 %v7735
    %v7737 = vpop.xlane.xlu0 %7736
    %v7738 = vsel %vm1009, %v7721, 0.0
    %7739 = vadd.xlane.f32.xlu0 %v7738
    %v7740 = vpop.xlane.xlu0 %7739
    %v7741 = vsel %vm1009, %v7723, 0.0
    %7742 = vadd.xlane.f32.xlu0 %v7741
    %v7743 = vpop.xlane.xlu0 %7742
    %v7744 = vsel %vm1009, %v7725, 0.0
    %7745 = vadd.xlane.f32.xlu0 %v7744
    %v7746 = vpop.xlane.xlu0 %7745
    %v7747 = vsel %vm1009, %v7727, 0.0
    %7748 = vadd.xlane.f32.xlu0 %v7747
    %v7749 = vpop.xlane.xlu0 %7748
    %v7750 = vsel %vm1009, %v7729, 0.0
    %7751 = vadd.xlane.f32.xlu0 %v7750
    %v7752 = vpop.xlane.xlu0 %7751
    %v7753 = vsel %vm1009, %v7731, 0.0
    %7754 = vadd.xlane.f32.xlu0 %v7753
    %v7755 = vpop.xlane.xlu0 %7754
    %v7756 = vrcp.pop %v7734
    %v7757 = vrcp.pop %v7737
    %v7758 = vrcp.pop %v7740
    %v7759 = vrcp.pop %v7743
    %v7760 = vrcp.pop %v7746
    %v7761 = vrcp.pop %v7749
    %v7762 = vrcp.pop %v7752
    %v7763 = vrcp.pop %v7755
    %v7764 = vmul.f32 %v7717, %v7756
    %v7765 = vmul.f32 %v7719, %v7757
    %v7766 = vmul.f32 %v7721, %v7758
    %v7767 = vmul.f32 %v7723, %v7759
    %v7768 = vmul.f32 %v7725, %v7760
    %v7769 = vmul.f32 %v7727, %v7761
    %v7770 = vmul.f32 %v7729, %v7762
    %v7771 = vmul.f32 %v7731, %v7763
    %7772 = vrot.lane.b32.xlu0 %v5725, 64
    %v7773 = vpop.permute.xlu0 %7772
    %7774 = vrot.lane.b32.xlu0 %v5730, 64
    %v7775 = vpop.permute.xlu0 %7774
    %7776 = vrot.lane.b32.xlu0 %v5735, 64
    %v7777 = vpop.permute.xlu0 %7776
    %7778 = vrot.lane.b32.xlu0 %v5740, 64
    %v7779 = vpop.permute.xlu0 %7778
    %7780 = vrot.lane.b32.xlu0 %v5745, 64
    %v7781 = vpop.permute.xlu0 %7780
    %7782 = vrot.lane.b32.xlu0 %v5750, 64
    %v7783 = vpop.permute.xlu0 %7782
    %7784 = vrot.lane.b32.xlu0 %v5755, 64
    %v7785 = vpop.permute.xlu0 %7784
    %7786 = vrot.lane.b32.xlu0 %v5760, 64
    %v7787 = vpop.permute.xlu0 %7786
    %v7797 = vsel %vm1009, %v7764, 0
    %v7800 = vsel %vm1009, %v7765, 0
    %v7803 = vsel %vm1009, %v7766, 0
    %v7806 = vsel %vm1009, %v7767, 0
    %v7809 = vsel %vm1009, %v7768, 0
    %v7812 = vsel %vm1009, %v7769, 0
    %v7815 = vsel %vm1009, %v7770, 0
    %v7818 = vsel %vm1009, %v7771, 0
    %7820 = vmatprep.subr.mxu0 0.0
    %7821 = vmatpush1.msra.mxu0 %v7773
    %7822 = vmatprep.subr.mxu0 0.0
    %7823 = vmatpush1.msra.mxu0 %v7775
    %7824 = vmatprep.subr.mxu0 0.0
    %7825 = vmatpush1.msra.mxu0 %v7777
    %7826 = vmatprep.subr.mxu0 0.0
    %7827 = vmatpush1.msra.mxu0 %v7779
    %7828 = vmatprep.subr.mxu0 0.0
    %7829 = vmatpush1.msra.mxu0 %v7781
    %7830 = vmatprep.subr.mxu0 0.0
    %7831 = vmatpush1.msra.mxu0 %v7783
    %7832 = vmatprep.subr.mxu0 0.0
    %7833 = vmatpush1.msra.mxu0 %v7785
    %7834 = vmatprep.subr.mxu0 0.0
    %7835 = vmatpush1.msra.mxu0 %v7787
    %7836 = vmatprep.subr.mxu0 0.0
    %7837 = vmatpush1.msra.mxu0 0.0
    %7838 = vmatprep.subr.mxu0 0.0
    %7839 = vmatpush1.msra.mxu0 0.0
    %7840 = vmatprep.subr.mxu0 0.0
    %7841 = vmatpush1.msra.mxu0 0.0
    %7842 = vmatprep.subr.mxu0 0.0
    %7843 = vmatpush1.msra.mxu0 0.0
    %7844 = vmatprep.subr.mxu0 0.0
    %7845 = vmatpush1.msra.mxu0 0.0
    %7846 = vmatprep.subr.mxu0 0.0
    %7847 = vmatpush1.msra.mxu0 0.0
    %7848 = vmatprep.subr.mxu0 0.0
    %7849 = vmatpush1.msra.mxu0 0.0
    %7850 = vmatprep.subr.mxu0 0.0
    %7851 = vmatpush1.msra.mxu0 0.0
    %7852 = vmatprep.subr.mxu0 0.0
    %7853 = vmatpush1.msra.mxu0 0.0
    %7854 = vmatprep.subr.mxu0 0.0
    %7855 = vmatpush1.msra.mxu0 0.0
    %7856 = vmatprep.subr.mxu0 0.0
    %7857 = vmatpush1.msra.mxu0 0.0
    %7858 = vmatprep.subr.mxu0 0.0
    %7859 = vmatpush1.msra.mxu0 0.0
    %7860 = vmatprep.subr.mxu0 0.0
    %7861 = vmatpush1.msra.mxu0 0.0
    %7862 = vmatprep.subr.mxu0 0.0
    %7863 = vmatpush1.msra.mxu0 0.0
    %7864 = vmatprep.subr.mxu0 0.0
    %7865 = vmatpush1.msra.mxu0 0.0
    %7866 = vmatprep.subr.mxu0 0.0
    %7867 = vmatpush1.msra.mxu0 0.0
    %7868 = vmatprep.subr.mxu0 0.0
    %7869 = vmatpush1.msra.mxu0 0.0
    %7870 = vmatprep.subr.mxu0 0.0
    %7871 = vmatpush1.msra.mxu0 0.0
    %7872 = vmatprep.subr.mxu0 0.0
    %7873 = vmatpush1.msra.mxu0 0.0
    %7874 = vmatprep.subr.mxu0 0.0
    %7875 = vmatpush1.msra.mxu0 0.0
    %7876 = vmatprep.subr.mxu0 0.0
    %7877 = vmatpush1.msra.mxu0 0.0
    %7878 = vmatprep.subr.mxu0 0.0
    %7879 = vmatpush1.msra.mxu0 0.0
    %7880 = vmatprep.subr.mxu0 0.0
    %7881 = vmatpush1.msra.mxu0 0.0
    %7882 = vmatprep.subr.mxu0 0.0
    %7883 = vmatpush1.msra.mxu0 0.0
    %7884 = vmatprep.mubr.f32.mxu0 0.0
    %7885 = vmatmul.mubr.f32.gmra.mrb[0].mxu0 %v7797
    %v7886 = vpop.f32.mrb[0].mxu0
    %v7887 = vadd.f32 0.0, %v7886
    %v7888 = vpop.f32.mrb[0].mxu0
    %7889 = vmatprep.mubr.f32.mxu0 0.0
    %7890 = vmatmul.mubr.f32.gmra.mrb[0].mxu0 %v7800
    %v7891 = vpop.f32.mrb[0].mxu0
    %v7892 = vadd.f32 0.0, %v7891
    %v7893 = vpop.f32.mrb[0].mxu0
    %7894 = vmatprep.mubr.f32.mxu0 0.0
    %7895 = vmatmul.mubr.f32.gmra.mrb[0].mxu0 %v7803
    %v7896 = vpop.f32.mrb[0].mxu0
    %v7897 = vadd.f32 0.0, %v7896
    %v7898 = vpop.f32.mrb[0].mxu0
    %7899 = vmatprep.mubr.f32.mxu0 0.0
    %7900 = vmatmul.mubr.f32.gmra.mrb[0].mxu0 %v7806
    %v7901 = vpop.f32.mrb[0].mxu0
    %v7902 = vadd.f32 0.0, %v7901
    %v7903 = vpop.f32.mrb[0].mxu0
    %7904 = vmatprep.mubr.f32.mxu0 0.0
    %7905 = vmatmul.mubr.f32.gmra.mrb[0].mxu0 %v7809
    %v7906 = vpop.f32.mrb[0].mxu0
    %v7907 = vadd.f32 0.0, %v7906
    %v7908 = vpop.f32.mrb[0].mxu0
    %7909 = vmatprep.mubr.f32.mxu0 0.0
    %7910 = vmatmul.mubr.f32.gmra.mrb[0].mxu0 %v7812
    %v7911 = vpop.f32.mrb[0].mxu0
    %v7912 = vadd.f32 0.0, %v7911
    %v7913 = vpop.f32.mrb[0].mxu0
    %7914 = vmatprep.mubr.f32.mxu0 0.0
    %7915 = vmatmul.mubr.f32.gmra.mrb[0].mxu0 %v7815
    %v7916 = vpop.f32.mrb[0].mxu0
    %v7917 = vadd.f32 0.0, %v7916
    %v7918 = vpop.f32.mrb[0].mxu0
    %7919 = vmatprep.mubr.f32.mxu0 0.0
    %7920 = vmatmul.mubr.f32.gmra.mrb[0].mxu0 %v7818
    %v7921 = vpop.f32.mrb[0].mxu0
    %v7922 = vadd.f32 0.0, %v7921
    %v7923 = vpop.f32.mrb[0].mxu0
    %7924 = vdwg.mxu0
    %7925 = vst.msk [vmem:[#allocation2 + $0x40] sm:$0xff] %vm871, %v7887
    %7926 = vst.msk [vmem:[#allocation2 + $0x48] sm:$0xff] %vm871, %v7892
    %7927 = vst.msk [vmem:[#allocation2 + $0x50] sm:$0xff] %vm871, %v7897
    %7928 = vst.msk [vmem:[#allocation2 + $0x58] sm:$0xff] %vm871, %v7902
    %7929 = vst.msk [vmem:[#allocation2 + $0x60] sm:$0xff] %vm871, %v7907
    %7930 = vst.msk [vmem:[#allocation2 + $0x68] sm:$0xff] %vm871, %v7912
    %7931 = vst.msk [vmem:[#allocation2 + $0x70] sm:$0xff] %vm871, %v7917
    %7932 = vst.msk [vmem:[#allocation2 + $0x78] sm:$0xff] %vm871, %v7922
    %7933 = vrot.lane.b32.xlu0 %v5725, 120
    %v7934 = vpop.permute.xlu0 %7933
    %7935 = vrot.lane.b32.xlu0 %v5730, 120
    %v7936 = vpop.permute.xlu0 %7935
    %7937 = vrot.lane.b32.xlu0 %v5735, 120
    %v7938 = vpop.permute.xlu0 %7937
    %7939 = vrot.lane.b32.xlu0 %v5740, 120
    %v7940 = vpop.permute.xlu0 %7939
    %7941 = vrot.lane.b32.xlu0 %v5745, 120
    %v7942 = vpop.permute.xlu0 %7941
    %7943 = vrot.lane.b32.xlu0 %v5750, 120
    %v7944 = vpop.permute.xlu0 %7943
    %7945 = vrot.lane.b32.xlu0 %v5755, 120
    %v7946 = vpop.permute.xlu0 %7945
    %7947 = vrot.lane.b32.xlu0 %v5760, 120
    %v7948 = vpop.permute.xlu0 %7947
    %7949 = vrot.lane.b32.xlu0 %v5725, 88
    %v7950 = vpop.permute.xlu0 %7949
    %7951 = vrot.lane.b32.xlu0 %v5730, 88
    %v7952 = vpop.permute.xlu0 %7951
    %7953 = vrot.lane.b32.xlu0 %v5735, 88
    %v7954 = vpop.permute.xlu0 %7953
    %7955 = vrot.lane.b32.xlu0 %v5740, 88
    %v7956 = vpop.permute.xlu0 %7955
    %7957 = vrot.lane.b32.xlu0 %v5745, 88
    %v7958 = vpop.permute.xlu0 %7957
    %7959 = vrot.lane.b32.xlu0 %v5750, 88
    %v7960 = vpop.permute.xlu0 %7959
    %7961 = vrot.lane.b32.xlu0 %v5755, 88
    %v7962 = vpop.permute.xlu0 %7961
    %7963 = vrot.lane.b32.xlu0 %v5760, 88
    %v7964 = vpop.permute.xlu0 %7963
    %v7965 = vsel %vm871, %v7934, 0
    %v7967 = vsel %vm871, %v7936, 0
    %v7969 = vsel %vm871, %v7938, 0
    %v7971 = vsel %vm871, %v7940, 0
    %v7973 = vsel %vm871, %v7942, 0
    %v7975 = vsel %vm871, %v7944, 0
    %v7977 = vsel %vm871, %v7946, 0
    %v7979 = vsel %vm871, %v7948, 0
    %v7981 = vsel %vm871, %v7950, 0
    %v7983 = vsel %vm871, %v7952, 0
    %v7985 = vsel %vm871, %v7954, 0
    %v7987 = vsel %vm871, %v7956, 0
    %v7989 = vsel %vm871, %v7958, 0
    %v7991 = vsel %vm871, %v7960, 0
    %v7993 = vsel %vm871, %v7962, 0
    %v7995 = vsel %vm871, %v7964, 0
    %7997 = vmatprep.subr.mxu0 0.0
    %7998 = vmatpush1.xpose.msra.mxu0 %v7981
    %7999 = vmatprep.subr.mxu0 0.0
    %8000 = vmatpush1.xpose.msra.mxu0 %v7983
    %8001 = vmatprep.subr.mxu0 0.0
    %8002 = vmatpush1.xpose.msra.mxu0 %v7985
    %8003 = vmatprep.subr.mxu0 0.0
    %8004 = vmatpush1.xpose.msra.mxu0 %v7987
    %8005 = vmatprep.subr.mxu0 0.0
    %8006 = vmatpush1.xpose.msra.mxu0 %v7989
    %8007 = vmatprep.subr.mxu0 0.0
    %8008 = vmatpush1.xpose.msra.mxu0 %v7991
    %8009 = vmatprep.subr.mxu0 0.0
    %8010 = vmatpush1.xpose.msra.mxu0 %v7993
    %8011 = vmatprep.subr.mxu0 0.0
    %8012 = vmatpush1.xpose.msra.mxu0 %v7995
    %8013 = vmatprep.subr.mxu0 0.0
    %8014 = vmatpush1.xpose.msra.mxu0 0.0
    %8015 = vmatprep.subr.mxu0 0.0
    %8016 = vmatpush1.xpose.msra.mxu0 0.0
    %8017 = vmatprep.subr.mxu0 0.0
    %8018 = vmatpush1.xpose.msra.mxu0 0.0
    %8019 = vmatprep.subr.mxu0 0.0
    %8020 = vmatpush1.xpose.msra.mxu0 0.0
    %8021 = vmatprep.subr.mxu0 0.0
    %8022 = vmatpush1.xpose.msra.mxu0 0.0
    %8023 = vmatprep.subr.mxu0 0.0
    %8024 = vmatpush1.xpose.msra.mxu0 0.0
    %8025 = vmatprep.subr.mxu0 0.0
    %8026 = vmatpush1.xpose.msra.mxu0 0.0
    %8027 = vmatprep.subr.mxu0 0.0
    %8028 = vmatpush1.xpose.msra.mxu0 0.0
    %8029 = vmatprep.subr.mxu0 0.0
    %8030 = vmatpush1.xpose.msra.mxu0 0.0
    %8031 = vmatprep.subr.mxu0 0.0
    %8032 = vmatpush1.xpose.msra.mxu0 0.0
    %8033 = vmatprep.subr.mxu0 0.0
    %8034 = vmatpush1.xpose.msra.mxu0 0.0
    %8035 = vmatprep.subr.mxu0 0.0
    %8036 = vmatpush1.xpose.msra.mxu0 0.0
    %8037 = vmatprep.subr.mxu0 0.0
    %8038 = vmatpush1.xpose.msra.mxu0 0.0
    %8039 = vmatprep.subr.mxu0 0.0
    %8040 = vmatpush1.xpose.msra.mxu0 0.0
    %8041 = vmatprep.subr.mxu0 0.0
    %8042 = vmatpush1.xpose.msra.mxu0 0.0
    %8043 = vmatprep.subr.mxu0 0.0
    %8044 = vmatpush1.xpose.msra.mxu0 0.0
    %8045 = vmatprep.subr.mxu0 0.0
    %8046 = vmatpush1.xpose.msra.mxu0 0.0
    %8047 = vmatprep.subr.mxu0 0.0
    %8048 = vmatpush1.xpose.msra.mxu0 0.0
    %8049 = vmatprep.subr.mxu0 0.0
    %8050 = vmatpush1.xpose.msra.mxu0 0.0
    %8051 = vmatprep.subr.mxu0 0.0
    %8052 = vmatpush1.xpose.msra.mxu0 0.0
    %8053 = vmatprep.subr.mxu0 0.0
    %8054 = vmatpush1.xpose.msra.mxu0 0.0
    %8055 = vmatprep.subr.mxu0 0.0
    %8056 = vmatpush1.xpose.msra.mxu0 0.0
    %8057 = vmatprep.subr.mxu0 0.0
    %8058 = vmatpush1.xpose.msra.mxu0 0.0
    %8059 = vmatprep.subr.mxu0 0.0
    %8060 = vmatpush1.xpose.msra.mxu0 0.0
    %8061 = vmatprep.mubr.f32.mxu0 0.0
    %8062 = vmatmul.mubr.f32.gmra.mrb[0].mxu0 %v7965
    %v8063 = vpop.f32.mrb[0].mxu0
    %v8064 = vadd.f32 0.0, %v8063
    %v8065 = vpop.f32.mrb[0].mxu0
    %8066 = vmatprep.mubr.f32.mxu0 0.0
    %8067 = vmatmul.mubr.f32.gmra.mrb[0].mxu0 %v7967
    %v8068 = vpop.f32.mrb[0].mxu0
    %v8069 = vadd.f32 0.0, %v8068
    %v8070 = vpop.f32.mrb[0].mxu0
    %8071 = vmatprep.mubr.f32.mxu0 0.0
    %8072 = vmatmul.mubr.f32.gmra.mrb[0].mxu0 %v7969
    %v8073 = vpop.f32.mrb[0].mxu0
    %v8074 = vadd.f32 0.0, %v8073
    %v8075 = vpop.f32.mrb[0].mxu0
    %8076 = vmatprep.mubr.f32.mxu0 0.0
    %8077 = vmatmul.mubr.f32.gmra.mrb[0].mxu0 %v7971
    %v8078 = vpop.f32.mrb[0].mxu0
    %v8079 = vadd.f32 0.0, %v8078
    %v8080 = vpop.f32.mrb[0].mxu0
    %8081 = vmatprep.mubr.f32.mxu0 0.0
    %8082 = vmatmul.mubr.f32.gmra.mrb[0].mxu0 %v7973
    %v8083 = vpop.f32.mrb[0].mxu0
    %v8084 = vadd.f32 0.0, %v8083
    %v8085 = vpop.f32.mrb[0].mxu0
    %8086 = vmatprep.mubr.f32.mxu0 0.0
    %8087 = vmatmul.mubr.f32.gmra.mrb[0].mxu0 %v7975
    %v8088 = vpop.f32.mrb[0].mxu0
    %v8089 = vadd.f32 0.0, %v8088
    %v8090 = vpop.f32.mrb[0].mxu0
    %8091 = vmatprep.mubr.f32.mxu0 0.0
    %8092 = vmatmul.mubr.f32.gmra.mrb[0].mxu0 %v7977
    %v8093 = vpop.f32.mrb[0].mxu0
    %v8094 = vadd.f32 0.0, %v8093
    %v8095 = vpop.f32.mrb[0].mxu0
    %8096 = vmatprep.mubr.f32.mxu0 0.0
    %8097 = vmatmul.mubr.f32.gmra.mrb[0].mxu0 %v7979
    %v8098 = vpop.f32.mrb[0].mxu0
    %v8099 = vadd.f32 0.0, %v8098
    %v8100 = vpop.f32.mrb[0].mxu0
    %8101 = vdwg.mxu0
    %v8102 = vsel %vm1009, %v8064, -inf
    %8103 = vmax.xlane.f32.xlu0 %v8102
    %v8104 = vpop.xlane.xlu0 %8103
    %v8105 = vsel %vm1009, %v8069, -inf
    %8106 = vmax.xlane.f32.xlu0 %v8105
    %v8107 = vpop.xlane.xlu0 %8106
    %v8108 = vsel %vm1009, %v8074, -inf
    %8109 = vmax.xlane.f32.xlu0 %v8108
    %v8110 = vpop.xlane.xlu0 %8109
    %v8111 = vsel %vm1009, %v8079, -inf
    %8112 = vmax.xlane.f32.xlu0 %v8111
    %v8113 = vpop.xlane.xlu0 %8112
    %v8114 = vsel %vm1009, %v8084, -inf
    %8115 = vmax.xlane.f32.xlu0 %v8114
    %v8116 = vpop.xlane.xlu0 %8115
    %v8117 = vsel %vm1009, %v8089, -inf
    %8118 = vmax.xlane.f32.xlu0 %v8117
    %v8119 = vpop.xlane.xlu0 %8118
    %v8120 = vsel %vm1009, %v8094, -inf
    %8121 = vmax.xlane.f32.xlu0 %v8120
    %v8122 = vpop.xlane.xlu0 %8121
    %v8123 = vsel %vm1009, %v8099, -inf
    %8124 = vmax.xlane.f32.xlu0 %v8123
    %v8125 = vpop.xlane.xlu0 %8124
    %v8126 = vsub.f32 %v8064, %v8104
    %v8127 = vsub.f32 %v8069, %v8107
    %v8128 = vsub.f32 %v8074, %v8110
    %v8129 = vsub.f32 %v8079, %v8113
    %v8130 = vsub.f32 %v8084, %v8116
    %v8131 = vsub.f32 %v8089, %v8119
    %v8132 = vsub.f32 %v8094, %v8122
    %v8133 = vsub.f32 %v8099, %v8125
    %v8134 = vmul.f32 %v8126, 1.442695
    %v8135 = vpow.pop %v8134
    %v8136 = vmul.f32 %v8127, 1.442695
    %v8137 = vpow.pop %v8136
    %v8138 = vmul.f32 %v8128, 1.442695
    %v8139 = vpow.pop %v8138
    %v8140 = vmul.f32 %v8129, 1.442695
    %v8141 = vpow.pop %v8140
    %v8142 = vmul.f32 %v8130, 1.442695
    %v8143 = vpow.pop %v8142
    %v8144 = vmul.f32 %v8131, 1.442695
    %v8145 = vpow.pop %v8144
    %v8146 = vmul.f32 %v8132, 1.442695
    %v8147 = vpow.pop %v8146
    %v8148 = vmul.f32 %v8133, 1.442695
    %v8149 = vpow.pop %v8148
    %v8150 = vsel %vm1009, %v8135, 0.0
    %8151 = vadd.xlane.f32.xlu0 %v8150
    %v8152 = vpop.xlane.xlu0 %8151
    %v8153 = vsel %vm1009, %v8137, 0.0
    %8154 = vadd.xlane.f32.xlu0 %v8153
    %v8155 = vpop.xlane.xlu0 %8154
    %v8156 = vsel %vm1009, %v8139, 0.0
    %8157 = vadd.xlane.f32.xlu0 %v8156
    %v8158 = vpop.xlane.xlu0 %8157
    %v8159 = vsel %vm1009, %v8141, 0.0
    %8160 = vadd.xlane.f32.xlu0 %v8159
    %v8161 = vpop.xlane.xlu0 %8160
    %v8162 = vsel %vm1009, %v8143, 0.0
    %8163 = vadd.xlane.f32.xlu0 %v8162
    %v8164 = vpop.xlane.xlu0 %8163
    %v8165 = vsel %vm1009, %v8145, 0.0
    %8166 = vadd.xlane.f32.xlu0 %v8165
    %v8167 = vpop.xlane.xlu0 %8166
    %v8168 = vsel %vm1009, %v8147, 0.0
    %8169 = vadd.xlane.f32.xlu0 %v8168
    %v8170 = vpop.xlane.xlu0 %8169
    %v8171 = vsel %vm1009, %v8149, 0.0
    %8172 = vadd.xlane.f32.xlu0 %v8171
    %v8173 = vpop.xlane.xlu0 %8172
    %v8174 = vrcp.pop %v8152
    %v8175 = vrcp.pop %v8155
    %v8176 = vrcp.pop %v8158
    %v8177 = vrcp.pop %v8161
    %v8178 = vrcp.pop %v8164
    %v8179 = vrcp.pop %v8167
    %v8180 = vrcp.pop %v8170
    %v8181 = vrcp.pop %v8173
    %v8182 = vmul.f32 %v8135, %v8174
    %v8183 = vmul.f32 %v8137, %v8175
    %v8184 = vmul.f32 %v8139, %v8176
    %v8185 = vmul.f32 %v8141, %v8177
    %v8186 = vmul.f32 %v8143, %v8178
    %v8187 = vmul.f32 %v8145, %v8179
    %v8188 = vmul.f32 %v8147, %v8180
    %v8189 = vmul.f32 %v8149, %v8181
    %8190 = vrot.lane.b32.xlu0 %v5725, 56
    %v8191 = vpop.permute.xlu0 %8190
    %8192 = vrot.lane.b32.xlu0 %v5730, 56
    %v8193 = vpop.permute.xlu0 %8192
    %8194 = vrot.lane.b32.xlu0 %v5735, 56
    %v8195 = vpop.permute.xlu0 %8194
    %8196 = vrot.lane.b32.xlu0 %v5740, 56
    %v8197 = vpop.permute.xlu0 %8196
    %8198 = vrot.lane.b32.xlu0 %v5745, 56
    %v8199 = vpop.permute.xlu0 %8198
    %8200 = vrot.lane.b32.xlu0 %v5750, 56
    %v8201 = vpop.permute.xlu0 %8200
    %8202 = vrot.lane.b32.xlu0 %v5755, 56
    %v8203 = vpop.permute.xlu0 %8202
    %8204 = vrot.lane.b32.xlu0 %v5760, 56
    %v8205 = vpop.permute.xlu0 %8204
    %v8215 = vsel %vm1009, %v8182, 0
    %v8218 = vsel %vm1009, %v8183, 0
    %v8221 = vsel %vm1009, %v8184, 0
    %v8224 = vsel %vm1009, %v8185, 0
    %v8227 = vsel %vm1009, %v8186, 0
    %v8230 = vsel %vm1009, %v8187, 0
    %v8233 = vsel %vm1009, %v8188, 0
    %v8236 = vsel %vm1009, %v8189, 0
    %8238 = vmatprep.subr.mxu0 0.0
    %8239 = vmatpush1.msra.mxu0 %v8191
    %8240 = vmatprep.subr.mxu0 0.0
    %8241 = vmatpush1.msra.mxu0 %v8193
    %8242 = vmatprep.subr.mxu0 0.0
    %8243 = vmatpush1.msra.mxu0 %v8195
    %8244 = vmatprep.subr.mxu0 0.0
    %8245 = vmatpush1.msra.mxu0 %v8197
    %8246 = vmatprep.subr.mxu0 0.0
    %8247 = vmatpush1.msra.mxu0 %v8199
    %8248 = vmatprep.subr.mxu0 0.0
    %8249 = vmatpush1.msra.mxu0 %v8201
    %8250 = vmatprep.subr.mxu0 0.0
    %8251 = vmatpush1.msra.mxu0 %v8203
    %8252 = vmatprep.subr.mxu0 0.0
    %8253 = vmatpush1.msra.mxu0 %v8205
    %8254 = vmatprep.subr.mxu0 0.0
    %8255 = vmatpush1.msra.mxu0 0.0
    %8256 = vmatprep.subr.mxu0 0.0
    %8257 = vmatpush1.msra.mxu0 0.0
    %8258 = vmatprep.subr.mxu0 0.0
    %8259 = vmatpush1.msra.mxu0 0.0
    %8260 = vmatprep.subr.mxu0 0.0
    %8261 = vmatpush1.msra.mxu0 0.0
    %8262 = vmatprep.subr.mxu0 0.0
    %8263 = vmatpush1.msra.mxu0 0.0
    %8264 = vmatprep.subr.mxu0 0.0
    %8265 = vmatpush1.msra.mxu0 0.0
    %8266 = vmatprep.subr.mxu0 0.0
    %8267 = vmatpush1.msra.mxu0 0.0
    %8268 = vmatprep.subr.mxu0 0.0
    %8269 = vmatpush1.msra.mxu0 0.0
    %8270 = vmatprep.subr.mxu0 0.0
    %8271 = vmatpush1.msra.mxu0 0.0
    %8272 = vmatprep.subr.mxu0 0.0
    %8273 = vmatpush1.msra.mxu0 0.0
    %8274 = vmatprep.subr.mxu0 0.0
    %8275 = vmatpush1.msra.mxu0 0.0
    %8276 = vmatprep.subr.mxu0 0.0
    %8277 = vmatpush1.msra.mxu0 0.0
    %8278 = vmatprep.subr.mxu0 0.0
    %8279 = vmatpush1.msra.mxu0 0.0
    %8280 = vmatprep.subr.mxu0 0.0
    %8281 = vmatpush1.msra.mxu0 0.0
    %8282 = vmatprep.subr.mxu0 0.0
    %8283 = vmatpush1.msra.mxu0 0.0
    %8284 = vmatprep.subr.mxu0 0.0
    %8285 = vmatpush1.msra.mxu0 0.0
    %8286 = vmatprep.subr.mxu0 0.0
    %8287 = vmatpush1.msra.mxu0 0.0
    %8288 = vmatprep.subr.mxu0 0.0
    %8289 = vmatpush1.msra.mxu0 0.0
    %8290 = vmatprep.subr.mxu0 0.0
    %8291 = vmatpush1.msra.mxu0 0.0
    %8292 = vmatprep.subr.mxu0 0.0
    %8293 = vmatpush1.msra.mxu0 0.0
    %8294 = vmatprep.subr.mxu0 0.0
    %8295 = vmatpush1.msra.mxu0 0.0
    %8296 = vmatprep.subr.mxu0 0.0
    %8297 = vmatpush1.msra.mxu0 0.0
    %8298 = vmatprep.subr.mxu0 0.0
    %8299 = vmatpush1.msra.mxu0 0.0
    %8300 = vmatprep.subr.mxu0 0.0
    %8301 = vmatpush1.msra.mxu0 0.0
    %8302 = vmatprep.mubr.f32.mxu0 0.0
    %8303 = vmatmul.mubr.f32.gmra.mrb[0].mxu0 %v8215
    %v8304 = vpop.f32.mrb[0].mxu0
    %v8305 = vadd.f32 0.0, %v8304
    %v8306 = vpop.f32.mrb[0].mxu0
    %8307 = vmatprep.mubr.f32.mxu0 0.0
    %8308 = vmatmul.mubr.f32.gmra.mrb[0].mxu0 %v8218
    %v8309 = vpop.f32.mrb[0].mxu0
    %v8310 = vadd.f32 0.0, %v8309
    %v8311 = vpop.f32.mrb[0].mxu0
    %8312 = vmatprep.mubr.f32.mxu0 0.0
    %8313 = vmatmul.mubr.f32.gmra.mrb[0].mxu0 %v8221
    %v8314 = vpop.f32.mrb[0].mxu0
    %v8315 = vadd.f32 0.0, %v8314
    %v8316 = vpop.f32.mrb[0].mxu0
    %8317 = vmatprep.mubr.f32.mxu0 0.0
    %8318 = vmatmul.mubr.f32.gmra.mrb[0].mxu0 %v8224
    %v8319 = vpop.f32.mrb[0].mxu0
    %v8320 = vadd.f32 0.0, %v8319
    %v8321 = vpop.f32.mrb[0].mxu0
    %8322 = vmatprep.mubr.f32.mxu0 0.0
    %8323 = vmatmul.mubr.f32.gmra.mrb[0].mxu0 %v8227
    %v8324 = vpop.f32.mrb[0].mxu0
    %v8325 = vadd.f32 0.0, %v8324
    %v8326 = vpop.f32.mrb[0].mxu0
    %8327 = vmatprep.mubr.f32.mxu0 0.0
    %8328 = vmatmul.mubr.f32.gmra.mrb[0].mxu0 %v8230
    %v8329 = vpop.f32.mrb[0].mxu0
    %v8330 = vadd.f32 0.0, %v8329
    %v8331 = vpop.f32.mrb[0].mxu0
    %8332 = vmatprep.mubr.f32.mxu0 0.0
    %8333 = vmatmul.mubr.f32.gmra.mrb[0].mxu0 %v8233
    %v8334 = vpop.f32.mrb[0].mxu0
    %v8335 = vadd.f32 0.0, %v8334
    %v8336 = vpop.f32.mrb[0].mxu0
    %8337 = vmatprep.mubr.f32.mxu0 0.0
    %8338 = vmatmul.mubr.f32.gmra.mrb[0].mxu0 %v8236
    %v8339 = vpop.f32.mrb[0].mxu0
    %v8340 = vadd.f32 0.0, %v8339
    %v8341 = vpop.f32.mrb[0].mxu0
    %8342 = vdwg.mxu0
    %8351 = vrot.lane.b32.xlu0 %v8305, 8
    %v8352 = vpop.permute.xlu0 %8351
    %8353 = vrot.lane.b32.xlu0 %v8310, 8
    %v8354 = vpop.permute.xlu0 %8353
    %8355 = vrot.lane.b32.xlu0 %v8315, 8
    %v8356 = vpop.permute.xlu0 %8355
    %8357 = vrot.lane.b32.xlu0 %v8320, 8
    %v8358 = vpop.permute.xlu0 %8357
    %8359 = vrot.lane.b32.xlu0 %v8325, 8
    %v8360 = vpop.permute.xlu0 %8359
    %8361 = vrot.lane.b32.xlu0 %v8330, 8
    %v8362 = vpop.permute.xlu0 %8361
    %8363 = vrot.lane.b32.xlu0 %v8335, 8
    %v8364 = vpop.permute.xlu0 %8363
    %8365 = vrot.lane.b32.xlu0 %v8340, 8
    %v8366 = vpop.permute.xlu0 %8365
    %8375 = vst.msk [vmem:[#allocation2 + $0x40] sm:$0xff] %vm1701, %v8352
    %8376 = vst.msk [vmem:[#allocation2 + $0x48] sm:$0xff] %vm1701, %v8354
    %8377 = vst.msk [vmem:[#allocation2 + $0x50] sm:$0xff] %vm1701, %v8356
    %8378 = vst.msk [vmem:[#allocation2 + $0x58] sm:$0xff] %vm1701, %v8358
    %8379 = vst.msk [vmem:[#allocation2 + $0x60] sm:$0xff] %vm1701, %v8360
    %8380 = vst.msk [vmem:[#allocation2 + $0x68] sm:$0xff] %vm1701, %v8362
    %8381 = vst.msk [vmem:[#allocation2 + $0x70] sm:$0xff] %vm1701, %v8364
    %8382 = vst.msk [vmem:[#allocation2 + $0x78] sm:$0xff] %vm1701, %v8366
    %8383 = vrot.lane.b32.xlu0 %v5725, 112
    %v8384 = vpop.permute.xlu0 %8383
    %8385 = vrot.lane.b32.xlu0 %v5730, 112
    %v8386 = vpop.permute.xlu0 %8385
    %8387 = vrot.lane.b32.xlu0 %v5735, 112
    %v8388 = vpop.permute.xlu0 %8387
    %8389 = vrot.lane.b32.xlu0 %v5740, 112
    %v8390 = vpop.permute.xlu0 %8389
    %8391 = vrot.lane.b32.xlu0 %v5745, 112
    %v8392 = vpop.permute.xlu0 %8391
    %8393 = vrot.lane.b32.xlu0 %v5750, 112
    %v8394 = vpop.permute.xlu0 %8393
    %8395 = vrot.lane.b32.xlu0 %v5755, 112
    %v8396 = vpop.permute.xlu0 %8395
    %8397 = vrot.lane.b32.xlu0 %v5760, 112
    %v8398 = vpop.permute.xlu0 %8397
    %8399 = vrot.lane.b32.xlu0 %v5725, 80
    %v8400 = vpop.permute.xlu0 %8399
    %8401 = vrot.lane.b32.xlu0 %v5730, 80
    %v8402 = vpop.permute.xlu0 %8401
    %8403 = vrot.lane.b32.xlu0 %v5735, 80
    %v8404 = vpop.permute.xlu0 %8403
    %8405 = vrot.lane.b32.xlu0 %v5740, 80
    %v8406 = vpop.permute.xlu0 %8405
    %8407 = vrot.lane.b32.xlu0 %v5745, 80
    %v8408 = vpop.permute.xlu0 %8407
    %8409 = vrot.lane.b32.xlu0 %v5750, 80
    %v8410 = vpop.permute.xlu0 %8409
    %8411 = vrot.lane.b32.xlu0 %v5755, 80
    %v8412 = vpop.permute.xlu0 %8411
    %8413 = vrot.lane.b32.xlu0 %v5760, 80
    %v8414 = vpop.permute.xlu0 %8413
    %v8415 = vsel %vm871, %v8384, 0
    %v8417 = vsel %vm871, %v8386, 0
    %v8419 = vsel %vm871, %v8388, 0
    %v8421 = vsel %vm871, %v8390, 0
    %v8423 = vsel %vm871, %v8392, 0
    %v8425 = vsel %vm871, %v8394, 0
    %v8427 = vsel %vm871, %v8396, 0
    %v8429 = vsel %vm871, %v8398, 0
    %v8431 = vsel %vm871, %v8400, 0
    %v8433 = vsel %vm871, %v8402, 0
    %v8435 = vsel %vm871, %v8404, 0
    %v8437 = vsel %vm871, %v8406, 0
    %v8439 = vsel %vm871, %v8408, 0
    %v8441 = vsel %vm871, %v8410, 0
    %v8443 = vsel %vm871, %v8412, 0
    %v8445 = vsel %vm871, %v8414, 0
    %8447 = vmatprep.subr.mxu0 0.0
    %8448 = vmatpush1.xpose.msra.mxu0 %v8431
    %8449 = vmatprep.subr.mxu0 0.0
    %8450 = vmatpush1.xpose.msra.mxu0 %v8433
    %8451 = vmatprep.subr.mxu0 0.0
    %8452 = vmatpush1.xpose.msra.mxu0 %v8435
    %8453 = vmatprep.subr.mxu0 0.0
    %8454 = vmatpush1.xpose.msra.mxu0 %v8437
    %8455 = vmatprep.subr.mxu0 0.0
    %8456 = vmatpush1.xpose.msra.mxu0 %v8439
    %8457 = vmatprep.subr.mxu0 0.0
    %8458 = vmatpush1.xpose.msra.mxu0 %v8441
    %8459 = vmatprep.subr.mxu0 0.0
    %8460 = vmatpush1.xpose.msra.mxu0 %v8443
    %8461 = vmatprep.subr.mxu0 0.0
    %8462 = vmatpush1.xpose.msra.mxu0 %v8445
    %8463 = vmatprep.subr.mxu0 0.0
    %8464 = vmatpush1.xpose.msra.mxu0 0.0
    %8465 = vmatprep.subr.mxu0 0.0
    %8466 = vmatpush1.xpose.msra.mxu0 0.0
    %8467 = vmatprep.subr.mxu0 0.0
    %8468 = vmatpush1.xpose.msra.mxu0 0.0
    %8469 = vmatprep.subr.mxu0 0.0
    %8470 = vmatpush1.xpose.msra.mxu0 0.0
    %8471 = vmatprep.subr.mxu0 0.0
    %8472 = vmatpush1.xpose.msra.mxu0 0.0
    %8473 = vmatprep.subr.mxu0 0.0
    %8474 = vmatpush1.xpose.msra.mxu0 0.0
    %8475 = vmatprep.subr.mxu0 0.0
    %8476 = vmatpush1.xpose.msra.mxu0 0.0
    %8477 = vmatprep.subr.mxu0 0.0
    %8478 = vmatpush1.xpose.msra.mxu0 0.0
    %8479 = vmatprep.subr.mxu0 0.0
    %8480 = vmatpush1.xpose.msra.mxu0 0.0
    %8481 = vmatprep.subr.mxu0 0.0
    %8482 = vmatpush1.xpose.msra.mxu0 0.0
    %8483 = vmatprep.subr.mxu0 0.0
    %8484 = vmatpush1.xpose.msra.mxu0 0.0
    %8485 = vmatprep.subr.mxu0 0.0
    %8486 = vmatpush1.xpose.msra.mxu0 0.0
    %8487 = vmatprep.subr.mxu0 0.0
    %8488 = vmatpush1.xpose.msra.mxu0 0.0
    %8489 = vmatprep.subr.mxu0 0.0
    %8490 = vmatpush1.xpose.msra.mxu0 0.0
    %8491 = vmatprep.subr.mxu0 0.0
    %8492 = vmatpush1.xpose.msra.mxu0 0.0
    %8493 = vmatprep.subr.mxu0 0.0
    %8494 = vmatpush1.xpose.msra.mxu0 0.0
    %8495 = vmatprep.subr.mxu0 0.0
    %8496 = vmatpush1.xpose.msra.mxu0 0.0
    %8497 = vmatprep.subr.mxu0 0.0
    %8498 = vmatpush1.xpose.msra.mxu0 0.0
    %8499 = vmatprep.subr.mxu0 0.0
    %8500 = vmatpush1.xpose.msra.mxu0 0.0
    %8501 = vmatprep.subr.mxu0 0.0
    %8502 = vmatpush1.xpose.msra.mxu0 0.0
    %8503 = vmatprep.subr.mxu0 0.0
    %8504 = vmatpush1.xpose.msra.mxu0 0.0
    %8505 = vmatprep.subr.mxu0 0.0
    %8506 = vmatpush1.xpose.msra.mxu0 0.0
    %8507 = vmatprep.subr.mxu0 0.0
    %8508 = vmatpush1.xpose.msra.mxu0 0.0
    %8509 = vmatprep.subr.mxu0 0.0
    %8510 = vmatpush1.xpose.msra.mxu0 0.0
    %8511 = vmatprep.mubr.f32.mxu0 0.0
    %8512 = vmatmul.mubr.f32.gmra.mrb[0].mxu0 %v8415
    %v8513 = vpop.f32.mrb[0].mxu0
    %v8514 = vadd.f32 0.0, %v8513
    %v8515 = vpop.f32.mrb[0].mxu0
    %8516 = vmatprep.mubr.f32.mxu0 0.0
    %8517 = vmatmul.mubr.f32.gmra.mrb[0].mxu0 %v8417
    %v8518 = vpop.f32.mrb[0].mxu0
    %v8519 = vadd.f32 0.0, %v8518
    %v8520 = vpop.f32.mrb[0].mxu0
    %8521 = vmatprep.mubr.f32.mxu0 0.0
    %8522 = vmatmul.mubr.f32.gmra.mrb[0].mxu0 %v8419
    %v8523 = vpop.f32.mrb[0].mxu0
    %v8524 = vadd.f32 0.0, %v8523
    %v8525 = vpop.f32.mrb[0].mxu0
    %8526 = vmatprep.mubr.f32.mxu0 0.0
    %8527 = vmatmul.mubr.f32.gmra.mrb[0].mxu0 %v8421
    %v8528 = vpop.f32.mrb[0].mxu0
    %v8529 = vadd.f32 0.0, %v8528
    %v8530 = vpop.f32.mrb[0].mxu0
    %8531 = vmatprep.mubr.f32.mxu0 0.0
    %8532 = vmatmul.mubr.f32.gmra.mrb[0].mxu0 %v8423
    %v8533 = vpop.f32.mrb[0].mxu0
    %v8534 = vadd.f32 0.0, %v8533
    %v8535 = vpop.f32.mrb[0].mxu0
    %8536 = vmatprep.mubr.f32.mxu0 0.0
    %8537 = vmatmul.mubr.f32.gmra.mrb[0].mxu0 %v8425
    %v8538 = vpop.f32.mrb[0].mxu0
    %v8539 = vadd.f32 0.0, %v8538
    %v8540 = vpop.f32.mrb[0].mxu0
    %8541 = vmatprep.mubr.f32.mxu0 0.0
    %8542 = vmatmul.mubr.f32.gmra.mrb[0].mxu0 %v8427
    %v8543 = vpop.f32.mrb[0].mxu0
    %v8544 = vadd.f32 0.0, %v8543
    %v8545 = vpop.f32.mrb[0].mxu0
    %8546 = vmatprep.mubr.f32.mxu0 0.0
    %8547 = vmatmul.mubr.f32.gmra.mrb[0].mxu0 %v8429
    %v8548 = vpop.f32.mrb[0].mxu0
    %v8549 = vadd.f32 0.0, %v8548
    %v8550 = vpop.f32.mrb[0].mxu0
    %8551 = vdwg.mxu0
    %v8552 = vsel %vm1009, %v8514, -inf
    %8553 = vmax.xlane.f32.xlu0 %v8552
    %v8554 = vpop.xlane.xlu0 %8553
    %v8555 = vsel %vm1009, %v8519, -inf
    %8556 = vmax.xlane.f32.xlu0 %v8555
    %v8557 = vpop.xlane.xlu0 %8556
    %v8558 = vsel %vm1009, %v8524, -inf
    %8559 = vmax.xlane.f32.xlu0 %v8558
    %v8560 = vpop.xlane.xlu0 %8559
    %v8561 = vsel %vm1009, %v8529, -inf
    %8562 = vmax.xlane.f32.xlu0 %v8561
    %v8563 = vpop.xlane.xlu0 %8562
    %v8564 = vsel %vm1009, %v8534, -inf
    %8565 = vmax.xlane.f32.xlu0 %v8564
    %v8566 = vpop.xlane.xlu0 %8565
    %v8567 = vsel %vm1009, %v8539, -inf
    %8568 = vmax.xlane.f32.xlu0 %v8567
    %v8569 = vpop.xlane.xlu0 %8568
    %v8570 = vsel %vm1009, %v8544, -inf
    %8571 = vmax.xlane.f32.xlu0 %v8570
    %v8572 = vpop.xlane.xlu0 %8571
    %v8573 = vsel %vm1009, %v8549, -inf
    %8574 = vmax.xlane.f32.xlu0 %v8573
    %v8575 = vpop.xlane.xlu0 %8574
    %v8576 = vsub.f32 %v8514, %v8554
    %v8577 = vsub.f32 %v8519, %v8557
    %v8578 = vsub.f32 %v8524, %v8560
    %v8579 = vsub.f32 %v8529, %v8563
    %v8580 = vsub.f32 %v8534, %v8566
    %v8581 = vsub.f32 %v8539, %v8569
    %v8582 = vsub.f32 %v8544, %v8572
    %v8583 = vsub.f32 %v8549, %v8575
    %v8584 = vmul.f32 %v8576, 1.442695
    %v8585 = vpow.pop %v8584
    %v8586 = vmul.f32 %v8577, 1.442695
    %v8587 = vpow.pop %v8586
    %v8588 = vmul.f32 %v8578, 1.442695
    %v8589 = vpow.pop %v8588
    %v8590 = vmul.f32 %v8579, 1.442695
    %v8591 = vpow.pop %v8590
    %v8592 = vmul.f32 %v8580, 1.442695
    %v8593 = vpow.pop %v8592
    %v8594 = vmul.f32 %v8581, 1.442695
    %v8595 = vpow.pop %v8594
    %v8596 = vmul.f32 %v8582, 1.442695
    %v8597 = vpow.pop %v8596
    %v8598 = vmul.f32 %v8583, 1.442695
    %v8599 = vpow.pop %v8598
    %v8600 = vsel %vm1009, %v8585, 0.0
    %8601 = vadd.xlane.f32.xlu0 %v8600
    %v8602 = vpop.xlane.xlu0 %8601
    %v8603 = vsel %vm1009, %v8587, 0.0
    %8604 = vadd.xlane.f32.xlu0 %v8603
    %v8605 = vpop.xlane.xlu0 %8604
    %v8606 = vsel %vm1009, %v8589, 0.0
    %8607 = vadd.xlane.f32.xlu0 %v8606
    %v8608 = vpop.xlane.xlu0 %8607
    %v8609 = vsel %vm1009, %v8591, 0.0
    %8610 = vadd.xlane.f32.xlu0 %v8609
    %v8611 = vpop.xlane.xlu0 %8610
    %v8612 = vsel %vm1009, %v8593, 0.0
    %8613 = vadd.xlane.f32.xlu0 %v8612
    %v8614 = vpop.xlane.xlu0 %8613
    %v8615 = vsel %vm1009, %v8595, 0.0
    %8616 = vadd.xlane.f32.xlu0 %v8615
    %v8617 = vpop.xlane.xlu0 %8616
    %v8618 = vsel %vm1009, %v8597, 0.0
    %8619 = vadd.xlane.f32.xlu0 %v8618
    %v8620 = vpop.xlane.xlu0 %8619
    %v8621 = vsel %vm1009, %v8599, 0.0
    %8622 = vadd.xlane.f32.xlu0 %v8621
    %v8623 = vpop.xlane.xlu0 %8622
    %v8624 = vrcp.pop %v8602
    %v8625 = vrcp.pop %v8605
    %v8626 = vrcp.pop %v8608
    %v8627 = vrcp.pop %v8611
    %v8628 = vrcp.pop %v8614
    %v8629 = vrcp.pop %v8617
    %v8630 = vrcp.pop %v8620
    %v8631 = vrcp.pop %v8623
    %v8632 = vmul.f32 %v8585, %v8624
    %v8633 = vmul.f32 %v8587, %v8625
    %v8634 = vmul.f32 %v8589, %v8626
    %v8635 = vmul.f32 %v8591, %v8627
    %v8636 = vmul.f32 %v8593, %v8628
    %v8637 = vmul.f32 %v8595, %v8629
    %v8638 = vmul.f32 %v8597, %v8630
    %v8639 = vmul.f32 %v8599, %v8631
    %8640 = vrot.lane.b32.xlu0 %v5725, 48
    %v8641 = vpop.permute.xlu0 %8640
    %8642 = vrot.lane.b32.xlu0 %v5730, 48
    %v8643 = vpop.permute.xlu0 %8642
    %8644 = vrot.lane.b32.xlu0 %v5735, 48
    %v8645 = vpop.permute.xlu0 %8644
    %8646 = vrot.lane.b32.xlu0 %v5740, 48
    %v8647 = vpop.permute.xlu0 %8646
    %8648 = vrot.lane.b32.xlu0 %v5745, 48
    %v8649 = vpop.permute.xlu0 %8648
    %8650 = vrot.lane.b32.xlu0 %v5750, 48
    %v8651 = vpop.permute.xlu0 %8650
    %8652 = vrot.lane.b32.xlu0 %v5755, 48
    %v8653 = vpop.permute.xlu0 %8652
    %8654 = vrot.lane.b32.xlu0 %v5760, 48
    %v8655 = vpop.permute.xlu0 %8654
    %v8665 = vsel %vm1009, %v8632, 0
    %v8668 = vsel %vm1009, %v8633, 0
    %v8671 = vsel %vm1009, %v8634, 0
    %v8674 = vsel %vm1009, %v8635, 0
    %v8677 = vsel %vm1009, %v8636, 0
    %v8680 = vsel %vm1009, %v8637, 0
    %v8683 = vsel %vm1009, %v8638, 0
    %v8686 = vsel %vm1009, %v8639, 0
    %8688 = vmatprep.subr.mxu0 0.0
    %8689 = vmatpush1.msra.mxu0 %v8641
    %8690 = vmatprep.subr.mxu0 0.0
    %8691 = vmatpush1.msra.mxu0 %v8643
    %8692 = vmatprep.subr.mxu0 0.0
    %8693 = vmatpush1.msra.mxu0 %v8645
    %8694 = vmatprep.subr.mxu0 0.0
    %8695 = vmatpush1.msra.mxu0 %v8647
    %8696 = vmatprep.subr.mxu0 0.0
    %8697 = vmatpush1.msra.mxu0 %v8649
    %8698 = vmatprep.subr.mxu0 0.0
    %8699 = vmatpush1.msra.mxu0 %v8651
    %8700 = vmatprep.subr.mxu0 0.0
    %8701 = vmatpush1.msra.mxu0 %v8653
    %8702 = vmatprep.subr.mxu0 0.0
    %8703 = vmatpush1.msra.mxu0 %v8655
    %8704 = vmatprep.subr.mxu0 0.0
    %8705 = vmatpush1.msra.mxu0 0.0
    %8706 = vmatprep.subr.mxu0 0.0
    %8707 = vmatpush1.msra.mxu0 0.0
    %8708 = vmatprep.subr.mxu0 0.0
    %8709 = vmatpush1.msra.mxu0 0.0
    %8710 = vmatprep.subr.mxu0 0.0
    %8711 = vmatpush1.msra.mxu0 0.0
    %8712 = vmatprep.subr.mxu0 0.0
    %8713 = vmatpush1.msra.mxu0 0.0
    %8714 = vmatprep.subr.mxu0 0.0
    %8715 = vmatpush1.msra.mxu0 0.0
    %8716 = vmatprep.subr.mxu0 0.0
    %8717 = vmatpush1.msra.mxu0 0.0
    %8718 = vmatprep.subr.mxu0 0.0
    %8719 = vmatpush1.msra.mxu0 0.0
    %8720 = vmatprep.subr.mxu0 0.0
    %8721 = vmatpush1.msra.mxu0 0.0
    %8722 = vmatprep.subr.mxu0 0.0
    %8723 = vmatpush1.msra.mxu0 0.0
    %8724 = vmatprep.subr.mxu0 0.0
    %8725 = vmatpush1.msra.mxu0 0.0
    %8726 = vmatprep.subr.mxu0 0.0
    %8727 = vmatpush1.msra.mxu0 0.0
    %8728 = vmatprep.subr.mxu0 0.0
    %8729 = vmatpush1.msra.mxu0 0.0
    %8730 = vmatprep.subr.mxu0 0.0
    %8731 = vmatpush1.msra.mxu0 0.0
    %8732 = vmatprep.subr.mxu0 0.0
    %8733 = vmatpush1.msra.mxu0 0.0
    %8734 = vmatprep.subr.mxu0 0.0
    %8735 = vmatpush1.msra.mxu0 0.0
    %8736 = vmatprep.subr.mxu0 0.0
    %8737 = vmatpush1.msra.mxu0 0.0
    %8738 = vmatprep.subr.mxu0 0.0
    %8739 = vmatpush1.msra.mxu0 0.0
    %8740 = vmatprep.subr.mxu0 0.0
    %8741 = vmatpush1.msra.mxu0 0.0
    %8742 = vmatprep.subr.mxu0 0.0
    %8743 = vmatpush1.msra.mxu0 0.0
    %8744 = vmatprep.subr.mxu0 0.0
    %8745 = vmatpush1.msra.mxu0 0.0
    %8746 = vmatprep.subr.mxu0 0.0
    %8747 = vmatpush1.msra.mxu0 0.0
    %8748 = vmatprep.subr.mxu0 0.0
    %8749 = vmatpush1.msra.mxu0 0.0
    %8750 = vmatprep.subr.mxu0 0.0
    %8751 = vmatpush1.msra.mxu0 0.0
    %8752 = vmatprep.mubr.f32.mxu0 0.0
    %8753 = vmatmul.mubr.f32.gmra.mrb[0].mxu0 %v8665
    %v8754 = vpop.f32.mrb[0].mxu0
    %v8755 = vadd.f32 0.0, %v8754
    %v8756 = vpop.f32.mrb[0].mxu0
    %8757 = vmatprep.mubr.f32.mxu0 0.0
    %8758 = vmatmul.mubr.f32.gmra.mrb[0].mxu0 %v8668
    %v8759 = vpop.f32.mrb[0].mxu0
    %v8760 = vadd.f32 0.0, %v8759
    %v8761 = vpop.f32.mrb[0].mxu0
    %8762 = vmatprep.mubr.f32.mxu0 0.0
    %8763 = vmatmul.mubr.f32.gmra.mrb[0].mxu0 %v8671
    %v8764 = vpop.f32.mrb[0].mxu0
    %v8765 = vadd.f32 0.0, %v8764
    %v8766 = vpop.f32.mrb[0].mxu0
    %8767 = vmatprep.mubr.f32.mxu0 0.0
    %8768 = vmatmul.mubr.f32.gmra.mrb[0].mxu0 %v8674
    %v8769 = vpop.f32.mrb[0].mxu0
    %v8770 = vadd.f32 0.0, %v8769
    %v8771 = vpop.f32.mrb[0].mxu0
    %8772 = vmatprep.mubr.f32.mxu0 0.0
    %8773 = vmatmul.mubr.f32.gmra.mrb[0].mxu0 %v8677
    %v8774 = vpop.f32.mrb[0].mxu0
    %v8775 = vadd.f32 0.0, %v8774
    %v8776 = vpop.f32.mrb[0].mxu0
    %8777 = vmatprep.mubr.f32.mxu0 0.0
    %8778 = vmatmul.mubr.f32.gmra.mrb[0].mxu0 %v8680
    %v8779 = vpop.f32.mrb[0].mxu0
    %v8780 = vadd.f32 0.0, %v8779
    %v8781 = vpop.f32.mrb[0].mxu0
    %8782 = vmatprep.mubr.f32.mxu0 0.0
    %8783 = vmatmul.mubr.f32.gmra.mrb[0].mxu0 %v8683
    %v8784 = vpop.f32.mrb[0].mxu0
    %v8785 = vadd.f32 0.0, %v8784
    %v8786 = vpop.f32.mrb[0].mxu0
    %8787 = vmatprep.mubr.f32.mxu0 0.0
    %8788 = vmatmul.mubr.f32.gmra.mrb[0].mxu0 %v8686
    %v8789 = vpop.f32.mrb[0].mxu0
    %v8790 = vadd.f32 0.0, %v8789
    %v8791 = vpop.f32.mrb[0].mxu0
    %8792 = vdwg.mxu0
    %8801 = vrot.lane.b32.xlu0 %v8755, 16
    %v8802 = vpop.permute.xlu0 %8801
    %8803 = vrot.lane.b32.xlu0 %v8760, 16
    %v8804 = vpop.permute.xlu0 %8803
    %8805 = vrot.lane.b32.xlu0 %v8765, 16
    %v8806 = vpop.permute.xlu0 %8805
    %8807 = vrot.lane.b32.xlu0 %v8770, 16
    %v8808 = vpop.permute.xlu0 %8807
    %8809 = vrot.lane.b32.xlu0 %v8775, 16
    %v8810 = vpop.permute.xlu0 %8809
    %8811 = vrot.lane.b32.xlu0 %v8780, 16
    %v8812 = vpop.permute.xlu0 %8811
    %8813 = vrot.lane.b32.xlu0 %v8785, 16
    %v8814 = vpop.permute.xlu0 %8813
    %8815 = vrot.lane.b32.xlu0 %v8790, 16
    %v8816 = vpop.permute.xlu0 %8815
    %8825 = vst.msk [vmem:[#allocation2 + $0x40] sm:$0xff] %vm2152, %v8802
    %8826 = vst.msk [vmem:[#allocation2 + $0x48] sm:$0xff] %vm2152, %v8804
    %8827 = vst.msk [vmem:[#allocation2 + $0x50] sm:$0xff] %vm2152, %v8806
    %8828 = vst.msk [vmem:[#allocation2 + $0x58] sm:$0xff] %vm2152, %v8808
    %8829 = vst.msk [vmem:[#allocation2 + $0x60] sm:$0xff] %vm2152, %v8810
    %8830 = vst.msk [vmem:[#allocation2 + $0x68] sm:$0xff] %vm2152, %v8812
    %8831 = vst.msk [vmem:[#allocation2 + $0x70] sm:$0xff] %vm2152, %v8814
    %8832 = vst.msk [vmem:[#allocation2 + $0x78] sm:$0xff] %vm2152, %v8816
    %8833 = vrot.lane.b32.xlu0 %v5725, 104
    %v8834 = vpop.permute.xlu0 %8833
    %8835 = vrot.lane.b32.xlu0 %v5730, 104
    %v8836 = vpop.permute.xlu0 %8835
    %8837 = vrot.lane.b32.xlu0 %v5735, 104
    %v8838 = vpop.permute.xlu0 %8837
    %8839 = vrot.lane.b32.xlu0 %v5740, 104
    %v8840 = vpop.permute.xlu0 %8839
    %8841 = vrot.lane.b32.xlu0 %v5745, 104
    %v8842 = vpop.permute.xlu0 %8841
    %8843 = vrot.lane.b32.xlu0 %v5750, 104
    %v8844 = vpop.permute.xlu0 %8843
    %8845 = vrot.lane.b32.xlu0 %v5755, 104
    %v8846 = vpop.permute.xlu0 %8845
    %8847 = vrot.lane.b32.xlu0 %v5760, 104
    %v8848 = vpop.permute.xlu0 %8847
    %8849 = vrot.lane.b32.xlu0 %v5725, 72
    %v8850 = vpop.permute.xlu0 %8849
    %8851 = vrot.lane.b32.xlu0 %v5730, 72
    %v8852 = vpop.permute.xlu0 %8851
    %8853 = vrot.lane.b32.xlu0 %v5735, 72
    %v8854 = vpop.permute.xlu0 %8853
    %8855 = vrot.lane.b32.xlu0 %v5740, 72
    %v8856 = vpop.permute.xlu0 %8855
    %8857 = vrot.lane.b32.xlu0 %v5745, 72
    %v8858 = vpop.permute.xlu0 %8857
    %8859 = vrot.lane.b32.xlu0 %v5750, 72
    %v8860 = vpop.permute.xlu0 %8859
    %8861 = vrot.lane.b32.xlu0 %v5755, 72
    %v8862 = vpop.permute.xlu0 %8861
    %8863 = vrot.lane.b32.xlu0 %v5760, 72
    %v8864 = vpop.permute.xlu0 %8863
    %v8865 = vsel %vm871, %v8834, 0
    %v8867 = vsel %vm871, %v8836, 0
    %v8869 = vsel %vm871, %v8838, 0
    %v8871 = vsel %vm871, %v8840, 0
    %v8873 = vsel %vm871, %v8842, 0
    %v8875 = vsel %vm871, %v8844, 0
    %v8877 = vsel %vm871, %v8846, 0
    %v8879 = vsel %vm871, %v8848, 0
    %v8881 = vsel %vm871, %v8850, 0
    %v8883 = vsel %vm871, %v8852, 0
    %v8885 = vsel %vm871, %v8854, 0
    %v8887 = vsel %vm871, %v8856, 0
    %v8889 = vsel %vm871, %v8858, 0
    %v8891 = vsel %vm871, %v8860, 0
    %v8893 = vsel %vm871, %v8862, 0
    %v8895 = vsel %vm871, %v8864, 0
    %8897 = vmatprep.subr.mxu0 0.0
    %8898 = vmatpush1.xpose.msra.mxu0 %v8881
    %8899 = vmatprep.subr.mxu0 0.0
    %8900 = vmatpush1.xpose.msra.mxu0 %v8883
    %8901 = vmatprep.subr.mxu0 0.0
    %8902 = vmatpush1.xpose.msra.mxu0 %v8885
    %8903 = vmatprep.subr.mxu0 0.0
    %8904 = vmatpush1.xpose.msra.mxu0 %v8887
    %8905 = vmatprep.subr.mxu0 0.0
    %8906 = vmatpush1.xpose.msra.mxu0 %v8889
    %8907 = vmatprep.subr.mxu0 0.0
    %8908 = vmatpush1.xpose.msra.mxu0 %v8891
    %8909 = vmatprep.subr.mxu0 0.0
    %8910 = vmatpush1.xpose.msra.mxu0 %v8893
    %8911 = vmatprep.subr.mxu0 0.0
    %8912 = vmatpush1.xpose.msra.mxu0 %v8895
    %8913 = vmatprep.subr.mxu0 0.0
    %8914 = vmatpush1.xpose.msra.mxu0 0.0
    %8915 = vmatprep.subr.mxu0 0.0
    %8916 = vmatpush1.xpose.msra.mxu0 0.0
    %8917 = vmatprep.subr.mxu0 0.0
    %8918 = vmatpush1.xpose.msra.mxu0 0.0
    %8919 = vmatprep.subr.mxu0 0.0
    %8920 = vmatpush1.xpose.msra.mxu0 0.0
    %8921 = vmatprep.subr.mxu0 0.0
    %8922 = vmatpush1.xpose.msra.mxu0 0.0
    %8923 = vmatprep.subr.mxu0 0.0
    %8924 = vmatpush1.xpose.msra.mxu0 0.0
    %8925 = vmatprep.subr.mxu0 0.0
    %8926 = vmatpush1.xpose.msra.mxu0 0.0
    %8927 = vmatprep.subr.mxu0 0.0
    %8928 = vmatpush1.xpose.msra.mxu0 0.0
    %8929 = vmatprep.subr.mxu0 0.0
    %8930 = vmatpush1.xpose.msra.mxu0 0.0
    %8931 = vmatprep.subr.mxu0 0.0
    %8932 = vmatpush1.xpose.msra.mxu0 0.0
    %8933 = vmatprep.subr.mxu0 0.0
    %8934 = vmatpush1.xpose.msra.mxu0 0.0
    %8935 = vmatprep.subr.mxu0 0.0
    %8936 = vmatpush1.xpose.msra.mxu0 0.0
    %8937 = vmatprep.subr.mxu0 0.0
    %8938 = vmatpush1.xpose.msra.mxu0 0.0
    %8939 = vmatprep.subr.mxu0 0.0
    %8940 = vmatpush1.xpose.msra.mxu0 0.0
    %8941 = vmatprep.subr.mxu0 0.0
    %8942 = vmatpush1.xpose.msra.mxu0 0.0
    %8943 = vmatprep.subr.mxu0 0.0
    %8944 = vmatpush1.xpose.msra.mxu0 0.0
    %8945 = vmatprep.subr.mxu0 0.0
    %8946 = vmatpush1.xpose.msra.mxu0 0.0
    %8947 = vmatprep.subr.mxu0 0.0
    %8948 = vmatpush1.xpose.msra.mxu0 0.0
    %8949 = vmatprep.subr.mxu0 0.0
    %8950 = vmatpush1.xpose.msra.mxu0 0.0
    %8951 = vmatprep.subr.mxu0 0.0
    %8952 = vmatpush1.xpose.msra.mxu0 0.0
    %8953 = vmatprep.subr.mxu0 0.0
    %8954 = vmatpush1.xpose.msra.mxu0 0.0
    %8955 = vmatprep.subr.mxu0 0.0
    %8956 = vmatpush1.xpose.msra.mxu0 0.0
    %8957 = vmatprep.subr.mxu0 0.0
    %8958 = vmatpush1.xpose.msra.mxu0 0.0
    %8959 = vmatprep.subr.mxu0 0.0
    %8960 = vmatpush1.xpose.msra.mxu0 0.0
    %8961 = vmatprep.mubr.f32.mxu0 0.0
    %8962 = vmatmul.mubr.f32.gmra.mrb[0].mxu0 %v8865
    %v8963 = vpop.f32.mrb[0].mxu0
    %v8964 = vadd.f32 0.0, %v8963
    %v8965 = vpop.f32.mrb[0].mxu0
    %8966 = vmatprep.mubr.f32.mxu0 0.0
    %8967 = vmatmul.mubr.f32.gmra.mrb[0].mxu0 %v8867
    %v8968 = vpop.f32.mrb[0].mxu0
    %v8969 = vadd.f32 0.0, %v8968
    %v8970 = vpop.f32.mrb[0].mxu0
    %8971 = vmatprep.mubr.f32.mxu0 0.0
    %8972 = vmatmul.mubr.f32.gmra.mrb[0].mxu0 %v8869
    %v8973 = vpop.f32.mrb[0].mxu0
    %v8974 = vadd.f32 0.0, %v8973
    %v8975 = vpop.f32.mrb[0].mxu0
    %8976 = vmatprep.mubr.f32.mxu0 0.0
    %8977 = vmatmul.mubr.f32.gmra.mrb[0].mxu0 %v8871
    %v8978 = vpop.f32.mrb[0].mxu0
    %v8979 = vadd.f32 0.0, %v8978
    %v8980 = vpop.f32.mrb[0].mxu0
    %8981 = vmatprep.mubr.f32.mxu0 0.0
    %8982 = vmatmul.mubr.f32.gmra.mrb[0].mxu0 %v8873
    %v8983 = vpop.f32.mrb[0].mxu0
    %v8984 = vadd.f32 0.0, %v8983
    %v8985 = vpop.f32.mrb[0].mxu0
    %8986 = vmatprep.mubr.f32.mxu0 0.0
    %8987 = vmatmul.mubr.f32.gmra.mrb[0].mxu0 %v8875
    %v8988 = vpop.f32.mrb[0].mxu0
    %v8989 = vadd.f32 0.0, %v8988
    %v8990 = vpop.f32.mrb[0].mxu0
    %8991 = vmatprep.mubr.f32.mxu0 0.0
    %8992 = vmatmul.mubr.f32.gmra.mrb[0].mxu0 %v8877
    %v8993 = vpop.f32.mrb[0].mxu0
    %v8994 = vadd.f32 0.0, %v8993
    %v8995 = vpop.f32.mrb[0].mxu0
    %8996 = vmatprep.mubr.f32.mxu0 0.0
    %8997 = vmatmul.mubr.f32.gmra.mrb[0].mxu0 %v8879
    %v8998 = vpop.f32.mrb[0].mxu0
    %v8999 = vadd.f32 0.0, %v8998
    %v9000 = vpop.f32.mrb[0].mxu0
    %9001 = vdwg.mxu0
    %v9002 = vsel %vm1009, %v8964, -inf
    %9003 = vmax.xlane.f32.xlu0 %v9002
    %v9004 = vpop.xlane.xlu0 %9003
    %v9005 = vsel %vm1009, %v8969, -inf
    %9006 = vmax.xlane.f32.xlu0 %v9005
    %v9007 = vpop.xlane.xlu0 %9006
    %v9008 = vsel %vm1009, %v8974, -inf
    %9009 = vmax.xlane.f32.xlu0 %v9008
    %v9010 = vpop.xlane.xlu0 %9009
    %v9011 = vsel %vm1009, %v8979, -inf
    %9012 = vmax.xlane.f32.xlu0 %v9011
    %v9013 = vpop.xlane.xlu0 %9012
    %v9014 = vsel %vm1009, %v8984, -inf
    %9015 = vmax.xlane.f32.xlu0 %v9014
    %v9016 = vpop.xlane.xlu0 %9015
    %v9017 = vsel %vm1009, %v8989, -inf
    %9018 = vmax.xlane.f32.xlu0 %v9017
    %v9019 = vpop.xlane.xlu0 %9018
    %v9020 = vsel %vm1009, %v8994, -inf
    %9021 = vmax.xlane.f32.xlu0 %v9020
    %v9022 = vpop.xlane.xlu0 %9021
    %v9023 = vsel %vm1009, %v8999, -inf
    %9024 = vmax.xlane.f32.xlu0 %v9023
    %v9025 = vpop.xlane.xlu0 %9024
    %v9026 = vsub.f32 %v8964, %v9004
    %v9027 = vsub.f32 %v8969, %v9007
    %v9028 = vsub.f32 %v8974, %v9010
    %v9029 = vsub.f32 %v8979, %v9013
    %v9030 = vsub.f32 %v8984, %v9016
    %v9031 = vsub.f32 %v8989, %v9019
    %v9032 = vsub.f32 %v8994, %v9022
    %v9033 = vsub.f32 %v8999, %v9025
    %v9034 = vmul.f32 %v9026, 1.442695
    %v9035 = vpow.pop %v9034
    %v9036 = vmul.f32 %v9027, 1.442695
    %v9037 = vpow.pop %v9036
    %v9038 = vmul.f32 %v9028, 1.442695
    %v9039 = vpow.pop %v9038
    %v9040 = vmul.f32 %v9029, 1.442695
    %v9041 = vpow.pop %v9040
    %v9042 = vmul.f32 %v9030, 1.442695
    %v9043 = vpow.pop %v9042
    %v9044 = vmul.f32 %v9031, 1.442695
    %v9045 = vpow.pop %v9044
    %v9046 = vmul.f32 %v9032, 1.442695
    %v9047 = vpow.pop %v9046
    %v9048 = vmul.f32 %v9033, 1.442695
    %v9049 = vpow.pop %v9048
    %v9050 = vsel %vm1009, %v9035, 0.0
    %9051 = vadd.xlane.f32.xlu0 %v9050
    %v9052 = vpop.xlane.xlu0 %9051
    %v9053 = vsel %vm1009, %v9037, 0.0
    %9054 = vadd.xlane.f32.xlu0 %v9053
    %v9055 = vpop.xlane.xlu0 %9054
    %v9056 = vsel %vm1009, %v9039, 0.0
    %9057 = vadd.xlane.f32.xlu0 %v9056
    %v9058 = vpop.xlane.xlu0 %9057
    %v9059 = vsel %vm1009, %v9041, 0.0
    %9060 = vadd.xlane.f32.xlu0 %v9059
    %v9061 = vpop.xlane.xlu0 %9060
    %v9062 = vsel %vm1009, %v9043, 0.0
    %9063 = vadd.xlane.f32.xlu0 %v9062
    %v9064 = vpop.xlane.xlu0 %9063
    %v9065 = vsel %vm1009, %v9045, 0.0
    %9066 = vadd.xlane.f32.xlu0 %v9065
    %v9067 = vpop.xlane.xlu0 %9066
    %v9068 = vsel %vm1009, %v9047, 0.0
    %9069 = vadd.xlane.f32.xlu0 %v9068
    %v9070 = vpop.xlane.xlu0 %9069
    %v9071 = vsel %vm1009, %v9049, 0.0
    %9072 = vadd.xlane.f32.xlu0 %v9071
    %v9073 = vpop.xlane.xlu0 %9072
    %v9074 = vrcp.pop %v9052
    %v9075 = vrcp.pop %v9055
    %v9076 = vrcp.pop %v9058
    %v9077 = vrcp.pop %v9061
    %v9078 = vrcp.pop %v9064
    %v9079 = vrcp.pop %v9067
    %v9080 = vrcp.pop %v9070
    %v9081 = vrcp.pop %v9073
    %v9082 = vmul.f32 %v9035, %v9074
    %v9083 = vmul.f32 %v9037, %v9075
    %v9084 = vmul.f32 %v9039, %v9076
    %v9085 = vmul.f32 %v9041, %v9077
    %v9086 = vmul.f32 %v9043, %v9078
    %v9087 = vmul.f32 %v9045, %v9079
    %v9088 = vmul.f32 %v9047, %v9080
    %v9089 = vmul.f32 %v9049, %v9081
    %9090 = vrot.lane.b32.xlu0 %v5725, 40
    %v9091 = vpop.permute.xlu0 %9090
    %9092 = vrot.lane.b32.xlu0 %v5730, 40
    %v9093 = vpop.permute.xlu0 %9092
    %9094 = vrot.lane.b32.xlu0 %v5735, 40
    %v9095 = vpop.permute.xlu0 %9094
    %9096 = vrot.lane.b32.xlu0 %v5740, 40
    %v9097 = vpop.permute.xlu0 %9096
    %9098 = vrot.lane.b32.xlu0 %v5745, 40
    %v9099 = vpop.permute.xlu0 %9098
    %9100 = vrot.lane.b32.xlu0 %v5750, 40
    %v9101 = vpop.permute.xlu0 %9100
    %9102 = vrot.lane.b32.xlu0 %v5755, 40
    %v9103 = vpop.permute.xlu0 %9102
    %9104 = vrot.lane.b32.xlu0 %v5760, 40
    %v9105 = vpop.permute.xlu0 %9104
    %v9115 = vsel %vm1009, %v9082, 0
    %v9118 = vsel %vm1009, %v9083, 0
    %v9121 = vsel %vm1009, %v9084, 0
    %v9124 = vsel %vm1009, %v9085, 0
    %v9127 = vsel %vm1009, %v9086, 0
    %v9130 = vsel %vm1009, %v9087, 0
    %v9133 = vsel %vm1009, %v9088, 0
    %v9136 = vsel %vm1009, %v9089, 0
    %9138 = vmatprep.subr.mxu0 0.0
    %9139 = vmatpush1.msra.mxu0 %v9091
    %9140 = vmatprep.subr.mxu0 0.0
    %9141 = vmatpush1.msra.mxu0 %v9093
    %9142 = vmatprep.subr.mxu0 0.0
    %9143 = vmatpush1.msra.mxu0 %v9095
    %9144 = vmatprep.subr.mxu0 0.0
    %9145 = vmatpush1.msra.mxu0 %v9097
    %9146 = vmatprep.subr.mxu0 0.0
    %9147 = vmatpush1.msra.mxu0 %v9099
    %9148 = vmatprep.subr.mxu0 0.0
    %9149 = vmatpush1.msra.mxu0 %v9101
    %9150 = vmatprep.subr.mxu0 0.0
    %9151 = vmatpush1.msra.mxu0 %v9103
    %9152 = vmatprep.subr.mxu0 0.0
    %9153 = vmatpush1.msra.mxu0 %v9105
    %9154 = vmatprep.subr.mxu0 0.0
    %9155 = vmatpush1.msra.mxu0 0.0
    %9156 = vmatprep.subr.mxu0 0.0
    %9157 = vmatpush1.msra.mxu0 0.0
    %9158 = vmatprep.subr.mxu0 0.0
    %9159 = vmatpush1.msra.mxu0 0.0
    %9160 = vmatprep.subr.mxu0 0.0
    %9161 = vmatpush1.msra.mxu0 0.0
    %9162 = vmatprep.subr.mxu0 0.0
    %9163 = vmatpush1.msra.mxu0 0.0
    %9164 = vmatprep.subr.mxu0 0.0
    %9165 = vmatpush1.msra.mxu0 0.0
    %9166 = vmatprep.subr.mxu0 0.0
    %9167 = vmatpush1.msra.mxu0 0.0
    %9168 = vmatprep.subr.mxu0 0.0
    %9169 = vmatpush1.msra.mxu0 0.0
    %9170 = vmatprep.subr.mxu0 0.0
    %9171 = vmatpush1.msra.mxu0 0.0
    %9172 = vmatprep.subr.mxu0 0.0
    %9173 = vmatpush1.msra.mxu0 0.0
    %9174 = vmatprep.subr.mxu0 0.0
    %9175 = vmatpush1.msra.mxu0 0.0
    %9176 = vmatprep.subr.mxu0 0.0
    %9177 = vmatpush1.msra.mxu0 0.0
    %9178 = vmatprep.subr.mxu0 0.0
    %9179 = vmatpush1.msra.mxu0 0.0
    %9180 = vmatprep.subr.mxu0 0.0
    %9181 = vmatpush1.msra.mxu0 0.0
    %9182 = vmatprep.subr.mxu0 0.0
    %9183 = vmatpush1.msra.mxu0 0.0
    %9184 = vmatprep.subr.mxu0 0.0
    %9185 = vmatpush1.msra.mxu0 0.0
    %9186 = vmatprep.subr.mxu0 0.0
    %9187 = vmatpush1.msra.mxu0 0.0
    %9188 = vmatprep.subr.mxu0 0.0
    %9189 = vmatpush1.msra.mxu0 0.0
    %9190 = vmatprep.subr.mxu0 0.0
    %9191 = vmatpush1.msra.mxu0 0.0
    %9192 = vmatprep.subr.mxu0 0.0
    %9193 = vmatpush1.msra.mxu0 0.0
    %9194 = vmatprep.subr.mxu0 0.0
    %9195 = vmatpush1.msra.mxu0 0.0
    %9196 = vmatprep.subr.mxu0 0.0
    %9197 = vmatpush1.msra.mxu0 0.0
    %9198 = vmatprep.subr.mxu0 0.0
    %9199 = vmatpush1.msra.mxu0 0.0
    %9200 = vmatprep.subr.mxu0 0.0
    %9201 = vmatpush1.msra.mxu0 0.0
    %9202 = vmatprep.mubr.f32.mxu0 0.0
    %9203 = vmatmul.mubr.f32.gmra.mrb[0].mxu0 %v9115
    %v9204 = vpop.f32.mrb[0].mxu0
    %v9205 = vadd.f32 0.0, %v9204
    %v9206 = vpop.f32.mrb[0].mxu0
    %9207 = vmatprep.mubr.f32.mxu0 0.0
    %9208 = vmatmul.mubr.f32.gmra.mrb[0].mxu0 %v9118
    %v9209 = vpop.f32.mrb[0].mxu0
    %v9210 = vadd.f32 0.0, %v9209
    %v9211 = vpop.f32.mrb[0].mxu0
    %9212 = vmatprep.mubr.f32.mxu0 0.0
    %9213 = vmatmul.mubr.f32.gmra.mrb[0].mxu0 %v9121
    %v9214 = vpop.f32.mrb[0].mxu0
    %v9215 = vadd.f32 0.0, %v9214
    %v9216 = vpop.f32.mrb[0].mxu0
    %9217 = vmatprep.mubr.f32.mxu0 0.0
    %9218 = vmatmul.mubr.f32.gmra.mrb[0].mxu0 %v9124
    %v9219 = vpop.f32.mrb[0].mxu0
    %v9220 = vadd.f32 0.0, %v9219
    %v9221 = vpop.f32.mrb[0].mxu0
    %9222 = vmatprep.mubr.f32.mxu0 0.0
    %9223 = vmatmul.mubr.f32.gmra.mrb[0].mxu0 %v9127
    %v9224 = vpop.f32.mrb[0].mxu0
    %v9225 = vadd.f32 0.0, %v9224
    %v9226 = vpop.f32.mrb[0].mxu0
    %9227 = vmatprep.mubr.f32.mxu0 0.0
    %9228 = vmatmul.mubr.f32.gmra.mrb[0].mxu0 %v9130
    %v9229 = vpop.f32.mrb[0].mxu0
    %v9230 = vadd.f32 0.0, %v9229
    %v9231 = vpop.f32.mrb[0].mxu0
    %9232 = vmatprep.mubr.f32.mxu0 0.0
    %9233 = vmatmul.mubr.f32.gmra.mrb[0].mxu0 %v9133
    %v9234 = vpop.f32.mrb[0].mxu0
    %v9235 = vadd.f32 0.0, %v9234
    %v9236 = vpop.f32.mrb[0].mxu0
    %9237 = vmatprep.mubr.f32.mxu0 0.0
    %9238 = vmatmul.mubr.f32.gmra.mrb[0].mxu0 %v9136
    %v9239 = vpop.f32.mrb[0].mxu0
    %v9240 = vadd.f32 0.0, %v9239
    %v9241 = vpop.f32.mrb[0].mxu0
    %9242 = vdwg.mxu0
    %9251 = vrot.lane.b32.xlu0 %v9205, 24
    %v9252 = vpop.permute.xlu0 %9251
    %9253 = vrot.lane.b32.xlu0 %v9210, 24
    %v9254 = vpop.permute.xlu0 %9253
    %9255 = vrot.lane.b32.xlu0 %v9215, 24
    %v9256 = vpop.permute.xlu0 %9255
    %9257 = vrot.lane.b32.xlu0 %v9220, 24
    %v9258 = vpop.permute.xlu0 %9257
    %9259 = vrot.lane.b32.xlu0 %v9225, 24
    %v9260 = vpop.permute.xlu0 %9259
    %9261 = vrot.lane.b32.xlu0 %v9230, 24
    %v9262 = vpop.permute.xlu0 %9261
    %9263 = vrot.lane.b32.xlu0 %v9235, 24
    %v9264 = vpop.permute.xlu0 %9263
    %9265 = vrot.lane.b32.xlu0 %v9240, 24
    %v9266 = vpop.permute.xlu0 %9265
    %9275 = vst.msk [vmem:[#allocation2 + $0x40] sm:$0xff] %vm2603, %v9252
    %9276 = vst.msk [vmem:[#allocation2 + $0x48] sm:$0xff] %vm2603, %v9254
    %9277 = vst.msk [vmem:[#allocation2 + $0x50] sm:$0xff] %vm2603, %v9256
    %9278 = vst.msk [vmem:[#allocation2 + $0x58] sm:$0xff] %vm2603, %v9258
    %9279 = vst.msk [vmem:[#allocation2 + $0x60] sm:$0xff] %vm2603, %v9260
    %9280 = vst.msk [vmem:[#allocation2 + $0x68] sm:$0xff] %vm2603, %v9262
    %9281 = vst.msk [vmem:[#allocation2 + $0x70] sm:$0xff] %vm2603, %v9264
    %9282 = vst.msk [vmem:[#allocation2 + $0x78] sm:$0xff] %vm2603, %v9266
    %v9283 = vld [vmem:[#allocation2] sm:$0xff]
    %v9284 = vld [vmem:[#allocation2 + $0x8] sm:$0xff]
    %v9285 = vld [vmem:[#allocation2 + $0x10] sm:$0xff]
    %v9286 = vld [vmem:[#allocation2 + $0x18] sm:$0xff]
    %v9287 = vld [vmem:[#allocation2 + $0x20] sm:$0xff]
    %v9288 = vld [vmem:[#allocation2 + $0x28] sm:$0xff]
    %v9289 = vld [vmem:[#allocation2 + $0x30] sm:$0xff]
    %v9290 = vld [vmem:[#allocation2 + $0x38] sm:$0xff]
    %v9291 = vld [vmem:[#allocation2 + $0x40] sm:$0xff]
    %v9292 = vld [vmem:[#allocation2 + $0x48] sm:$0xff]
    %v9293 = vld [vmem:[#allocation2 + $0x50] sm:$0xff]
    %v9294 = vld [vmem:[#allocation2 + $0x58] sm:$0xff]
    %v9295 = vld [vmem:[#allocation2 + $0x60] sm:$0xff]
    %v9296 = vld [vmem:[#allocation2 + $0x68] sm:$0xff]
    %v9297 = vld [vmem:[#allocation2 + $0x70] sm:$0xff]
    %v9298 = vld [vmem:[#allocation2 + $0x78] sm:$0xff]
    %s9299 = scalar_lea.vmem %s7, 32
    %v9300 = vld [vmem:[%s9299] sm:$0xff]
    %v9301 = vld [vmem:[%s9299 + $0x8] sm:$0xff]
    %v9302 = vld [vmem:[%s9299 + $0x10] sm:$0xff]
    %v9303 = vld [vmem:[%s9299 + $0x18] sm:$0xff]
    %s9304 = scalar_lea.vmem [#allocation9], 1
    %v9305 = vld [vmem:[%s9304] sm:$0x1]
    %v9307 = vlaneseq
    %v9308 = vshrl.u32 %v9307, 7
    %v9309 = vsub.s32 0, %v9308
    %v9310 = vrot.slane %v9305, %v9309
    %v9313 = vsel %vm213, %v9283, 0
    %v9316 = vsel %vm213, %v9284, 0
    %v9319 = vsel %vm213, %v9285, 0
    %v9322 = vsel %vm213, %v9286, 0
    %v9325 = vsel %vm213, %v9287, 0
    %v9328 = vsel %vm213, %v9288, 0
    %v9331 = vsel %vm213, %v9289, 0
    %v9334 = vsel %vm213, %v9290, 0
    %v9337 = vsel %vm213, %v9291, 0
    %v9340 = vsel %vm213, %v9292, 0
    %v9343 = vsel %vm213, %v9293, 0
    %v9346 = vsel %vm213, %v9294, 0
    %v9349 = vsel %vm213, %v9295, 0
    %v9352 = vsel %vm213, %v9296, 0
    %v9355 = vsel %vm213, %v9297, 0
    %v9358 = vsel %vm213, %v9298, 0
    %9360 = vmatprep.subr.mxu0 0.0
    %9361 = vmatpush1.msra.mxu0 %v9300
    %9362 = vmatprep.subr.mxu0 0.0
    %9363 = vmatpush1.msra.mxu0 %v9301
    %9364 = vmatprep.subr.mxu0 0.0
    %9365 = vmatpush1.msra.mxu0 %v9302
    %9366 = vmatprep.subr.mxu0 0.0
    %9367 = vmatpush1.msra.mxu0 %v9303
    %9368 = vmatprep.subr.mxu0 0.0
    %9369 = vmatpush1.msra.mxu0 0.0
    %9370 = vmatprep.subr.mxu0 0.0
    %9371 = vmatpush1.msra.mxu0 0.0
    %9372 = vmatprep.subr.mxu0 0.0
    %9373 = vmatpush1.msra.mxu0 0.0
    %9374 = vmatprep.subr.mxu0 0.0
    %9375 = vmatpush1.msra.mxu0 0.0
    %9376 = vmatprep.subr.mxu0 0.0
    %9377 = vmatpush1.msra.mxu0 0.0
    %9378 = vmatprep.subr.mxu0 0.0
    %9379 = vmatpush1.msra.mxu0 0.0
    %9380 = vmatprep.subr.mxu0 0.0
    %9381 = vmatpush1.msra.mxu0 0.0
    %9382 = vmatprep.subr.mxu0 0.0
    %9383 = vmatpush1.msra.mxu0 0.0
    %9384 = vmatprep.subr.mxu0 0.0
    %9385 = vmatpush1.msra.mxu0 0.0
    %9386 = vmatprep.subr.mxu0 0.0
    %9387 = vmatpush1.msra.mxu0 0.0
    %9388 = vmatprep.subr.mxu0 0.0
    %9389 = vmatpush1.msra.mxu0 0.0
    %9390 = vmatprep.subr.mxu0 0.0
    %9391 = vmatpush1.msra.mxu0 0.0
    %9392 = vmatprep.subr.mxu0 0.0
    %9393 = vmatpush1.msra.mxu0 0.0
    %9394 = vmatprep.subr.mxu0 0.0
    %9395 = vmatpush1.msra.mxu0 0.0
    %9396 = vmatprep.subr.mxu0 0.0
    %9397 = vmatpush1.msra.mxu0 0.0
    %9398 = vmatprep.subr.mxu0 0.0
    %9399 = vmatpush1.msra.mxu0 0.0
    %9400 = vmatprep.subr.mxu0 0.0
    %9401 = vmatpush1.msra.mxu0 0.0
    %9402 = vmatprep.subr.mxu0 0.0
    %9403 = vmatpush1.msra.mxu0 0.0
    %9404 = vmatprep.subr.mxu0 0.0
    %9405 = vmatpush1.msra.mxu0 0.0
    %9406 = vmatprep.subr.mxu0 0.0
    %9407 = vmatpush1.msra.mxu0 0.0
    %9408 = vmatprep.subr.mxu0 0.0
    %9409 = vmatpush1.msra.mxu0 0.0
    %9410 = vmatprep.subr.mxu0 0.0
    %9411 = vmatpush1.msra.mxu0 0.0
    %9412 = vmatprep.subr.mxu0 0.0
    %9413 = vmatpush1.msra.mxu0 0.0
    %9414 = vmatprep.subr.mxu0 0.0
    %9415 = vmatpush1.msra.mxu0 0.0
    %9416 = vmatprep.subr.mxu0 0.0
    %9417 = vmatpush1.msra.mxu0 0.0
    %9418 = vmatprep.subr.mxu0 0.0
    %9419 = vmatpush1.msra.mxu0 0.0
    %9420 = vmatprep.subr.mxu0 0.0
    %9421 = vmatpush1.msra.mxu0 0.0
    %9422 = vmatprep.subr.mxu0 0.0
    %9423 = vmatpush1.msra.mxu0 0.0
    %9424 = vmatprep.mubr.f32.mxu0 0.0
    %9425 = vmatmul.mubr.f32.gmra.mrb[0].mxu0 %v9313
    %v9426 = vpop.f32.mrb[0].mxu0
    %v9427 = vadd.f32 %v9310, %v9426
    %v9428 = vpop.f32.mrb[0].mxu0
    %9429 = vmatprep.mubr.f32.mxu0 0.0
    %9430 = vmatmul.mubr.f32.gmra.mrb[0].mxu0 %v9316
    %v9431 = vpop.f32.mrb[0].mxu0
    %v9432 = vadd.f32 %v9310, %v9431
    %v9433 = vpop.f32.mrb[0].mxu0
    %9434 = vmatprep.mubr.f32.mxu0 0.0
    %9435 = vmatmul.mubr.f32.gmra.mrb[0].mxu0 %v9319
    %v9436 = vpop.f32.mrb[0].mxu0
    %v9437 = vadd.f32 %v9310, %v9436
    %v9438 = vpop.f32.mrb[0].mxu0
    %9439 = vmatprep.mubr.f32.mxu0 0.0
    %9440 = vmatmul.mubr.f32.gmra.mrb[0].mxu0 %v9322
    %v9441 = vpop.f32.mrb[0].mxu0
    %v9442 = vadd.f32 %v9310, %v9441
    %v9443 = vpop.f32.mrb[0].mxu0
    %9444 = vmatprep.mubr.f32.mxu0 0.0
    %9445 = vmatmul.mubr.f32.gmra.mrb[0].mxu0 %v9325
    %v9446 = vpop.f32.mrb[0].mxu0
    %v9447 = vadd.f32 %v9310, %v9446
    %v9448 = vpop.f32.mrb[0].mxu0
    %9449 = vmatprep.mubr.f32.mxu0 0.0
    %9450 = vmatmul.mubr.f32.gmra.mrb[0].mxu0 %v9328
    %v9451 = vpop.f32.mrb[0].mxu0
    %v9452 = vadd.f32 %v9310, %v9451
    %v9453 = vpop.f32.mrb[0].mxu0
    %9454 = vmatprep.mubr.f32.mxu0 0.0
    %9455 = vmatmul.mubr.f32.gmra.mrb[0].mxu0 %v9331
    %v9456 = vpop.f32.mrb[0].mxu0
    %v9457 = vadd.f32 %v9310, %v9456
    %v9458 = vpop.f32.mrb[0].mxu0
    %9459 = vmatprep.mubr.f32.mxu0 0.0
    %9460 = vmatmul.mubr.f32.gmra.mrb[0].mxu0 %v9334
    %v9461 = vpop.f32.mrb[0].mxu0
    %v9462 = vadd.f32 %v9310, %v9461
    %v9463 = vpop.f32.mrb[0].mxu0
    %9464 = vmatprep.mubr.f32.mxu0 0.0
    %9465 = vmatmul.mubr.f32.gmra.mrb[0].mxu0 %v9337
    %v9466 = vpop.f32.mrb[0].mxu0
    %v9467 = vadd.f32 %v9310, %v9466
    %v9468 = vpop.f32.mrb[0].mxu0
    %9469 = vmatprep.mubr.f32.mxu0 0.0
    %9470 = vmatmul.mubr.f32.gmra.mrb[0].mxu0 %v9340
    %v9471 = vpop.f32.mrb[0].mxu0
    %v9472 = vadd.f32 %v9310, %v9471
    %v9473 = vpop.f32.mrb[0].mxu0
    %9474 = vmatprep.mubr.f32.mxu0 0.0
    %9475 = vmatmul.mubr.f32.gmra.mrb[0].mxu0 %v9343
    %v9476 = vpop.f32.mrb[0].mxu0
    %v9477 = vadd.f32 %v9310, %v9476
    %v9478 = vpop.f32.mrb[0].mxu0
    %9479 = vmatprep.mubr.f32.mxu0 0.0
    %9480 = vmatmul.mubr.f32.gmra.mrb[0].mxu0 %v9346
    %v9481 = vpop.f32.mrb[0].mxu0
    %v9482 = vadd.f32 %v9310, %v9481
    %v9483 = vpop.f32.mrb[0].mxu0
    %9484 = vmatprep.mubr.f32.mxu0 0.0
    %9485 = vmatmul.mubr.f32.gmra.mrb[0].mxu0 %v9349
    %v9486 = vpop.f32.mrb[0].mxu0
    %v9487 = vadd.f32 %v9310, %v9486
    %v9488 = vpop.f32.mrb[0].mxu0
    %9489 = vmatprep.mubr.f32.mxu0 0.0
    %9490 = vmatmul.mubr.f32.gmra.mrb[0].mxu0 %v9352
    %v9491 = vpop.f32.mrb[0].mxu0
    %v9492 = vadd.f32 %v9310, %v9491
    %v9493 = vpop.f32.mrb[0].mxu0
    %9494 = vmatprep.mubr.f32.mxu0 0.0
    %9495 = vmatmul.mubr.f32.gmra.mrb[0].mxu0 %v9355
    %v9496 = vpop.f32.mrb[0].mxu0
    %v9497 = vadd.f32 %v9310, %v9496
    %v9498 = vpop.f32.mrb[0].mxu0
    %9499 = vmatprep.mubr.f32.mxu0 0.0
    %9500 = vmatmul.mubr.f32.gmra.mrb[0].mxu0 %v9358
    %v9501 = vpop.f32.mrb[0].mxu0
    %v9502 = vadd.f32 %v9310, %v9501
    %v9503 = vpop.f32.mrb[0].mxu0
    %9504 = vdwg.mxu0
    %v9505 = vadd.f32 %v5541, %v9427
    %v9506 = vadd.f32 %v5542, %v9432
    %v9507 = vadd.f32 %v5543, %v9437
    %v9508 = vadd.f32 %v5544, %v9442
    %v9509 = vadd.f32 %v5545, %v9447
    %v9510 = vadd.f32 %v5546, %v9452
    %v9511 = vadd.f32 %v5547, %v9457
    %v9512 = vadd.f32 %v5548, %v9462
    %v9513 = vadd.f32 %v5549, %v9467
    %v9514 = vadd.f32 %v5550, %v9472
    %v9515 = vadd.f32 %v5551, %v9477
    %v9516 = vadd.f32 %v5552, %v9482
    %v9517 = vadd.f32 %v5553, %v9487
    %v9518 = vadd.f32 %v5554, %v9492
    %v9519 = vadd.f32 %v5555, %v9497
    %v9520 = vadd.f32 %v5556, %v9502
    %s9521 = scalar_lea.vmem %s13, 1
    %v9522 = vld [vmem:[%s9521] sm:$0x1]
    %s9523 = scalar_lea.vmem [#allocation15], 1
    %v9524 = vld [vmem:[%s9523] sm:$0x1]
    %v9525 = vsel %vm213, %v9505, 0.0
    %9526 = vadd.xlane.f32.xlu0 %v9525
    %v9527 = vpop.xlane.xlu0 %9526
    %v9528 = vsel %vm213, %v9506, 0.0
    %9529 = vadd.xlane.f32.xlu0 %v9528
    %v9530 = vpop.xlane.xlu0 %9529
    %v9531 = vsel %vm213, %v9507, 0.0
    %9532 = vadd.xlane.f32.xlu0 %v9531
    %v9533 = vpop.xlane.xlu0 %9532
    %v9534 = vsel %vm213, %v9508, 0.0
    %9535 = vadd.xlane.f32.xlu0 %v9534
    %v9536 = vpop.xlane.xlu0 %9535
    %v9537 = vsel %vm213, %v9509, 0.0
    %9538 = vadd.xlane.f32.xlu0 %v9537
    %v9539 = vpop.xlane.xlu0 %9538
    %v9540 = vsel %vm213, %v9510, 0.0
    %9541 = vadd.xlane.f32.xlu0 %v9540
    %v9542 = vpop.xlane.xlu0 %9541
    %v9543 = vsel %vm213, %v9511, 0.0
    %9544 = vadd.xlane.f32.xlu0 %v9543
    %v9545 = vpop.xlane.xlu0 %9544
    %v9546 = vsel %vm213, %v9512, 0.0
    %9547 = vadd.xlane.f32.xlu0 %v9546
    %v9548 = vpop.xlane.xlu0 %9547
    %v9549 = vsel %vm213, %v9513, 0.0
    %9550 = vadd.xlane.f32.xlu0 %v9549
    %v9551 = vpop.xlane.xlu0 %9550
    %v9552 = vsel %vm213, %v9514, 0.0
    %9553 = vadd.xlane.f32.xlu0 %v9552
    %v9554 = vpop.xlane.xlu0 %9553
    %v9555 = vsel %vm213, %v9515, 0.0
    %9556 = vadd.xlane.f32.xlu0 %v9555
    %v9557 = vpop.xlane.xlu0 %9556
    %v9558 = vsel %vm213, %v9516, 0.0
    %9559 = vadd.xlane.f32.xlu0 %v9558
    %v9560 = vpop.xlane.xlu0 %9559
    %v9561 = vsel %vm213, %v9517, 0.0
    %9562 = vadd.xlane.f32.xlu0 %v9561
    %v9563 = vpop.xlane.xlu0 %9562
    %v9564 = vsel %vm213, %v9518, 0.0
    %9565 = vadd.xlane.f32.xlu0 %v9564
    %v9566 = vpop.xlane.xlu0 %9565
    %v9567 = vsel %vm213, %v9519, 0.0
    %9568 = vadd.xlane.f32.xlu0 %v9567
    %v9569 = vpop.xlane.xlu0 %9568
    %v9570 = vsel %vm213, %v9520, 0.0
    %9571 = vadd.xlane.f32.xlu0 %v9570
    %v9572 = vpop.xlane.xlu0 %9571
    %v9573 = vmul.f32 %v9527, %v4658
    %v9574 = vmul.f32 %v9530, %v4658
    %v9575 = vmul.f32 %v9533, %v4658
    %v9576 = vmul.f32 %v9536, %v4658
    %v9577 = vmul.f32 %v9539, %v4658
    %v9578 = vmul.f32 %v9542, %v4658
    %v9579 = vmul.f32 %v9545, %v4658
    %v9580 = vmul.f32 %v9548, %v4658
    %v9581 = vmul.f32 %v9551, %v4658
    %v9582 = vmul.f32 %v9554, %v4658
    %v9583 = vmul.f32 %v9557, %v4658
    %v9584 = vmul.f32 %v9560, %v4658
    %v9585 = vmul.f32 %v9563, %v4658
    %v9586 = vmul.f32 %v9566, %v4658
    %v9587 = vmul.f32 %v9569, %v4658
    %v9588 = vmul.f32 %v9572, %v4658
    %v9589 = vsub.f32 %v9505, %v9573
    %v9590 = vsub.f32 %v9506, %v9574
    %v9591 = vsub.f32 %v9507, %v9575
    %v9592 = vsub.f32 %v9508, %v9576
    %v9593 = vsub.f32 %v9509, %v9577
    %v9594 = vsub.f32 %v9510, %v9578
    %v9595 = vsub.f32 %v9511, %v9579
    %v9596 = vsub.f32 %v9512, %v9580
    %v9597 = vsub.f32 %v9513, %v9581
    %v9598 = vsub.f32 %v9514, %v9582
    %v9599 = vsub.f32 %v9515, %v9583
    %v9600 = vsub.f32 %v9516, %v9584
    %v9601 = vsub.f32 %v9517, %v9585
    %v9602 = vsub.f32 %v9518, %v9586
    %v9603 = vsub.f32 %v9519, %v9587
    %v9604 = vsub.f32 %v9520, %v9588
    %v9605 = vmul.f32 %v9589, %v9589
    %v9606 = vmul.f32 %v9590, %v9590
    %v9607 = vmul.f32 %v9591, %v9591
    %v9608 = vmul.f32 %v9592, %v9592
    %v9609 = vmul.f32 %v9593, %v9593
    %v9610 = vmul.f32 %v9594, %v9594
    %v9611 = vmul.f32 %v9595, %v9595
    %v9612 = vmul.f32 %v9596, %v9596
    %v9613 = vmul.f32 %v9597, %v9597
    %v9614 = vmul.f32 %v9598, %v9598
    %v9615 = vmul.f32 %v9599, %v9599
    %v9616 = vmul.f32 %v9600, %v9600
    %v9617 = vmul.f32 %v9601, %v9601
    %v9618 = vmul.f32 %v9602, %v9602
    %v9619 = vmul.f32 %v9603, %v9603
    %v9620 = vmul.f32 %v9604, %v9604
    %v9621 = vsel %vm213, %v9605, 0.0
    %9622 = vadd.xlane.f32.xlu0 %v9621
    %v9623 = vpop.xlane.xlu0 %9622
    %v9624 = vsel %vm213, %v9606, 0.0
    %9625 = vadd.xlane.f32.xlu0 %v9624
    %v9626 = vpop.xlane.xlu0 %9625
    %v9627 = vsel %vm213, %v9607, 0.0
    %9628 = vadd.xlane.f32.xlu0 %v9627
    %v9629 = vpop.xlane.xlu0 %9628
    %v9630 = vsel %vm213, %v9608, 0.0
    %9631 = vadd.xlane.f32.xlu0 %v9630
    %v9632 = vpop.xlane.xlu0 %9631
    %v9633 = vsel %vm213, %v9609, 0.0
    %9634 = vadd.xlane.f32.xlu0 %v9633
    %v9635 = vpop.xlane.xlu0 %9634
    %v9636 = vsel %vm213, %v9610, 0.0
    %9637 = vadd.xlane.f32.xlu0 %v9636
    %v9638 = vpop.xlane.xlu0 %9637
    %v9639 = vsel %vm213, %v9611, 0.0
    %9640 = vadd.xlane.f32.xlu0 %v9639
    %v9641 = vpop.xlane.xlu0 %9640
    %v9642 = vsel %vm213, %v9612, 0.0
    %9643 = vadd.xlane.f32.xlu0 %v9642
    %v9644 = vpop.xlane.xlu0 %9643
    %v9645 = vsel %vm213, %v9613, 0.0
    %9646 = vadd.xlane.f32.xlu0 %v9645
    %v9647 = vpop.xlane.xlu0 %9646
    %v9648 = vsel %vm213, %v9614, 0.0
    %9649 = vadd.xlane.f32.xlu0 %v9648
    %v9650 = vpop.xlane.xlu0 %9649
    %v9651 = vsel %vm213, %v9615, 0.0
    %9652 = vadd.xlane.f32.xlu0 %v9651
    %v9653 = vpop.xlane.xlu0 %9652
    %v9654 = vsel %vm213, %v9616, 0.0
    %9655 = vadd.xlane.f32.xlu0 %v9654
    %v9656 = vpop.xlane.xlu0 %9655
    %v9657 = vsel %vm213, %v9617, 0.0
    %9658 = vadd.xlane.f32.xlu0 %v9657
    %v9659 = vpop.xlane.xlu0 %9658
    %v9660 = vsel %vm213, %v9618, 0.0
    %9661 = vadd.xlane.f32.xlu0 %v9660
    %v9662 = vpop.xlane.xlu0 %9661
    %v9663 = vsel %vm213, %v9619, 0.0
    %9664 = vadd.xlane.f32.xlu0 %v9663
    %v9665 = vpop.xlane.xlu0 %9664
    %v9666 = vsel %vm213, %v9620, 0.0
    %9667 = vadd.xlane.f32.xlu0 %v9666
    %v9668 = vpop.xlane.xlu0 %9667
    %v9669 = vmul.f32 %v9623, %v4658
    %v9670 = vmul.f32 %v9626, %v4658
    %v9671 = vmul.f32 %v9629, %v4658
    %v9672 = vmul.f32 %v9632, %v4658
    %v9673 = vmul.f32 %v9635, %v4658
    %v9674 = vmul.f32 %v9638, %v4658
    %v9675 = vmul.f32 %v9641, %v4658
    %v9676 = vmul.f32 %v9644, %v4658
    %v9677 = vmul.f32 %v9647, %v4658
    %v9678 = vmul.f32 %v9650, %v4658
    %v9679 = vmul.f32 %v9653, %v4658
    %v9680 = vmul.f32 %v9656, %v4658
    %v9681 = vmul.f32 %v9659, %v4658
    %v9682 = vmul.f32 %v9662, %v4658
    %v9683 = vmul.f32 %v9665, %v4658
    %v9684 = vmul.f32 %v9668, %v4658
    %v9685 = vadd.f32 %v9669, 1e-05
    %v9686 = vadd.f32 %v9670, 1e-05
    %v9687 = vadd.f32 %v9671, 1e-05
    %v9688 = vadd.f32 %v9672, 1e-05
    %v9689 = vadd.f32 %v9673, 1e-05
    %v9690 = vadd.f32 %v9674, 1e-05
    %v9691 = vadd.f32 %v9675, 1e-05
    %v9692 = vadd.f32 %v9676, 1e-05
    %v9693 = vadd.f32 %v9677, 1e-05
    %v9694 = vadd.f32 %v9678, 1e-05
    %v9695 = vadd.f32 %v9679, 1e-05
    %v9696 = vadd.f32 %v9680, 1e-05
    %v9697 = vadd.f32 %v9681, 1e-05
    %v9698 = vadd.f32 %v9682, 1e-05
    %v9699 = vadd.f32 %v9683, 1e-05
    %v9700 = vadd.f32 %v9684, 1e-05
    %v9701 = vrsqrt.pop %v9685
    %v9702 = vrsqrt.pop %v9686
    %v9703 = vrsqrt.pop %v9687
    %v9704 = vrsqrt.pop %v9688
    %v9705 = vrsqrt.pop %v9689
    %v9706 = vrsqrt.pop %v9690
    %v9707 = vrsqrt.pop %v9691
    %v9708 = vrsqrt.pop %v9692
    %v9709 = vrsqrt.pop %v9693
    %v9710 = vrsqrt.pop %v9694
    %v9711 = vrsqrt.pop %v9695
    %v9712 = vrsqrt.pop %v9696
    %v9713 = vrsqrt.pop %v9697
    %v9714 = vrsqrt.pop %v9698
    %v9715 = vrsqrt.pop %v9699
    %v9716 = vrsqrt.pop %v9700
    %v9717 = vmul.f32 %v9589, %v9701
    %v9718 = vmul.f32 %v9590, %v9702
    %v9719 = vmul.f32 %v9591, %v9703
    %v9720 = vmul.f32 %v9592, %v9704
    %v9721 = vmul.f32 %v9593, %v9705
    %v9722 = vmul.f32 %v9594, %v9706
    %v9723 = vmul.f32 %v9595, %v9707
    %v9724 = vmul.f32 %v9596, %v9708
    %v9725 = vmul.f32 %v9597, %v9709
    %v9726 = vmul.f32 %v9598, %v9710
    %v9727 = vmul.f32 %v9599, %v9711
    %v9728 = vmul.f32 %v9600, %v9712
    %v9729 = vmul.f32 %v9601, %v9713
    %v9730 = vmul.f32 %v9602, %v9714
    %v9731 = vmul.f32 %v9603, %v9715
    %v9732 = vmul.f32 %v9604, %v9716
    %v9734 = vlaneseq
    %v9735 = vshrl.u32 %v9734, 7
    %v9736 = vsub.s32 0, %v9735
    %v9737 = vrot.slane %v9522, %v9736
    %v9739 = vmul.f32 %v9717, %v9737
    %v9740 = vmul.f32 %v9718, %v9737
    %v9741 = vmul.f32 %v9719, %v9737
    %v9742 = vmul.f32 %v9720, %v9737
    %v9743 = vmul.f32 %v9721, %v9737
    %v9744 = vmul.f32 %v9722, %v9737
    %v9745 = vmul.f32 %v9723, %v9737
    %v9746 = vmul.f32 %v9724, %v9737
    %v9747 = vmul.f32 %v9725, %v9737
    %v9748 = vmul.f32 %v9726, %v9737
    %v9749 = vmul.f32 %v9727, %v9737
    %v9750 = vmul.f32 %v9728, %v9737
    %v9751 = vmul.f32 %v9729, %v9737
    %v9752 = vmul.f32 %v9730, %v9737
    %v9753 = vmul.f32 %v9731, %v9737
    %v9754 = vmul.f32 %v9732, %v9737
    %v9756 = vlaneseq
    %v9757 = vshrl.u32 %v9756, 7
    %v9758 = vsub.s32 0, %v9757
    %v9759 = vrot.slane %v9524, %v9758
    %v9761 = vadd.f32 %v9739, %v9759
    %v9762 = vadd.f32 %v9740, %v9759
    %v9763 = vadd.f32 %v9741, %v9759
    %v9764 = vadd.f32 %v9742, %v9759
    %v9765 = vadd.f32 %v9743, %v9759
    %v9766 = vadd.f32 %v9744, %v9759
    %v9767 = vadd.f32 %v9745, %v9759
    %v9768 = vadd.f32 %v9746, %v9759
    %v9769 = vadd.f32 %v9747, %v9759
    %v9770 = vadd.f32 %v9748, %v9759
    %v9771 = vadd.f32 %v9749, %v9759
    %v9772 = vadd.f32 %v9750, %v9759
    %v9773 = vadd.f32 %v9751, %v9759
    %v9774 = vadd.f32 %v9752, %v9759
    %v9775 = vadd.f32 %v9753, %v9759
    %v9776 = vadd.f32 %v9754, %v9759
    %s9777 = scalar_lea.vmem %s9, 32
    %v9778 = vld [vmem:[%s9777] sm:$0xff]
    %v9779 = vld [vmem:[%s9777 + $0x8] sm:$0xff]
    %v9780 = vld [vmem:[%s9777 + $0x10] sm:$0xff]
    %v9781 = vld [vmem:[%s9777 + $0x18] sm:$0xff]
    %s9782 = scalar_lea.vmem [#allocation11], 1
    %v9783 = vld [vmem:[%s9782] sm:$0x1]
    %v9785 = vlaneseq
    %v9786 = vshrl.u32 %v9785, 7
    %v9787 = vsub.s32 0, %v9786
    %v9788 = vrot.slane %v9783, %v9787
    %v9791 = vsel %vm213, %v9761, 0
    %v9794 = vsel %vm213, %v9762, 0
    %v9797 = vsel %vm213, %v9763, 0
    %v9800 = vsel %vm213, %v9764, 0
    %v9803 = vsel %vm213, %v9765, 0
    %v9806 = vsel %vm213, %v9766, 0
    %v9809 = vsel %vm213, %v9767, 0
    %v9812 = vsel %vm213, %v9768, 0
    %v9815 = vsel %vm213, %v9769, 0
    %v9818 = vsel %vm213, %v9770, 0
    %v9821 = vsel %vm213, %v9771, 0
    %v9824 = vsel %vm213, %v9772, 0
    %v9827 = vsel %vm213, %v9773, 0
    %v9830 = vsel %vm213, %v9774, 0
    %v9833 = vsel %vm213, %v9775, 0
    %v9836 = vsel %vm213, %v9776, 0
    %9838 = vmatprep.subr.mxu0 0.0
    %9839 = vmatpush1.msra.mxu0 %v9778
    %9840 = vmatprep.subr.mxu0 0.0
    %9841 = vmatpush1.msra.mxu0 %v9779
    %9842 = vmatprep.subr.mxu0 0.0
    %9843 = vmatpush1.msra.mxu0 %v9780
    %9844 = vmatprep.subr.mxu0 0.0
    %9845 = vmatpush1.msra.mxu0 %v9781
    %9846 = vmatprep.subr.mxu0 0.0
    %9847 = vmatpush1.msra.mxu0 0.0
    %9848 = vmatprep.subr.mxu0 0.0
    %9849 = vmatpush1.msra.mxu0 0.0
    %9850 = vmatprep.subr.mxu0 0.0
    %9851 = vmatpush1.msra.mxu0 0.0
    %9852 = vmatprep.subr.mxu0 0.0
    %9853 = vmatpush1.msra.mxu0 0.0
    %9854 = vmatprep.subr.mxu0 0.0
    %9855 = vmatpush1.msra.mxu0 0.0
    %9856 = vmatprep.subr.mxu0 0.0
    %9857 = vmatpush1.msra.mxu0 0.0
    %9858 = vmatprep.subr.mxu0 0.0
    %9859 = vmatpush1.msra.mxu0 0.0
    %9860 = vmatprep.subr.mxu0 0.0
    %9861 = vmatpush1.msra.mxu0 0.0
    %9862 = vmatprep.subr.mxu0 0.0
    %9863 = vmatpush1.msra.mxu0 0.0
    %9864 = vmatprep.subr.mxu0 0.0
    %9865 = vmatpush1.msra.mxu0 0.0
    %9866 = vmatprep.subr.mxu0 0.0
    %9867 = vmatpush1.msra.mxu0 0.0
    %9868 = vmatprep.subr.mxu0 0.0
    %9869 = vmatpush1.msra.mxu0 0.0
    %9870 = vmatprep.subr.mxu0 0.0
    %9871 = vmatpush1.msra.mxu0 0.0
    %9872 = vmatprep.subr.mxu0 0.0
    %9873 = vmatpush1.msra.mxu0 0.0
    %9874 = vmatprep.subr.mxu0 0.0
    %9875 = vmatpush1.msra.mxu0 0.0
    %9876 = vmatprep.subr.mxu0 0.0
    %9877 = vmatpush1.msra.mxu0 0.0
    %9878 = vmatprep.subr.mxu0 0.0
    %9879 = vmatpush1.msra.mxu0 0.0
    %9880 = vmatprep.subr.mxu0 0.0
    %9881 = vmatpush1.msra.mxu0 0.0
    %9882 = vmatprep.subr.mxu0 0.0
    %9883 = vmatpush1.msra.mxu0 0.0
    %9884 = vmatprep.subr.mxu0 0.0
    %9885 = vmatpush1.msra.mxu0 0.0
    %9886 = vmatprep.subr.mxu0 0.0
    %9887 = vmatpush1.msra.mxu0 0.0
    %9888 = vmatprep.subr.mxu0 0.0
    %9889 = vmatpush1.msra.mxu0 0.0
    %9890 = vmatprep.subr.mxu0 0.0
    %9891 = vmatpush1.msra.mxu0 0.0
    %9892 = vmatprep.subr.mxu0 0.0
    %9893 = vmatpush1.msra.mxu0 0.0
    %9894 = vmatprep.subr.mxu0 0.0
    %9895 = vmatpush1.msra.mxu0 0.0
    %9896 = vmatprep.subr.mxu0 0.0
    %9897 = vmatpush1.msra.mxu0 0.0
    %9898 = vmatprep.subr.mxu0 0.0
    %9899 = vmatpush1.msra.mxu0 0.0
    %9900 = vmatprep.subr.mxu0 0.0
    %9901 = vmatpush1.msra.mxu0 0.0
    %9902 = vmatprep.mubr.f32.mxu0 0.0
    %9903 = vmatmul.mubr.f32.gmra.mrb[0].mxu0 %v9791
    %v9904 = vpop.f32.mrb[0].mxu0
    %v9905 = vadd.f32 %v9788, %v9904
    %v9906 = vpop.f32.mrb[0].mxu0
    %9907 = vmatprep.mubr.f32.mxu0 0.0
    %9908 = vmatmul.mubr.f32.gmra.mrb[0].mxu0 %v9794
    %v9909 = vpop.f32.mrb[0].mxu0
    %v9910 = vadd.f32 %v9788, %v9909
    %v9911 = vpop.f32.mrb[0].mxu0
    %9912 = vmatprep.mubr.f32.mxu0 0.0
    %9913 = vmatmul.mubr.f32.gmra.mrb[0].mxu0 %v9797
    %v9914 = vpop.f32.mrb[0].mxu0
    %v9915 = vadd.f32 %v9788, %v9914
    %v9916 = vpop.f32.mrb[0].mxu0
    %9917 = vmatprep.mubr.f32.mxu0 0.0
    %9918 = vmatmul.mubr.f32.gmra.mrb[0].mxu0 %v9800
    %v9919 = vpop.f32.mrb[0].mxu0
    %v9920 = vadd.f32 %v9788, %v9919
    %v9921 = vpop.f32.mrb[0].mxu0
    %9922 = vmatprep.mubr.f32.mxu0 0.0
    %9923 = vmatmul.mubr.f32.gmra.mrb[0].mxu0 %v9803
    %v9924 = vpop.f32.mrb[0].mxu0
    %v9925 = vadd.f32 %v9788, %v9924
    %v9926 = vpop.f32.mrb[0].mxu0
    %9927 = vmatprep.mubr.f32.mxu0 0.0
    %9928 = vmatmul.mubr.f32.gmra.mrb[0].mxu0 %v9806
    %v9929 = vpop.f32.mrb[0].mxu0
    %v9930 = vadd.f32 %v9788, %v9929
    %v9931 = vpop.f32.mrb[0].mxu0
    %9932 = vmatprep.mubr.f32.mxu0 0.0
    %9933 = vmatmul.mubr.f32.gmra.mrb[0].mxu0 %v9809
    %v9934 = vpop.f32.mrb[0].mxu0
    %v9935 = vadd.f32 %v9788, %v9934
    %v9936 = vpop.f32.mrb[0].mxu0
    %9937 = vmatprep.mubr.f32.mxu0 0.0
    %9938 = vmatmul.mubr.f32.gmra.mrb[0].mxu0 %v9812
    %v9939 = vpop.f32.mrb[0].mxu0
    %v9940 = vadd.f32 %v9788, %v9939
    %v9941 = vpop.f32.mrb[0].mxu0
    %9942 = vmatprep.mubr.f32.mxu0 0.0
    %9943 = vmatmul.mubr.f32.gmra.mrb[0].mxu0 %v9815
    %v9944 = vpop.f32.mrb[0].mxu0
    %v9945 = vadd.f32 %v9788, %v9944
    %v9946 = vpop.f32.mrb[0].mxu0
    %9947 = vmatprep.mubr.f32.mxu0 0.0
    %9948 = vmatmul.mubr.f32.gmra.mrb[0].mxu0 %v9818
    %v9949 = vpop.f32.mrb[0].mxu0
    %v9950 = vadd.f32 %v9788, %v9949
    %v9951 = vpop.f32.mrb[0].mxu0
    %9952 = vmatprep.mubr.f32.mxu0 0.0
    %9953 = vmatmul.mubr.f32.gmra.mrb[0].mxu0 %v9821
    %v9954 = vpop.f32.mrb[0].mxu0
    %v9955 = vadd.f32 %v9788, %v9954
    %v9956 = vpop.f32.mrb[0].mxu0
    %9957 = vmatprep.mubr.f32.mxu0 0.0
    %9958 = vmatmul.mubr.f32.gmra.mrb[0].mxu0 %v9824
    %v9959 = vpop.f32.mrb[0].mxu0
    %v9960 = vadd.f32 %v9788, %v9959
    %v9961 = vpop.f32.mrb[0].mxu0
    %9962 = vmatprep.mubr.f32.mxu0 0.0
    %9963 = vmatmul.mubr.f32.gmra.mrb[0].mxu0 %v9827
    %v9964 = vpop.f32.mrb[0].mxu0
    %v9965 = vadd.f32 %v9788, %v9964
    %v9966 = vpop.f32.mrb[0].mxu0
    %9967 = vmatprep.mubr.f32.mxu0 0.0
    %9968 = vmatmul.mubr.f32.gmra.mrb[0].mxu0 %v9830
    %v9969 = vpop.f32.mrb[0].mxu0
    %v9970 = vadd.f32 %v9788, %v9969
    %v9971 = vpop.f32.mrb[0].mxu0
    %9972 = vmatprep.mubr.f32.mxu0 0.0
    %9973 = vmatmul.mubr.f32.gmra.mrb[0].mxu0 %v9833
    %v9974 = vpop.f32.mrb[0].mxu0
    %v9975 = vadd.f32 %v9788, %v9974
    %v9976 = vpop.f32.mrb[0].mxu0
    %9977 = vmatprep.mubr.f32.mxu0 0.0
    %9978 = vmatmul.mubr.f32.gmra.mrb[0].mxu0 %v9836
    %v9979 = vpop.f32.mrb[0].mxu0
    %v9980 = vadd.f32 %v9788, %v9979
    %v9981 = vpop.f32.mrb[0].mxu0
    %9982 = vdwg.mxu0
    %v9983 = vmax.f32 %v9905, 0.0
    %v9984 = vmax.f32 %v9910, 0.0
    %v9985 = vmax.f32 %v9915, 0.0
    %v9986 = vmax.f32 %v9920, 0.0
    %v9987 = vmax.f32 %v9925, 0.0
    %v9988 = vmax.f32 %v9930, 0.0
    %v9989 = vmax.f32 %v9935, 0.0
    %v9990 = vmax.f32 %v9940, 0.0
    %v9991 = vmax.f32 %v9945, 0.0
    %v9992 = vmax.f32 %v9950, 0.0
    %v9993 = vmax.f32 %v9955, 0.0
    %v9994 = vmax.f32 %v9960, 0.0
    %v9995 = vmax.f32 %v9965, 0.0
    %v9996 = vmax.f32 %v9970, 0.0
    %v9997 = vmax.f32 %v9975, 0.0
    %v9998 = vmax.f32 %v9980, 0.0
    %s9999 = scalar_lea.vmem [#allocation12], 32
    %v10000 = vld [vmem:[%s9999] sm:$0xff]
    %v10001 = vld [vmem:[%s9999 + $0x8] sm:$0xff]
    %v10002 = vld [vmem:[%s9999 + $0x10] sm:$0xff]
    %v10003 = vld [vmem:[%s9999 + $0x18] sm:$0xff]
    %s10004 = scalar_lea.vmem [#allocation14], 1
    %v10005 = vld [vmem:[%s10004] sm:$0x1]
    %v10007 = vlaneseq
    %v10008 = vshrl.u32 %v10007, 7
    %v10009 = vsub.s32 0, %v10008
    %v10010 = vrot.slane %v10005, %v10009
    %v10013 = vsel %vm213, %v9983, 0
    %v10016 = vsel %vm213, %v9984, 0
    %v10019 = vsel %vm213, %v9985, 0
    %v10022 = vsel %vm213, %v9986, 0
    %v10025 = vsel %vm213, %v9987, 0
    %v10028 = vsel %vm213, %v9988, 0
    %v10031 = vsel %vm213, %v9989, 0
    %v10034 = vsel %vm213, %v9990, 0
    %v10037 = vsel %vm213, %v9991, 0
    %v10040 = vsel %vm213, %v9992, 0
    %v10043 = vsel %vm213, %v9993, 0
    %v10046 = vsel %vm213, %v9994, 0
    %v10049 = vsel %vm213, %v9995, 0
    %v10052 = vsel %vm213, %v9996, 0
    %v10055 = vsel %vm213, %v9997, 0
    %v10058 = vsel %vm213, %v9998, 0
    %10060 = vmatprep.subr.mxu0 0.0
    %10061 = vmatpush1.msra.mxu0 %v10000
    %10062 = vmatprep.subr.mxu0 0.0
    %10063 = vmatpush1.msra.mxu0 %v10001
    %10064 = vmatprep.subr.mxu0 0.0
    %10065 = vmatpush1.msra.mxu0 %v10002
    %10066 = vmatprep.subr.mxu0 0.0
    %10067 = vmatpush1.msra.mxu0 %v10003
    %10068 = vmatprep.subr.mxu0 0.0
    %10069 = vmatpush1.msra.mxu0 0.0
    %10070 = vmatprep.subr.mxu0 0.0
    %10071 = vmatpush1.msra.mxu0 0.0
    %10072 = vmatprep.subr.mxu0 0.0
    %10073 = vmatpush1.msra.mxu0 0.0
    %10074 = vmatprep.subr.mxu0 0.0
    %10075 = vmatpush1.msra.mxu0 0.0
    %10076 = vmatprep.subr.mxu0 0.0
    %10077 = vmatpush1.msra.mxu0 0.0
    %10078 = vmatprep.subr.mxu0 0.0
    %10079 = vmatpush1.msra.mxu0 0.0
    %10080 = vmatprep.subr.mxu0 0.0
    %10081 = vmatpush1.msra.mxu0 0.0
    %10082 = vmatprep.subr.mxu0 0.0
    %10083 = vmatpush1.msra.mxu0 0.0
    %10084 = vmatprep.subr.mxu0 0.0
    %10085 = vmatpush1.msra.mxu0 0.0
    %10086 = vmatprep.subr.mxu0 0.0
    %10087 = vmatpush1.msra.mxu0 0.0
    %10088 = vmatprep.subr.mxu0 0.0
    %10089 = vmatpush1.msra.mxu0 0.0
    %10090 = vmatprep.subr.mxu0 0.0
    %10091 = vmatpush1.msra.mxu0 0.0
    %10092 = vmatprep.subr.mxu0 0.0
    %10093 = vmatpush1.msra.mxu0 0.0
    %10094 = vmatprep.subr.mxu0 0.0
    %10095 = vmatpush1.msra.mxu0 0.0
    %10096 = vmatprep.subr.mxu0 0.0
    %10097 = vmatpush1.msra.mxu0 0.0
    %10098 = vmatprep.subr.mxu0 0.0
    %10099 = vmatpush1.msra.mxu0 0.0
    %10100 = vmatprep.subr.mxu0 0.0
    %10101 = vmatpush1.msra.mxu0 0.0
    %10102 = vmatprep.subr.mxu0 0.0
    %10103 = vmatpush1.msra.mxu0 0.0
    %10104 = vmatprep.subr.mxu0 0.0
    %10105 = vmatpush1.msra.mxu0 0.0
    %10106 = vmatprep.subr.mxu0 0.0
    %10107 = vmatpush1.msra.mxu0 0.0
    %10108 = vmatprep.subr.mxu0 0.0
    %10109 = vmatpush1.msra.mxu0 0.0
    %10110 = vmatprep.subr.mxu0 0.0
    %10111 = vmatpush1.msra.mxu0 0.0
    %10112 = vmatprep.subr.mxu0 0.0
    %10113 = vmatpush1.msra.mxu0 0.0
    %10114 = vmatprep.subr.mxu0 0.0
    %10115 = vmatpush1.msra.mxu0 0.0
    %10116 = vmatprep.subr.mxu0 0.0
    %10117 = vmatpush1.msra.mxu0 0.0
    %10118 = vmatprep.subr.mxu0 0.0
    %10119 = vmatpush1.msra.mxu0 0.0
    %10120 = vmatprep.subr.mxu0 0.0
    %10121 = vmatpush1.msra.mxu0 0.0
    %10122 = vmatprep.subr.mxu0 0.0
    %10123 = vmatpush1.msra.mxu0 0.0
    %10124 = vmatprep.mubr.f32.mxu0 0.0
    %10125 = vmatmul.mubr.f32.gmra.mrb[0].mxu0 %v10013
    %v10126 = vpop.f32.mrb[0].mxu0
    %v10127 = vadd.f32 %v10010, %v10126
    %v10128 = vpop.f32.mrb[0].mxu0
    %10129 = vmatprep.mubr.f32.mxu0 0.0
    %10130 = vmatmul.mubr.f32.gmra.mrb[0].mxu0 %v10016
    %v10131 = vpop.f32.mrb[0].mxu0
    %v10132 = vadd.f32 %v10010, %v10131
    %v10133 = vpop.f32.mrb[0].mxu0
    %10134 = vmatprep.mubr.f32.mxu0 0.0
    %10135 = vmatmul.mubr.f32.gmra.mrb[0].mxu0 %v10019
    %v10136 = vpop.f32.mrb[0].mxu0
    %v10137 = vadd.f32 %v10010, %v10136
    %v10138 = vpop.f32.mrb[0].mxu0
    %10139 = vmatprep.mubr.f32.mxu0 0.0
    %10140 = vmatmul.mubr.f32.gmra.mrb[0].mxu0 %v10022
    %v10141 = vpop.f32.mrb[0].mxu0
    %v10142 = vadd.f32 %v10010, %v10141
    %v10143 = vpop.f32.mrb[0].mxu0
    %10144 = vmatprep.mubr.f32.mxu0 0.0
    %10145 = vmatmul.mubr.f32.gmra.mrb[0].mxu0 %v10025
    %v10146 = vpop.f32.mrb[0].mxu0
    %v10147 = vadd.f32 %v10010, %v10146
    %v10148 = vpop.f32.mrb[0].mxu0
    %10149 = vmatprep.mubr.f32.mxu0 0.0
    %10150 = vmatmul.mubr.f32.gmra.mrb[0].mxu0 %v10028
    %v10151 = vpop.f32.mrb[0].mxu0
    %v10152 = vadd.f32 %v10010, %v10151
    %v10153 = vpop.f32.mrb[0].mxu0
    %10154 = vmatprep.mubr.f32.mxu0 0.0
    %10155 = vmatmul.mubr.f32.gmra.mrb[0].mxu0 %v10031
    %v10156 = vpop.f32.mrb[0].mxu0
    %v10157 = vadd.f32 %v10010, %v10156
    %v10158 = vpop.f32.mrb[0].mxu0
    %10159 = vmatprep.mubr.f32.mxu0 0.0
    %10160 = vmatmul.mubr.f32.gmra.mrb[0].mxu0 %v10034
    %v10161 = vpop.f32.mrb[0].mxu0
    %v10162 = vadd.f32 %v10010, %v10161
    %v10163 = vpop.f32.mrb[0].mxu0
    %10164 = vmatprep.mubr.f32.mxu0 0.0
    %10165 = vmatmul.mubr.f32.gmra.mrb[0].mxu0 %v10037
    %v10166 = vpop.f32.mrb[0].mxu0
    %v10167 = vadd.f32 %v10010, %v10166
    %v10168 = vpop.f32.mrb[0].mxu0
    %10169 = vmatprep.mubr.f32.mxu0 0.0
    %10170 = vmatmul.mubr.f32.gmra.mrb[0].mxu0 %v10040
    %v10171 = vpop.f32.mrb[0].mxu0
    %v10172 = vadd.f32 %v10010, %v10171
    %v10173 = vpop.f32.mrb[0].mxu0
    %10174 = vmatprep.mubr.f32.mxu0 0.0
    %10175 = vmatmul.mubr.f32.gmra.mrb[0].mxu0 %v10043
    %v10176 = vpop.f32.mrb[0].mxu0
    %v10177 = vadd.f32 %v10010, %v10176
    %v10178 = vpop.f32.mrb[0].mxu0
    %10179 = vmatprep.mubr.f32.mxu0 0.0
    %10180 = vmatmul.mubr.f32.gmra.mrb[0].mxu0 %v10046
    %v10181 = vpop.f32.mrb[0].mxu0
    %v10182 = vadd.f32 %v10010, %v10181
    %v10183 = vpop.f32.mrb[0].mxu0
    %10184 = vmatprep.mubr.f32.mxu0 0.0
    %10185 = vmatmul.mubr.f32.gmra.mrb[0].mxu0 %v10049
    %v10186 = vpop.f32.mrb[0].mxu0
    %v10187 = vadd.f32 %v10010, %v10186
    %v10188 = vpop.f32.mrb[0].mxu0
    %10189 = vmatprep.mubr.f32.mxu0 0.0
    %10190 = vmatmul.mubr.f32.gmra.mrb[0].mxu0 %v10052
    %v10191 = vpop.f32.mrb[0].mxu0
    %v10192 = vadd.f32 %v10010, %v10191
    %v10193 = vpop.f32.mrb[0].mxu0
    %10194 = vmatprep.mubr.f32.mxu0 0.0
    %10195 = vmatmul.mubr.f32.gmra.mrb[0].mxu0 %v10055
    %v10196 = vpop.f32.mrb[0].mxu0
    %v10197 = vadd.f32 %v10010, %v10196
    %v10198 = vpop.f32.mrb[0].mxu0
    %10199 = vmatprep.mubr.f32.mxu0 0.0
    %10200 = vmatmul.mubr.f32.gmra.mrb[0].mxu0 %v10058
    %v10201 = vpop.f32.mrb[0].mxu0
    %v10202 = vadd.f32 %v10010, %v10201
    %v10203 = vpop.f32.mrb[0].mxu0
    %10204 = vdwg.mxu0
    %v10205 = vadd.f32 %v9761, %v10127
    %v10206 = vadd.f32 %v9762, %v10132
    %v10207 = vadd.f32 %v9763, %v10137
    %v10208 = vadd.f32 %v9764, %v10142
    %v10209 = vadd.f32 %v9765, %v10147
    %v10210 = vadd.f32 %v9766, %v10152
    %v10211 = vadd.f32 %v9767, %v10157
    %v10212 = vadd.f32 %v9768, %v10162
    %v10213 = vadd.f32 %v9769, %v10167
    %v10214 = vadd.f32 %v9770, %v10172
    %v10215 = vadd.f32 %v9771, %v10177
    %v10216 = vadd.f32 %v9772, %v10182
    %v10217 = vadd.f32 %v9773, %v10187
    %v10218 = vadd.f32 %v9774, %v10192
    %v10219 = vadd.f32 %v9775, %v10197
    %v10220 = vadd.f32 %v9776, %v10202
    %s10221 = scalar_lea.vmem %s15, 1
    %v10222 = vld [vmem:[%s10221] sm:$0x1]
    %s10223 = scalar_lea.vmem [#allocation17], 1
    %v10224 = vld [vmem:[%s10223] sm:$0x1]
    %v10225 = vsel %vm213, %v10205, 0.0
    %10226 = vadd.xlane.f32.xlu0 %v10225
    %v10227 = vpop.xlane.xlu0 %10226
    %v10228 = vsel %vm213, %v10206, 0.0
    %10229 = vadd.xlane.f32.xlu0 %v10228
    %v10230 = vpop.xlane.xlu0 %10229
    %v10231 = vsel %vm213, %v10207, 0.0
    %10232 = vadd.xlane.f32.xlu0 %v10231
    %v10233 = vpop.xlane.xlu0 %10232
    %v10234 = vsel %vm213, %v10208, 0.0
    %10235 = vadd.xlane.f32.xlu0 %v10234
    %v10236 = vpop.xlane.xlu0 %10235
    %v10237 = vsel %vm213, %v10209, 0.0
    %10238 = vadd.xlane.f32.xlu0 %v10237
    %v10239 = vpop.xlane.xlu0 %10238
    %v10240 = vsel %vm213, %v10210, 0.0
    %10241 = vadd.xlane.f32.xlu0 %v10240
    %v10242 = vpop.xlane.xlu0 %10241
    %v10243 = vsel %vm213, %v10211, 0.0
    %10244 = vadd.xlane.f32.xlu0 %v10243
    %v10245 = vpop.xlane.xlu0 %10244
    %v10246 = vsel %vm213, %v10212, 0.0
    %10247 = vadd.xlane.f32.xlu0 %v10246
    %v10248 = vpop.xlane.xlu0 %10247
    %v10249 = vsel %vm213, %v10213, 0.0
    %10250 = vadd.xlane.f32.xlu0 %v10249
    %v10251 = vpop.xlane.xlu0 %10250
    %v10252 = vsel %vm213, %v10214, 0.0
    %10253 = vadd.xlane.f32.xlu0 %v10252
    %v10254 = vpop.xlane.xlu0 %10253
    %v10255 = vsel %vm213, %v10215, 0.0
    %10256 = vadd.xlane.f32.xlu0 %v10255
    %v10257 = vpop.xlane.xlu0 %10256
    %v10258 = vsel %vm213, %v10216, 0.0
    %10259 = vadd.xlane.f32.xlu0 %v10258
    %v10260 = vpop.xlane.xlu0 %10259
    %v10261 = vsel %vm213, %v10217, 0.0
    %10262 = vadd.xlane.f32.xlu0 %v10261
    %v10263 = vpop.xlane.xlu0 %10262
    %v10264 = vsel %vm213, %v10218, 0.0
    %10265 = vadd.xlane.f32.xlu0 %v10264
    %v10266 = vpop.xlane.xlu0 %10265
    %v10267 = vsel %vm213, %v10219, 0.0
    %10268 = vadd.xlane.f32.xlu0 %v10267
    %v10269 = vpop.xlane.xlu0 %10268
    %v10270 = vsel %vm213, %v10220, 0.0
    %10271 = vadd.xlane.f32.xlu0 %v10270
    %v10272 = vpop.xlane.xlu0 %10271
    %v10273 = vmul.f32 %v10227, %v4658
    %v10274 = vmul.f32 %v10230, %v4658
    %v10275 = vmul.f32 %v10233, %v4658
    %v10276 = vmul.f32 %v10236, %v4658
    %v10277 = vmul.f32 %v10239, %v4658
    %v10278 = vmul.f32 %v10242, %v4658
    %v10279 = vmul.f32 %v10245, %v4658
    %v10280 = vmul.f32 %v10248, %v4658
    %v10281 = vmul.f32 %v10251, %v4658
    %v10282 = vmul.f32 %v10254, %v4658
    %v10283 = vmul.f32 %v10257, %v4658
    %v10284 = vmul.f32 %v10260, %v4658
    %v10285 = vmul.f32 %v10263, %v4658
    %v10286 = vmul.f32 %v10266, %v4658
    %v10287 = vmul.f32 %v10269, %v4658
    %v10288 = vmul.f32 %v10272, %v4658
    %v10289 = vsub.f32 %v10205, %v10273
    %v10290 = vsub.f32 %v10206, %v10274
    %v10291 = vsub.f32 %v10207, %v10275
    %v10292 = vsub.f32 %v10208, %v10276
    %v10293 = vsub.f32 %v10209, %v10277
    %v10294 = vsub.f32 %v10210, %v10278
    %v10295 = vsub.f32 %v10211, %v10279
    %v10296 = vsub.f32 %v10212, %v10280
    %v10297 = vsub.f32 %v10213, %v10281
    %v10298 = vsub.f32 %v10214, %v10282
    %v10299 = vsub.f32 %v10215, %v10283
    %v10300 = vsub.f32 %v10216, %v10284
    %v10301 = vsub.f32 %v10217, %v10285
    %v10302 = vsub.f32 %v10218, %v10286
    %v10303 = vsub.f32 %v10219, %v10287
    %v10304 = vsub.f32 %v10220, %v10288
    %v10305 = vmul.f32 %v10289, %v10289
    %v10306 = vmul.f32 %v10290, %v10290
    %v10307 = vmul.f32 %v10291, %v10291
    %v10308 = vmul.f32 %v10292, %v10292
    %v10309 = vmul.f32 %v10293, %v10293
    %v10310 = vmul.f32 %v10294, %v10294
    %v10311 = vmul.f32 %v10295, %v10295
    %v10312 = vmul.f32 %v10296, %v10296
    %v10313 = vmul.f32 %v10297, %v10297
    %v10314 = vmul.f32 %v10298, %v10298
    %v10315 = vmul.f32 %v10299, %v10299
    %v10316 = vmul.f32 %v10300, %v10300
    %v10317 = vmul.f32 %v10301, %v10301
    %v10318 = vmul.f32 %v10302, %v10302
    %v10319 = vmul.f32 %v10303, %v10303
    %v10320 = vmul.f32 %v10304, %v10304
    %v10321 = vsel %vm213, %v10305, 0.0
    %10322 = vadd.xlane.f32.xlu0 %v10321
    %v10323 = vpop.xlane.xlu0 %10322
    %v10324 = vsel %vm213, %v10306, 0.0
    %10325 = vadd.xlane.f32.xlu0 %v10324
    %v10326 = vpop.xlane.xlu0 %10325
    %v10327 = vsel %vm213, %v10307, 0.0
    %10328 = vadd.xlane.f32.xlu0 %v10327
    %v10329 = vpop.xlane.xlu0 %10328
    %v10330 = vsel %vm213, %v10308, 0.0
    %10331 = vadd.xlane.f32.xlu0 %v10330
    %v10332 = vpop.xlane.xlu0 %10331
    %v10333 = vsel %vm213, %v10309, 0.0
    %10334 = vadd.xlane.f32.xlu0 %v10333
    %v10335 = vpop.xlane.xlu0 %10334
    %v10336 = vsel %vm213, %v10310, 0.0
    %10337 = vadd.xlane.f32.xlu0 %v10336
    %v10338 = vpop.xlane.xlu0 %10337
    %v10339 = vsel %vm213, %v10311, 0.0
    %10340 = vadd.xlane.f32.xlu0 %v10339
    %v10341 = vpop.xlane.xlu0 %10340
    %v10342 = vsel %vm213, %v10312, 0.0
    %10343 = vadd.xlane.f32.xlu0 %v10342
    %v10344 = vpop.xlane.xlu0 %10343
    %v10345 = vsel %vm213, %v10313, 0.0
    %10346 = vadd.xlane.f32.xlu0 %v10345
    %v10347 = vpop.xlane.xlu0 %10346
    %v10348 = vsel %vm213, %v10314, 0.0
    %10349 = vadd.xlane.f32.xlu0 %v10348
    %v10350 = vpop.xlane.xlu0 %10349
    %v10351 = vsel %vm213, %v10315, 0.0
    %10352 = vadd.xlane.f32.xlu0 %v10351
    %v10353 = vpop.xlane.xlu0 %10352
    %v10354 = vsel %vm213, %v10316, 0.0
    %10355 = vadd.xlane.f32.xlu0 %v10354
    %v10356 = vpop.xlane.xlu0 %10355
    %v10357 = vsel %vm213, %v10317, 0.0
    %10358 = vadd.xlane.f32.xlu0 %v10357
    %v10359 = vpop.xlane.xlu0 %10358
    %v10360 = vsel %vm213, %v10318, 0.0
    %10361 = vadd.xlane.f32.xlu0 %v10360
    %v10362 = vpop.xlane.xlu0 %10361
    %v10363 = vsel %vm213, %v10319, 0.0
    %10364 = vadd.xlane.f32.xlu0 %v10363
    %v10365 = vpop.xlane.xlu0 %10364
    %v10366 = vsel %vm213, %v10320, 0.0
    %10367 = vadd.xlane.f32.xlu0 %v10366
    %v10368 = vpop.xlane.xlu0 %10367
    %v10369 = vmul.f32 %v10323, %v4658
    %v10370 = vmul.f32 %v10326, %v4658
    %v10371 = vmul.f32 %v10329, %v4658
    %v10372 = vmul.f32 %v10332, %v4658
    %v10373 = vmul.f32 %v10335, %v4658
    %v10374 = vmul.f32 %v10338, %v4658
    %v10375 = vmul.f32 %v10341, %v4658
    %v10376 = vmul.f32 %v10344, %v4658
    %v10377 = vmul.f32 %v10347, %v4658
    %v10378 = vmul.f32 %v10350, %v4658
    %v10379 = vmul.f32 %v10353, %v4658
    %v10380 = vmul.f32 %v10356, %v4658
    %v10381 = vmul.f32 %v10359, %v4658
    %v10382 = vmul.f32 %v10362, %v4658
    %v10383 = vmul.f32 %v10365, %v4658
    %v10384 = vmul.f32 %v10368, %v4658
    %v10385 = vadd.f32 %v10369, 1e-05
    %v10386 = vadd.f32 %v10370, 1e-05
    %v10387 = vadd.f32 %v10371, 1e-05
    %v10388 = vadd.f32 %v10372, 1e-05
    %v10389 = vadd.f32 %v10373, 1e-05
    %v10390 = vadd.f32 %v10374, 1e-05
    %v10391 = vadd.f32 %v10375, 1e-05
    %v10392 = vadd.f32 %v10376, 1e-05
    %v10393 = vadd.f32 %v10377, 1e-05
    %v10394 = vadd.f32 %v10378, 1e-05
    %v10395 = vadd.f32 %v10379, 1e-05
    %v10396 = vadd.f32 %v10380, 1e-05
    %v10397 = vadd.f32 %v10381, 1e-05
    %v10398 = vadd.f32 %v10382, 1e-05
    %v10399 = vadd.f32 %v10383, 1e-05
    %v10400 = vadd.f32 %v10384, 1e-05
    %v10401 = vrsqrt.pop %v10385
    %v10402 = vrsqrt.pop %v10386
    %v10403 = vrsqrt.pop %v10387
    %v10404 = vrsqrt.pop %v10388
    %v10405 = vrsqrt.pop %v10389
    %v10406 = vrsqrt.pop %v10390
    %v10407 = vrsqrt.pop %v10391
    %v10408 = vrsqrt.pop %v10392
    %v10409 = vrsqrt.pop %v10393
    %v10410 = vrsqrt.pop %v10394
    %v10411 = vrsqrt.pop %v10395
    %v10412 = vrsqrt.pop %v10396
    %v10413 = vrsqrt.pop %v10397
    %v10414 = vrsqrt.pop %v10398
    %v10415 = vrsqrt.pop %v10399
    %v10416 = vrsqrt.pop %v10400
    %v10417 = vmul.f32 %v10289, %v10401
    %v10418 = vmul.f32 %v10290, %v10402
    %v10419 = vmul.f32 %v10291, %v10403
    %v10420 = vmul.f32 %v10292, %v10404
    %v10421 = vmul.f32 %v10293, %v10405
    %v10422 = vmul.f32 %v10294, %v10406
    %v10423 = vmul.f32 %v10295, %v10407
    %v10424 = vmul.f32 %v10296, %v10408
    %v10425 = vmul.f32 %v10297, %v10409
    %v10426 = vmul.f32 %v10298, %v10410
    %v10427 = vmul.f32 %v10299, %v10411
    %v10428 = vmul.f32 %v10300, %v10412
    %v10429 = vmul.f32 %v10301, %v10413
    %v10430 = vmul.f32 %v10302, %v10414
    %v10431 = vmul.f32 %v10303, %v10415
    %v10432 = vmul.f32 %v10304, %v10416
    %v10434 = vlaneseq
    %v10435 = vshrl.u32 %v10434, 7
    %v10436 = vsub.s32 0, %v10435
    %v10437 = vrot.slane %v10222, %v10436
    %v10439 = vmul.f32 %v10417, %v10437
    %v10440 = vmul.f32 %v10418, %v10437
    %v10441 = vmul.f32 %v10419, %v10437
    %v10442 = vmul.f32 %v10420, %v10437
    %v10443 = vmul.f32 %v10421, %v10437
    %v10444 = vmul.f32 %v10422, %v10437
    %v10445 = vmul.f32 %v10423, %v10437
    %v10446 = vmul.f32 %v10424, %v10437
    %v10447 = vmul.f32 %v10425, %v10437
    %v10448 = vmul.f32 %v10426, %v10437
    %v10449 = vmul.f32 %v10427, %v10437
    %v10450 = vmul.f32 %v10428, %v10437
    %v10451 = vmul.f32 %v10429, %v10437
    %v10452 = vmul.f32 %v10430, %v10437
    %v10453 = vmul.f32 %v10431, %v10437
    %v10454 = vmul.f32 %v10432, %v10437
    %v10456 = vlaneseq
    %v10457 = vshrl.u32 %v10456, 7
    %v10458 = vsub.s32 0, %v10457
    %v10459 = vrot.slane %v10224, %v10458
    %v10461 = vadd.f32 %v10439, %v10459
    %v10462 = vadd.f32 %v10440, %v10459
    %v10463 = vadd.f32 %v10441, %v10459
    %v10464 = vadd.f32 %v10442, %v10459
    %v10465 = vadd.f32 %v10443, %v10459
    %v10466 = vadd.f32 %v10444, %v10459
    %v10467 = vadd.f32 %v10445, %v10459
    %v10468 = vadd.f32 %v10446, %v10459
    %v10469 = vadd.f32 %v10447, %v10459
    %v10470 = vadd.f32 %v10448, %v10459
    %v10471 = vadd.f32 %v10449, %v10459
    %v10472 = vadd.f32 %v10450, %v10459
    %v10473 = vadd.f32 %v10451, %v10459
    %v10474 = vadd.f32 %v10452, %v10459
    %v10475 = vadd.f32 %v10453, %v10459
    %v10476 = vadd.f32 %v10454, %v10459
    %10477 = vst.msk [vmem:[#allocation18] sm:$0xff] %vm213, %v10461
    %10478 = vst.msk [vmem:[#allocation18 + $0x8] sm:$0xff] %vm213, %v10462
    %10479 = vst.msk [vmem:[#allocation18 + $0x10] sm:$0xff] %vm213, %v10463
    %10480 = vst.msk [vmem:[#allocation18 + $0x18] sm:$0xff] %vm213, %v10464
    %10481 = vst.msk [vmem:[#allocation18 + $0x20] sm:$0xff] %vm213, %v10465
    %10482 = vst.msk [vmem:[#allocation18 + $0x28] sm:$0xff] %vm213, %v10466
    %10483 = vst.msk [vmem:[#allocation18 + $0x30] sm:$0xff] %vm213, %v10467
    %10484 = vst.msk [vmem:[#allocation18 + $0x38] sm:$0xff] %vm213, %v10468
    %10485 = vst.msk [vmem:[#allocation18 + $0x40] sm:$0xff] %vm213, %v10469
    %10486 = vst.msk [vmem:[#allocation18 + $0x48] sm:$0xff] %vm213, %v10470
    %10487 = vst.msk [vmem:[#allocation18 + $0x50] sm:$0xff] %vm213, %v10471
    %10488 = vst.msk [vmem:[#allocation18 + $0x58] sm:$0xff] %vm213, %v10472
    %10489 = vst.msk [vmem:[#allocation18 + $0x60] sm:$0xff] %vm213, %v10473
    %10490 = vst.msk [vmem:[#allocation18 + $0x68] sm:$0xff] %vm213, %v10474
    %10491 = vst.msk [vmem:[#allocation18 + $0x70] sm:$0xff] %vm213, %v10475
    %10492 = vst.msk [vmem:[#allocation18 + $0x78] sm:$0xff] %vm213, %v10476
    // Predicated region
    $region106: #{transformer_encoder_forward.1} parent=1 // pred_check
      _
    $region107: #{transformer_encoder_forward.1} parent=1 // pred_check_branch
      %10494 = sbr.rel (0) target = $region109
    $region108: #{transformer_encoder_forward.1} parent=1 // pred_region
      %s10496 = ssub.s32 2048, 2048
      %10497 = vsyncadd [#allocation5], %s10496
      %s10498 = sshll.u32 [#allocation18], 4
      %s10499 = int_to_ptr.vmem [resolvable:$true] %s10498
      %10504 = dma.vmem_to_hbm [thread:$0]  %s10499, 2048, %s17, [#allocation5], 128, 128, 8
    $region109: #{transformer_encoder_forward.1} parent=1 // pred_fallthru
      _
    // Predicated region
    $region110: #{transformer_encoder_forward.1} parent=1 // pred_check
      _
    $region111: #{transformer_encoder_forward.1} parent=1 // pred_check_branch
      %10506 = sbr.rel (0) target = $region113
    $region112: #{transformer_encoder_forward.1} parent=1 // pred_region
      %10507 = dma.done [#allocation5], 2048
    $region113: #{transformer_encoder_forward.1} parent=1 // pred_fallthru
      _
    %10508 = vsyncpa [#allocation4], 1
    %10509 = vsyncpa [#allocation7], 1
    %10510 = vsyncpa [#allocation10], 1
    %10511 = vsyncpa [#allocation13], 1
    %10512 = vsyncpa [#allocation16], 1
    %10513 = vsyncpa [#allocation5], 1

</llo_original>
